<compile_context>
chip_gen: v7x
topology: tpu7x:2x2x1
jax: 0.10.0
libtpu: 0.0.40
codegen_flags: <defaults>
</compile_context>

<pallas_src>
import functools

import jax
import jax.numpy as jnp
from jax.experimental import pallas as pl
from jax.experimental.pallas import tpu as pltpu

EPS = 1e-5
LANE = 128  # padded channel width (TPU lane count)


# ---------------------------------------------------------------------------
# Fused Pallas kernel
# ---------------------------------------------------------------------------
def _upres_kernel(x_ref, w1s_ref, w2_ref, w3_ref,
                  g1_ref, be1_ref, g2_ref, be2_ref,
                  g3_ref, be3_ref, gs_ref, bes_ref,
                  o_ref,
                  yp_ref, acc_ref, s_ref,
                  *, n, h, w):
    c = LANE
    m = n * h * w
    inv_m = 1.0 / float(m)

    def bn(y, g, beta, relu):
        # One-pass batch stats (biased variance) + single FMA normalize (+ReLU).
        mean = jnp.sum(y, axis=0, keepdims=True) * inv_m
        msq = jnp.sum(y * y, axis=0, keepdims=True) * inv_m
        var = jnp.maximum(msq - mean * mean, 0.0)
        scale = g * jax.lax.rsqrt(var + EPS)
        shift = beta - mean * scale
        out = y * scale + shift
        return jnp.maximum(out, 0.0) if relu else out

    # Branch-1 1x1 deconv and shortcut 1x1 deconv share LHS x -> one fused matmul.
    z = jnp.dot(x_ref[...], w1s_ref[...], preferred_element_type=jnp.float32)
    s_ref[...] = bn(z[:, c:], gs_ref[...], bes_ref[...], relu=False)   # shortcut BN
    y1 = bn(z[:, :c], g1_ref[...], be1_ref[...], relu=True)            # block-1 BN+ReLU

    # Scatter y1 into the zero-padded spatial scratch. Interior at (H=1, W=8)
    # keeps the store sublane-aligned; the 3x3 taps read W offsets 7/8/9.
    yp_ref[...] = jnp.zeros_like(yp_ref)
    yp_ref[:, 1:1 + h, 8:8 + w, :] = y1.reshape(n, h, w, c)

    # 3x3 stride-1 deconv == conv with flipped kernel: 9 accumulated matmuls.
    for t in range(9):
        kh, kw = t // 3, t % 3
        patch = yp_ref[:, kh:kh + h, 7 + kw:7 + kw + w, :]
        patch = patch.reshape(m, c).astype(jnp.bfloat16)
        part = jnp.dot(patch, w2_ref[t], preferred_element_type=jnp.float32)
        if t == 0:
            acc_ref[...] = part
        else:
            acc_ref[...] += part

    y2 = bn(acc_ref[...], g2_ref[...], be2_ref[...], relu=True).astype(jnp.bfloat16)

    # Block-3 1x1 deconv to 4*Cout + BN, add shortcut, final ReLU.
    y3 = bn(jnp.dot(y2, w3_ref[...], preferred_element_type=jnp.float32),
            g3_ref[...], be3_ref[...], relu=False)
    o_ref[...] = jnp.maximum(y3 + s_ref[...], 0.0)


# ---------------------------------------------------------------------------
# pallas_call wrapper (whole problem resident in VMEM; shapes are small)
# ---------------------------------------------------------------------------
def _vmem_specs(k):
    return [pl.BlockSpec(memory_space=pltpu.MemorySpace.VMEM) for _ in range(k)]


def _pad2(a, rows, cols):
    return jnp.pad(a, ((0, rows - a.shape[0]), (0, cols - a.shape[1])))


def up_res_block_forward(x_nchw, p):
    n, cin, hh, ww = x_nchw.shape
    cout = p["w1"].shape[1]
    c4 = 4 * cout
    m = n * hh * ww
    C = LANE
    assert cin <= C and c4 <= C and ww % 8 == 0, "demo-sized shapes only"

    # NCHW -> flattened NHWC; channels padded to 128 lanes; bf16 MXU operands.
    x = jnp.transpose(x_nchw, (0, 2, 3, 1)).reshape(m, cin)
    x_p = _pad2(x, m, C).astype(jnp.bfloat16)

    w1s = jnp.concatenate([_pad2(p["w1"], C, C), _pad2(p["ws"], C, C)],
                          axis=1).astype(jnp.bfloat16)                    # (C, 2C)
    w2 = jnp.stack([_pad2(p["w2"][t], C, C) for t in range(9)]
                   ).astype(jnp.bfloat16)                                 # (9, C, C)
    w3 = _pad2(p["w3"], C, C).astype(jnp.bfloat16)                        # (C, C)

    padv = lambda v: jnp.pad(v, ((0, 0), (0, C - v.shape[1]))).astype(jnp.float32)
    bn_args = [padv(p[k]) for k in
               ("g1", "beta1", "g2", "beta2", "g3", "beta3", "gs", "betas")]

    flops = 2 * m * (C * 2 * C + 9 * C * C + C * C)
    bytes_accessed = 2 * (x_p.size + w1s.size + w2.size + w3.size) + 4 * m * C

    out = pl.pallas_call(
        functools.partial(_upres_kernel, n=n, h=hh, w=ww),
        out_shape=jax.ShapeDtypeStruct((m, C), jnp.float32),
        in_specs=_vmem_specs(12),
        out_specs=pl.BlockSpec(memory_space=pltpu.MemorySpace.VMEM),
        scratch_shapes=[
            pltpu.VMEM((n, hh + 2, ww + 16, C), jnp.float32),  # padded y1 (halo)
            pltpu.VMEM((m, C), jnp.float32),                   # 3x3 accumulator
            pltpu.VMEM((m, C), jnp.float32),                   # shortcut BN result
        ],
        compiler_params=pltpu.CompilerParams(vmem_limit_bytes=32 * 1024 * 1024),
        cost_estimate=pl.CostEstimate(flops=flops, transcendentals=4 * C,
                                      bytes_accessed=bytes_accessed),
    )(x_p, w1s, w2, w3, *bn_args)

    return out[:, :c4].reshape(n, hh, ww, c4).transpose(0, 3, 1, 2)       # NCHW


# ---------------------------------------------------------------------------
# Pure-JAX reference (same math, bf16 matmul operands to match MXU precision).
# Keeps the PyTorch conv biases, which cancel exactly inside BatchNorm.
# ---------------------------------------------------------------------------
def im2col_3x3(y_nhwc, H, W):
    n, _, _, c = y_nhwc.shape
    yp = jnp.pad(y_nhwc, ((0, 0), (1, 1), (1, 1), (0, 0)))
    cols = [yp[:, kh:kh + H, kw:kw + W, :] for kh in range(3) for kw in range(3)]
    return jnp.concatenate(cols, axis=-1).reshape(n * H * W, 9 * c)


def reference_forward(x_nchw, p):
    n, cin, hh, ww = x_nchw.shape
    cout = p["w1"].shape[1]
    x = jnp.transpose(x_nchw, (0, 2, 3, 1)).reshape(n * hh * ww, cin)

    def dot(a, b):
        return jnp.dot(a.astype(jnp.bfloat16), b.astype(jnp.bfloat16),
                       preferred_element_type=jnp.float32)

    def bn(y, g, beta):
        mean = jnp.mean(y, axis=0, keepdims=True)
        var = jnp.mean((y - mean) ** 2, axis=0, keepdims=True)
        return g * (y - mean) * jax.lax.rsqrt(var + EPS) + beta

    y1 = jnp.maximum(bn(dot(x, p["w1"]) + p["b1"], p["g1"], p["beta1"]), 0.0)
    patches = im2col_3x3(y1.reshape(n, hh, ww, cout), hh, ww)
    w2_mat = p["w2"].reshape(9 * cout, cout)
    y2 = jnp.maximum(bn(dot(patches, w2_mat) + p["b2"], p["g2"], p["beta2"]), 0.0)
    y3 = bn(dot(y2, p["w3"]) + p["b3"], p["g3"], p["beta3"])
    s = bn(dot(x, p["ws"]) + p["bs"], p["gs"], p["betas"])
    out = jnp.maximum(y3 + s, 0.0)
    return out.reshape(n, hh, ww, 4 * cout).transpose(0, 3, 1, 2)


# ---------------------------------------------------------------------------
# Weight conversion & deterministic parameter construction
# ---------------------------------------------------------------------------
def deconv3x3_to_taps(w_t):
    # ConvTranspose2d weight (Cin, Cout, 3, 3) -> (9, Cin, Cout) per-tap matrices
    # of the equivalent stride-1 conv (spatially flipped kernel); tap = kh*3+kw.
    wf = jnp.flip(w_t, axis=(2, 3))
    wf = jnp.transpose(wf, (2, 3, 0, 1))            # (kh, kw, Cin, Cout)
    return wf.reshape(9, w_t.shape[0], w_t.shape[1])


def init_params(key, in_ch, out_ch):
    ks = jax.random.split(key, 16)

    def deconv_params(kw_, kb, kg, kbeta, cin, cout, ksize):
        w_t = 0.1 * jax.random.normal(kw_, (cin, cout, ksize, ksize), jnp.float32)
        b = 0.1 * jax.random.normal(kb, (1, cout), jnp.float32)
        g = 1.0 + 0.1 * jax.random.normal(kg, (1, cout), jnp.float32)
        beta = 0.1 * jax.random.normal(kbeta, (1, cout), jnp.float32)
        return w_t, b, g, beta

    w1t, b1, g1, be1 = deconv_params(*ks[0:4], in_ch, out_ch, 1)
    w2t, b2, g2, be2 = deconv_params(*ks[4:8], out_ch, out_ch, 3)
    w3t, b3, g3, be3 = deconv_params(*ks[8:12], out_ch, out_ch * 4, 1)
    wst, bs, gs, bes = deconv_params(*ks[12:16], in_ch, out_ch * 4, 1)

    return {
        "w1": w1t[:, :, 0, 0], "b1": b1, "g1": g1, "beta1": be1,
        "w2": deconv3x3_to_taps(w2t), "b2": b2, "g2": g2, "beta2": be2,
        "w3": w3t[:, :, 0, 0], "b3": b3, "g3": g3, "beta3": be3,
        "ws": wst[:, :, 0, 0], "bs": bs, "gs": gs, "betas": bes,
    }


if __name__ == "__main__":
    key = jax.random.PRNGKey(0)
    k_x, k_p = jax.random.split(key)

    N, IN_CH, OUT_CH, H, W = 2, 8, 8, 16, 16
    x = jax.random.normal(k_x, (N, IN_CH, H, W), jnp.float32)   # NCHW like PyTorch
    params = init_params(k_p, IN_CH, OUT_CH)

    out = jax.block_until_ready(up_res_block_forward(x, params))
    ref = jax.block_until_ready(reference_forward(x, params))

    assert out.shape == (N, 4 * OUT_CH, H, W), out.shape
    assert jnp.allclose(out, ref, atol=1e-2, rtol=1e-2), \
        float(jnp.max(jnp.abs(out - ref)))
    print("KERNEL_OK")
</pallas_src>

<mosaic_0001>
module attributes {stable_mosaic.version = 11 : i64} {
  func.func @_upres_kernel(%arg0: memref<512x128xbf16, #tpu.memory_space<vmem>>, %arg1: memref<128x256xbf16, #tpu.memory_space<vmem>>, %arg2: memref<9x128x128xbf16, #tpu.memory_space<vmem>>, %arg3: memref<128x128xbf16, #tpu.memory_space<vmem>>, %arg4: memref<1x128xf32, #tpu.memory_space<vmem>>, %arg5: memref<1x128xf32, #tpu.memory_space<vmem>>, %arg6: memref<1x128xf32, #tpu.memory_space<vmem>>, %arg7: memref<1x128xf32, #tpu.memory_space<vmem>>, %arg8: memref<1x128xf32, #tpu.memory_space<vmem>>, %arg9: memref<1x128xf32, #tpu.memory_space<vmem>>, %arg10: memref<1x128xf32, #tpu.memory_space<vmem>>, %arg11: memref<1x128xf32, #tpu.memory_space<vmem>>, %arg12: memref<512x128xf32, #tpu.memory_space<vmem>>, %arg13: memref<2x18x32x128xf32, #tpu.memory_space<vmem>>, %arg14: memref<512x128xf32, #tpu.memory_space<vmem>>, %arg15: memref<512x128xf32, #tpu.memory_space<vmem>>) attributes {dimension_semantics = [], scalar_prefetch = 0 : i64, scratch_operands = 3 : i64, tpu.core_type = #tpu.core_type<tc>} {
    %c0 = arith.constant 0 : index
    %c0_0 = arith.constant 0 : index
    %0 = vector.load %arg0[%c0, %c0_0] : memref<512x128xbf16, #tpu.memory_space<vmem>>, vector<512x128xbf16>
    %c0_1 = arith.constant 0 : index
    %c0_2 = arith.constant 0 : index
    %1 = vector.load %arg1[%c0_1, %c0_2] : memref<128x256xbf16, #tpu.memory_space<vmem>>, vector<128x256xbf16>
    %cst = arith.constant dense<0.000000e+00> : vector<512x256xf32>
    %2 = tpu.matmul %0, %1, %cst {dimension_numbers = #tpu.dot_dimension_numbers<[1], [0], [0], [1], [0, 0, 1, 1], [], []>} : vector<512x128xbf16>, vector<128x256xbf16>, vector<512x256xf32> -> vector<512x256xf32>
    %3 = vector.extract_strided_slice %2 {offsets = [0, 128], sizes = [512, 128], strides = [1, 1]} : vector<512x256xf32> to vector<512x128xf32>
    %c0_3 = arith.constant 0 : index
    %c0_4 = arith.constant 0 : index
    %4 = vector.load %arg10[%c0_3, %c0_4] : memref<1x128xf32, #tpu.memory_space<vmem>>, vector<1x128xf32>
    %c0_5 = arith.constant 0 : index
    %c0_6 = arith.constant 0 : index
    %5 = vector.load %arg11[%c0_5, %c0_6] : memref<1x128xf32, #tpu.memory_space<vmem>>, vector<1x128xf32>
    %cst_7 = arith.constant dense<0.000000e+00> : vector<128xf32>
    %6 = vector.multi_reduction <add>, %3, %cst_7 [0] : vector<512x128xf32> to vector<128xf32>
    %7 = vector.shape_cast %6 : vector<128xf32> to vector<1x128xf32>
    %cst_8 = arith.constant 0.001953125 : f32
    %8 = vector.broadcast %cst_8 : f32 to vector<1x128xf32>
    %9 = arith.mulf %7, %8 : vector<1x128xf32>
    %10 = arith.mulf %3, %3 : vector<512x128xf32>
    %cst_9 = arith.constant dense<0.000000e+00> : vector<128xf32>
    %11 = vector.multi_reduction <add>, %10, %cst_9 [0] : vector<512x128xf32> to vector<128xf32>
    %12 = vector.shape_cast %11 : vector<128xf32> to vector<1x128xf32>
    %cst_10 = arith.constant 0.001953125 : f32
    %13 = vector.broadcast %cst_10 : f32 to vector<1x128xf32>
    %14 = arith.mulf %12, %13 : vector<1x128xf32>
    %15 = arith.mulf %9, %9 : vector<1x128xf32>
    %16 = arith.subf %14, %15 : vector<1x128xf32>
    %cst_11 = arith.constant 0.000000e+00 : f32
    %17 = vector.broadcast %cst_11 : f32 to vector<1x128xf32>
    %18 = arith.maximumf %16, %17 : vector<1x128xf32>
    %cst_12 = arith.constant 9.99999974E-6 : f32
    %19 = vector.broadcast %cst_12 : f32 to vector<1x128xf32>
    %20 = arith.addf %18, %19 : vector<1x128xf32>
    %21 = math.rsqrt %20 : vector<1x128xf32>
    %22 = arith.mulf %4, %21 : vector<1x128xf32>
    %23 = arith.mulf %9, %22 : vector<1x128xf32>
    %24 = arith.subf %5, %23 : vector<1x128xf32>
    %25 = vector.broadcast %22 : vector<1x128xf32> to vector<512x128xf32>
    %26 = arith.mulf %3, %25 : vector<512x128xf32>
    %27 = vector.broadcast %24 : vector<1x128xf32> to vector<512x128xf32>
    %28 = arith.addf %26, %27 : vector<512x128xf32>
    %c0_13 = arith.constant 0 : index
    %c0_14 = arith.constant 0 : index
    %29 = vector.load %arg15[%c0_13, %c0_14] : memref<512x128xf32, #tpu.memory_space<vmem>>, vector<512x128xf32>
    tpu.vector_store %arg15[%c0_13, %c0_14], %28 {strides = array<i32>} : memref<512x128xf32, #tpu.memory_space<vmem>>, vector<512x128xf32>,
    %30 = vector.extract_strided_slice %2 {offsets = [0, 0], sizes = [512, 128], strides = [1, 1]} : vector<512x256xf32> to vector<512x128xf32>
    %c0_15 = arith.constant 0 : index
    %c0_16 = arith.constant 0 : index
    %31 = vector.load %arg4[%c0_15, %c0_16] : memref<1x128xf32, #tpu.memory_space<vmem>>, vector<1x128xf32>
    %c0_17 = arith.constant 0 : index
    %c0_18 = arith.constant 0 : index
    %32 = vector.load %arg5[%c0_17, %c0_18] : memref<1x128xf32, #tpu.memory_space<vmem>>, vector<1x128xf32>
    %cst_19 = arith.constant dense<0.000000e+00> : vector<128xf32>
    %33 = vector.multi_reduction <add>, %30, %cst_19 [0] : vector<512x128xf32> to vector<128xf32>
    %34 = vector.shape_cast %33 : vector<128xf32> to vector<1x128xf32>
    %cst_20 = arith.constant 0.001953125 : f32
    %35 = vector.broadcast %cst_20 : f32 to vector<1x128xf32>
    %36 = arith.mulf %34, %35 : vector<1x128xf32>
    %37 = arith.mulf %30, %30 : vector<512x128xf32>
    %cst_21 = arith.constant dense<0.000000e+00> : vector<128xf32>
    %38 = vector.multi_reduction <add>, %37, %cst_21 [0] : vector<512x128xf32> to vector<128xf32>
    %39 = vector.shape_cast %38 : vector<128xf32> to vector<1x128xf32>
    %cst_22 = arith.constant 0.001953125 : f32
    %40 = vector.broadcast %cst_22 : f32 to vector<1x128xf32>
    %41 = arith.mulf %39, %40 : vector<1x128xf32>
    %42 = arith.mulf %36, %36 : vector<1x128xf32>
    %43 = arith.subf %41, %42 : vector<1x128xf32>
    %cst_23 = arith.constant 0.000000e+00 : f32
    %44 = vector.broadcast %cst_23 : f32 to vector<1x128xf32>
    %45 = arith.maximumf %43, %44 : vector<1x128xf32>
    %cst_24 = arith.constant 9.99999974E-6 : f32
    %46 = vector.broadcast %cst_24 : f32 to vector<1x128xf32>
    %47 = arith.addf %45, %46 : vector<1x128xf32>
    %48 = math.rsqrt %47 : vector<1x128xf32>
    %49 = arith.mulf %31, %48 : vector<1x128xf32>
    %50 = arith.mulf %36, %49 : vector<1x128xf32>
    %51 = arith.subf %32, %50 : vector<1x128xf32>
    %52 = vector.broadcast %49 : vector<1x128xf32> to vector<512x128xf32>
    %53 = arith.mulf %30, %52 : vector<512x128xf32>
    %54 = vector.broadcast %51 : vector<1x128xf32> to vector<512x128xf32>
    %55 = arith.addf %53, %54 : vector<512x128xf32>
    %cst_25 = arith.constant 0.000000e+00 : f32
    %56 = vector.broadcast %cst_25 : f32 to vector<512x128xf32>
    %57 = arith.maximumf %55, %56 : vector<512x128xf32>
    %cst_26 = arith.constant 0.000000e+00 : f32
    %58 = vector.broadcast %cst_26 : f32 to vector<2x18x32x128xf32>
    %c0_27 = arith.constant 0 : index
    %c0_28 = arith.constant 0 : index
    %c0_29 = arith.constant 0 : index
    %c0_30 = arith.constant 0 : index
    %59 = vector.load %arg13[%c0_27, %c0_28, %c0_29, %c0_30] : memref<2x18x32x128xf32, #tpu.memory_space<vmem>>, vector<2x18x32x128xf32>
    tpu.vector_store %arg13[%c0_27, %c0_28, %c0_29, %c0_30], %58 {strides = array<i32>} : memref<2x18x32x128xf32, #tpu.memory_space<vmem>>, vector<2x18x32x128xf32>,
    %60 = vector.shape_cast %57 : vector<512x128xf32> to vector<2x16x16x128xf32>
    %c0_31 = arith.constant 0 : index
    %c1 = arith.constant 1 : index
    %c8 = arith.constant 8 : index
    %c0_32 = arith.constant 0 : index
    %61 = vector.load %arg13[%c0_31, %c1, %c8, %c0_32] : memref<2x18x32x128xf32, #tpu.memory_space<vmem>>, vector<2x16x16x128xf32>
    tpu.vector_store %arg13[%c0_31, %c1, %c8, %c0_32], %60 {strides = array<i32>} : memref<2x18x32x128xf32, #tpu.memory_space<vmem>>, vector<2x16x16x128xf32>,
    %c0_33 = arith.constant 0 : index
    %c0_34 = arith.constant 0 : index
    %c7 = arith.constant 7 : index
    %c0_35 = arith.constant 0 : index
    %62 = vector.load %arg13[%c0_33, %c0_34, %c7, %c0_35] : memref<2x18x32x128xf32, #tpu.memory_space<vmem>>, vector<2x16x16x128xf32>
    %63 = vector.shape_cast %62 : vector<2x16x16x128xf32> to vector<512x128xf32>
    %64 = arith.truncf %63 : vector<512x128xf32> to vector<512x128xbf16>
    %c0_36 = arith.constant 0 : index
    %c0_37 = arith.constant 0 : index
    %c0_38 = arith.constant 0 : index
    %65 = vector.load %arg2[%c0_36, %c0_37, %c0_38] : memref<9x128x128xbf16, #tpu.memory_space<vmem>>, vector<1x128x128xbf16>
    %66 = vector.shape_cast %65 : vector<1x128x128xbf16> to vector<128x128xbf16>
    %cst_39 = arith.constant dense<0.000000e+00> : vector<512x128xf32>
    %67 = tpu.matmul %64, %66, %cst_39 {dimension_numbers = #tpu.dot_dimension_numbers<[1], [0], [0], [1], [0, 0, 1, 1], [], []>} : vector<512x128xbf16>, vector<128x128xbf16>, vector<512x128xf32> -> vector<512x128xf32>
    %c0_40 = arith.constant 0 : index
    %c0_41 = arith.constant 0 : index
    %68 = vector.load %arg14[%c0_40, %c0_41] : memref<512x128xf32, #tpu.memory_space<vmem>>, vector<512x128xf32>
    tpu.vector_store %arg14[%c0_40, %c0_41], %67 {strides = array<i32>} : memref<512x128xf32, #tpu.memory_space<vmem>>, vector<512x128xf32>,
    %c0_42 = arith.constant 0 : index
    %c0_43 = arith.constant 0 : index
    %c8_44 = arith.constant 8 : index
    %c0_45 = arith.constant 0 : index
    %69 = vector.load %arg13[%c0_42, %c0_43, %c8_44, %c0_45] : memref<2x18x32x128xf32, #tpu.memory_space<vmem>>, vector<2x16x16x128xf32>
    %70 = vector.shape_cast %69 : vector<2x16x16x128xf32> to vector<512x128xf32>
    %71 = arith.truncf %70 : vector<512x128xf32> to vector<512x128xbf16>
    %c1_46 = arith.constant 1 : index
    %c0_47 = arith.constant 0 : index
    %c0_48 = arith.constant 0 : index
    %72 = vector.load %arg2[%c1_46, %c0_47, %c0_48] : memref<9x128x128xbf16, #tpu.memory_space<vmem>>, vector<1x128x128xbf16>
    %73 = vector.shape_cast %72 : vector<1x128x128xbf16> to vector<128x128xbf16>
    %cst_49 = arith.constant dense<0.000000e+00> : vector<512x128xf32>
    %74 = tpu.matmul %71, %73, %cst_49 {dimension_numbers = #tpu.dot_dimension_numbers<[1], [0], [0], [1], [0, 0, 1, 1], [], []>} : vector<512x128xbf16>, vector<128x128xbf16>, vector<512x128xf32> -> vector<512x128xf32>
    %c0_50 = arith.constant 0 : index
    %c0_51 = arith.constant 0 : index
    %75 = vector.load %arg14[%c0_50, %c0_51] : memref<512x128xf32, #tpu.memory_space<vmem>>, vector<512x128xf32>
    %76 = arith.addf %75, %74 : vector<512x128xf32>
    %c0_52 = arith.constant 0 : index
    %c0_53 = arith.constant 0 : index
    %77 = vector.load %arg14[%c0_52, %c0_53] : memref<512x128xf32, #tpu.memory_space<vmem>>, vector<512x128xf32>
    tpu.vector_store %arg14[%c0_52, %c0_53], %76 {strides = array<i32>} : memref<512x128xf32, #tpu.memory_space<vmem>>, vector<512x128xf32>,
    %c0_54 = arith.constant 0 : index
    %c0_55 = arith.constant 0 : index
    %c9 = arith.constant 9 : index
    %c0_56 = arith.constant 0 : index
    %78 = vector.load %arg13[%c0_54, %c0_55, %c9, %c0_56] : memref<2x18x32x128xf32, #tpu.memory_space<vmem>>, vector<2x16x16x128xf32>
    %79 = vector.shape_cast %78 : vector<2x16x16x128xf32> to vector<512x128xf32>
    %80 = arith.truncf %79 : vector<512x128xf32> to vector<512x128xbf16>
    %c2 = arith.constant 2 : index
    %c0_57 = arith.constant 0 : index
    %c0_58 = arith.constant 0 : index
    %81 = vector.load %arg2[%c2, %c0_57, %c0_58] : memref<9x128x128xbf16, #tpu.memory_space<vmem>>, vector<1x128x128xbf16>
    %82 = vector.shape_cast %81 : vector<1x128x128xbf16> to vector<128x128xbf16>
    %cst_59 = arith.constant dense<0.000000e+00> : vector<512x128xf32>
    %83 = tpu.matmul %80, %82, %cst_59 {dimension_numbers = #tpu.dot_dimension_numbers<[1], [0], [0], [1], [0, 0, 1, 1], [], []>} : vector<512x128xbf16>, vector<128x128xbf16>, vector<512x128xf32> -> vector<512x128xf32>
    %c0_60 = arith.constant 0 : index
    %c0_61 = arith.constant 0 : index
    %84 = vector.load %arg14[%c0_60, %c0_61] : memref<512x128xf32, #tpu.memory_space<vmem>>, vector<512x128xf32>
    %85 = arith.addf %84, %83 : vector<512x128xf32>
    %c0_62 = arith.constant 0 : index
    %c0_63 = arith.constant 0 : index
    %86 = vector.load %arg14[%c0_62, %c0_63] : memref<512x128xf32, #tpu.memory_space<vmem>>, vector<512x128xf32>
    tpu.vector_store %arg14[%c0_62, %c0_63], %85 {strides = array<i32>} : memref<512x128xf32, #tpu.memory_space<vmem>>, vector<512x128xf32>,
    %c0_64 = arith.constant 0 : index
    %c1_65 = arith.constant 1 : index
    %c7_66 = arith.constant 7 : index
    %c0_67 = arith.constant 0 : index
    %87 = vector.load %arg13[%c0_64, %c1_65, %c7_66, %c0_67] : memref<2x18x32x128xf32, #tpu.memory_space<vmem>>, vector<2x16x16x128xf32>
    %88 = vector.shape_cast %87 : vector<2x16x16x128xf32> to vector<512x128xf32>
    %89 = arith.truncf %88 : vector<512x128xf32> to vector<512x128xbf16>
    %c3 = arith.constant 3 : index
    %c0_68 = arith.constant 0 : index
    %c0_69 = arith.constant 0 : index
    %90 = vector.load %arg2[%c3, %c0_68, %c0_69] : memref<9x128x128xbf16, #tpu.memory_space<vmem>>, vector<1x128x128xbf16>
    %91 = vector.shape_cast %90 : vector<1x128x128xbf16> to vector<128x128xbf16>
    %cst_70 = arith.constant dense<0.000000e+00> : vector<512x128xf32>
    %92 = tpu.matmul %89, %91, %cst_70 {dimension_numbers = #tpu.dot_dimension_numbers<[1], [0], [0], [1], [0, 0, 1, 1], [], []>} : vector<512x128xbf16>, vector<128x128xbf16>, vector<512x128xf32> -> vector<512x128xf32>
    %c0_71 = arith.constant 0 : index
    %c0_72 = arith.constant 0 : index
    %93 = vector.load %arg14[%c0_71, %c0_72] : memref<512x128xf32, #tpu.memory_space<vmem>>, vector<512x128xf32>
    %94 = arith.addf %93, %92 : vector<512x128xf32>
    %c0_73 = arith.constant 0 : index
    %c0_74 = arith.constant 0 : index
    %95 = vector.load %arg14[%c0_73, %c0_74] : memref<512x128xf32, #tpu.memory_space<vmem>>, vector<512x128xf32>
    tpu.vector_store %arg14[%c0_73, %c0_74], %94 {strides = array<i32>} : memref<512x128xf32, #tpu.memory_space<vmem>>, vector<512x128xf32>,
    %c0_75 = arith.constant 0 : index
    %c1_76 = arith.constant 1 : index
    %c8_77 = arith.constant 8 : index
    %c0_78 = arith.constant 0 : index
    %96 = vector.load %arg13[%c0_75, %c1_76, %c8_77, %c0_78] : memref<2x18x32x128xf32, #tpu.memory_space<vmem>>, vector<2x16x16x128xf32>
    %97 = vector.shape_cast %96 : vector<2x16x16x128xf32> to vector<512x128xf32>
    %98 = arith.truncf %97 : vector<512x128xf32> to vector<512x128xbf16>
    %c4 = arith.constant 4 : index
    %c0_79 = arith.constant 0 : index
    %c0_80 = arith.constant 0 : index
    %99 = vector.load %arg2[%c4, %c0_79, %c0_80] : memref<9x128x128xbf16, #tpu.memory_space<vmem>>, vector<1x128x128xbf16>
    %100 = vector.shape_cast %99 : vector<1x128x128xbf16> to vector<128x128xbf16>
    %cst_81 = arith.constant dense<0.000000e+00> : vector<512x128xf32>
    %101 = tpu.matmul %98, %100, %cst_81 {dimension_numbers = #tpu.dot_dimension_numbers<[1], [0], [0], [1], [0, 0, 1, 1], [], []>} : vector<512x128xbf16>, vector<128x128xbf16>, vector<512x128xf32> -> vector<512x128xf32>
    %c0_82 = arith.constant 0 : index
    %c0_83 = arith.constant 0 : index
    %102 = vector.load %arg14[%c0_82, %c0_83] : memref<512x128xf32, #tpu.memory_space<vmem>>, vector<512x128xf32>
    %103 = arith.addf %102, %101 : vector<512x128xf32>
    %c0_84 = arith.constant 0 : index
    %c0_85 = arith.constant 0 : index
    %104 = vector.load %arg14[%c0_84, %c0_85] : memref<512x128xf32, #tpu.memory_space<vmem>>, vector<512x128xf32>
    tpu.vector_store %arg14[%c0_84, %c0_85], %103 {strides = array<i32>} : memref<512x128xf32, #tpu.memory_space<vmem>>, vector<512x128xf32>,
    %c0_86 = arith.constant 0 : index
    %c1_87 = arith.constant 1 : index
    %c9_88 = arith.constant 9 : index
    %c0_89 = arith.constant 0 : index
    %105 = vector.load %arg13[%c0_86, %c1_87, %c9_88, %c0_89] : memref<2x18x32x128xf32, #tpu.memory_space<vmem>>, vector<2x16x16x128xf32>
    %106 = vector.shape_cast %105 : vector<2x16x16x128xf32> to vector<512x128xf32>
    %107 = arith.truncf %106 : vector<512x128xf32> to vector<512x128xbf16>
    %c5 = arith.constant 5 : index
    %c0_90 = arith.constant 0 : index
    %c0_91 = arith.constant 0 : index
    %108 = vector.load %arg2[%c5, %c0_90, %c0_91] : memref<9x128x128xbf16, #tpu.memory_space<vmem>>, vector<1x128x128xbf16>
    %109 = vector.shape_cast %108 : vector<1x128x128xbf16> to vector<128x128xbf16>
    %cst_92 = arith.constant dense<0.000000e+00> : vector<512x128xf32>
    %110 = tpu.matmul %107, %109, %cst_92 {dimension_numbers = #tpu.dot_dimension_numbers<[1], [0], [0], [1], [0, 0, 1, 1], [], []>} : vector<512x128xbf16>, vector<128x128xbf16>, vector<512x128xf32> -> vector<512x128xf32>
    %c0_93 = arith.constant 0 : index
    %c0_94 = arith.constant 0 : index
    %111 = vector.load %arg14[%c0_93, %c0_94] : memref<512x128xf32, #tpu.memory_space<vmem>>, vector<512x128xf32>
    %112 = arith.addf %111, %110 : vector<512x128xf32>
    %c0_95 = arith.constant 0 : index
    %c0_96 = arith.constant 0 : index
    %113 = vector.load %arg14[%c0_95, %c0_96] : memref<512x128xf32, #tpu.memory_space<vmem>>, vector<512x128xf32>
    tpu.vector_store %arg14[%c0_95, %c0_96], %112 {strides = array<i32>} : memref<512x128xf32, #tpu.memory_space<vmem>>, vector<512x128xf32>,
    %c0_97 = arith.constant 0 : index
    %c2_98 = arith.constant 2 : index
    %c7_99 = arith.constant 7 : index
    %c0_100 = arith.constant 0 : index
    %114 = vector.load %arg13[%c0_97, %c2_98, %c7_99, %c0_100] : memref<2x18x32x128xf32, #tpu.memory_space<vmem>>, vector<2x16x16x128xf32>
    %115 = vector.shape_cast %114 : vector<2x16x16x128xf32> to vector<512x128xf32>
    %116 = arith.truncf %115 : vector<512x128xf32> to vector<512x128xbf16>
    %c6 = arith.constant 6 : index
    %c0_101 = arith.constant 0 : index
    %c0_102 = arith.constant 0 : index
    %117 = vector.load %arg2[%c6, %c0_101, %c0_102] : memref<9x128x128xbf16, #tpu.memory_space<vmem>>, vector<1x128x128xbf16>
    %118 = vector.shape_cast %117 : vector<1x128x128xbf16> to vector<128x128xbf16>
    %cst_103 = arith.constant dense<0.000000e+00> : vector<512x128xf32>
    %119 = tpu.matmul %116, %118, %cst_103 {dimension_numbers = #tpu.dot_dimension_numbers<[1], [0], [0], [1], [0, 0, 1, 1], [], []>} : vector<512x128xbf16>, vector<128x128xbf16>, vector<512x128xf32> -> vector<512x128xf32>
    %c0_104 = arith.constant 0 : index
    %c0_105 = arith.constant 0 : index
    %120 = vector.load %arg14[%c0_104, %c0_105] : memref<512x128xf32, #tpu.memory_space<vmem>>, vector<512x128xf32>
    %121 = arith.addf %120, %119 : vector<512x128xf32>
    %c0_106 = arith.constant 0 : index
    %c0_107 = arith.constant 0 : index
    %122 = vector.load %arg14[%c0_106, %c0_107] : memref<512x128xf32, #tpu.memory_space<vmem>>, vector<512x128xf32>
    tpu.vector_store %arg14[%c0_106, %c0_107], %121 {strides = array<i32>} : memref<512x128xf32, #tpu.memory_space<vmem>>, vector<512x128xf32>,
    %c0_108 = arith.constant 0 : index
    %c2_109 = arith.constant 2 : index
    %c8_110 = arith.constant 8 : index
    %c0_111 = arith.constant 0 : index
    %123 = vector.load %arg13[%c0_108, %c2_109, %c8_110, %c0_111] : memref<2x18x32x128xf32, #tpu.memory_space<vmem>>, vector<2x16x16x128xf32>
    %124 = vector.shape_cast %123 : vector<2x16x16x128xf32> to vector<512x128xf32>
    %125 = arith.truncf %124 : vector<512x128xf32> to vector<512x128xbf16>
    %c7_112 = arith.constant 7 : index
    %c0_113 = arith.constant 0 : index
    %c0_114 = arith.constant 0 : index
    %126 = vector.load %arg2[%c7_112, %c0_113, %c0_114] : memref<9x128x128xbf16, #tpu.memory_space<vmem>>, vector<1x128x128xbf16>
    %127 = vector.shape_cast %126 : vector<1x128x128xbf16> to vector<128x128xbf16>
    %cst_115 = arith.constant dense<0.000000e+00> : vector<512x128xf32>
    %128 = tpu.matmul %125, %127, %cst_115 {dimension_numbers = #tpu.dot_dimension_numbers<[1], [0], [0], [1], [0, 0, 1, 1], [], []>} : vector<512x128xbf16>, vector<128x128xbf16>, vector<512x128xf32> -> vector<512x128xf32>
    %c0_116 = arith.constant 0 : index
    %c0_117 = arith.constant 0 : index
    %129 = vector.load %arg14[%c0_116, %c0_117] : memref<512x128xf32, #tpu.memory_space<vmem>>, vector<512x128xf32>
    %130 = arith.addf %129, %128 : vector<512x128xf32>
    %c0_118 = arith.constant 0 : index
    %c0_119 = arith.constant 0 : index
    %131 = vector.load %arg14[%c0_118, %c0_119] : memref<512x128xf32, #tpu.memory_space<vmem>>, vector<512x128xf32>
    tpu.vector_store %arg14[%c0_118, %c0_119], %130 {strides = array<i32>} : memref<512x128xf32, #tpu.memory_space<vmem>>, vector<512x128xf32>,
    %c0_120 = arith.constant 0 : index
    %c2_121 = arith.constant 2 : index
    %c9_122 = arith.constant 9 : index
    %c0_123 = arith.constant 0 : index
    %132 = vector.load %arg13[%c0_120, %c2_121, %c9_122, %c0_123] : memref<2x18x32x128xf32, #tpu.memory_space<vmem>>, vector<2x16x16x128xf32>
    %133 = vector.shape_cast %132 : vector<2x16x16x128xf32> to vector<512x128xf32>
    %134 = arith.truncf %133 : vector<512x128xf32> to vector<512x128xbf16>
    %c8_124 = arith.constant 8 : index
    %c0_125 = arith.constant 0 : index
    %c0_126 = arith.constant 0 : index
    %135 = vector.load %arg2[%c8_124, %c0_125, %c0_126] : memref<9x128x128xbf16, #tpu.memory_space<vmem>>, vector<1x128x128xbf16>
    %136 = vector.shape_cast %135 : vector<1x128x128xbf16> to vector<128x128xbf16>
    %cst_127 = arith.constant dense<0.000000e+00> : vector<512x128xf32>
    %137 = tpu.matmul %134, %136, %cst_127 {dimension_numbers = #tpu.dot_dimension_numbers<[1], [0], [0], [1], [0, 0, 1, 1], [], []>} : vector<512x128xbf16>, vector<128x128xbf16>, vector<512x128xf32> -> vector<512x128xf32>
    %c0_128 = arith.constant 0 : index
    %c0_129 = arith.constant 0 : index
    %138 = vector.load %arg14[%c0_128, %c0_129] : memref<512x128xf32, #tpu.memory_space<vmem>>, vector<512x128xf32>
    %139 = arith.addf %138, %137 : vector<512x128xf32>
    %c0_130 = arith.constant 0 : index
    %c0_131 = arith.constant 0 : index
    %140 = vector.load %arg14[%c0_130, %c0_131] : memref<512x128xf32, #tpu.memory_space<vmem>>, vector<512x128xf32>
    tpu.vector_store %arg14[%c0_130, %c0_131], %139 {strides = array<i32>} : memref<512x128xf32, #tpu.memory_space<vmem>>, vector<512x128xf32>,
    %c0_132 = arith.constant 0 : index
    %c0_133 = arith.constant 0 : index
    %141 = vector.load %arg14[%c0_132, %c0_133] : memref<512x128xf32, #tpu.memory_space<vmem>>, vector<512x128xf32>
    %c0_134 = arith.constant 0 : index
    %c0_135 = arith.constant 0 : index
    %142 = vector.load %arg6[%c0_134, %c0_135] : memref<1x128xf32, #tpu.memory_space<vmem>>, vector<1x128xf32>
    %c0_136 = arith.constant 0 : index
    %c0_137 = arith.constant 0 : index
    %143 = vector.load %arg7[%c0_136, %c0_137] : memref<1x128xf32, #tpu.memory_space<vmem>>, vector<1x128xf32>
    %cst_138 = arith.constant dense<0.000000e+00> : vector<128xf32>
    %144 = vector.multi_reduction <add>, %141, %cst_138 [0] : vector<512x128xf32> to vector<128xf32>
    %145 = vector.shape_cast %144 : vector<128xf32> to vector<1x128xf32>
    %cst_139 = arith.constant 0.001953125 : f32
    %146 = vector.broadcast %cst_139 : f32 to vector<1x128xf32>
    %147 = arith.mulf %145, %146 : vector<1x128xf32>
    %148 = arith.mulf %141, %141 : vector<512x128xf32>
    %cst_140 = arith.constant dense<0.000000e+00> : vector<128xf32>
    %149 = vector.multi_reduction <add>, %148, %cst_140 [0] : vector<512x128xf32> to vector<128xf32>
    %150 = vector.shape_cast %149 : vector<128xf32> to vector<1x128xf32>
    %cst_141 = arith.constant 0.001953125 : f32
    %151 = vector.broadcast %cst_141 : f32 to vector<1x128xf32>
    %152 = arith.mulf %150, %151 : vector<1x128xf32>
    %153 = arith.mulf %147, %147 : vector<1x128xf32>
    %154 = arith.subf %152, %153 : vector<1x128xf32>
    %cst_142 = arith.constant 0.000000e+00 : f32
    %155 = vector.broadcast %cst_142 : f32 to vector<1x128xf32>
    %156 = arith.maximumf %154, %155 : vector<1x128xf32>
    %cst_143 = arith.constant 9.99999974E-6 : f32
    %157 = vector.broadcast %cst_143 : f32 to vector<1x128xf32>
    %158 = arith.addf %156, %157 : vector<1x128xf32>
    %159 = math.rsqrt %158 : vector<1x128xf32>
    %160 = arith.mulf %142, %159 : vector<1x128xf32>
    %161 = arith.mulf %147, %160 : vector<1x128xf32>
    %162 = arith.subf %143, %161 : vector<1x128xf32>
    %163 = vector.broadcast %160 : vector<1x128xf32> to vector<512x128xf32>
    %164 = arith.mulf %141, %163 : vector<512x128xf32>
    %165 = vector.broadcast %162 : vector<1x128xf32> to vector<512x128xf32>
    %166 = arith.addf %164, %165 : vector<512x128xf32>
    %cst_144 = arith.constant 0.000000e+00 : f32
    %167 = vector.broadcast %cst_144 : f32 to vector<512x128xf32>
    %168 = arith.maximumf %166, %167 : vector<512x128xf32>
    %169 = arith.truncf %168 : vector<512x128xf32> to vector<512x128xbf16>
    %c0_145 = arith.constant 0 : index
    %c0_146 = arith.constant 0 : index
    %170 = vector.load %arg3[%c0_145, %c0_146] : memref<128x128xbf16, #tpu.memory_space<vmem>>, vector<128x128xbf16>
    %cst_147 = arith.constant dense<0.000000e+00> : vector<512x128xf32>
    %171 = tpu.matmul %169, %170, %cst_147 {dimension_numbers = #tpu.dot_dimension_numbers<[1], [0], [0], [1], [0, 0, 1, 1], [], []>} : vector<512x128xbf16>, vector<128x128xbf16>, vector<512x128xf32> -> vector<512x128xf32>
    %c0_148 = arith.constant 0 : index
    %c0_149 = arith.constant 0 : index
    %172 = vector.load %arg8[%c0_148, %c0_149] : memref<1x128xf32, #tpu.memory_space<vmem>>, vector<1x128xf32>
    %c0_150 = arith.constant 0 : index
    %c0_151 = arith.constant 0 : index
    %173 = vector.load %arg9[%c0_150, %c0_151] : memref<1x128xf32, #tpu.memory_space<vmem>>, vector<1x128xf32>
    %cst_152 = arith.constant dense<0.000000e+00> : vector<128xf32>
    %174 = vector.multi_reduction <add>, %171, %cst_152 [0] : vector<512x128xf32> to vector<128xf32>
    %175 = vector.shape_cast %174 : vector<128xf32> to vector<1x128xf32>
    %cst_153 = arith.constant 0.001953125 : f32
    %176 = vector.broadcast %cst_153 : f32 to vector<1x128xf32>
    %177 = arith.mulf %175, %176 : vector<1x128xf32>
    %178 = arith.mulf %171, %171 : vector<512x128xf32>
    %cst_154 = arith.constant dense<0.000000e+00> : vector<128xf32>
    %179 = vector.multi_reduction <add>, %178, %cst_154 [0] : vector<512x128xf32> to vector<128xf32>
    %180 = vector.shape_cast %179 : vector<128xf32> to vector<1x128xf32>
    %cst_155 = arith.constant 0.001953125 : f32
    %181 = vector.broadcast %cst_155 : f32 to vector<1x128xf32>
    %182 = arith.mulf %180, %181 : vector<1x128xf32>
    %183 = arith.mulf %177, %177 : vector<1x128xf32>
    %184 = arith.subf %182, %183 : vector<1x128xf32>
    %cst_156 = arith.constant 0.000000e+00 : f32
    %185 = vector.broadcast %cst_156 : f32 to vector<1x128xf32>
    %186 = arith.maximumf %184, %185 : vector<1x128xf32>
    %cst_157 = arith.constant 9.99999974E-6 : f32
    %187 = vector.broadcast %cst_157 : f32 to vector<1x128xf32>
    %188 = arith.addf %186, %187 : vector<1x128xf32>
    %189 = math.rsqrt %188 : vector<1x128xf32>
    %190 = arith.mulf %172, %189 : vector<1x128xf32>
    %191 = arith.mulf %177, %190 : vector<1x128xf32>
    %192 = arith.subf %173, %191 : vector<1x128xf32>
    %193 = vector.broadcast %190 : vector<1x128xf32> to vector<512x128xf32>
    %194 = arith.mulf %171, %193 : vector<512x128xf32>
    %195 = vector.broadcast %192 : vector<1x128xf32> to vector<512x128xf32>
    %196 = arith.addf %194, %195 : vector<512x128xf32>
    %c0_158 = arith.constant 0 : index
    %c0_159 = arith.constant 0 : index
    %197 = vector.load %arg15[%c0_158, %c0_159] : memref<512x128xf32, #tpu.memory_space<vmem>>, vector<512x128xf32>
    %198 = arith.addf %196, %197 : vector<512x128xf32>
    %cst_160 = arith.constant 0.000000e+00 : f32
    %199 = vector.broadcast %cst_160 : f32 to vector<512x128xf32>
    %200 = arith.maximumf %198, %199 : vector<512x128xf32>
    %c0_161 = arith.constant 0 : index
    %c0_162 = arith.constant 0 : index
    %201 = vector.load %arg12[%c0_161, %c0_162] : memref<512x128xf32, #tpu.memory_space<vmem>>, vector<512x128xf32>
    tpu.vector_store %arg12[%c0_161, %c0_162], %200 {strides = array<i32>} : memref<512x128xf32, #tpu.memory_space<vmem>>, vector<512x128xf32>,
    return
  }
}

</mosaic_0001>

<llo_original>
// kernel: tpu_custom_call.1
$region0: #{tpu_custom_call.1}
  #allocation0 [shape = 'u32[]', space=smem, size = 0x4, offset = 0x4, fixed_abs, tag = 'smem constant byte address 0x4 - core index']
  #allocation1 [shape = 'u32[144,128]{1,0:T(1,128)}', space=vmem, size = 0x12000, scoped, tag = 'internal scratch']
  #allocation2 [shape = 'f32[2,18,32,128]{3,2,1,0:T(8,128)}', space=vmem, size = 0x90000, scoped, tag = 'scratch operand']
  #allocation3 [shape = 'f32[512,128]{1,0:T(8,128)}', space=vmem, size = 0x40000, scoped, tag = 'scratch operand']
  #allocation4 [shape = 'f32[512,128]{1,0:T(8,128)}', space=vmem, size = 0x40000, scoped, tag = 'scratch operand']
  %s0 = inlined_call_operand.hbm [shape: bf16[512,128], index: 0, kind: input, shape index: {}]
  %s1 = inlined_call_operand.hbm [shape: bf16[128,256], index: 1, kind: input, shape index: {}]
  %s2 = inlined_call_operand.hbm [shape: bf16[9,128,128], index: 2, kind: input, shape index: {}]
  %s3 = inlined_call_operand.hbm [shape: bf16[128,128], index: 3, kind: input, shape index: {}]
  %s4 = inlined_call_operand.vmem [shape: f32[1,128], index: 4, kind: input, shape index: {}]
  %s5 = inlined_call_operand.vmem [shape: f32[1,128], index: 5, kind: input, shape index: {}]
  %s6 = inlined_call_operand.vmem [shape: f32[1,128], index: 6, kind: input, shape index: {}]
  %s7 = inlined_call_operand.vmem [shape: f32[1,128], index: 7, kind: input, shape index: {}]
  %s8 = inlined_call_operand.vmem [shape: f32[1,128], index: 8, kind: input, shape index: {}]
  %s9 = inlined_call_operand.vmem [shape: f32[1,128], index: 9, kind: input, shape index: {}]
  %s10 = inlined_call_operand.vmem [shape: f32[1,128], index: 10, kind: input, shape index: {}]
  %s11 = inlined_call_operand.vmem [shape: f32[1,128], index: 11, kind: input, shape index: {}]
  %s12 = inlined_call_operand.hbm [shape: f32[512,128], index: 12, kind: output, shape index: {}]
  %s13 = sld [smem:[#allocation0]]
  $region74: #{tpu_custom_call.1} parent=0
    _
  %s15 = ssub.s32 1, %s13
  %s16 = scalar_select 0, %s15, %s13
  $region1: #{tpu_custom_call.1} parent=0
    #allocation5 [shape = 'u8[131072]{0}', space=vmem, size = 0x20000, scoped, tag = 'input window, operand 0, single buffered']
    #allocation6 [shape = 's32[1]{0}', space=sflag, size = 0x4, scoped, tag = 'scoped memory for tpu_custom_call.1']
    #allocation7 [shape = 's32[1]{0}', space=sflag, size = 0x4, scoped, tag = 'scoped memory for tpu_custom_call.1']
    #allocation8 [shape = 'u8[65536]{0}', space=vmem, size = 0x10000, scoped, tag = 'input window, operand 1, single buffered']
    #allocation9 [shape = 's32[1]{0}', space=sflag, size = 0x4, scoped, tag = 'scoped memory for tpu_custom_call.1']
    #allocation10 [shape = 'u8[294912]{0}', space=vmem, size = 0x48000, scoped, tag = 'input window, operand 2, single buffered']
    #allocation11 [shape = 'u8[32768]{0}', space=vmem, size = 0x8000, scoped, tag = 'input window, operand 3, single buffered']
    #allocation12 [shape = 's32[1]{0}', space=sflag, size = 0x4, scoped, tag = 'scoped memory for tpu_custom_call.1']
    #allocation13 [shape = 'u8[262144]{0}', space=vmem, size = 0x40000, scoped, tag = 'output window, operand 0, single buffered']
    %17 = vsyncpa [#allocation6], 0
    %18 = vsyncpa [#allocation9], 0
    %19 = vsyncpa [#allocation12], 0
    %20 = vsyncpa [#allocation7], 0
    // Predicated region
    $region2: #{tpu_custom_call.1} parent=1 // pred_check
      _
    $region3: #{tpu_custom_call.1} parent=1 // pred_check_branch
      %22 = sbr.rel (0) target = $region5
    $region4: #{tpu_custom_call.1} parent=1 // pred_region
      %s24 = ssub.s32 4096, 4096
      %25 = vsyncadd [#allocation6], %s24
      %s26 = sshll.u32 [#allocation5], 4
      %s27 = int_to_ptr.vmem [resolvable:$true] %s26
      %32 = dma.hbm_to_vmem [thread:$0]  %s0, 4096, %s27, [#allocation6], 64, 64, 4
    $region5: #{tpu_custom_call.1} parent=1 // pred_fallthru
      _
    // Predicated region
    $region6: #{tpu_custom_call.1} parent=1 // pred_check
      _
    $region7: #{tpu_custom_call.1} parent=1 // pred_check_branch
      %34 = sbr.rel (0) target = $region9
    $region8: #{tpu_custom_call.1} parent=1 // pred_region
      %s36 = ssub.s32 2048, 2048
      %37 = vsyncadd [#allocation9], %s36
      %s38 = sshll.u32 [#allocation8], 4
      %s39 = int_to_ptr.vmem [resolvable:$true] %s38
      %44 = dma.hbm_to_vmem [thread:$0]  %s1, 2048, %s39, [#allocation9], 128, 128, 8
    $region9: #{tpu_custom_call.1} parent=1 // pred_fallthru
      _
    // Predicated region
    $region10: #{tpu_custom_call.1} parent=1 // pred_check
      _
    $region11: #{tpu_custom_call.1} parent=1 // pred_check_branch
      %46 = sbr.rel (0) target = $region13
    $region12: #{tpu_custom_call.1} parent=1 // pred_region
      %s48 = ssub.s32 9216, 9216
      %49 = vsyncadd [#allocation9], %s48
      %s50 = sshll.u32 [#allocation10], 4
      %s51 = int_to_ptr.vmem [resolvable:$true] %s50
      %56 = dma.hbm_to_vmem [thread:$0]  %s2, 9216, %s51, [#allocation9], 64, 64, 4
    $region13: #{tpu_custom_call.1} parent=1 // pred_fallthru
      _
    // Predicated region
    $region14: #{tpu_custom_call.1} parent=1 // pred_check
      _
    $region15: #{tpu_custom_call.1} parent=1 // pred_check_branch
      %58 = sbr.rel (0) target = $region17
    $region16: #{tpu_custom_call.1} parent=1 // pred_region
      %s60 = ssub.s32 1024, 1024
      %61 = vsyncadd [#allocation12], %s60
      %s62 = sshll.u32 [#allocation11], 4
      %s63 = int_to_ptr.vmem [resolvable:$true] %s62
      %68 = dma.hbm_to_vmem [thread:$0]  %s3, 1024, %s63, [#allocation12], 64, 64, 4
    $region17: #{tpu_custom_call.1} parent=1 // pred_fallthru
      _
    // Predicated region
    $region18: #{tpu_custom_call.1} parent=1 // pred_check
      _
    $region19: #{tpu_custom_call.1} parent=1 // pred_check_branch
      %70 = sbr.rel (0) target = $region21
    $region20: #{tpu_custom_call.1} parent=1 // pred_region
      _
    $region21: #{tpu_custom_call.1} parent=1 // pred_fallthru
      _
    // Predicated region
    $region22: #{tpu_custom_call.1} parent=1 // pred_check
      _
    $region23: #{tpu_custom_call.1} parent=1 // pred_check_branch
      %72 = sbr.rel (0) target = $region25
    $region24: #{tpu_custom_call.1} parent=1 // pred_region
      _
    $region25: #{tpu_custom_call.1} parent=1 // pred_fallthru
      _
    // Predicated region
    $region26: #{tpu_custom_call.1} parent=1 // pred_check
      _
    $region27: #{tpu_custom_call.1} parent=1 // pred_check_branch
      %74 = sbr.rel (0) target = $region29
    $region28: #{tpu_custom_call.1} parent=1 // pred_region
      _
    $region29: #{tpu_custom_call.1} parent=1 // pred_fallthru
      _
    // Predicated region
    $region30: #{tpu_custom_call.1} parent=1 // pred_check
      _
    $region31: #{tpu_custom_call.1} parent=1 // pred_check_branch
      %76 = sbr.rel (0) target = $region33
    $region32: #{tpu_custom_call.1} parent=1 // pred_region
      _
    $region33: #{tpu_custom_call.1} parent=1 // pred_fallthru
      _
    // Predicated region
    $region34: #{tpu_custom_call.1} parent=1 // pred_check
      _
    $region35: #{tpu_custom_call.1} parent=1 // pred_check_branch
      %78 = sbr.rel (0) target = $region37
    $region36: #{tpu_custom_call.1} parent=1 // pred_region
      _
    $region37: #{tpu_custom_call.1} parent=1 // pred_fallthru
      _
    // Predicated region
    $region38: #{tpu_custom_call.1} parent=1 // pred_check
      _
    $region39: #{tpu_custom_call.1} parent=1 // pred_check_branch
      %80 = sbr.rel (0) target = $region41
    $region40: #{tpu_custom_call.1} parent=1 // pred_region
      _
    $region41: #{tpu_custom_call.1} parent=1 // pred_fallthru
      _
    // Predicated region
    $region42: #{tpu_custom_call.1} parent=1 // pred_check
      _
    $region43: #{tpu_custom_call.1} parent=1 // pred_check_branch
      %82 = sbr.rel (0) target = $region45
    $region44: #{tpu_custom_call.1} parent=1 // pred_region
      _
    $region45: #{tpu_custom_call.1} parent=1 // pred_fallthru
      _
    // Predicated region
    $region46: #{tpu_custom_call.1} parent=1 // pred_check
      _
    $region47: #{tpu_custom_call.1} parent=1 // pred_check_branch
      %84 = sbr.rel (0) target = $region49
    $region48: #{tpu_custom_call.1} parent=1 // pred_region
      _
    $region49: #{tpu_custom_call.1} parent=1 // pred_fallthru
      _
    // Predicated region
    $region50: #{tpu_custom_call.1} parent=1 // pred_check
      _
    $region51: #{tpu_custom_call.1} parent=1 // pred_check_branch
      %86 = sbr.rel (0) target = $region53
    $region52: #{tpu_custom_call.1} parent=1 // pred_region
      %87 = dma.done [#allocation6], 4096
    $region53: #{tpu_custom_call.1} parent=1 // pred_fallthru
      _
    // Predicated region
    $region54: #{tpu_custom_call.1} parent=1 // pred_check
      _
    $region55: #{tpu_custom_call.1} parent=1 // pred_check_branch
      %89 = sbr.rel (0) target = $region57
    $region56: #{tpu_custom_call.1} parent=1 // pred_region
      %90 = dma.done [#allocation9], 2048
    $region57: #{tpu_custom_call.1} parent=1 // pred_fallthru
      _
    // Predicated region
    $region58: #{tpu_custom_call.1} parent=1 // pred_check
      _
    $region59: #{tpu_custom_call.1} parent=1 // pred_check_branch
      %92 = sbr.rel (0) target = $region61
    $region60: #{tpu_custom_call.1} parent=1 // pred_region
      %93 = dma.done [#allocation9], 9216
    $region61: #{tpu_custom_call.1} parent=1 // pred_fallthru
      _
    // Predicated region
    $region62: #{tpu_custom_call.1} parent=1 // pred_check
      _
    $region63: #{tpu_custom_call.1} parent=1 // pred_check_branch
      %95 = sbr.rel (0) target = $region65
    $region64: #{tpu_custom_call.1} parent=1 // pred_region
      %96 = dma.done [#allocation12], 1024
    $region65: #{tpu_custom_call.1} parent=1 // pred_fallthru
      _
    %v98 = vld [vmem:[#allocation5] sm:$0xf]
    %v99 = vld [vmem:[#allocation5 + $0x4] sm:$0xf]
    %v100 = vld [vmem:[#allocation5 + $0x8] sm:$0xf]
    %v101 = vld [vmem:[#allocation5 + $0xc] sm:$0xf]
    %v102 = vld [vmem:[#allocation5 + $0x10] sm:$0xf]
    %v103 = vld [vmem:[#allocation5 + $0x14] sm:$0xf]
    %v104 = vld [vmem:[#allocation5 + $0x18] sm:$0xf]
    %v105 = vld [vmem:[#allocation5 + $0x1c] sm:$0xf]
    %v106 = vld [vmem:[#allocation5 + $0x20] sm:$0xf]
    %v107 = vld [vmem:[#allocation5 + $0x24] sm:$0xf]
    %v108 = vld [vmem:[#allocation5 + $0x28] sm:$0xf]
    %v109 = vld [vmem:[#allocation5 + $0x2c] sm:$0xf]
    %v110 = vld [vmem:[#allocation5 + $0x30] sm:$0xf]
    %v111 = vld [vmem:[#allocation5 + $0x34] sm:$0xf]
    %v112 = vld [vmem:[#allocation5 + $0x38] sm:$0xf]
    %v113 = vld [vmem:[#allocation5 + $0x3c] sm:$0xf]
    %v114 = vld [vmem:[#allocation5 + $0x40] sm:$0xf]
    %v115 = vld [vmem:[#allocation5 + $0x44] sm:$0xf]
    %v116 = vld [vmem:[#allocation5 + $0x48] sm:$0xf]
    %v117 = vld [vmem:[#allocation5 + $0x4c] sm:$0xf]
    %v118 = vld [vmem:[#allocation5 + $0x50] sm:$0xf]
    %v119 = vld [vmem:[#allocation5 + $0x54] sm:$0xf]
    %v120 = vld [vmem:[#allocation5 + $0x58] sm:$0xf]
    %v121 = vld [vmem:[#allocation5 + $0x5c] sm:$0xf]
    %v122 = vld [vmem:[#allocation5 + $0x60] sm:$0xf]
    %v123 = vld [vmem:[#allocation5 + $0x64] sm:$0xf]
    %v124 = vld [vmem:[#allocation5 + $0x68] sm:$0xf]
    %v125 = vld [vmem:[#allocation5 + $0x6c] sm:$0xf]
    %v126 = vld [vmem:[#allocation5 + $0x70] sm:$0xf]
    %v127 = vld [vmem:[#allocation5 + $0x74] sm:$0xf]
    %v128 = vld [vmem:[#allocation5 + $0x78] sm:$0xf]
    %v129 = vld [vmem:[#allocation5 + $0x7c] sm:$0xf]
    %v130 = vld [vmem:[#allocation5 + $0x80] sm:$0xf]
    %v131 = vld [vmem:[#allocation5 + $0x84] sm:$0xf]
    %v132 = vld [vmem:[#allocation5 + $0x88] sm:$0xf]
    %v133 = vld [vmem:[#allocation5 + $0x8c] sm:$0xf]
    %v134 = vld [vmem:[#allocation5 + $0x90] sm:$0xf]
    %v135 = vld [vmem:[#allocation5 + $0x94] sm:$0xf]
    %v136 = vld [vmem:[#allocation5 + $0x98] sm:$0xf]
    %v137 = vld [vmem:[#allocation5 + $0x9c] sm:$0xf]
    %v138 = vld [vmem:[#allocation5 + $0xa0] sm:$0xf]
    %v139 = vld [vmem:[#allocation5 + $0xa4] sm:$0xf]
    %v140 = vld [vmem:[#allocation5 + $0xa8] sm:$0xf]
    %v141 = vld [vmem:[#allocation5 + $0xac] sm:$0xf]
    %v142 = vld [vmem:[#allocation5 + $0xb0] sm:$0xf]
    %v143 = vld [vmem:[#allocation5 + $0xb4] sm:$0xf]
    %v144 = vld [vmem:[#allocation5 + $0xb8] sm:$0xf]
    %v145 = vld [vmem:[#allocation5 + $0xbc] sm:$0xf]
    %v146 = vld [vmem:[#allocation5 + $0xc0] sm:$0xf]
    %v147 = vld [vmem:[#allocation5 + $0xc4] sm:$0xf]
    %v148 = vld [vmem:[#allocation5 + $0xc8] sm:$0xf]
    %v149 = vld [vmem:[#allocation5 + $0xcc] sm:$0xf]
    %v150 = vld [vmem:[#allocation5 + $0xd0] sm:$0xf]
    %v151 = vld [vmem:[#allocation5 + $0xd4] sm:$0xf]
    %v152 = vld [vmem:[#allocation5 + $0xd8] sm:$0xf]
    %v153 = vld [vmem:[#allocation5 + $0xdc] sm:$0xf]
    %v154 = vld [vmem:[#allocation5 + $0xe0] sm:$0xf]
    %v155 = vld [vmem:[#allocation5 + $0xe4] sm:$0xf]
    %v156 = vld [vmem:[#allocation5 + $0xe8] sm:$0xf]
    %v157 = vld [vmem:[#allocation5 + $0xec] sm:$0xf]
    %v158 = vld [vmem:[#allocation5 + $0xf0] sm:$0xf]
    %v159 = vld [vmem:[#allocation5 + $0xf4] sm:$0xf]
    %v160 = vld [vmem:[#allocation5 + $0xf8] sm:$0xf]
    %v161 = vld [vmem:[#allocation5 + $0xfc] sm:$0xf]
    %v162 = vld [vmem:[#allocation8] sm:$0xff]
    %v163 = vld [vmem:[#allocation8 + $0x8] sm:$0xff]
    %v164 = vld [vmem:[#allocation8 + $0x10] sm:$0xff]
    %v165 = vld [vmem:[#allocation8 + $0x18] sm:$0xff]
    %v166 = vld [vmem:[#allocation8 + $0x20] sm:$0xff]
    %v167 = vld [vmem:[#allocation8 + $0x28] sm:$0xff]
    %v168 = vld [vmem:[#allocation8 + $0x30] sm:$0xff]
    %v169 = vld [vmem:[#allocation8 + $0x38] sm:$0xff]
    %v170 = vld [vmem:[#allocation8 + $0x40] sm:$0xff]
    %v171 = vld [vmem:[#allocation8 + $0x48] sm:$0xff]
    %v172 = vld [vmem:[#allocation8 + $0x50] sm:$0xff]
    %v173 = vld [vmem:[#allocation8 + $0x58] sm:$0xff]
    %v174 = vld [vmem:[#allocation8 + $0x60] sm:$0xff]
    %v175 = vld [vmem:[#allocation8 + $0x68] sm:$0xff]
    %v176 = vld [vmem:[#allocation8 + $0x70] sm:$0xff]
    %v177 = vld [vmem:[#allocation8 + $0x78] sm:$0xff]
    %v242 = vunpack.c.l.b16 %v98
    %v243 = vunpack.c.l.b16 %v99
    %v244 = vunpack.c.l.b16 %v100
    %v245 = vunpack.c.l.b16 %v101
    %v246 = vunpack.c.l.b16 %v102
    %v247 = vunpack.c.l.b16 %v103
    %v248 = vunpack.c.l.b16 %v104
    %v249 = vunpack.c.l.b16 %v105
    %v250 = vunpack.c.l.b16 %v106
    %v251 = vunpack.c.l.b16 %v107
    %v252 = vunpack.c.l.b16 %v108
    %v253 = vunpack.c.l.b16 %v109
    %v254 = vunpack.c.l.b16 %v110
    %v255 = vunpack.c.l.b16 %v111
    %v256 = vunpack.c.l.b16 %v112
    %v257 = vunpack.c.l.b16 %v113
    %v258 = vunpack.c.l.b16 %v114
    %v259 = vunpack.c.l.b16 %v115
    %v260 = vunpack.c.l.b16 %v116
    %v261 = vunpack.c.l.b16 %v117
    %v262 = vunpack.c.l.b16 %v118
    %v263 = vunpack.c.l.b16 %v119
    %v264 = vunpack.c.l.b16 %v120
    %v265 = vunpack.c.l.b16 %v121
    %v266 = vunpack.c.l.b16 %v122
    %v267 = vunpack.c.l.b16 %v123
    %v268 = vunpack.c.l.b16 %v124
    %v269 = vunpack.c.l.b16 %v125
    %v270 = vunpack.c.l.b16 %v126
    %v271 = vunpack.c.l.b16 %v127
    %v272 = vunpack.c.l.b16 %v128
    %v273 = vunpack.c.l.b16 %v129
    %v274 = vunpack.c.l.b16 %v130
    %v275 = vunpack.c.l.b16 %v131
    %v276 = vunpack.c.l.b16 %v132
    %v277 = vunpack.c.l.b16 %v133
    %v278 = vunpack.c.l.b16 %v134
    %v279 = vunpack.c.l.b16 %v135
    %v280 = vunpack.c.l.b16 %v136
    %v281 = vunpack.c.l.b16 %v137
    %v282 = vunpack.c.l.b16 %v138
    %v283 = vunpack.c.l.b16 %v139
    %v284 = vunpack.c.l.b16 %v140
    %v285 = vunpack.c.l.b16 %v141
    %v286 = vunpack.c.l.b16 %v142
    %v287 = vunpack.c.l.b16 %v143
    %v288 = vunpack.c.l.b16 %v144
    %v289 = vunpack.c.l.b16 %v145
    %v290 = vunpack.c.l.b16 %v146
    %v291 = vunpack.c.l.b16 %v147
    %v292 = vunpack.c.l.b16 %v148
    %v293 = vunpack.c.l.b16 %v149
    %v294 = vunpack.c.l.b16 %v150
    %v295 = vunpack.c.l.b16 %v151
    %v296 = vunpack.c.l.b16 %v152
    %v297 = vunpack.c.l.b16 %v153
    %v298 = vunpack.c.l.b16 %v154
    %v299 = vunpack.c.l.b16 %v155
    %v300 = vunpack.c.l.b16 %v156
    %v301 = vunpack.c.l.b16 %v157
    %v302 = vunpack.c.l.b16 %v158
    %v303 = vunpack.c.l.b16 %v159
    %v304 = vunpack.c.l.b16 %v160
    %v305 = vunpack.c.l.b16 %v161
    %v306 = vpack.c.b16 %v243, %v242
    %v307 = vpack.c.b16 %v245, %v244
    %v308 = vpack.c.b16 %v247, %v246
    %v309 = vpack.c.b16 %v249, %v248
    %v310 = vpack.c.b16 %v251, %v250
    %v311 = vpack.c.b16 %v253, %v252
    %v312 = vpack.c.b16 %v255, %v254
    %v313 = vpack.c.b16 %v257, %v256
    %v314 = vpack.c.b16 %v259, %v258
    %v315 = vpack.c.b16 %v261, %v260
    %v316 = vpack.c.b16 %v263, %v262
    %v317 = vpack.c.b16 %v265, %v264
    %v318 = vpack.c.b16 %v267, %v266
    %v319 = vpack.c.b16 %v269, %v268
    %v320 = vpack.c.b16 %v271, %v270
    %v321 = vpack.c.b16 %v273, %v272
    %v322 = vpack.c.b16 %v275, %v274
    %v323 = vpack.c.b16 %v277, %v276
    %v324 = vpack.c.b16 %v279, %v278
    %v325 = vpack.c.b16 %v281, %v280
    %v326 = vpack.c.b16 %v283, %v282
    %v327 = vpack.c.b16 %v285, %v284
    %v328 = vpack.c.b16 %v287, %v286
    %v329 = vpack.c.b16 %v289, %v288
    %v330 = vpack.c.b16 %v291, %v290
    %v331 = vpack.c.b16 %v293, %v292
    %v332 = vpack.c.b16 %v295, %v294
    %v333 = vpack.c.b16 %v297, %v296
    %v334 = vpack.c.b16 %v299, %v298
    %v335 = vpack.c.b16 %v301, %v300
    %v336 = vpack.c.b16 %v303, %v302
    %v337 = vpack.c.b16 %v305, %v304
    %v386 = vunpack.c.l.b16 %v162
    %v387 = vunpack.c.h.b16 %v162
    %v388 = vunpack.c.l.b16 %v163
    %v389 = vunpack.c.h.b16 %v163
    %v390 = vunpack.c.l.b16 %v164
    %v391 = vunpack.c.h.b16 %v164
    %v392 = vunpack.c.l.b16 %v165
    %v393 = vunpack.c.h.b16 %v165
    %v394 = vunpack.c.l.b16 %v166
    %v395 = vunpack.c.h.b16 %v166
    %v396 = vunpack.c.l.b16 %v167
    %v397 = vunpack.c.h.b16 %v167
    %v398 = vunpack.c.l.b16 %v168
    %v399 = vunpack.c.h.b16 %v168
    %v400 = vunpack.c.l.b16 %v169
    %v401 = vunpack.c.h.b16 %v169
    %v402 = vunpack.c.l.b16 %v170
    %v403 = vunpack.c.h.b16 %v170
    %v404 = vunpack.c.l.b16 %v171
    %v405 = vunpack.c.h.b16 %v171
    %v406 = vunpack.c.l.b16 %v172
    %v407 = vunpack.c.h.b16 %v172
    %v408 = vunpack.c.l.b16 %v173
    %v409 = vunpack.c.h.b16 %v173
    %v410 = vunpack.c.l.b16 %v174
    %v411 = vunpack.c.h.b16 %v174
    %v412 = vunpack.c.l.b16 %v175
    %v413 = vunpack.c.h.b16 %v175
    %v414 = vunpack.c.l.b16 %v176
    %v415 = vunpack.c.h.b16 %v176
    %v416 = vunpack.c.l.b16 %v177
    %v417 = vunpack.c.h.b16 %v177
    %v418 = vpack.c.b16 %v388, %v386
    %v419 = vpack.c.b16 %v389, %v387
    %v420 = vpack.c.b16 %v392, %v390
    %v421 = vpack.c.b16 %v393, %v391
    %v422 = vpack.c.b16 %v396, %v394
    %v423 = vpack.c.b16 %v397, %v395
    %v424 = vpack.c.b16 %v400, %v398
    %v425 = vpack.c.b16 %v401, %v399
    %v426 = vpack.c.b16 %v404, %v402
    %v427 = vpack.c.b16 %v405, %v403
    %v428 = vpack.c.b16 %v408, %v406
    %v429 = vpack.c.b16 %v409, %v407
    %v430 = vpack.c.b16 %v412, %v410
    %v431 = vpack.c.b16 %v413, %v411
    %v432 = vpack.c.b16 %v416, %v414
    %v433 = vpack.c.b16 %v417, %v415
    %450 = vmatprep.subr.bf16.mxu0 %v419
    %451 = vmatpush1.bf16.msra.mxu0 %v418
    %452 = vmatprep.subr.bf16.mxu0 %v421
    %453 = vmatpush1.bf16.msra.mxu0 %v420
    %454 = vmatprep.subr.bf16.mxu0 %v423
    %455 = vmatpush1.bf16.msra.mxu0 %v422
    %456 = vmatprep.subr.bf16.mxu0 %v425
    %457 = vmatpush1.bf16.msra.mxu0 %v424
    %458 = vmatprep.subr.bf16.mxu0 %v427
    %459 = vmatpush1.bf16.msra.mxu0 %v426
    %460 = vmatprep.subr.bf16.mxu0 %v429
    %461 = vmatpush1.bf16.msra.mxu0 %v428
    %462 = vmatprep.subr.bf16.mxu0 %v431
    %463 = vmatpush1.bf16.msra.mxu0 %v430
    %464 = vmatprep.subr.bf16.mxu0 %v433
    %465 = vmatpush1.bf16.msra.mxu0 %v432
    %466 = vmatprep.subr.bf16.mxu0 0
    %467 = vmatpush1.bf16.msra.mxu0 0
    %468 = vmatprep.subr.bf16.mxu0 0
    %469 = vmatpush1.bf16.msra.mxu0 0
    %470 = vmatprep.subr.bf16.mxu0 0
    %471 = vmatpush1.bf16.msra.mxu0 0
    %472 = vmatprep.subr.bf16.mxu0 0
    %473 = vmatpush1.bf16.msra.mxu0 0
    %474 = vmatprep.subr.bf16.mxu0 0
    %475 = vmatpush1.bf16.msra.mxu0 0
    %476 = vmatprep.subr.bf16.mxu0 0
    %477 = vmatpush1.bf16.msra.mxu0 0
    %478 = vmatprep.subr.bf16.mxu0 0
    %479 = vmatpush1.bf16.msra.mxu0 0
    %480 = vmatprep.subr.bf16.mxu0 0
    %481 = vmatpush1.bf16.msra.mxu0 0
    %482 = vmatprep.mubr.bf16.mxu0 0
    %483 = vmatmul.mubr.bf16.gmra.mrb[0].mxu0 %v306
    %v484 = vpop.f32.mrb[0].mxu0
    %v485 = vadd.f32 0.0, %v484
    %v486 = vpop.f32.mrb[0].mxu0
    %v487 = vadd.f32 0.0, %v486
    %v488 = vpop.f32.mrb[0].mxu0
    %v489 = vadd.f32 0.0, %v488
    %v490 = vpop.f32.mrb[0].mxu0
    %v491 = vadd.f32 0.0, %v490
    %492 = vmatprep.mubr.bf16.mxu0 0
    %493 = vmatmul.mubr.bf16.gmra.mrb[0].mxu0 %v307
    %v494 = vpop.f32.mrb[0].mxu0
    %v495 = vadd.f32 0.0, %v494
    %v496 = vpop.f32.mrb[0].mxu0
    %v497 = vadd.f32 0.0, %v496
    %v498 = vpop.f32.mrb[0].mxu0
    %v499 = vadd.f32 0.0, %v498
    %v500 = vpop.f32.mrb[0].mxu0
    %v501 = vadd.f32 0.0, %v500
    %502 = vmatprep.mubr.bf16.mxu0 0
    %503 = vmatmul.mubr.bf16.gmra.mrb[0].mxu0 %v308
    %v504 = vpop.f32.mrb[0].mxu0
    %v505 = vadd.f32 0.0, %v504
    %v506 = vpop.f32.mrb[0].mxu0
    %v507 = vadd.f32 0.0, %v506
    %v508 = vpop.f32.mrb[0].mxu0
    %v509 = vadd.f32 0.0, %v508
    %v510 = vpop.f32.mrb[0].mxu0
    %v511 = vadd.f32 0.0, %v510
    %512 = vmatprep.mubr.bf16.mxu0 0
    %513 = vmatmul.mubr.bf16.gmra.mrb[0].mxu0 %v309
    %v514 = vpop.f32.mrb[0].mxu0
    %v515 = vadd.f32 0.0, %v514
    %v516 = vpop.f32.mrb[0].mxu0
    %v517 = vadd.f32 0.0, %v516
    %v518 = vpop.f32.mrb[0].mxu0
    %v519 = vadd.f32 0.0, %v518
    %v520 = vpop.f32.mrb[0].mxu0
    %v521 = vadd.f32 0.0, %v520
    %522 = vmatprep.mubr.bf16.mxu0 0
    %523 = vmatmul.mubr.bf16.gmra.mrb[0].mxu0 %v310
    %v524 = vpop.f32.mrb[0].mxu0
    %v525 = vadd.f32 0.0, %v524
    %v526 = vpop.f32.mrb[0].mxu0
    %v527 = vadd.f32 0.0, %v526
    %v528 = vpop.f32.mrb[0].mxu0
    %v529 = vadd.f32 0.0, %v528
    %v530 = vpop.f32.mrb[0].mxu0
    %v531 = vadd.f32 0.0, %v530
    %532 = vmatprep.mubr.bf16.mxu0 0
    %533 = vmatmul.mubr.bf16.gmra.mrb[0].mxu0 %v311
    %v534 = vpop.f32.mrb[0].mxu0
    %v535 = vadd.f32 0.0, %v534
    %v536 = vpop.f32.mrb[0].mxu0
    %v537 = vadd.f32 0.0, %v536
    %v538 = vpop.f32.mrb[0].mxu0
    %v539 = vadd.f32 0.0, %v538
    %v540 = vpop.f32.mrb[0].mxu0
    %v541 = vadd.f32 0.0, %v540
    %542 = vmatprep.mubr.bf16.mxu0 0
    %543 = vmatmul.mubr.bf16.gmra.mrb[0].mxu0 %v312
    %v544 = vpop.f32.mrb[0].mxu0
    %v545 = vadd.f32 0.0, %v544
    %v546 = vpop.f32.mrb[0].mxu0
    %v547 = vadd.f32 0.0, %v546
    %v548 = vpop.f32.mrb[0].mxu0
    %v549 = vadd.f32 0.0, %v548
    %v550 = vpop.f32.mrb[0].mxu0
    %v551 = vadd.f32 0.0, %v550
    %552 = vmatprep.mubr.bf16.mxu0 0
    %553 = vmatmul.mubr.bf16.gmra.mrb[0].mxu0 %v313
    %v554 = vpop.f32.mrb[0].mxu0
    %v555 = vadd.f32 0.0, %v554
    %v556 = vpop.f32.mrb[0].mxu0
    %v557 = vadd.f32 0.0, %v556
    %v558 = vpop.f32.mrb[0].mxu0
    %v559 = vadd.f32 0.0, %v558
    %v560 = vpop.f32.mrb[0].mxu0
    %v561 = vadd.f32 0.0, %v560
    %562 = vmatprep.mubr.bf16.mxu0 0
    %563 = vmatmul.mubr.bf16.gmra.mrb[0].mxu0 %v314
    %v564 = vpop.f32.mrb[0].mxu0
    %v565 = vadd.f32 0.0, %v564
    %v566 = vpop.f32.mrb[0].mxu0
    %v567 = vadd.f32 0.0, %v566
    %v568 = vpop.f32.mrb[0].mxu0
    %v569 = vadd.f32 0.0, %v568
    %v570 = vpop.f32.mrb[0].mxu0
    %v571 = vadd.f32 0.0, %v570
    %572 = vmatprep.mubr.bf16.mxu0 0
    %573 = vmatmul.mubr.bf16.gmra.mrb[0].mxu0 %v315
    %v574 = vpop.f32.mrb[0].mxu0
    %v575 = vadd.f32 0.0, %v574
    %v576 = vpop.f32.mrb[0].mxu0
    %v577 = vadd.f32 0.0, %v576
    %v578 = vpop.f32.mrb[0].mxu0
    %v579 = vadd.f32 0.0, %v578
    %v580 = vpop.f32.mrb[0].mxu0
    %v581 = vadd.f32 0.0, %v580
    %582 = vmatprep.mubr.bf16.mxu0 0
    %583 = vmatmul.mubr.bf16.gmra.mrb[0].mxu0 %v316
    %v584 = vpop.f32.mrb[0].mxu0
    %v585 = vadd.f32 0.0, %v584
    %v586 = vpop.f32.mrb[0].mxu0
    %v587 = vadd.f32 0.0, %v586
    %v588 = vpop.f32.mrb[0].mxu0
    %v589 = vadd.f32 0.0, %v588
    %v590 = vpop.f32.mrb[0].mxu0
    %v591 = vadd.f32 0.0, %v590
    %592 = vmatprep.mubr.bf16.mxu0 0
    %593 = vmatmul.mubr.bf16.gmra.mrb[0].mxu0 %v317
    %v594 = vpop.f32.mrb[0].mxu0
    %v595 = vadd.f32 0.0, %v594
    %v596 = vpop.f32.mrb[0].mxu0
    %v597 = vadd.f32 0.0, %v596
    %v598 = vpop.f32.mrb[0].mxu0
    %v599 = vadd.f32 0.0, %v598
    %v600 = vpop.f32.mrb[0].mxu0
    %v601 = vadd.f32 0.0, %v600
    %602 = vmatprep.mubr.bf16.mxu0 0
    %603 = vmatmul.mubr.bf16.gmra.mrb[0].mxu0 %v318
    %v604 = vpop.f32.mrb[0].mxu0
    %v605 = vadd.f32 0.0, %v604
    %v606 = vpop.f32.mrb[0].mxu0
    %v607 = vadd.f32 0.0, %v606
    %v608 = vpop.f32.mrb[0].mxu0
    %v609 = vadd.f32 0.0, %v608
    %v610 = vpop.f32.mrb[0].mxu0
    %v611 = vadd.f32 0.0, %v610
    %612 = vmatprep.mubr.bf16.mxu0 0
    %613 = vmatmul.mubr.bf16.gmra.mrb[0].mxu0 %v319
    %v614 = vpop.f32.mrb[0].mxu0
    %v615 = vadd.f32 0.0, %v614
    %v616 = vpop.f32.mrb[0].mxu0
    %v617 = vadd.f32 0.0, %v616
    %v618 = vpop.f32.mrb[0].mxu0
    %v619 = vadd.f32 0.0, %v618
    %v620 = vpop.f32.mrb[0].mxu0
    %v621 = vadd.f32 0.0, %v620
    %622 = vmatprep.mubr.bf16.mxu0 0
    %623 = vmatmul.mubr.bf16.gmra.mrb[0].mxu0 %v320
    %v624 = vpop.f32.mrb[0].mxu0
    %v625 = vadd.f32 0.0, %v624
    %v626 = vpop.f32.mrb[0].mxu0
    %v627 = vadd.f32 0.0, %v626
    %v628 = vpop.f32.mrb[0].mxu0
    %v629 = vadd.f32 0.0, %v628
    %v630 = vpop.f32.mrb[0].mxu0
    %v631 = vadd.f32 0.0, %v630
    %632 = vmatprep.mubr.bf16.mxu0 0
    %633 = vmatmul.mubr.bf16.gmra.mrb[0].mxu0 %v321
    %v634 = vpop.f32.mrb[0].mxu0
    %v635 = vadd.f32 0.0, %v634
    %v636 = vpop.f32.mrb[0].mxu0
    %v637 = vadd.f32 0.0, %v636
    %v638 = vpop.f32.mrb[0].mxu0
    %v639 = vadd.f32 0.0, %v638
    %v640 = vpop.f32.mrb[0].mxu0
    %v641 = vadd.f32 0.0, %v640
    %642 = vmatprep.mubr.bf16.mxu0 0
    %643 = vmatmul.mubr.bf16.gmra.mrb[0].mxu0 %v322
    %v644 = vpop.f32.mrb[0].mxu0
    %v645 = vadd.f32 0.0, %v644
    %v646 = vpop.f32.mrb[0].mxu0
    %v647 = vadd.f32 0.0, %v646
    %v648 = vpop.f32.mrb[0].mxu0
    %v649 = vadd.f32 0.0, %v648
    %v650 = vpop.f32.mrb[0].mxu0
    %v651 = vadd.f32 0.0, %v650
    %652 = vmatprep.mubr.bf16.mxu0 0
    %653 = vmatmul.mubr.bf16.gmra.mrb[0].mxu0 %v323
    %v654 = vpop.f32.mrb[0].mxu0
    %v655 = vadd.f32 0.0, %v654
    %v656 = vpop.f32.mrb[0].mxu0
    %v657 = vadd.f32 0.0, %v656
    %v658 = vpop.f32.mrb[0].mxu0
    %v659 = vadd.f32 0.0, %v658
    %v660 = vpop.f32.mrb[0].mxu0
    %v661 = vadd.f32 0.0, %v660
    %662 = vmatprep.mubr.bf16.mxu0 0
    %663 = vmatmul.mubr.bf16.gmra.mrb[0].mxu0 %v324
    %v664 = vpop.f32.mrb[0].mxu0
    %v665 = vadd.f32 0.0, %v664
    %v666 = vpop.f32.mrb[0].mxu0
    %v667 = vadd.f32 0.0, %v666
    %v668 = vpop.f32.mrb[0].mxu0
    %v669 = vadd.f32 0.0, %v668
    %v670 = vpop.f32.mrb[0].mxu0
    %v671 = vadd.f32 0.0, %v670
    %672 = vmatprep.mubr.bf16.mxu0 0
    %673 = vmatmul.mubr.bf16.gmra.mrb[0].mxu0 %v325
    %v674 = vpop.f32.mrb[0].mxu0
    %v675 = vadd.f32 0.0, %v674
    %v676 = vpop.f32.mrb[0].mxu0
    %v677 = vadd.f32 0.0, %v676
    %v678 = vpop.f32.mrb[0].mxu0
    %v679 = vadd.f32 0.0, %v678
    %v680 = vpop.f32.mrb[0].mxu0
    %v681 = vadd.f32 0.0, %v680
    %682 = vmatprep.mubr.bf16.mxu0 0
    %683 = vmatmul.mubr.bf16.gmra.mrb[0].mxu0 %v326
    %v684 = vpop.f32.mrb[0].mxu0
    %v685 = vadd.f32 0.0, %v684
    %v686 = vpop.f32.mrb[0].mxu0
    %v687 = vadd.f32 0.0, %v686
    %v688 = vpop.f32.mrb[0].mxu0
    %v689 = vadd.f32 0.0, %v688
    %v690 = vpop.f32.mrb[0].mxu0
    %v691 = vadd.f32 0.0, %v690
    %692 = vmatprep.mubr.bf16.mxu0 0
    %693 = vmatmul.mubr.bf16.gmra.mrb[0].mxu0 %v327
    %v694 = vpop.f32.mrb[0].mxu0
    %v695 = vadd.f32 0.0, %v694
    %v696 = vpop.f32.mrb[0].mxu0
    %v697 = vadd.f32 0.0, %v696
    %v698 = vpop.f32.mrb[0].mxu0
    %v699 = vadd.f32 0.0, %v698
    %v700 = vpop.f32.mrb[0].mxu0
    %v701 = vadd.f32 0.0, %v700
    %702 = vmatprep.mubr.bf16.mxu0 0
    %703 = vmatmul.mubr.bf16.gmra.mrb[0].mxu0 %v328
    %v704 = vpop.f32.mrb[0].mxu0
    %v705 = vadd.f32 0.0, %v704
    %v706 = vpop.f32.mrb[0].mxu0
    %v707 = vadd.f32 0.0, %v706
    %v708 = vpop.f32.mrb[0].mxu0
    %v709 = vadd.f32 0.0, %v708
    %v710 = vpop.f32.mrb[0].mxu0
    %v711 = vadd.f32 0.0, %v710
    %712 = vmatprep.mubr.bf16.mxu0 0
    %713 = vmatmul.mubr.bf16.gmra.mrb[0].mxu0 %v329
    %v714 = vpop.f32.mrb[0].mxu0
    %v715 = vadd.f32 0.0, %v714
    %v716 = vpop.f32.mrb[0].mxu0
    %v717 = vadd.f32 0.0, %v716
    %v718 = vpop.f32.mrb[0].mxu0
    %v719 = vadd.f32 0.0, %v718
    %v720 = vpop.f32.mrb[0].mxu0
    %v721 = vadd.f32 0.0, %v720
    %722 = vmatprep.mubr.bf16.mxu0 0
    %723 = vmatmul.mubr.bf16.gmra.mrb[0].mxu0 %v330
    %v724 = vpop.f32.mrb[0].mxu0
    %v725 = vadd.f32 0.0, %v724
    %v726 = vpop.f32.mrb[0].mxu0
    %v727 = vadd.f32 0.0, %v726
    %v728 = vpop.f32.mrb[0].mxu0
    %v729 = vadd.f32 0.0, %v728
    %v730 = vpop.f32.mrb[0].mxu0
    %v731 = vadd.f32 0.0, %v730
    %732 = vmatprep.mubr.bf16.mxu0 0
    %733 = vmatmul.mubr.bf16.gmra.mrb[0].mxu0 %v331
    %v734 = vpop.f32.mrb[0].mxu0
    %v735 = vadd.f32 0.0, %v734
    %v736 = vpop.f32.mrb[0].mxu0
    %v737 = vadd.f32 0.0, %v736
    %v738 = vpop.f32.mrb[0].mxu0
    %v739 = vadd.f32 0.0, %v738
    %v740 = vpop.f32.mrb[0].mxu0
    %v741 = vadd.f32 0.0, %v740
    %742 = vmatprep.mubr.bf16.mxu0 0
    %743 = vmatmul.mubr.bf16.gmra.mrb[0].mxu0 %v332
    %v744 = vpop.f32.mrb[0].mxu0
    %v745 = vadd.f32 0.0, %v744
    %v746 = vpop.f32.mrb[0].mxu0
    %v747 = vadd.f32 0.0, %v746
    %v748 = vpop.f32.mrb[0].mxu0
    %v749 = vadd.f32 0.0, %v748
    %v750 = vpop.f32.mrb[0].mxu0
    %v751 = vadd.f32 0.0, %v750
    %752 = vmatprep.mubr.bf16.mxu0 0
    %753 = vmatmul.mubr.bf16.gmra.mrb[0].mxu0 %v333
    %v754 = vpop.f32.mrb[0].mxu0
    %v755 = vadd.f32 0.0, %v754
    %v756 = vpop.f32.mrb[0].mxu0
    %v757 = vadd.f32 0.0, %v756
    %v758 = vpop.f32.mrb[0].mxu0
    %v759 = vadd.f32 0.0, %v758
    %v760 = vpop.f32.mrb[0].mxu0
    %v761 = vadd.f32 0.0, %v760
    %762 = vmatprep.mubr.bf16.mxu0 0
    %763 = vmatmul.mubr.bf16.gmra.mrb[0].mxu0 %v334
    %v764 = vpop.f32.mrb[0].mxu0
    %v765 = vadd.f32 0.0, %v764
    %v766 = vpop.f32.mrb[0].mxu0
    %v767 = vadd.f32 0.0, %v766
    %v768 = vpop.f32.mrb[0].mxu0
    %v769 = vadd.f32 0.0, %v768
    %v770 = vpop.f32.mrb[0].mxu0
    %v771 = vadd.f32 0.0, %v770
    %772 = vmatprep.mubr.bf16.mxu0 0
    %773 = vmatmul.mubr.bf16.gmra.mrb[0].mxu0 %v335
    %v774 = vpop.f32.mrb[0].mxu0
    %v775 = vadd.f32 0.0, %v774
    %v776 = vpop.f32.mrb[0].mxu0
    %v777 = vadd.f32 0.0, %v776
    %v778 = vpop.f32.mrb[0].mxu0
    %v779 = vadd.f32 0.0, %v778
    %v780 = vpop.f32.mrb[0].mxu0
    %v781 = vadd.f32 0.0, %v780
    %782 = vmatprep.mubr.bf16.mxu0 0
    %783 = vmatmul.mubr.bf16.gmra.mrb[0].mxu0 %v336
    %v784 = vpop.f32.mrb[0].mxu0
    %v785 = vadd.f32 0.0, %v784
    %v786 = vpop.f32.mrb[0].mxu0
    %v787 = vadd.f32 0.0, %v786
    %v788 = vpop.f32.mrb[0].mxu0
    %v789 = vadd.f32 0.0, %v788
    %v790 = vpop.f32.mrb[0].mxu0
    %v791 = vadd.f32 0.0, %v790
    %792 = vmatprep.mubr.bf16.mxu0 0
    %793 = vmatmul.mubr.bf16.gmra.mrb[0].mxu0 %v337
    %v794 = vpop.f32.mrb[0].mxu0
    %v795 = vadd.f32 0.0, %v794
    %v796 = vpop.f32.mrb[0].mxu0
    %v797 = vadd.f32 0.0, %v796
    %v798 = vpop.f32.mrb[0].mxu0
    %v799 = vadd.f32 0.0, %v798
    %v800 = vpop.f32.mrb[0].mxu0
    %v801 = vadd.f32 0.0, %v800
    %802 = vdwg.mxu0
    %v803 = vld [vmem:[%s10] sm:$0x1]
    %v804 = vld [vmem:[%s11] sm:$0x1]
    %v805 = vadd.f32 %v487, %v491
    %v806 = vadd.f32 %v805, %v497
    %v807 = vadd.f32 %v806, %v501
    %v808 = vadd.f32 %v807, %v507
    %v809 = vadd.f32 %v808, %v511
    %v810 = vadd.f32 %v809, %v517
    %v811 = vadd.f32 %v810, %v521
    %v812 = vadd.f32 %v811, %v527
    %v813 = vadd.f32 %v812, %v531
    %v814 = vadd.f32 %v813, %v537
    %v815 = vadd.f32 %v814, %v541
    %v816 = vadd.f32 %v815, %v547
    %v817 = vadd.f32 %v816, %v551
    %v818 = vadd.f32 %v817, %v557
    %v819 = vadd.f32 %v818, %v561
    %v820 = vadd.f32 %v819, %v567
    %v821 = vadd.f32 %v820, %v571
    %v822 = vadd.f32 %v821, %v577
    %v823 = vadd.f32 %v822, %v581
    %v824 = vadd.f32 %v823, %v587
    %v825 = vadd.f32 %v824, %v591
    %v826 = vadd.f32 %v825, %v597
    %v827 = vadd.f32 %v826, %v601
    %v828 = vadd.f32 %v827, %v607
    %v829 = vadd.f32 %v828, %v611
    %v830 = vadd.f32 %v829, %v617
    %v831 = vadd.f32 %v830, %v621
    %v832 = vadd.f32 %v831, %v627
    %v833 = vadd.f32 %v832, %v631
    %v834 = vadd.f32 %v833, %v637
    %v835 = vadd.f32 %v834, %v641
    %v836 = vadd.f32 %v835, %v647
    %v837 = vadd.f32 %v836, %v651
    %v838 = vadd.f32 %v837, %v657
    %v839 = vadd.f32 %v838, %v661
    %v840 = vadd.f32 %v839, %v667
    %v841 = vadd.f32 %v840, %v671
    %v842 = vadd.f32 %v841, %v677
    %v843 = vadd.f32 %v842, %v681
    %v844 = vadd.f32 %v843, %v687
    %v845 = vadd.f32 %v844, %v691
    %v846 = vadd.f32 %v845, %v697
    %v847 = vadd.f32 %v846, %v701
    %v848 = vadd.f32 %v847, %v707
    %v849 = vadd.f32 %v848, %v711
    %v850 = vadd.f32 %v849, %v717
    %v851 = vadd.f32 %v850, %v721
    %v852 = vadd.f32 %v851, %v727
    %v853 = vadd.f32 %v852, %v731
    %v854 = vadd.f32 %v853, %v737
    %v855 = vadd.f32 %v854, %v741
    %v856 = vadd.f32 %v855, %v747
    %v857 = vadd.f32 %v856, %v751
    %v858 = vadd.f32 %v857, %v757
    %v859 = vadd.f32 %v858, %v761
    %v860 = vadd.f32 %v859, %v767
    %v861 = vadd.f32 %v860, %v771
    %v862 = vadd.f32 %v861, %v777
    %v863 = vadd.f32 %v862, %v781
    %v864 = vadd.f32 %v863, %v787
    %v865 = vadd.f32 %v864, %v791
    %v866 = vadd.f32 %v865, %v797
    %v867 = vadd.f32 %v866, %v801
    %v868 = vrot.slane %v867, 4
    %v869 = vadd.f32 %v867, %v868
    %v870 = vrot.slane %v869, 2
    %v871 = vadd.f32 %v869, %v870
    %v872 = vrot.slane %v871, 1
    %v873 = vadd.f32 %v871, %v872
    %v874 = vmul.f32 %v873, 0.001953125
    %v875 = vmul.f32 %v487, %v487
    %v876 = vmul.f32 %v491, %v491
    %v877 = vmul.f32 %v497, %v497
    %v878 = vmul.f32 %v501, %v501
    %v879 = vmul.f32 %v507, %v507
    %v880 = vmul.f32 %v511, %v511
    %v881 = vmul.f32 %v517, %v517
    %v882 = vmul.f32 %v521, %v521
    %v883 = vmul.f32 %v527, %v527
    %v884 = vmul.f32 %v531, %v531
    %v885 = vmul.f32 %v537, %v537
    %v886 = vmul.f32 %v541, %v541
    %v887 = vmul.f32 %v547, %v547
    %v888 = vmul.f32 %v551, %v551
    %v889 = vmul.f32 %v557, %v557
    %v890 = vmul.f32 %v561, %v561
    %v891 = vmul.f32 %v567, %v567
    %v892 = vmul.f32 %v571, %v571
    %v893 = vmul.f32 %v577, %v577
    %v894 = vmul.f32 %v581, %v581
    %v895 = vmul.f32 %v587, %v587
    %v896 = vmul.f32 %v591, %v591
    %v897 = vmul.f32 %v597, %v597
    %v898 = vmul.f32 %v601, %v601
    %v899 = vmul.f32 %v607, %v607
    %v900 = vmul.f32 %v611, %v611
    %v901 = vmul.f32 %v617, %v617
    %v902 = vmul.f32 %v621, %v621
    %v903 = vmul.f32 %v627, %v627
    %v904 = vmul.f32 %v631, %v631
    %v905 = vmul.f32 %v637, %v637
    %v906 = vmul.f32 %v641, %v641
    %v907 = vmul.f32 %v647, %v647
    %v908 = vmul.f32 %v651, %v651
    %v909 = vmul.f32 %v657, %v657
    %v910 = vmul.f32 %v661, %v661
    %v911 = vmul.f32 %v667, %v667
    %v912 = vmul.f32 %v671, %v671
    %v913 = vmul.f32 %v677, %v677
    %v914 = vmul.f32 %v681, %v681
    %v915 = vmul.f32 %v687, %v687
    %v916 = vmul.f32 %v691, %v691
    %v917 = vmul.f32 %v697, %v697
    %v918 = vmul.f32 %v701, %v701
    %v919 = vmul.f32 %v707, %v707
    %v920 = vmul.f32 %v711, %v711
    %v921 = vmul.f32 %v717, %v717
    %v922 = vmul.f32 %v721, %v721
    %v923 = vmul.f32 %v727, %v727
    %v924 = vmul.f32 %v731, %v731
    %v925 = vmul.f32 %v737, %v737
    %v926 = vmul.f32 %v741, %v741
    %v927 = vmul.f32 %v747, %v747
    %v928 = vmul.f32 %v751, %v751
    %v929 = vmul.f32 %v757, %v757
    %v930 = vmul.f32 %v761, %v761
    %v931 = vmul.f32 %v767, %v767
    %v932 = vmul.f32 %v771, %v771
    %v933 = vmul.f32 %v777, %v777
    %v934 = vmul.f32 %v781, %v781
    %v935 = vmul.f32 %v787, %v787
    %v936 = vmul.f32 %v791, %v791
    %v937 = vmul.f32 %v797, %v797
    %v938 = vmul.f32 %v801, %v801
    %v939 = vadd.f32 %v875, %v876
    %v940 = vadd.f32 %v939, %v877
    %v941 = vadd.f32 %v940, %v878
    %v942 = vadd.f32 %v941, %v879
    %v943 = vadd.f32 %v942, %v880
    %v944 = vadd.f32 %v943, %v881
    %v945 = vadd.f32 %v944, %v882
    %v946 = vadd.f32 %v945, %v883
    %v947 = vadd.f32 %v946, %v884
    %v948 = vadd.f32 %v947, %v885
    %v949 = vadd.f32 %v948, %v886
    %v950 = vadd.f32 %v949, %v887
    %v951 = vadd.f32 %v950, %v888
    %v952 = vadd.f32 %v951, %v889
    %v953 = vadd.f32 %v952, %v890
    %v954 = vadd.f32 %v953, %v891
    %v955 = vadd.f32 %v954, %v892
    %v956 = vadd.f32 %v955, %v893
    %v957 = vadd.f32 %v956, %v894
    %v958 = vadd.f32 %v957, %v895
    %v959 = vadd.f32 %v958, %v896
    %v960 = vadd.f32 %v959, %v897
    %v961 = vadd.f32 %v960, %v898
    %v962 = vadd.f32 %v961, %v899
    %v963 = vadd.f32 %v962, %v900
    %v964 = vadd.f32 %v963, %v901
    %v965 = vadd.f32 %v964, %v902
    %v966 = vadd.f32 %v965, %v903
    %v967 = vadd.f32 %v966, %v904
    %v968 = vadd.f32 %v967, %v905
    %v969 = vadd.f32 %v968, %v906
    %v970 = vadd.f32 %v969, %v907
    %v971 = vadd.f32 %v970, %v908
    %v972 = vadd.f32 %v971, %v909
    %v973 = vadd.f32 %v972, %v910
    %v974 = vadd.f32 %v973, %v911
    %v975 = vadd.f32 %v974, %v912
    %v976 = vadd.f32 %v975, %v913
    %v977 = vadd.f32 %v976, %v914
    %v978 = vadd.f32 %v977, %v915
    %v979 = vadd.f32 %v978, %v916
    %v980 = vadd.f32 %v979, %v917
    %v981 = vadd.f32 %v980, %v918
    %v982 = vadd.f32 %v981, %v919
    %v983 = vadd.f32 %v982, %v920
    %v984 = vadd.f32 %v983, %v921
    %v985 = vadd.f32 %v984, %v922
    %v986 = vadd.f32 %v985, %v923
    %v987 = vadd.f32 %v986, %v924
    %v988 = vadd.f32 %v987, %v925
    %v989 = vadd.f32 %v988, %v926
    %v990 = vadd.f32 %v989, %v927
    %v991 = vadd.f32 %v990, %v928
    %v992 = vadd.f32 %v991, %v929
    %v993 = vadd.f32 %v992, %v930
    %v994 = vadd.f32 %v993, %v931
    %v995 = vadd.f32 %v994, %v932
    %v996 = vadd.f32 %v995, %v933
    %v997 = vadd.f32 %v996, %v934
    %v998 = vadd.f32 %v997, %v935
    %v999 = vadd.f32 %v998, %v936
    %v1000 = vadd.f32 %v999, %v937
    %v1001 = vadd.f32 %v1000, %v938
    %v1002 = vrot.slane %v1001, 4
    %v1003 = vadd.f32 %v1001, %v1002
    %v1004 = vrot.slane %v1003, 2
    %v1005 = vadd.f32 %v1003, %v1004
    %v1006 = vrot.slane %v1005, 1
    %v1007 = vadd.f32 %v1005, %v1006
    %v1008 = vmul.f32 %v1007, 0.001953125
    %v1009 = vmul.f32 %v874, %v874
    %v1010 = vsub.f32 %v1008, %v1009
    %v1011 = vmax.f32 %v1010, 0.0
    %v1012 = vadd.f32 %v1011, 1e-05
    %v1013 = vrsqrt.pop %v1012
    %v1014 = vmul.f32 %v803, %v1013
    %v1015 = vmul.f32 %v874, %v1014
    %v1016 = vsub.f32 %v804, %v1015
    %v1018 = vlaneseq
    %v1019 = vshrl.u32 %v1018, 7
    %v1020 = vsub.s32 0, %v1019
    %v1021 = vrot.slane %v1014, %v1020
    %v1023 = vmul.f32 %v487, %v1021
    %v1024 = vmul.f32 %v491, %v1021
    %v1025 = vmul.f32 %v497, %v1021
    %v1026 = vmul.f32 %v501, %v1021
    %v1027 = vmul.f32 %v507, %v1021
    %v1028 = vmul.f32 %v511, %v1021
    %v1029 = vmul.f32 %v517, %v1021
    %v1030 = vmul.f32 %v521, %v1021
    %v1031 = vmul.f32 %v527, %v1021
    %v1032 = vmul.f32 %v531, %v1021
    %v1033 = vmul.f32 %v537, %v1021
    %v1034 = vmul.f32 %v541, %v1021
    %v1035 = vmul.f32 %v547, %v1021
    %v1036 = vmul.f32 %v551, %v1021
    %v1037 = vmul.f32 %v557, %v1021
    %v1038 = vmul.f32 %v561, %v1021
    %v1039 = vmul.f32 %v567, %v1021
    %v1040 = vmul.f32 %v571, %v1021
    %v1041 = vmul.f32 %v577, %v1021
    %v1042 = vmul.f32 %v581, %v1021
    %v1043 = vmul.f32 %v587, %v1021
    %v1044 = vmul.f32 %v591, %v1021
    %v1045 = vmul.f32 %v597, %v1021
    %v1046 = vmul.f32 %v601, %v1021
    %v1047 = vmul.f32 %v607, %v1021
    %v1048 = vmul.f32 %v611, %v1021
    %v1049 = vmul.f32 %v617, %v1021
    %v1050 = vmul.f32 %v621, %v1021
    %v1051 = vmul.f32 %v627, %v1021
    %v1052 = vmul.f32 %v631, %v1021
    %v1053 = vmul.f32 %v637, %v1021
    %v1054 = vmul.f32 %v641, %v1021
    %v1055 = vmul.f32 %v647, %v1021
    %v1056 = vmul.f32 %v651, %v1021
    %v1057 = vmul.f32 %v657, %v1021
    %v1058 = vmul.f32 %v661, %v1021
    %v1059 = vmul.f32 %v667, %v1021
    %v1060 = vmul.f32 %v671, %v1021
    %v1061 = vmul.f32 %v677, %v1021
    %v1062 = vmul.f32 %v681, %v1021
    %v1063 = vmul.f32 %v687, %v1021
    %v1064 = vmul.f32 %v691, %v1021
    %v1065 = vmul.f32 %v697, %v1021
    %v1066 = vmul.f32 %v701, %v1021
    %v1067 = vmul.f32 %v707, %v1021
    %v1068 = vmul.f32 %v711, %v1021
    %v1069 = vmul.f32 %v717, %v1021
    %v1070 = vmul.f32 %v721, %v1021
    %v1071 = vmul.f32 %v727, %v1021
    %v1072 = vmul.f32 %v731, %v1021
    %v1073 = vmul.f32 %v737, %v1021
    %v1074 = vmul.f32 %v741, %v1021
    %v1075 = vmul.f32 %v747, %v1021
    %v1076 = vmul.f32 %v751, %v1021
    %v1077 = vmul.f32 %v757, %v1021
    %v1078 = vmul.f32 %v761, %v1021
    %v1079 = vmul.f32 %v767, %v1021
    %v1080 = vmul.f32 %v771, %v1021
    %v1081 = vmul.f32 %v777, %v1021
    %v1082 = vmul.f32 %v781, %v1021
    %v1083 = vmul.f32 %v787, %v1021
    %v1084 = vmul.f32 %v791, %v1021
    %v1085 = vmul.f32 %v797, %v1021
    %v1086 = vmul.f32 %v801, %v1021
    %v1088 = vlaneseq
    %v1089 = vshrl.u32 %v1088, 7
    %v1090 = vsub.s32 0, %v1089
    %v1091 = vrot.slane %v1016, %v1090
    %v1093 = vadd.f32 %v1023, %v1091
    %v1094 = vadd.f32 %v1024, %v1091
    %v1095 = vadd.f32 %v1025, %v1091
    %v1096 = vadd.f32 %v1026, %v1091
    %v1097 = vadd.f32 %v1027, %v1091
    %v1098 = vadd.f32 %v1028, %v1091
    %v1099 = vadd.f32 %v1029, %v1091
    %v1100 = vadd.f32 %v1030, %v1091
    %v1101 = vadd.f32 %v1031, %v1091
    %v1102 = vadd.f32 %v1032, %v1091
    %v1103 = vadd.f32 %v1033, %v1091
    %v1104 = vadd.f32 %v1034, %v1091
    %v1105 = vadd.f32 %v1035, %v1091
    %v1106 = vadd.f32 %v1036, %v1091
    %v1107 = vadd.f32 %v1037, %v1091
    %v1108 = vadd.f32 %v1038, %v1091
    %v1109 = vadd.f32 %v1039, %v1091
    %v1110 = vadd.f32 %v1040, %v1091
    %v1111 = vadd.f32 %v1041, %v1091
    %v1112 = vadd.f32 %v1042, %v1091
    %v1113 = vadd.f32 %v1043, %v1091
    %v1114 = vadd.f32 %v1044, %v1091
    %v1115 = vadd.f32 %v1045, %v1091
    %v1116 = vadd.f32 %v1046, %v1091
    %v1117 = vadd.f32 %v1047, %v1091
    %v1118 = vadd.f32 %v1048, %v1091
    %v1119 = vadd.f32 %v1049, %v1091
    %v1120 = vadd.f32 %v1050, %v1091
    %v1121 = vadd.f32 %v1051, %v1091
    %v1122 = vadd.f32 %v1052, %v1091
    %v1123 = vadd.f32 %v1053, %v1091
    %v1124 = vadd.f32 %v1054, %v1091
    %v1125 = vadd.f32 %v1055, %v1091
    %v1126 = vadd.f32 %v1056, %v1091
    %v1127 = vadd.f32 %v1057, %v1091
    %v1128 = vadd.f32 %v1058, %v1091
    %v1129 = vadd.f32 %v1059, %v1091
    %v1130 = vadd.f32 %v1060, %v1091
    %v1131 = vadd.f32 %v1061, %v1091
    %v1132 = vadd.f32 %v1062, %v1091
    %v1133 = vadd.f32 %v1063, %v1091
    %v1134 = vadd.f32 %v1064, %v1091
    %v1135 = vadd.f32 %v1065, %v1091
    %v1136 = vadd.f32 %v1066, %v1091
    %v1137 = vadd.f32 %v1067, %v1091
    %v1138 = vadd.f32 %v1068, %v1091
    %v1139 = vadd.f32 %v1069, %v1091
    %v1140 = vadd.f32 %v1070, %v1091
    %v1141 = vadd.f32 %v1071, %v1091
    %v1142 = vadd.f32 %v1072, %v1091
    %v1143 = vadd.f32 %v1073, %v1091
    %v1144 = vadd.f32 %v1074, %v1091
    %v1145 = vadd.f32 %v1075, %v1091
    %v1146 = vadd.f32 %v1076, %v1091
    %v1147 = vadd.f32 %v1077, %v1091
    %v1148 = vadd.f32 %v1078, %v1091
    %v1149 = vadd.f32 %v1079, %v1091
    %v1150 = vadd.f32 %v1080, %v1091
    %v1151 = vadd.f32 %v1081, %v1091
    %v1152 = vadd.f32 %v1082, %v1091
    %v1153 = vadd.f32 %v1083, %v1091
    %v1154 = vadd.f32 %v1084, %v1091
    %v1155 = vadd.f32 %v1085, %v1091
    %v1156 = vadd.f32 %v1086, %v1091
    %1157 = vst [vmem:[#allocation4] sm:$0xff] %v1093
    %1158 = vst [vmem:[#allocation4 + $0x8] sm:$0xff] %v1094
    %1159 = vst [vmem:[#allocation4 + $0x10] sm:$0xff] %v1095
    %1160 = vst [vmem:[#allocation4 + $0x18] sm:$0xff] %v1096
    %1161 = vst [vmem:[#allocation4 + $0x20] sm:$0xff] %v1097
    %1162 = vst [vmem:[#allocation4 + $0x28] sm:$0xff] %v1098
    %1163 = vst [vmem:[#allocation4 + $0x30] sm:$0xff] %v1099
    %1164 = vst [vmem:[#allocation4 + $0x38] sm:$0xff] %v1100
    %1165 = vst [vmem:[#allocation4 + $0x40] sm:$0xff] %v1101
    %1166 = vst [vmem:[#allocation4 + $0x48] sm:$0xff] %v1102
    %1167 = vst [vmem:[#allocation4 + $0x50] sm:$0xff] %v1103
    %1168 = vst [vmem:[#allocation4 + $0x58] sm:$0xff] %v1104
    %1169 = vst [vmem:[#allocation4 + $0x60] sm:$0xff] %v1105
    %1170 = vst [vmem:[#allocation4 + $0x68] sm:$0xff] %v1106
    %1171 = vst [vmem:[#allocation4 + $0x70] sm:$0xff] %v1107
    %1172 = vst [vmem:[#allocation4 + $0x78] sm:$0xff] %v1108
    %1173 = vst [vmem:[#allocation4 + $0x80] sm:$0xff] %v1109
    %1174 = vst [vmem:[#allocation4 + $0x88] sm:$0xff] %v1110
    %1175 = vst [vmem:[#allocation4 + $0x90] sm:$0xff] %v1111
    %1176 = vst [vmem:[#allocation4 + $0x98] sm:$0xff] %v1112
    %1177 = vst [vmem:[#allocation4 + $0xa0] sm:$0xff] %v1113
    %1178 = vst [vmem:[#allocation4 + $0xa8] sm:$0xff] %v1114
    %1179 = vst [vmem:[#allocation4 + $0xb0] sm:$0xff] %v1115
    %1180 = vst [vmem:[#allocation4 + $0xb8] sm:$0xff] %v1116
    %1181 = vst [vmem:[#allocation4 + $0xc0] sm:$0xff] %v1117
    %1182 = vst [vmem:[#allocation4 + $0xc8] sm:$0xff] %v1118
    %1183 = vst [vmem:[#allocation4 + $0xd0] sm:$0xff] %v1119
    %1184 = vst [vmem:[#allocation4 + $0xd8] sm:$0xff] %v1120
    %1185 = vst [vmem:[#allocation4 + $0xe0] sm:$0xff] %v1121
    %1186 = vst [vmem:[#allocation4 + $0xe8] sm:$0xff] %v1122
    %1187 = vst [vmem:[#allocation4 + $0xf0] sm:$0xff] %v1123
    %1188 = vst [vmem:[#allocation4 + $0xf8] sm:$0xff] %v1124
    %1189 = vst [vmem:[#allocation4 + $0x100] sm:$0xff] %v1125
    %1190 = vst [vmem:[#allocation4 + $0x108] sm:$0xff] %v1126
    %1191 = vst [vmem:[#allocation4 + $0x110] sm:$0xff] %v1127
    %1192 = vst [vmem:[#allocation4 + $0x118] sm:$0xff] %v1128
    %1193 = vst [vmem:[#allocation4 + $0x120] sm:$0xff] %v1129
    %1194 = vst [vmem:[#allocation4 + $0x128] sm:$0xff] %v1130
    %1195 = vst [vmem:[#allocation4 + $0x130] sm:$0xff] %v1131
    %1196 = vst [vmem:[#allocation4 + $0x138] sm:$0xff] %v1132
    %1197 = vst [vmem:[#allocation4 + $0x140] sm:$0xff] %v1133
    %1198 = vst [vmem:[#allocation4 + $0x148] sm:$0xff] %v1134
    %1199 = vst [vmem:[#allocation4 + $0x150] sm:$0xff] %v1135
    %1200 = vst [vmem:[#allocation4 + $0x158] sm:$0xff] %v1136
    %1201 = vst [vmem:[#allocation4 + $0x160] sm:$0xff] %v1137
    %1202 = vst [vmem:[#allocation4 + $0x168] sm:$0xff] %v1138
    %1203 = vst [vmem:[#allocation4 + $0x170] sm:$0xff] %v1139
    %1204 = vst [vmem:[#allocation4 + $0x178] sm:$0xff] %v1140
    %1205 = vst [vmem:[#allocation4 + $0x180] sm:$0xff] %v1141
    %1206 = vst [vmem:[#allocation4 + $0x188] sm:$0xff] %v1142
    %1207 = vst [vmem:[#allocation4 + $0x190] sm:$0xff] %v1143
    %1208 = vst [vmem:[#allocation4 + $0x198] sm:$0xff] %v1144
    %1209 = vst [vmem:[#allocation4 + $0x1a0] sm:$0xff] %v1145
    %1210 = vst [vmem:[#allocation4 + $0x1a8] sm:$0xff] %v1146
    %1211 = vst [vmem:[#allocation4 + $0x1b0] sm:$0xff] %v1147
    %1212 = vst [vmem:[#allocation4 + $0x1b8] sm:$0xff] %v1148
    %1213 = vst [vmem:[#allocation4 + $0x1c0] sm:$0xff] %v1149
    %1214 = vst [vmem:[#allocation4 + $0x1c8] sm:$0xff] %v1150
    %1215 = vst [vmem:[#allocation4 + $0x1d0] sm:$0xff] %v1151
    %1216 = vst [vmem:[#allocation4 + $0x1d8] sm:$0xff] %v1152
    %1217 = vst [vmem:[#allocation4 + $0x1e0] sm:$0xff] %v1153
    %1218 = vst [vmem:[#allocation4 + $0x1e8] sm:$0xff] %v1154
    %1219 = vst [vmem:[#allocation4 + $0x1f0] sm:$0xff] %v1155
    %1220 = vst [vmem:[#allocation4 + $0x1f8] sm:$0xff] %v1156
    %v1221 = vld [vmem:[%s4] sm:$0x1]
    %v1222 = vld [vmem:[%s5] sm:$0x1]
    %v1223 = vadd.f32 %v485, %v489
    %v1224 = vadd.f32 %v1223, %v495
    %v1225 = vadd.f32 %v1224, %v499
    %v1226 = vadd.f32 %v1225, %v505
    %v1227 = vadd.f32 %v1226, %v509
    %v1228 = vadd.f32 %v1227, %v515
    %v1229 = vadd.f32 %v1228, %v519
    %v1230 = vadd.f32 %v1229, %v525
    %v1231 = vadd.f32 %v1230, %v529
    %v1232 = vadd.f32 %v1231, %v535
    %v1233 = vadd.f32 %v1232, %v539
    %v1234 = vadd.f32 %v1233, %v545
    %v1235 = vadd.f32 %v1234, %v549
    %v1236 = vadd.f32 %v1235, %v555
    %v1237 = vadd.f32 %v1236, %v559
    %v1238 = vadd.f32 %v1237, %v565
    %v1239 = vadd.f32 %v1238, %v569
    %v1240 = vadd.f32 %v1239, %v575
    %v1241 = vadd.f32 %v1240, %v579
    %v1242 = vadd.f32 %v1241, %v585
    %v1243 = vadd.f32 %v1242, %v589
    %v1244 = vadd.f32 %v1243, %v595
    %v1245 = vadd.f32 %v1244, %v599
    %v1246 = vadd.f32 %v1245, %v605
    %v1247 = vadd.f32 %v1246, %v609
    %v1248 = vadd.f32 %v1247, %v615
    %v1249 = vadd.f32 %v1248, %v619
    %v1250 = vadd.f32 %v1249, %v625
    %v1251 = vadd.f32 %v1250, %v629
    %v1252 = vadd.f32 %v1251, %v635
    %v1253 = vadd.f32 %v1252, %v639
    %v1254 = vadd.f32 %v1253, %v645
    %v1255 = vadd.f32 %v1254, %v649
    %v1256 = vadd.f32 %v1255, %v655
    %v1257 = vadd.f32 %v1256, %v659
    %v1258 = vadd.f32 %v1257, %v665
    %v1259 = vadd.f32 %v1258, %v669
    %v1260 = vadd.f32 %v1259, %v675
    %v1261 = vadd.f32 %v1260, %v679
    %v1262 = vadd.f32 %v1261, %v685
    %v1263 = vadd.f32 %v1262, %v689
    %v1264 = vadd.f32 %v1263, %v695
    %v1265 = vadd.f32 %v1264, %v699
    %v1266 = vadd.f32 %v1265, %v705
    %v1267 = vadd.f32 %v1266, %v709
    %v1268 = vadd.f32 %v1267, %v715
    %v1269 = vadd.f32 %v1268, %v719
    %v1270 = vadd.f32 %v1269, %v725
    %v1271 = vadd.f32 %v1270, %v729
    %v1272 = vadd.f32 %v1271, %v735
    %v1273 = vadd.f32 %v1272, %v739
    %v1274 = vadd.f32 %v1273, %v745
    %v1275 = vadd.f32 %v1274, %v749
    %v1276 = vadd.f32 %v1275, %v755
    %v1277 = vadd.f32 %v1276, %v759
    %v1278 = vadd.f32 %v1277, %v765
    %v1279 = vadd.f32 %v1278, %v769
    %v1280 = vadd.f32 %v1279, %v775
    %v1281 = vadd.f32 %v1280, %v779
    %v1282 = vadd.f32 %v1281, %v785
    %v1283 = vadd.f32 %v1282, %v789
    %v1284 = vadd.f32 %v1283, %v795
    %v1285 = vadd.f32 %v1284, %v799
    %v1286 = vrot.slane %v1285, 4
    %v1287 = vadd.f32 %v1285, %v1286
    %v1288 = vrot.slane %v1287, 2
    %v1289 = vadd.f32 %v1287, %v1288
    %v1290 = vrot.slane %v1289, 1
    %v1291 = vadd.f32 %v1289, %v1290
    %v1292 = vmul.f32 %v1291, 0.001953125
    %v1293 = vmul.f32 %v485, %v485
    %v1294 = vmul.f32 %v489, %v489
    %v1295 = vmul.f32 %v495, %v495
    %v1296 = vmul.f32 %v499, %v499
    %v1297 = vmul.f32 %v505, %v505
    %v1298 = vmul.f32 %v509, %v509
    %v1299 = vmul.f32 %v515, %v515
    %v1300 = vmul.f32 %v519, %v519
    %v1301 = vmul.f32 %v525, %v525
    %v1302 = vmul.f32 %v529, %v529
    %v1303 = vmul.f32 %v535, %v535
    %v1304 = vmul.f32 %v539, %v539
    %v1305 = vmul.f32 %v545, %v545
    %v1306 = vmul.f32 %v549, %v549
    %v1307 = vmul.f32 %v555, %v555
    %v1308 = vmul.f32 %v559, %v559
    %v1309 = vmul.f32 %v565, %v565
    %v1310 = vmul.f32 %v569, %v569
    %v1311 = vmul.f32 %v575, %v575
    %v1312 = vmul.f32 %v579, %v579
    %v1313 = vmul.f32 %v585, %v585
    %v1314 = vmul.f32 %v589, %v589
    %v1315 = vmul.f32 %v595, %v595
    %v1316 = vmul.f32 %v599, %v599
    %v1317 = vmul.f32 %v605, %v605
    %v1318 = vmul.f32 %v609, %v609
    %v1319 = vmul.f32 %v615, %v615
    %v1320 = vmul.f32 %v619, %v619
    %v1321 = vmul.f32 %v625, %v625
    %v1322 = vmul.f32 %v629, %v629
    %v1323 = vmul.f32 %v635, %v635
    %v1324 = vmul.f32 %v639, %v639
    %v1325 = vmul.f32 %v645, %v645
    %v1326 = vmul.f32 %v649, %v649
    %v1327 = vmul.f32 %v655, %v655
    %v1328 = vmul.f32 %v659, %v659
    %v1329 = vmul.f32 %v665, %v665
    %v1330 = vmul.f32 %v669, %v669
    %v1331 = vmul.f32 %v675, %v675
    %v1332 = vmul.f32 %v679, %v679
    %v1333 = vmul.f32 %v685, %v685
    %v1334 = vmul.f32 %v689, %v689
    %v1335 = vmul.f32 %v695, %v695
    %v1336 = vmul.f32 %v699, %v699
    %v1337 = vmul.f32 %v705, %v705
    %v1338 = vmul.f32 %v709, %v709
    %v1339 = vmul.f32 %v715, %v715
    %v1340 = vmul.f32 %v719, %v719
    %v1341 = vmul.f32 %v725, %v725
    %v1342 = vmul.f32 %v729, %v729
    %v1343 = vmul.f32 %v735, %v735
    %v1344 = vmul.f32 %v739, %v739
    %v1345 = vmul.f32 %v745, %v745
    %v1346 = vmul.f32 %v749, %v749
    %v1347 = vmul.f32 %v755, %v755
    %v1348 = vmul.f32 %v759, %v759
    %v1349 = vmul.f32 %v765, %v765
    %v1350 = vmul.f32 %v769, %v769
    %v1351 = vmul.f32 %v775, %v775
    %v1352 = vmul.f32 %v779, %v779
    %v1353 = vmul.f32 %v785, %v785
    %v1354 = vmul.f32 %v789, %v789
    %v1355 = vmul.f32 %v795, %v795
    %v1356 = vmul.f32 %v799, %v799
    %v1357 = vadd.f32 %v1293, %v1294
    %v1358 = vadd.f32 %v1357, %v1295
    %v1359 = vadd.f32 %v1358, %v1296
    %v1360 = vadd.f32 %v1359, %v1297
    %v1361 = vadd.f32 %v1360, %v1298
    %v1362 = vadd.f32 %v1361, %v1299
    %v1363 = vadd.f32 %v1362, %v1300
    %v1364 = vadd.f32 %v1363, %v1301
    %v1365 = vadd.f32 %v1364, %v1302
    %v1366 = vadd.f32 %v1365, %v1303
    %v1367 = vadd.f32 %v1366, %v1304
    %v1368 = vadd.f32 %v1367, %v1305
    %v1369 = vadd.f32 %v1368, %v1306
    %v1370 = vadd.f32 %v1369, %v1307
    %v1371 = vadd.f32 %v1370, %v1308
    %v1372 = vadd.f32 %v1371, %v1309
    %v1373 = vadd.f32 %v1372, %v1310
    %v1374 = vadd.f32 %v1373, %v1311
    %v1375 = vadd.f32 %v1374, %v1312
    %v1376 = vadd.f32 %v1375, %v1313
    %v1377 = vadd.f32 %v1376, %v1314
    %v1378 = vadd.f32 %v1377, %v1315
    %v1379 = vadd.f32 %v1378, %v1316
    %v1380 = vadd.f32 %v1379, %v1317
    %v1381 = vadd.f32 %v1380, %v1318
    %v1382 = vadd.f32 %v1381, %v1319
    %v1383 = vadd.f32 %v1382, %v1320
    %v1384 = vadd.f32 %v1383, %v1321
    %v1385 = vadd.f32 %v1384, %v1322
    %v1386 = vadd.f32 %v1385, %v1323
    %v1387 = vadd.f32 %v1386, %v1324
    %v1388 = vadd.f32 %v1387, %v1325
    %v1389 = vadd.f32 %v1388, %v1326
    %v1390 = vadd.f32 %v1389, %v1327
    %v1391 = vadd.f32 %v1390, %v1328
    %v1392 = vadd.f32 %v1391, %v1329
    %v1393 = vadd.f32 %v1392, %v1330
    %v1394 = vadd.f32 %v1393, %v1331
    %v1395 = vadd.f32 %v1394, %v1332
    %v1396 = vadd.f32 %v1395, %v1333
    %v1397 = vadd.f32 %v1396, %v1334
    %v1398 = vadd.f32 %v1397, %v1335
    %v1399 = vadd.f32 %v1398, %v1336
    %v1400 = vadd.f32 %v1399, %v1337
    %v1401 = vadd.f32 %v1400, %v1338
    %v1402 = vadd.f32 %v1401, %v1339
    %v1403 = vadd.f32 %v1402, %v1340
    %v1404 = vadd.f32 %v1403, %v1341
    %v1405 = vadd.f32 %v1404, %v1342
    %v1406 = vadd.f32 %v1405, %v1343
    %v1407 = vadd.f32 %v1406, %v1344
    %v1408 = vadd.f32 %v1407, %v1345
    %v1409 = vadd.f32 %v1408, %v1346
    %v1410 = vadd.f32 %v1409, %v1347
    %v1411 = vadd.f32 %v1410, %v1348
    %v1412 = vadd.f32 %v1411, %v1349
    %v1413 = vadd.f32 %v1412, %v1350
    %v1414 = vadd.f32 %v1413, %v1351
    %v1415 = vadd.f32 %v1414, %v1352
    %v1416 = vadd.f32 %v1415, %v1353
    %v1417 = vadd.f32 %v1416, %v1354
    %v1418 = vadd.f32 %v1417, %v1355
    %v1419 = vadd.f32 %v1418, %v1356
    %v1420 = vrot.slane %v1419, 4
    %v1421 = vadd.f32 %v1419, %v1420
    %v1422 = vrot.slane %v1421, 2
    %v1423 = vadd.f32 %v1421, %v1422
    %v1424 = vrot.slane %v1423, 1
    %v1425 = vadd.f32 %v1423, %v1424
    %v1426 = vmul.f32 %v1425, 0.001953125
    %v1427 = vmul.f32 %v1292, %v1292
    %v1428 = vsub.f32 %v1426, %v1427
    %v1429 = vmax.f32 %v1428, 0.0
    %v1430 = vadd.f32 %v1429, 1e-05
    %v1431 = vrsqrt.pop %v1430
    %v1432 = vmul.f32 %v1221, %v1431
    %v1433 = vmul.f32 %v1292, %v1432
    %v1434 = vsub.f32 %v1222, %v1433
    %v1436 = vlaneseq
    %v1437 = vshrl.u32 %v1436, 7
    %v1438 = vsub.s32 0, %v1437
    %v1439 = vrot.slane %v1432, %v1438
    %v1441 = vmul.f32 %v485, %v1439
    %v1442 = vmul.f32 %v489, %v1439
    %v1443 = vmul.f32 %v495, %v1439
    %v1444 = vmul.f32 %v499, %v1439
    %v1445 = vmul.f32 %v505, %v1439
    %v1446 = vmul.f32 %v509, %v1439
    %v1447 = vmul.f32 %v515, %v1439
    %v1448 = vmul.f32 %v519, %v1439
    %v1449 = vmul.f32 %v525, %v1439
    %v1450 = vmul.f32 %v529, %v1439
    %v1451 = vmul.f32 %v535, %v1439
    %v1452 = vmul.f32 %v539, %v1439
    %v1453 = vmul.f32 %v545, %v1439
    %v1454 = vmul.f32 %v549, %v1439
    %v1455 = vmul.f32 %v555, %v1439
    %v1456 = vmul.f32 %v559, %v1439
    %v1457 = vmul.f32 %v565, %v1439
    %v1458 = vmul.f32 %v569, %v1439
    %v1459 = vmul.f32 %v575, %v1439
    %v1460 = vmul.f32 %v579, %v1439
    %v1461 = vmul.f32 %v585, %v1439
    %v1462 = vmul.f32 %v589, %v1439
    %v1463 = vmul.f32 %v595, %v1439
    %v1464 = vmul.f32 %v599, %v1439
    %v1465 = vmul.f32 %v605, %v1439
    %v1466 = vmul.f32 %v609, %v1439
    %v1467 = vmul.f32 %v615, %v1439
    %v1468 = vmul.f32 %v619, %v1439
    %v1469 = vmul.f32 %v625, %v1439
    %v1470 = vmul.f32 %v629, %v1439
    %v1471 = vmul.f32 %v635, %v1439
    %v1472 = vmul.f32 %v639, %v1439
    %v1473 = vmul.f32 %v645, %v1439
    %v1474 = vmul.f32 %v649, %v1439
    %v1475 = vmul.f32 %v655, %v1439
    %v1476 = vmul.f32 %v659, %v1439
    %v1477 = vmul.f32 %v665, %v1439
    %v1478 = vmul.f32 %v669, %v1439
    %v1479 = vmul.f32 %v675, %v1439
    %v1480 = vmul.f32 %v679, %v1439
    %v1481 = vmul.f32 %v685, %v1439
    %v1482 = vmul.f32 %v689, %v1439
    %v1483 = vmul.f32 %v695, %v1439
    %v1484 = vmul.f32 %v699, %v1439
    %v1485 = vmul.f32 %v705, %v1439
    %v1486 = vmul.f32 %v709, %v1439
    %v1487 = vmul.f32 %v715, %v1439
    %v1488 = vmul.f32 %v719, %v1439
    %v1489 = vmul.f32 %v725, %v1439
    %v1490 = vmul.f32 %v729, %v1439
    %v1491 = vmul.f32 %v735, %v1439
    %v1492 = vmul.f32 %v739, %v1439
    %v1493 = vmul.f32 %v745, %v1439
    %v1494 = vmul.f32 %v749, %v1439
    %v1495 = vmul.f32 %v755, %v1439
    %v1496 = vmul.f32 %v759, %v1439
    %v1497 = vmul.f32 %v765, %v1439
    %v1498 = vmul.f32 %v769, %v1439
    %v1499 = vmul.f32 %v775, %v1439
    %v1500 = vmul.f32 %v779, %v1439
    %v1501 = vmul.f32 %v785, %v1439
    %v1502 = vmul.f32 %v789, %v1439
    %v1503 = vmul.f32 %v795, %v1439
    %v1504 = vmul.f32 %v799, %v1439
    %v1506 = vlaneseq
    %v1507 = vshrl.u32 %v1506, 7
    %v1508 = vsub.s32 0, %v1507
    %v1509 = vrot.slane %v1434, %v1508
    %v1511 = vadd.f32 %v1441, %v1509
    %v1512 = vadd.f32 %v1442, %v1509
    %v1513 = vadd.f32 %v1443, %v1509
    %v1514 = vadd.f32 %v1444, %v1509
    %v1515 = vadd.f32 %v1445, %v1509
    %v1516 = vadd.f32 %v1446, %v1509
    %v1517 = vadd.f32 %v1447, %v1509
    %v1518 = vadd.f32 %v1448, %v1509
    %v1519 = vadd.f32 %v1449, %v1509
    %v1520 = vadd.f32 %v1450, %v1509
    %v1521 = vadd.f32 %v1451, %v1509
    %v1522 = vadd.f32 %v1452, %v1509
    %v1523 = vadd.f32 %v1453, %v1509
    %v1524 = vadd.f32 %v1454, %v1509
    %v1525 = vadd.f32 %v1455, %v1509
    %v1526 = vadd.f32 %v1456, %v1509
    %v1527 = vadd.f32 %v1457, %v1509
    %v1528 = vadd.f32 %v1458, %v1509
    %v1529 = vadd.f32 %v1459, %v1509
    %v1530 = vadd.f32 %v1460, %v1509
    %v1531 = vadd.f32 %v1461, %v1509
    %v1532 = vadd.f32 %v1462, %v1509
    %v1533 = vadd.f32 %v1463, %v1509
    %v1534 = vadd.f32 %v1464, %v1509
    %v1535 = vadd.f32 %v1465, %v1509
    %v1536 = vadd.f32 %v1466, %v1509
    %v1537 = vadd.f32 %v1467, %v1509
    %v1538 = vadd.f32 %v1468, %v1509
    %v1539 = vadd.f32 %v1469, %v1509
    %v1540 = vadd.f32 %v1470, %v1509
    %v1541 = vadd.f32 %v1471, %v1509
    %v1542 = vadd.f32 %v1472, %v1509
    %v1543 = vadd.f32 %v1473, %v1509
    %v1544 = vadd.f32 %v1474, %v1509
    %v1545 = vadd.f32 %v1475, %v1509
    %v1546 = vadd.f32 %v1476, %v1509
    %v1547 = vadd.f32 %v1477, %v1509
    %v1548 = vadd.f32 %v1478, %v1509
    %v1549 = vadd.f32 %v1479, %v1509
    %v1550 = vadd.f32 %v1480, %v1509
    %v1551 = vadd.f32 %v1481, %v1509
    %v1552 = vadd.f32 %v1482, %v1509
    %v1553 = vadd.f32 %v1483, %v1509
    %v1554 = vadd.f32 %v1484, %v1509
    %v1555 = vadd.f32 %v1485, %v1509
    %v1556 = vadd.f32 %v1486, %v1509
    %v1557 = vadd.f32 %v1487, %v1509
    %v1558 = vadd.f32 %v1488, %v1509
    %v1559 = vadd.f32 %v1489, %v1509
    %v1560 = vadd.f32 %v1490, %v1509
    %v1561 = vadd.f32 %v1491, %v1509
    %v1562 = vadd.f32 %v1492, %v1509
    %v1563 = vadd.f32 %v1493, %v1509
    %v1564 = vadd.f32 %v1494, %v1509
    %v1565 = vadd.f32 %v1495, %v1509
    %v1566 = vadd.f32 %v1496, %v1509
    %v1567 = vadd.f32 %v1497, %v1509
    %v1568 = vadd.f32 %v1498, %v1509
    %v1569 = vadd.f32 %v1499, %v1509
    %v1570 = vadd.f32 %v1500, %v1509
    %v1571 = vadd.f32 %v1501, %v1509
    %v1572 = vadd.f32 %v1502, %v1509
    %v1573 = vadd.f32 %v1503, %v1509
    %v1574 = vadd.f32 %v1504, %v1509
    %v1575 = vmax.f32 %v1511, 0.0
    %v1576 = vmax.f32 %v1512, 0.0
    %v1577 = vmax.f32 %v1513, 0.0
    %v1578 = vmax.f32 %v1514, 0.0
    %v1579 = vmax.f32 %v1515, 0.0
    %v1580 = vmax.f32 %v1516, 0.0
    %v1581 = vmax.f32 %v1517, 0.0
    %v1582 = vmax.f32 %v1518, 0.0
    %v1583 = vmax.f32 %v1519, 0.0
    %v1584 = vmax.f32 %v1520, 0.0
    %v1585 = vmax.f32 %v1521, 0.0
    %v1586 = vmax.f32 %v1522, 0.0
    %v1587 = vmax.f32 %v1523, 0.0
    %v1588 = vmax.f32 %v1524, 0.0
    %v1589 = vmax.f32 %v1525, 0.0
    %v1590 = vmax.f32 %v1526, 0.0
    %v1591 = vmax.f32 %v1527, 0.0
    %v1592 = vmax.f32 %v1528, 0.0
    %v1593 = vmax.f32 %v1529, 0.0
    %v1594 = vmax.f32 %v1530, 0.0
    %v1595 = vmax.f32 %v1531, 0.0
    %v1596 = vmax.f32 %v1532, 0.0
    %v1597 = vmax.f32 %v1533, 0.0
    %v1598 = vmax.f32 %v1534, 0.0
    %v1599 = vmax.f32 %v1535, 0.0
    %v1600 = vmax.f32 %v1536, 0.0
    %v1601 = vmax.f32 %v1537, 0.0
    %v1602 = vmax.f32 %v1538, 0.0
    %v1603 = vmax.f32 %v1539, 0.0
    %v1604 = vmax.f32 %v1540, 0.0
    %v1605 = vmax.f32 %v1541, 0.0
    %v1606 = vmax.f32 %v1542, 0.0
    %v1607 = vmax.f32 %v1543, 0.0
    %v1608 = vmax.f32 %v1544, 0.0
    %v1609 = vmax.f32 %v1545, 0.0
    %v1610 = vmax.f32 %v1546, 0.0
    %v1611 = vmax.f32 %v1547, 0.0
    %v1612 = vmax.f32 %v1548, 0.0
    %v1613 = vmax.f32 %v1549, 0.0
    %v1614 = vmax.f32 %v1550, 0.0
    %v1615 = vmax.f32 %v1551, 0.0
    %v1616 = vmax.f32 %v1552, 0.0
    %v1617 = vmax.f32 %v1553, 0.0
    %v1618 = vmax.f32 %v1554, 0.0
    %v1619 = vmax.f32 %v1555, 0.0
    %v1620 = vmax.f32 %v1556, 0.0
    %v1621 = vmax.f32 %v1557, 0.0
    %v1622 = vmax.f32 %v1558, 0.0
    %v1623 = vmax.f32 %v1559, 0.0
    %v1624 = vmax.f32 %v1560, 0.0
    %v1625 = vmax.f32 %v1561, 0.0
    %v1626 = vmax.f32 %v1562, 0.0
    %v1627 = vmax.f32 %v1563, 0.0
    %v1628 = vmax.f32 %v1564, 0.0
    %v1629 = vmax.f32 %v1565, 0.0
    %v1630 = vmax.f32 %v1566, 0.0
    %v1631 = vmax.f32 %v1567, 0.0
    %v1632 = vmax.f32 %v1568, 0.0
    %v1633 = vmax.f32 %v1569, 0.0
    %v1634 = vmax.f32 %v1570, 0.0
    %v1635 = vmax.f32 %v1571, 0.0
    %v1636 = vmax.f32 %v1572, 0.0
    %v1637 = vmax.f32 %v1573, 0.0
    %v1638 = vmax.f32 %v1574, 0.0
    %1639 = vst [vmem:[#allocation2] sm:$0xff] 0.0
    %1640 = vst [vmem:[#allocation2 + $0x8] sm:$0xff] 0.0
    %1641 = vst [vmem:[#allocation2 + $0x10] sm:$0xff] 0.0
    %1642 = vst [vmem:[#allocation2 + $0x18] sm:$0xff] 0.0
    %1643 = vst [vmem:[#allocation2 + $0x20] sm:$0xff] 0.0
    %1644 = vst [vmem:[#allocation2 + $0x28] sm:$0xff] 0.0
    %1645 = vst [vmem:[#allocation2 + $0x30] sm:$0xff] 0.0
    %1646 = vst [vmem:[#allocation2 + $0x38] sm:$0xff] 0.0
    %1647 = vst [vmem:[#allocation2 + $0x40] sm:$0xff] 0.0
    %1648 = vst [vmem:[#allocation2 + $0x48] sm:$0xff] 0.0
    %1649 = vst [vmem:[#allocation2 + $0x50] sm:$0xff] 0.0
    %1650 = vst [vmem:[#allocation2 + $0x58] sm:$0xff] 0.0
    %1651 = vst [vmem:[#allocation2 + $0x60] sm:$0xff] 0.0
    %1652 = vst [vmem:[#allocation2 + $0x68] sm:$0xff] 0.0
    %1653 = vst [vmem:[#allocation2 + $0x70] sm:$0xff] 0.0
    %1654 = vst [vmem:[#allocation2 + $0x78] sm:$0xff] 0.0
    %1655 = vst [vmem:[#allocation2 + $0x80] sm:$0xff] 0.0
    %1656 = vst [vmem:[#allocation2 + $0x88] sm:$0xff] 0.0
    %1657 = vst [vmem:[#allocation2 + $0x90] sm:$0xff] 0.0
    %1658 = vst [vmem:[#allocation2 + $0x98] sm:$0xff] 0.0
    %1659 = vst [vmem:[#allocation2 + $0xa0] sm:$0xff] 0.0
    %1660 = vst [vmem:[#allocation2 + $0xa8] sm:$0xff] 0.0
    %1661 = vst [vmem:[#allocation2 + $0xb0] sm:$0xff] 0.0
    %1662 = vst [vmem:[#allocation2 + $0xb8] sm:$0xff] 0.0
    %1663 = vst [vmem:[#allocation2 + $0xc0] sm:$0xff] 0.0
    %1664 = vst [vmem:[#allocation2 + $0xc8] sm:$0xff] 0.0
    %1665 = vst [vmem:[#allocation2 + $0xd0] sm:$0xff] 0.0
    %1666 = vst [vmem:[#allocation2 + $0xd8] sm:$0xff] 0.0
    %1667 = vst [vmem:[#allocation2 + $0xe0] sm:$0xff] 0.0
    %1668 = vst [vmem:[#allocation2 + $0xe8] sm:$0xff] 0.0
    %1669 = vst [vmem:[#allocation2 + $0xf0] sm:$0xff] 0.0
    %1670 = vst [vmem:[#allocation2 + $0xf8] sm:$0xff] 0.0
    %1671 = vst [vmem:[#allocation2 + $0x100] sm:$0xff] 0.0
    %1672 = vst [vmem:[#allocation2 + $0x108] sm:$0xff] 0.0
    %1673 = vst [vmem:[#allocation2 + $0x110] sm:$0xff] 0.0
    %1674 = vst [vmem:[#allocation2 + $0x118] sm:$0xff] 0.0
    %1675 = vst [vmem:[#allocation2 + $0x120] sm:$0xff] 0.0
    %1676 = vst [vmem:[#allocation2 + $0x128] sm:$0xff] 0.0
    %1677 = vst [vmem:[#allocation2 + $0x130] sm:$0xff] 0.0
    %1678 = vst [vmem:[#allocation2 + $0x138] sm:$0xff] 0.0
    %1679 = vst [vmem:[#allocation2 + $0x140] sm:$0xff] 0.0
    %1680 = vst [vmem:[#allocation2 + $0x148] sm:$0xff] 0.0
    %1681 = vst [vmem:[#allocation2 + $0x150] sm:$0xff] 0.0
    %1682 = vst [vmem:[#allocation2 + $0x158] sm:$0xff] 0.0
    %1683 = vst [vmem:[#allocation2 + $0x160] sm:$0xff] 0.0
    %1684 = vst [vmem:[#allocation2 + $0x168] sm:$0xff] 0.0
    %1685 = vst [vmem:[#allocation2 + $0x170] sm:$0xff] 0.0
    %1686 = vst [vmem:[#allocation2 + $0x178] sm:$0xff] 0.0
    %1687 = vst [vmem:[#allocation2 + $0x180] sm:$0xff] 0.0
    %1688 = vst [vmem:[#allocation2 + $0x188] sm:$0xff] 0.0
    %1689 = vst [vmem:[#allocation2 + $0x190] sm:$0xff] 0.0
    %1690 = vst [vmem:[#allocation2 + $0x198] sm:$0xff] 0.0
    %1691 = vst [vmem:[#allocation2 + $0x1a0] sm:$0xff] 0.0
    %1692 = vst [vmem:[#allocation2 + $0x1a8] sm:$0xff] 0.0
    %1693 = vst [vmem:[#allocation2 + $0x1b0] sm:$0xff] 0.0
    %1694 = vst [vmem:[#allocation2 + $0x1b8] sm:$0xff] 0.0
    %1695 = vst [vmem:[#allocation2 + $0x1c0] sm:$0xff] 0.0
    %1696 = vst [vmem:[#allocation2 + $0x1c8] sm:$0xff] 0.0
    %1697 = vst [vmem:[#allocation2 + $0x1d0] sm:$0xff] 0.0
    %1698 = vst [vmem:[#allocation2 + $0x1d8] sm:$0xff] 0.0
    %1699 = vst [vmem:[#allocation2 + $0x1e0] sm:$0xff] 0.0
    %1700 = vst [vmem:[#allocation2 + $0x1e8] sm:$0xff] 0.0
    %1701 = vst [vmem:[#allocation2 + $0x1f0] sm:$0xff] 0.0
    %1702 = vst [vmem:[#allocation2 + $0x1f8] sm:$0xff] 0.0
    %1703 = vst [vmem:[#allocation2 + $0x200] sm:$0xff] 0.0
    %1704 = vst [vmem:[#allocation2 + $0x208] sm:$0xff] 0.0
    %1705 = vst [vmem:[#allocation2 + $0x210] sm:$0xff] 0.0
    %1706 = vst [vmem:[#allocation2 + $0x218] sm:$0xff] 0.0
    %1707 = vst [vmem:[#allocation2 + $0x220] sm:$0xff] 0.0
    %1708 = vst [vmem:[#allocation2 + $0x228] sm:$0xff] 0.0
    %1709 = vst [vmem:[#allocation2 + $0x230] sm:$0xff] 0.0
    %1710 = vst [vmem:[#allocation2 + $0x238] sm:$0xff] 0.0
    %1711 = vst [vmem:[#allocation2 + $0x240] sm:$0xff] 0.0
    %1712 = vst [vmem:[#allocation2 + $0x248] sm:$0xff] 0.0
    %1713 = vst [vmem:[#allocation2 + $0x250] sm:$0xff] 0.0
    %1714 = vst [vmem:[#allocation2 + $0x258] sm:$0xff] 0.0
    %1715 = vst [vmem:[#allocation2 + $0x260] sm:$0xff] 0.0
    %1716 = vst [vmem:[#allocation2 + $0x268] sm:$0xff] 0.0
    %1717 = vst [vmem:[#allocation2 + $0x270] sm:$0xff] 0.0
    %1718 = vst [vmem:[#allocation2 + $0x278] sm:$0xff] 0.0
    %1719 = vst [vmem:[#allocation2 + $0x280] sm:$0xff] 0.0
    %1720 = vst [vmem:[#allocation2 + $0x288] sm:$0xff] 0.0
    %1721 = vst [vmem:[#allocation2 + $0x290] sm:$0xff] 0.0
    %1722 = vst [vmem:[#allocation2 + $0x298] sm:$0xff] 0.0
    %1723 = vst [vmem:[#allocation2 + $0x2a0] sm:$0xff] 0.0
    %1724 = vst [vmem:[#allocation2 + $0x2a8] sm:$0xff] 0.0
    %1725 = vst [vmem:[#allocation2 + $0x2b0] sm:$0xff] 0.0
    %1726 = vst [vmem:[#allocation2 + $0x2b8] sm:$0xff] 0.0
    %1727 = vst [vmem:[#allocation2 + $0x2c0] sm:$0xff] 0.0
    %1728 = vst [vmem:[#allocation2 + $0x2c8] sm:$0xff] 0.0
    %1729 = vst [vmem:[#allocation2 + $0x2d0] sm:$0xff] 0.0
    %1730 = vst [vmem:[#allocation2 + $0x2d8] sm:$0xff] 0.0
    %1731 = vst [vmem:[#allocation2 + $0x2e0] sm:$0xff] 0.0
    %1732 = vst [vmem:[#allocation2 + $0x2e8] sm:$0xff] 0.0
    %1733 = vst [vmem:[#allocation2 + $0x2f0] sm:$0xff] 0.0
    %1734 = vst [vmem:[#allocation2 + $0x2f8] sm:$0xff] 0.0
    %1735 = vst [vmem:[#allocation2 + $0x300] sm:$0xff] 0.0
    %1736 = vst [vmem:[#allocation2 + $0x308] sm:$0xff] 0.0
    %1737 = vst [vmem:[#allocation2 + $0x310] sm:$0xff] 0.0
    %1738 = vst [vmem:[#allocation2 + $0x318] sm:$0xff] 0.0
    %1739 = vst [vmem:[#allocation2 + $0x320] sm:$0xff] 0.0
    %1740 = vst [vmem:[#allocation2 + $0x328] sm:$0xff] 0.0
    %1741 = vst [vmem:[#allocation2 + $0x330] sm:$0xff] 0.0
    %1742 = vst [vmem:[#allocation2 + $0x338] sm:$0xff] 0.0
    %1743 = vst [vmem:[#allocation2 + $0x340] sm:$0xff] 0.0
    %1744 = vst [vmem:[#allocation2 + $0x348] sm:$0xff] 0.0
    %1745 = vst [vmem:[#allocation2 + $0x350] sm:$0xff] 0.0
    %1746 = vst [vmem:[#allocation2 + $0x358] sm:$0xff] 0.0
    %1747 = vst [vmem:[#allocation2 + $0x360] sm:$0xff] 0.0
    %1748 = vst [vmem:[#allocation2 + $0x368] sm:$0xff] 0.0
    %1749 = vst [vmem:[#allocation2 + $0x370] sm:$0xff] 0.0
    %1750 = vst [vmem:[#allocation2 + $0x378] sm:$0xff] 0.0
    %1751 = vst [vmem:[#allocation2 + $0x380] sm:$0xff] 0.0
    %1752 = vst [vmem:[#allocation2 + $0x388] sm:$0xff] 0.0
    %1753 = vst [vmem:[#allocation2 + $0x390] sm:$0xff] 0.0
    %1754 = vst [vmem:[#allocation2 + $0x398] sm:$0xff] 0.0
    %1755 = vst [vmem:[#allocation2 + $0x3a0] sm:$0xff] 0.0
    %1756 = vst [vmem:[#allocation2 + $0x3a8] sm:$0xff] 0.0
    %1757 = vst [vmem:[#allocation2 + $0x3b0] sm:$0xff] 0.0
    %1758 = vst [vmem:[#allocation2 + $0x3b8] sm:$0xff] 0.0
    %1759 = vst [vmem:[#allocation2 + $0x3c0] sm:$0xff] 0.0
    %1760 = vst [vmem:[#allocation2 + $0x3c8] sm:$0xff] 0.0
    %1761 = vst [vmem:[#allocation2 + $0x3d0] sm:$0xff] 0.0
    %1762 = vst [vmem:[#allocation2 + $0x3d8] sm:$0xff] 0.0
    %1763 = vst [vmem:[#allocation2 + $0x3e0] sm:$0xff] 0.0
    %1764 = vst [vmem:[#allocation2 + $0x3e8] sm:$0xff] 0.0
    %1765 = vst [vmem:[#allocation2 + $0x3f0] sm:$0xff] 0.0
    %1766 = vst [vmem:[#allocation2 + $0x3f8] sm:$0xff] 0.0
    %1767 = vst [vmem:[#allocation2 + $0x400] sm:$0xff] 0.0
    %1768 = vst [vmem:[#allocation2 + $0x408] sm:$0xff] 0.0
    %1769 = vst [vmem:[#allocation2 + $0x410] sm:$0xff] 0.0
    %1770 = vst [vmem:[#allocation2 + $0x418] sm:$0xff] 0.0
    %1771 = vst [vmem:[#allocation2 + $0x420] sm:$0xff] 0.0
    %1772 = vst [vmem:[#allocation2 + $0x428] sm:$0xff] 0.0
    %1773 = vst [vmem:[#allocation2 + $0x430] sm:$0xff] 0.0
    %1774 = vst [vmem:[#allocation2 + $0x438] sm:$0xff] 0.0
    %1775 = vst [vmem:[#allocation2 + $0x440] sm:$0xff] 0.0
    %1776 = vst [vmem:[#allocation2 + $0x448] sm:$0xff] 0.0
    %1777 = vst [vmem:[#allocation2 + $0x450] sm:$0xff] 0.0
    %1778 = vst [vmem:[#allocation2 + $0x458] sm:$0xff] 0.0
    %1779 = vst [vmem:[#allocation2 + $0x460] sm:$0xff] 0.0
    %1780 = vst [vmem:[#allocation2 + $0x468] sm:$0xff] 0.0
    %1781 = vst [vmem:[#allocation2 + $0x470] sm:$0xff] 0.0
    %1782 = vst [vmem:[#allocation2 + $0x478] sm:$0xff] 0.0
    %s1783 = scalar_lea.vmem [#allocation2], 32
    %1784 = vst [vmem:[%s1783 + $0x8] sm:$0xff] %v1575
    %1785 = vst [vmem:[%s1783 + $0x10] sm:$0xff] %v1576
    %1786 = vst [vmem:[%s1783 + $0x28] sm:$0xff] %v1577
    %1787 = vst [vmem:[%s1783 + $0x30] sm:$0xff] %v1578
    %1788 = vst [vmem:[%s1783 + $0x48] sm:$0xff] %v1579
    %1789 = vst [vmem:[%s1783 + $0x50] sm:$0xff] %v1580
    %1790 = vst [vmem:[%s1783 + $0x68] sm:$0xff] %v1581
    %1791 = vst [vmem:[%s1783 + $0x70] sm:$0xff] %v1582
    %1792 = vst [vmem:[%s1783 + $0x88] sm:$0xff] %v1583
    %1793 = vst [vmem:[%s1783 + $0x90] sm:$0xff] %v1584
    %1794 = vst [vmem:[%s1783 + $0xa8] sm:$0xff] %v1585
    %1795 = vst [vmem:[%s1783 + $0xb0] sm:$0xff] %v1586
    %1796 = vst [vmem:[%s1783 + $0xc8] sm:$0xff] %v1587
    %1797 = vst [vmem:[%s1783 + $0xd0] sm:$0xff] %v1588
    %1798 = vst [vmem:[%s1783 + $0xe8] sm:$0xff] %v1589
    %1799 = vst [vmem:[%s1783 + $0xf0] sm:$0xff] %v1590
    %1800 = vst [vmem:[%s1783 + $0x108] sm:$0xff] %v1591
    %1801 = vst [vmem:[%s1783 + $0x110] sm:$0xff] %v1592
    %1802 = vst [vmem:[%s1783 + $0x128] sm:$0xff] %v1593
    %1803 = vst [vmem:[%s1783 + $0x130] sm:$0xff] %v1594
    %1804 = vst [vmem:[%s1783 + $0x148] sm:$0xff] %v1595
    %1805 = vst [vmem:[%s1783 + $0x150] sm:$0xff] %v1596
    %1806 = vst [vmem:[%s1783 + $0x168] sm:$0xff] %v1597
    %1807 = vst [vmem:[%s1783 + $0x170] sm:$0xff] %v1598
    %1808 = vst [vmem:[%s1783 + $0x188] sm:$0xff] %v1599
    %1809 = vst [vmem:[%s1783 + $0x190] sm:$0xff] %v1600
    %1810 = vst [vmem:[%s1783 + $0x1a8] sm:$0xff] %v1601
    %1811 = vst [vmem:[%s1783 + $0x1b0] sm:$0xff] %v1602
    %1812 = vst [vmem:[%s1783 + $0x1c8] sm:$0xff] %v1603
    %1813 = vst [vmem:[%s1783 + $0x1d0] sm:$0xff] %v1604
    %1814 = vst [vmem:[%s1783 + $0x1e8] sm:$0xff] %v1605
    %1815 = vst [vmem:[%s1783 + $0x1f0] sm:$0xff] %v1606
    %1816 = vst [vmem:[%s1783 + $0x248] sm:$0xff] %v1607
    %1817 = vst [vmem:[%s1783 + $0x250] sm:$0xff] %v1608
    %1818 = vst [vmem:[%s1783 + $0x268] sm:$0xff] %v1609
    %1819 = vst [vmem:[%s1783 + $0x270] sm:$0xff] %v1610
    %1820 = vst [vmem:[%s1783 + $0x288] sm:$0xff] %v1611
    %1821 = vst [vmem:[%s1783 + $0x290] sm:$0xff] %v1612
    %1822 = vst [vmem:[%s1783 + $0x2a8] sm:$0xff] %v1613
    %1823 = vst [vmem:[%s1783 + $0x2b0] sm:$0xff] %v1614
    %1824 = vst [vmem:[%s1783 + $0x2c8] sm:$0xff] %v1615
    %1825 = vst [vmem:[%s1783 + $0x2d0] sm:$0xff] %v1616
    %1826 = vst [vmem:[%s1783 + $0x2e8] sm:$0xff] %v1617
    %1827 = vst [vmem:[%s1783 + $0x2f0] sm:$0xff] %v1618
    %1828 = vst [vmem:[%s1783 + $0x308] sm:$0xff] %v1619
    %1829 = vst [vmem:[%s1783 + $0x310] sm:$0xff] %v1620
    %1830 = vst [vmem:[%s1783 + $0x328] sm:$0xff] %v1621
    %1831 = vst [vmem:[%s1783 + $0x330] sm:$0xff] %v1622
    %1832 = vst [vmem:[%s1783 + $0x348] sm:$0xff] %v1623
    %1833 = vst [vmem:[%s1783 + $0x350] sm:$0xff] %v1624
    %1834 = vst [vmem:[%s1783 + $0x368] sm:$0xff] %v1625
    %1835 = vst [vmem:[%s1783 + $0x370] sm:$0xff] %v1626
    %1836 = vst [vmem:[%s1783 + $0x388] sm:$0xff] %v1627
    %1837 = vst [vmem:[%s1783 + $0x390] sm:$0xff] %v1628
    %1838 = vst [vmem:[%s1783 + $0x3a8] sm:$0xff] %v1629
    %1839 = vst [vmem:[%s1783 + $0x3b0] sm:$0xff] %v1630
    %1840 = vst [vmem:[%s1783 + $0x3c8] sm:$0xff] %v1631
    %1841 = vst [vmem:[%s1783 + $0x3d0] sm:$0xff] %v1632
    %1842 = vst [vmem:[%s1783 + $0x3e8] sm:$0xff] %v1633
    %1843 = vst [vmem:[%s1783 + $0x3f0] sm:$0xff] %v1634
    %1844 = vst [vmem:[%s1783 + $0x408] sm:$0xff] %v1635
    %1845 = vst [vmem:[%s1783 + $0x410] sm:$0xff] %v1636
    %1846 = vst [vmem:[%s1783 + $0x428] sm:$0xff] %v1637
    %1847 = vst [vmem:[%s1783 + $0x430] sm:$0xff] %v1638
    %v1848 = vld [vmem:[#allocation2 + $0x7] sm:$0xff]
    %v1849 = vld [vmem:[#allocation2 + $0xf] sm:$0xff]
    %v1850 = vld [vmem:[#allocation2 + $0x27] sm:$0xff]
    %v1851 = vld [vmem:[#allocation2 + $0x2f] sm:$0xff]
    %v1852 = vld [vmem:[#allocation2 + $0x47] sm:$0xff]
    %v1853 = vld [vmem:[#allocation2 + $0x4f] sm:$0xff]
    %v1854 = vld [vmem:[#allocation2 + $0x67] sm:$0xff]
    %v1855 = vld [vmem:[#allocation2 + $0x6f] sm:$0xff]
    %v1856 = vld [vmem:[#allocation2 + $0x87] sm:$0xff]
    %v1857 = vld [vmem:[#allocation2 + $0x8f] sm:$0xff]
    %v1858 = vld [vmem:[#allocation2 + $0xa7] sm:$0xff]
    %v1859 = vld [vmem:[#allocation2 + $0xaf] sm:$0xff]
    %v1860 = vld [vmem:[#allocation2 + $0xc7] sm:$0xff]
    %v1861 = vld [vmem:[#allocation2 + $0xcf] sm:$0xff]
    %v1862 = vld [vmem:[#allocation2 + $0xe7] sm:$0xff]
    %v1863 = vld [vmem:[#allocation2 + $0xef] sm:$0xff]
    %v1864 = vld [vmem:[#allocation2 + $0x107] sm:$0xff]
    %v1865 = vld [vmem:[#allocation2 + $0x10f] sm:$0xff]
    %v1866 = vld [vmem:[#allocation2 + $0x127] sm:$0xff]
    %v1867 = vld [vmem:[#allocation2 + $0x12f] sm:$0xff]
    %v1868 = vld [vmem:[#allocation2 + $0x147] sm:$0xff]
    %v1869 = vld [vmem:[#allocation2 + $0x14f] sm:$0xff]
    %v1870 = vld [vmem:[#allocation2 + $0x167] sm:$0xff]
    %v1871 = vld [vmem:[#allocation2 + $0x16f] sm:$0xff]
    %v1872 = vld [vmem:[#allocation2 + $0x187] sm:$0xff]
    %v1873 = vld [vmem:[#allocation2 + $0x18f] sm:$0xff]
    %v1874 = vld [vmem:[#allocation2 + $0x1a7] sm:$0xff]
    %v1875 = vld [vmem:[#allocation2 + $0x1af] sm:$0xff]
    %v1876 = vld [vmem:[#allocation2 + $0x1c7] sm:$0xff]
    %v1877 = vld [vmem:[#allocation2 + $0x1cf] sm:$0xff]
    %v1878 = vld [vmem:[#allocation2 + $0x1e7] sm:$0xff]
    %v1879 = vld [vmem:[#allocation2 + $0x1ef] sm:$0xff]
    %v1880 = vld [vmem:[#allocation2 + $0x247] sm:$0xff]
    %v1881 = vld [vmem:[#allocation2 + $0x24f] sm:$0xff]
    %v1882 = vld [vmem:[#allocation2 + $0x267] sm:$0xff]
    %v1883 = vld [vmem:[#allocation2 + $0x26f] sm:$0xff]
    %v1884 = vld [vmem:[#allocation2 + $0x287] sm:$0xff]
    %v1885 = vld [vmem:[#allocation2 + $0x28f] sm:$0xff]
    %v1886 = vld [vmem:[#allocation2 + $0x2a7] sm:$0xff]
    %v1887 = vld [vmem:[#allocation2 + $0x2af] sm:$0xff]
    %v1888 = vld [vmem:[#allocation2 + $0x2c7] sm:$0xff]
    %v1889 = vld [vmem:[#allocation2 + $0x2cf] sm:$0xff]
    %v1890 = vld [vmem:[#allocation2 + $0x2e7] sm:$0xff]
    %v1891 = vld [vmem:[#allocation2 + $0x2ef] sm:$0xff]
    %v1892 = vld [vmem:[#allocation2 + $0x307] sm:$0xff]
    %v1893 = vld [vmem:[#allocation2 + $0x30f] sm:$0xff]
    %v1894 = vld [vmem:[#allocation2 + $0x327] sm:$0xff]
    %v1895 = vld [vmem:[#allocation2 + $0x32f] sm:$0xff]
    %v1896 = vld [vmem:[#allocation2 + $0x347] sm:$0xff]
    %v1897 = vld [vmem:[#allocation2 + $0x34f] sm:$0xff]
    %v1898 = vld [vmem:[#allocation2 + $0x367] sm:$0xff]
    %v1899 = vld [vmem:[#allocation2 + $0x36f] sm:$0xff]
    %v1900 = vld [vmem:[#allocation2 + $0x387] sm:$0xff]
    %v1901 = vld [vmem:[#allocation2 + $0x38f] sm:$0xff]
    %v1902 = vld [vmem:[#allocation2 + $0x3a7] sm:$0xff]
    %v1903 = vld [vmem:[#allocation2 + $0x3af] sm:$0xff]
    %v1904 = vld [vmem:[#allocation2 + $0x3c7] sm:$0xff]
    %v1905 = vld [vmem:[#allocation2 + $0x3cf] sm:$0xff]
    %v1906 = vld [vmem:[#allocation2 + $0x3e7] sm:$0xff]
    %v1907 = vld [vmem:[#allocation2 + $0x3ef] sm:$0xff]
    %v1908 = vld [vmem:[#allocation2 + $0x407] sm:$0xff]
    %v1909 = vld [vmem:[#allocation2 + $0x40f] sm:$0xff]
    %v1910 = vld [vmem:[#allocation2 + $0x427] sm:$0xff]
    %v1911 = vld [vmem:[#allocation2 + $0x42f] sm:$0xff]
    %v1912 = vpack.c.bf16 %v1849, %v1848
    %v1913 = vpack.c.bf16 %v1851, %v1850
    %v1914 = vpack.c.bf16 %v1853, %v1852
    %v1915 = vpack.c.bf16 %v1855, %v1854
    %v1916 = vpack.c.bf16 %v1857, %v1856
    %v1917 = vpack.c.bf16 %v1859, %v1858
    %v1918 = vpack.c.bf16 %v1861, %v1860
    %v1919 = vpack.c.bf16 %v1863, %v1862
    %v1920 = vpack.c.bf16 %v1865, %v1864
    %v1921 = vpack.c.bf16 %v1867, %v1866
    %v1922 = vpack.c.bf16 %v1869, %v1868
    %v1923 = vpack.c.bf16 %v1871, %v1870
    %v1924 = vpack.c.bf16 %v1873, %v1872
    %v1925 = vpack.c.bf16 %v1875, %v1874
    %v1926 = vpack.c.bf16 %v1877, %v1876
    %v1927 = vpack.c.bf16 %v1879, %v1878
    %v1928 = vpack.c.bf16 %v1881, %v1880
    %v1929 = vpack.c.bf16 %v1883, %v1882
    %v1930 = vpack.c.bf16 %v1885, %v1884
    %v1931 = vpack.c.bf16 %v1887, %v1886
    %v1932 = vpack.c.bf16 %v1889, %v1888
    %v1933 = vpack.c.bf16 %v1891, %v1890
    %v1934 = vpack.c.bf16 %v1893, %v1892
    %v1935 = vpack.c.bf16 %v1895, %v1894
    %v1936 = vpack.c.bf16 %v1897, %v1896
    %v1937 = vpack.c.bf16 %v1899, %v1898
    %v1938 = vpack.c.bf16 %v1901, %v1900
    %v1939 = vpack.c.bf16 %v1903, %v1902
    %v1940 = vpack.c.bf16 %v1905, %v1904
    %v1941 = vpack.c.bf16 %v1907, %v1906
    %v1942 = vpack.c.bf16 %v1909, %v1908
    %v1943 = vpack.c.bf16 %v1911, %v1910
    %v1944 = vld [vmem:[#allocation10] sm:$0xf]
    %v1945 = vld [vmem:[#allocation10 + $0x4] sm:$0xf]
    %v1946 = vld [vmem:[#allocation10 + $0x8] sm:$0xf]
    %v1947 = vld [vmem:[#allocation10 + $0xc] sm:$0xf]
    %v1948 = vld [vmem:[#allocation10 + $0x10] sm:$0xf]
    %v1949 = vld [vmem:[#allocation10 + $0x14] sm:$0xf]
    %v1950 = vld [vmem:[#allocation10 + $0x18] sm:$0xf]
    %v1951 = vld [vmem:[#allocation10 + $0x1c] sm:$0xf]
    %v1952 = vld [vmem:[#allocation10 + $0x20] sm:$0xf]
    %v1953 = vld [vmem:[#allocation10 + $0x24] sm:$0xf]
    %v1954 = vld [vmem:[#allocation10 + $0x28] sm:$0xf]
    %v1955 = vld [vmem:[#allocation10 + $0x2c] sm:$0xf]
    %v1956 = vld [vmem:[#allocation10 + $0x30] sm:$0xf]
    %v1957 = vld [vmem:[#allocation10 + $0x34] sm:$0xf]
    %v1958 = vld [vmem:[#allocation10 + $0x38] sm:$0xf]
    %v1959 = vld [vmem:[#allocation10 + $0x3c] sm:$0xf]
    %v1976 = vunpack.c.l.b16 %v1944
    %v1977 = vunpack.c.l.b16 %v1945
    %v1978 = vunpack.c.l.b16 %v1946
    %v1979 = vunpack.c.l.b16 %v1947
    %v1980 = vunpack.c.l.b16 %v1948
    %v1981 = vunpack.c.l.b16 %v1949
    %v1982 = vunpack.c.l.b16 %v1950
    %v1983 = vunpack.c.l.b16 %v1951
    %v1984 = vunpack.c.l.b16 %v1952
    %v1985 = vunpack.c.l.b16 %v1953
    %v1986 = vunpack.c.l.b16 %v1954
    %v1987 = vunpack.c.l.b16 %v1955
    %v1988 = vunpack.c.l.b16 %v1956
    %v1989 = vunpack.c.l.b16 %v1957
    %v1990 = vunpack.c.l.b16 %v1958
    %v1991 = vunpack.c.l.b16 %v1959
    %v1992 = vpack.c.b16 %v1977, %v1976
    %v1993 = vpack.c.b16 %v1979, %v1978
    %v1994 = vpack.c.b16 %v1981, %v1980
    %v1995 = vpack.c.b16 %v1983, %v1982
    %v1996 = vpack.c.b16 %v1985, %v1984
    %v1997 = vpack.c.b16 %v1987, %v1986
    %v1998 = vpack.c.b16 %v1989, %v1988
    %v1999 = vpack.c.b16 %v1991, %v1990
    %2008 = vmatprep.subr.bf16.mxu0 0
    %2009 = vmatpush1.bf16.msra.mxu0 %v1992
    %2010 = vmatprep.subr.bf16.mxu0 0
    %2011 = vmatpush1.bf16.msra.mxu0 %v1993
    %2012 = vmatprep.subr.bf16.mxu0 0
    %2013 = vmatpush1.bf16.msra.mxu0 %v1994
    %2014 = vmatprep.subr.bf16.mxu0 0
    %2015 = vmatpush1.bf16.msra.mxu0 %v1995
    %2016 = vmatprep.subr.bf16.mxu0 0
    %2017 = vmatpush1.bf16.msra.mxu0 %v1996
    %2018 = vmatprep.subr.bf16.mxu0 0
    %2019 = vmatpush1.bf16.msra.mxu0 %v1997
    %2020 = vmatprep.subr.bf16.mxu0 0
    %2021 = vmatpush1.bf16.msra.mxu0 %v1998
    %2022 = vmatprep.subr.bf16.mxu0 0
    %2023 = vmatpush1.bf16.msra.mxu0 %v1999
    %2024 = vmatprep.subr.bf16.mxu0 0
    %2025 = vmatpush1.bf16.msra.mxu0 0
    %2026 = vmatprep.subr.bf16.mxu0 0
    %2027 = vmatpush1.bf16.msra.mxu0 0
    %2028 = vmatprep.subr.bf16.mxu0 0
    %2029 = vmatpush1.bf16.msra.mxu0 0
    %2030 = vmatprep.subr.bf16.mxu0 0
    %2031 = vmatpush1.bf16.msra.mxu0 0
    %2032 = vmatprep.subr.bf16.mxu0 0
    %2033 = vmatpush1.bf16.msra.mxu0 0
    %2034 = vmatprep.subr.bf16.mxu0 0
    %2035 = vmatpush1.bf16.msra.mxu0 0
    %2036 = vmatprep.subr.bf16.mxu0 0
    %2037 = vmatpush1.bf16.msra.mxu0 0
    %2038 = vmatprep.subr.bf16.mxu0 0
    %2039 = vmatpush1.bf16.msra.mxu0 0
    %2040 = vmatprep.mubr.bf16.mxu0 0
    %2041 = vmatmul.mubr.bf16.gmra.mrb[0].mxu0 %v1912
    %v2042 = vpop.f32.mrb[0].mxu0
    %v2043 = vadd.f32 0.0, %v2042
    %v2044 = vpop.f32.mrb[0].mxu0
    %v2045 = vpop.f32.mrb[0].mxu0
    %v2046 = vadd.f32 0.0, %v2045
    %v2047 = vpop.f32.mrb[0].mxu0
    %2048 = vmatprep.mubr.bf16.mxu0 0
    %2049 = vmatmul.mubr.bf16.gmra.mrb[0].mxu0 %v1913
    %v2050 = vpop.f32.mrb[0].mxu0
    %v2051 = vadd.f32 0.0, %v2050
    %v2052 = vpop.f32.mrb[0].mxu0
    %v2053 = vpop.f32.mrb[0].mxu0
    %v2054 = vadd.f32 0.0, %v2053
    %v2055 = vpop.f32.mrb[0].mxu0
    %2056 = vmatprep.mubr.bf16.mxu0 0
    %2057 = vmatmul.mubr.bf16.gmra.mrb[0].mxu0 %v1914
    %v2058 = vpop.f32.mrb[0].mxu0
    %v2059 = vadd.f32 0.0, %v2058
    %v2060 = vpop.f32.mrb[0].mxu0
    %v2061 = vpop.f32.mrb[0].mxu0
    %v2062 = vadd.f32 0.0, %v2061
    %v2063 = vpop.f32.mrb[0].mxu0
    %2064 = vmatprep.mubr.bf16.mxu0 0
    %2065 = vmatmul.mubr.bf16.gmra.mrb[0].mxu0 %v1915
    %v2066 = vpop.f32.mrb[0].mxu0
    %v2067 = vadd.f32 0.0, %v2066
    %v2068 = vpop.f32.mrb[0].mxu0
    %v2069 = vpop.f32.mrb[0].mxu0
    %v2070 = vadd.f32 0.0, %v2069
    %v2071 = vpop.f32.mrb[0].mxu0
    %2072 = vmatprep.mubr.bf16.mxu0 0
    %2073 = vmatmul.mubr.bf16.gmra.mrb[0].mxu0 %v1916
    %v2074 = vpop.f32.mrb[0].mxu0
    %v2075 = vadd.f32 0.0, %v2074
    %v2076 = vpop.f32.mrb[0].mxu0
    %v2077 = vpop.f32.mrb[0].mxu0
    %v2078 = vadd.f32 0.0, %v2077
    %v2079 = vpop.f32.mrb[0].mxu0
    %2080 = vmatprep.mubr.bf16.mxu0 0
    %2081 = vmatmul.mubr.bf16.gmra.mrb[0].mxu0 %v1917
    %v2082 = vpop.f32.mrb[0].mxu0
    %v2083 = vadd.f32 0.0, %v2082
    %v2084 = vpop.f32.mrb[0].mxu0
    %v2085 = vpop.f32.mrb[0].mxu0
    %v2086 = vadd.f32 0.0, %v2085
    %v2087 = vpop.f32.mrb[0].mxu0
    %2088 = vmatprep.mubr.bf16.mxu0 0
    %2089 = vmatmul.mubr.bf16.gmra.mrb[0].mxu0 %v1918
    %v2090 = vpop.f32.mrb[0].mxu0
    %v2091 = vadd.f32 0.0, %v2090
    %v2092 = vpop.f32.mrb[0].mxu0
    %v2093 = vpop.f32.mrb[0].mxu0
    %v2094 = vadd.f32 0.0, %v2093
    %v2095 = vpop.f32.mrb[0].mxu0
    %2096 = vmatprep.mubr.bf16.mxu0 0
    %2097 = vmatmul.mubr.bf16.gmra.mrb[0].mxu0 %v1919
    %v2098 = vpop.f32.mrb[0].mxu0
    %v2099 = vadd.f32 0.0, %v2098
    %v2100 = vpop.f32.mrb[0].mxu0
    %v2101 = vpop.f32.mrb[0].mxu0
    %v2102 = vadd.f32 0.0, %v2101
    %v2103 = vpop.f32.mrb[0].mxu0
    %2104 = vmatprep.mubr.bf16.mxu0 0
    %2105 = vmatmul.mubr.bf16.gmra.mrb[0].mxu0 %v1920
    %v2106 = vpop.f32.mrb[0].mxu0
    %v2107 = vadd.f32 0.0, %v2106
    %v2108 = vpop.f32.mrb[0].mxu0
    %v2109 = vpop.f32.mrb[0].mxu0
    %v2110 = vadd.f32 0.0, %v2109
    %v2111 = vpop.f32.mrb[0].mxu0
    %2112 = vmatprep.mubr.bf16.mxu0 0
    %2113 = vmatmul.mubr.bf16.gmra.mrb[0].mxu0 %v1921
    %v2114 = vpop.f32.mrb[0].mxu0
    %v2115 = vadd.f32 0.0, %v2114
    %v2116 = vpop.f32.mrb[0].mxu0
    %v2117 = vpop.f32.mrb[0].mxu0
    %v2118 = vadd.f32 0.0, %v2117
    %v2119 = vpop.f32.mrb[0].mxu0
    %2120 = vmatprep.mubr.bf16.mxu0 0
    %2121 = vmatmul.mubr.bf16.gmra.mrb[0].mxu0 %v1922
    %v2122 = vpop.f32.mrb[0].mxu0
    %v2123 = vadd.f32 0.0, %v2122
    %v2124 = vpop.f32.mrb[0].mxu0
    %v2125 = vpop.f32.mrb[0].mxu0
    %v2126 = vadd.f32 0.0, %v2125
    %v2127 = vpop.f32.mrb[0].mxu0
    %2128 = vmatprep.mubr.bf16.mxu0 0
    %2129 = vmatmul.mubr.bf16.gmra.mrb[0].mxu0 %v1923
    %v2130 = vpop.f32.mrb[0].mxu0
    %v2131 = vadd.f32 0.0, %v2130
    %v2132 = vpop.f32.mrb[0].mxu0
    %v2133 = vpop.f32.mrb[0].mxu0
    %v2134 = vadd.f32 0.0, %v2133
    %v2135 = vpop.f32.mrb[0].mxu0
    %2136 = vmatprep.mubr.bf16.mxu0 0
    %2137 = vmatmul.mubr.bf16.gmra.mrb[0].mxu0 %v1924
    %v2138 = vpop.f32.mrb[0].mxu0
    %v2139 = vadd.f32 0.0, %v2138
    %v2140 = vpop.f32.mrb[0].mxu0
    %v2141 = vpop.f32.mrb[0].mxu0
    %v2142 = vadd.f32 0.0, %v2141
    %v2143 = vpop.f32.mrb[0].mxu0
    %2144 = vmatprep.mubr.bf16.mxu0 0
    %2145 = vmatmul.mubr.bf16.gmra.mrb[0].mxu0 %v1925
    %v2146 = vpop.f32.mrb[0].mxu0
    %v2147 = vadd.f32 0.0, %v2146
    %v2148 = vpop.f32.mrb[0].mxu0
    %v2149 = vpop.f32.mrb[0].mxu0
    %v2150 = vadd.f32 0.0, %v2149
    %v2151 = vpop.f32.mrb[0].mxu0
    %2152 = vmatprep.mubr.bf16.mxu0 0
    %2153 = vmatmul.mubr.bf16.gmra.mrb[0].mxu0 %v1926
    %v2154 = vpop.f32.mrb[0].mxu0
    %v2155 = vadd.f32 0.0, %v2154
    %v2156 = vpop.f32.mrb[0].mxu0
    %v2157 = vpop.f32.mrb[0].mxu0
    %v2158 = vadd.f32 0.0, %v2157
    %v2159 = vpop.f32.mrb[0].mxu0
    %2160 = vmatprep.mubr.bf16.mxu0 0
    %2161 = vmatmul.mubr.bf16.gmra.mrb[0].mxu0 %v1927
    %v2162 = vpop.f32.mrb[0].mxu0
    %v2163 = vadd.f32 0.0, %v2162
    %v2164 = vpop.f32.mrb[0].mxu0
    %v2165 = vpop.f32.mrb[0].mxu0
    %v2166 = vadd.f32 0.0, %v2165
    %v2167 = vpop.f32.mrb[0].mxu0
    %2168 = vmatprep.mubr.bf16.mxu0 0
    %2169 = vmatmul.mubr.bf16.gmra.mrb[0].mxu0 %v1928
    %v2170 = vpop.f32.mrb[0].mxu0
    %v2171 = vadd.f32 0.0, %v2170
    %v2172 = vpop.f32.mrb[0].mxu0
    %v2173 = vpop.f32.mrb[0].mxu0
    %v2174 = vadd.f32 0.0, %v2173
    %v2175 = vpop.f32.mrb[0].mxu0
    %2176 = vmatprep.mubr.bf16.mxu0 0
    %2177 = vmatmul.mubr.bf16.gmra.mrb[0].mxu0 %v1929
    %v2178 = vpop.f32.mrb[0].mxu0
    %v2179 = vadd.f32 0.0, %v2178
    %v2180 = vpop.f32.mrb[0].mxu0
    %v2181 = vpop.f32.mrb[0].mxu0
    %v2182 = vadd.f32 0.0, %v2181
    %v2183 = vpop.f32.mrb[0].mxu0
    %2184 = vmatprep.mubr.bf16.mxu0 0
    %2185 = vmatmul.mubr.bf16.gmra.mrb[0].mxu0 %v1930
    %v2186 = vpop.f32.mrb[0].mxu0
    %v2187 = vadd.f32 0.0, %v2186
    %v2188 = vpop.f32.mrb[0].mxu0
    %v2189 = vpop.f32.mrb[0].mxu0
    %v2190 = vadd.f32 0.0, %v2189
    %v2191 = vpop.f32.mrb[0].mxu0
    %2192 = vmatprep.mubr.bf16.mxu0 0
    %2193 = vmatmul.mubr.bf16.gmra.mrb[0].mxu0 %v1931
    %v2194 = vpop.f32.mrb[0].mxu0
    %v2195 = vadd.f32 0.0, %v2194
    %v2196 = vpop.f32.mrb[0].mxu0
    %v2197 = vpop.f32.mrb[0].mxu0
    %v2198 = vadd.f32 0.0, %v2197
    %v2199 = vpop.f32.mrb[0].mxu0
    %2200 = vmatprep.mubr.bf16.mxu0 0
    %2201 = vmatmul.mubr.bf16.gmra.mrb[0].mxu0 %v1932
    %v2202 = vpop.f32.mrb[0].mxu0
    %v2203 = vadd.f32 0.0, %v2202
    %v2204 = vpop.f32.mrb[0].mxu0
    %v2205 = vpop.f32.mrb[0].mxu0
    %v2206 = vadd.f32 0.0, %v2205
    %v2207 = vpop.f32.mrb[0].mxu0
    %2208 = vmatprep.mubr.bf16.mxu0 0
    %2209 = vmatmul.mubr.bf16.gmra.mrb[0].mxu0 %v1933
    %v2210 = vpop.f32.mrb[0].mxu0
    %v2211 = vadd.f32 0.0, %v2210
    %v2212 = vpop.f32.mrb[0].mxu0
    %v2213 = vpop.f32.mrb[0].mxu0
    %v2214 = vadd.f32 0.0, %v2213
    %v2215 = vpop.f32.mrb[0].mxu0
    %2216 = vmatprep.mubr.bf16.mxu0 0
    %2217 = vmatmul.mubr.bf16.gmra.mrb[0].mxu0 %v1934
    %v2218 = vpop.f32.mrb[0].mxu0
    %v2219 = vadd.f32 0.0, %v2218
    %v2220 = vpop.f32.mrb[0].mxu0
    %v2221 = vpop.f32.mrb[0].mxu0
    %v2222 = vadd.f32 0.0, %v2221
    %v2223 = vpop.f32.mrb[0].mxu0
    %2224 = vmatprep.mubr.bf16.mxu0 0
    %2225 = vmatmul.mubr.bf16.gmra.mrb[0].mxu0 %v1935
    %v2226 = vpop.f32.mrb[0].mxu0
    %v2227 = vadd.f32 0.0, %v2226
    %v2228 = vpop.f32.mrb[0].mxu0
    %v2229 = vpop.f32.mrb[0].mxu0
    %v2230 = vadd.f32 0.0, %v2229
    %v2231 = vpop.f32.mrb[0].mxu0
    %2232 = vmatprep.mubr.bf16.mxu0 0
    %2233 = vmatmul.mubr.bf16.gmra.mrb[0].mxu0 %v1936
    %v2234 = vpop.f32.mrb[0].mxu0
    %v2235 = vadd.f32 0.0, %v2234
    %v2236 = vpop.f32.mrb[0].mxu0
    %v2237 = vpop.f32.mrb[0].mxu0
    %v2238 = vadd.f32 0.0, %v2237
    %v2239 = vpop.f32.mrb[0].mxu0
    %2240 = vmatprep.mubr.bf16.mxu0 0
    %2241 = vmatmul.mubr.bf16.gmra.mrb[0].mxu0 %v1937
    %v2242 = vpop.f32.mrb[0].mxu0
    %v2243 = vadd.f32 0.0, %v2242
    %v2244 = vpop.f32.mrb[0].mxu0
    %v2245 = vpop.f32.mrb[0].mxu0
    %v2246 = vadd.f32 0.0, %v2245
    %v2247 = vpop.f32.mrb[0].mxu0
    %2248 = vmatprep.mubr.bf16.mxu0 0
    %2249 = vmatmul.mubr.bf16.gmra.mrb[0].mxu0 %v1938
    %v2250 = vpop.f32.mrb[0].mxu0
    %v2251 = vadd.f32 0.0, %v2250
    %v2252 = vpop.f32.mrb[0].mxu0
    %v2253 = vpop.f32.mrb[0].mxu0
    %v2254 = vadd.f32 0.0, %v2253
    %v2255 = vpop.f32.mrb[0].mxu0
    %2256 = vmatprep.mubr.bf16.mxu0 0
    %2257 = vmatmul.mubr.bf16.gmra.mrb[0].mxu0 %v1939
    %v2258 = vpop.f32.mrb[0].mxu0
    %v2259 = vadd.f32 0.0, %v2258
    %v2260 = vpop.f32.mrb[0].mxu0
    %v2261 = vpop.f32.mrb[0].mxu0
    %v2262 = vadd.f32 0.0, %v2261
    %v2263 = vpop.f32.mrb[0].mxu0
    %2264 = vmatprep.mubr.bf16.mxu0 0
    %2265 = vmatmul.mubr.bf16.gmra.mrb[0].mxu0 %v1940
    %v2266 = vpop.f32.mrb[0].mxu0
    %v2267 = vadd.f32 0.0, %v2266
    %v2268 = vpop.f32.mrb[0].mxu0
    %v2269 = vpop.f32.mrb[0].mxu0
    %v2270 = vadd.f32 0.0, %v2269
    %v2271 = vpop.f32.mrb[0].mxu0
    %2272 = vmatprep.mubr.bf16.mxu0 0
    %2273 = vmatmul.mubr.bf16.gmra.mrb[0].mxu0 %v1941
    %v2274 = vpop.f32.mrb[0].mxu0
    %v2275 = vadd.f32 0.0, %v2274
    %v2276 = vpop.f32.mrb[0].mxu0
    %v2277 = vpop.f32.mrb[0].mxu0
    %v2278 = vadd.f32 0.0, %v2277
    %v2279 = vpop.f32.mrb[0].mxu0
    %2280 = vmatprep.mubr.bf16.mxu0 0
    %2281 = vmatmul.mubr.bf16.gmra.mrb[0].mxu0 %v1942
    %v2282 = vpop.f32.mrb[0].mxu0
    %v2283 = vadd.f32 0.0, %v2282
    %v2284 = vpop.f32.mrb[0].mxu0
    %v2285 = vpop.f32.mrb[0].mxu0
    %v2286 = vadd.f32 0.0, %v2285
    %v2287 = vpop.f32.mrb[0].mxu0
    %2288 = vmatprep.mubr.bf16.mxu0 0
    %2289 = vmatmul.mubr.bf16.gmra.mrb[0].mxu0 %v1943
    %v2290 = vpop.f32.mrb[0].mxu0
    %v2291 = vadd.f32 0.0, %v2290
    %v2292 = vpop.f32.mrb[0].mxu0
    %v2293 = vpop.f32.mrb[0].mxu0
    %v2294 = vadd.f32 0.0, %v2293
    %v2295 = vpop.f32.mrb[0].mxu0
    %2296 = vdwg.mxu0
    %2297 = vst [vmem:[#allocation3] sm:$0xff] %v2043
    %2298 = vst [vmem:[#allocation3 + $0x8] sm:$0xff] %v2046
    %2299 = vst [vmem:[#allocation3 + $0x10] sm:$0xff] %v2051
    %2300 = vst [vmem:[#allocation3 + $0x18] sm:$0xff] %v2054
    %2301 = vst [vmem:[#allocation3 + $0x20] sm:$0xff] %v2059
    %2302 = vst [vmem:[#allocation3 + $0x28] sm:$0xff] %v2062
    %2303 = vst [vmem:[#allocation3 + $0x30] sm:$0xff] %v2067
    %2304 = vst [vmem:[#allocation3 + $0x38] sm:$0xff] %v2070
    %2305 = vst [vmem:[#allocation3 + $0x40] sm:$0xff] %v2075
    %2306 = vst [vmem:[#allocation3 + $0x48] sm:$0xff] %v2078
    %2307 = vst [vmem:[#allocation3 + $0x50] sm:$0xff] %v2083
    %2308 = vst [vmem:[#allocation3 + $0x58] sm:$0xff] %v2086
    %2309 = vst [vmem:[#allocation3 + $0x60] sm:$0xff] %v2091
    %2310 = vst [vmem:[#allocation3 + $0x68] sm:$0xff] %v2094
    %2311 = vst [vmem:[#allocation3 + $0x70] sm:$0xff] %v2099
    %2312 = vst [vmem:[#allocation3 + $0x78] sm:$0xff] %v2102
    %2313 = vst [vmem:[#allocation3 + $0x80] sm:$0xff] %v2107
    %2314 = vst [vmem:[#allocation3 + $0x88] sm:$0xff] %v2110
    %2315 = vst [vmem:[#allocation3 + $0x90] sm:$0xff] %v2115
    %2316 = vst [vmem:[#allocation3 + $0x98] sm:$0xff] %v2118
    %2317 = vst [vmem:[#allocation3 + $0xa0] sm:$0xff] %v2123
    %2318 = vst [vmem:[#allocation3 + $0xa8] sm:$0xff] %v2126
    %2319 = vst [vmem:[#allocation3 + $0xb0] sm:$0xff] %v2131
    %2320 = vst [vmem:[#allocation3 + $0xb8] sm:$0xff] %v2134
    %2321 = vst [vmem:[#allocation3 + $0xc0] sm:$0xff] %v2139
    %2322 = vst [vmem:[#allocation3 + $0xc8] sm:$0xff] %v2142
    %2323 = vst [vmem:[#allocation3 + $0xd0] sm:$0xff] %v2147
    %2324 = vst [vmem:[#allocation3 + $0xd8] sm:$0xff] %v2150
    %2325 = vst [vmem:[#allocation3 + $0xe0] sm:$0xff] %v2155
    %2326 = vst [vmem:[#allocation3 + $0xe8] sm:$0xff] %v2158
    %2327 = vst [vmem:[#allocation3 + $0xf0] sm:$0xff] %v2163
    %2328 = vst [vmem:[#allocation3 + $0xf8] sm:$0xff] %v2166
    %2329 = vst [vmem:[#allocation3 + $0x100] sm:$0xff] %v2171
    %2330 = vst [vmem:[#allocation3 + $0x108] sm:$0xff] %v2174
    %2331 = vst [vmem:[#allocation3 + $0x110] sm:$0xff] %v2179
    %2332 = vst [vmem:[#allocation3 + $0x118] sm:$0xff] %v2182
    %2333 = vst [vmem:[#allocation3 + $0x120] sm:$0xff] %v2187
    %2334 = vst [vmem:[#allocation3 + $0x128] sm:$0xff] %v2190
    %2335 = vst [vmem:[#allocation3 + $0x130] sm:$0xff] %v2195
    %2336 = vst [vmem:[#allocation3 + $0x138] sm:$0xff] %v2198
    %2337 = vst [vmem:[#allocation3 + $0x140] sm:$0xff] %v2203
    %2338 = vst [vmem:[#allocation3 + $0x148] sm:$0xff] %v2206
    %2339 = vst [vmem:[#allocation3 + $0x150] sm:$0xff] %v2211
    %2340 = vst [vmem:[#allocation3 + $0x158] sm:$0xff] %v2214
    %2341 = vst [vmem:[#allocation3 + $0x160] sm:$0xff] %v2219
    %2342 = vst [vmem:[#allocation3 + $0x168] sm:$0xff] %v2222
    %2343 = vst [vmem:[#allocation3 + $0x170] sm:$0xff] %v2227
    %2344 = vst [vmem:[#allocation3 + $0x178] sm:$0xff] %v2230
    %2345 = vst [vmem:[#allocation3 + $0x180] sm:$0xff] %v2235
    %2346 = vst [vmem:[#allocation3 + $0x188] sm:$0xff] %v2238
    %2347 = vst [vmem:[#allocation3 + $0x190] sm:$0xff] %v2243
    %2348 = vst [vmem:[#allocation3 + $0x198] sm:$0xff] %v2246
    %2349 = vst [vmem:[#allocation3 + $0x1a0] sm:$0xff] %v2251
    %2350 = vst [vmem:[#allocation3 + $0x1a8] sm:$0xff] %v2254
    %2351 = vst [vmem:[#allocation3 + $0x1b0] sm:$0xff] %v2259
    %2352 = vst [vmem:[#allocation3 + $0x1b8] sm:$0xff] %v2262
    %2353 = vst [vmem:[#allocation3 + $0x1c0] sm:$0xff] %v2267
    %2354 = vst [vmem:[#allocation3 + $0x1c8] sm:$0xff] %v2270
    %2355 = vst [vmem:[#allocation3 + $0x1d0] sm:$0xff] %v2275
    %2356 = vst [vmem:[#allocation3 + $0x1d8] sm:$0xff] %v2278
    %2357 = vst [vmem:[#allocation3 + $0x1e0] sm:$0xff] %v2283
    %2358 = vst [vmem:[#allocation3 + $0x1e8] sm:$0xff] %v2286
    %2359 = vst [vmem:[#allocation3 + $0x1f0] sm:$0xff] %v2291
    %2360 = vst [vmem:[#allocation3 + $0x1f8] sm:$0xff] %v2294
    %v2361 = vld [vmem:[#allocation2 + $0x8] sm:$0xff]
    %v2362 = vld [vmem:[#allocation2 + $0x10] sm:$0xff]
    %v2363 = vld [vmem:[#allocation2 + $0x28] sm:$0xff]
    %v2364 = vld [vmem:[#allocation2 + $0x30] sm:$0xff]
    %v2365 = vld [vmem:[#allocation2 + $0x48] sm:$0xff]
    %v2366 = vld [vmem:[#allocation2 + $0x50] sm:$0xff]
    %v2367 = vld [vmem:[#allocation2 + $0x68] sm:$0xff]
    %v2368 = vld [vmem:[#allocation2 + $0x70] sm:$0xff]
    %v2369 = vld [vmem:[#allocation2 + $0x88] sm:$0xff]
    %v2370 = vld [vmem:[#allocation2 + $0x90] sm:$0xff]
    %v2371 = vld [vmem:[#allocation2 + $0xa8] sm:$0xff]
    %v2372 = vld [vmem:[#allocation2 + $0xb0] sm:$0xff]
    %v2373 = vld [vmem:[#allocation2 + $0xc8] sm:$0xff]
    %v2374 = vld [vmem:[#allocation2 + $0xd0] sm:$0xff]
    %v2375 = vld [vmem:[#allocation2 + $0xe8] sm:$0xff]
    %v2376 = vld [vmem:[#allocation2 + $0xf0] sm:$0xff]
    %v2377 = vld [vmem:[#allocation2 + $0x108] sm:$0xff]
    %v2378 = vld [vmem:[#allocation2 + $0x110] sm:$0xff]
    %v2379 = vld [vmem:[#allocation2 + $0x128] sm:$0xff]
    %v2380 = vld [vmem:[#allocation2 + $0x130] sm:$0xff]
    %v2381 = vld [vmem:[#allocation2 + $0x148] sm:$0xff]
    %v2382 = vld [vmem:[#allocation2 + $0x150] sm:$0xff]
    %v2383 = vld [vmem:[#allocation2 + $0x168] sm:$0xff]
    %v2384 = vld [vmem:[#allocation2 + $0x170] sm:$0xff]
    %v2385 = vld [vmem:[#allocation2 + $0x188] sm:$0xff]
    %v2386 = vld [vmem:[#allocation2 + $0x190] sm:$0xff]
    %v2387 = vld [vmem:[#allocation2 + $0x1a8] sm:$0xff]
    %v2388 = vld [vmem:[#allocation2 + $0x1b0] sm:$0xff]
    %v2389 = vld [vmem:[#allocation2 + $0x1c8] sm:$0xff]
    %v2390 = vld [vmem:[#allocation2 + $0x1d0] sm:$0xff]
    %v2391 = vld [vmem:[#allocation2 + $0x1e8] sm:$0xff]
    %v2392 = vld [vmem:[#allocation2 + $0x1f0] sm:$0xff]
    %v2393 = vld [vmem:[#allocation2 + $0x248] sm:$0xff]
    %v2394 = vld [vmem:[#allocation2 + $0x250] sm:$0xff]
    %v2395 = vld [vmem:[#allocation2 + $0x268] sm:$0xff]
    %v2396 = vld [vmem:[#allocation2 + $0x270] sm:$0xff]
    %v2397 = vld [vmem:[#allocation2 + $0x288] sm:$0xff]
    %v2398 = vld [vmem:[#allocation2 + $0x290] sm:$0xff]
    %v2399 = vld [vmem:[#allocation2 + $0x2a8] sm:$0xff]
    %v2400 = vld [vmem:[#allocation2 + $0x2b0] sm:$0xff]
    %v2401 = vld [vmem:[#allocation2 + $0x2c8] sm:$0xff]
    %v2402 = vld [vmem:[#allocation2 + $0x2d0] sm:$0xff]
    %v2403 = vld [vmem:[#allocation2 + $0x2e8] sm:$0xff]
    %v2404 = vld [vmem:[#allocation2 + $0x2f0] sm:$0xff]
    %v2405 = vld [vmem:[#allocation2 + $0x308] sm:$0xff]
    %v2406 = vld [vmem:[#allocation2 + $0x310] sm:$0xff]
    %v2407 = vld [vmem:[#allocation2 + $0x328] sm:$0xff]
    %v2408 = vld [vmem:[#allocation2 + $0x330] sm:$0xff]
    %v2409 = vld [vmem:[#allocation2 + $0x348] sm:$0xff]
    %v2410 = vld [vmem:[#allocation2 + $0x350] sm:$0xff]
    %v2411 = vld [vmem:[#allocation2 + $0x368] sm:$0xff]
    %v2412 = vld [vmem:[#allocation2 + $0x370] sm:$0xff]
    %v2413 = vld [vmem:[#allocation2 + $0x388] sm:$0xff]
    %v2414 = vld [vmem:[#allocation2 + $0x390] sm:$0xff]
    %v2415 = vld [vmem:[#allocation2 + $0x3a8] sm:$0xff]
    %v2416 = vld [vmem:[#allocation2 + $0x3b0] sm:$0xff]
    %v2417 = vld [vmem:[#allocation2 + $0x3c8] sm:$0xff]
    %v2418 = vld [vmem:[#allocation2 + $0x3d0] sm:$0xff]
    %v2419 = vld [vmem:[#allocation2 + $0x3e8] sm:$0xff]
    %v2420 = vld [vmem:[#allocation2 + $0x3f0] sm:$0xff]
    %v2421 = vld [vmem:[#allocation2 + $0x408] sm:$0xff]
    %v2422 = vld [vmem:[#allocation2 + $0x410] sm:$0xff]
    %v2423 = vld [vmem:[#allocation2 + $0x428] sm:$0xff]
    %v2424 = vld [vmem:[#allocation2 + $0x430] sm:$0xff]
    %v2425 = vpack.c.bf16 %v2362, %v2361
    %v2426 = vpack.c.bf16 %v2364, %v2363
    %v2427 = vpack.c.bf16 %v2366, %v2365
    %v2428 = vpack.c.bf16 %v2368, %v2367
    %v2429 = vpack.c.bf16 %v2370, %v2369
    %v2430 = vpack.c.bf16 %v2372, %v2371
    %v2431 = vpack.c.bf16 %v2374, %v2373
    %v2432 = vpack.c.bf16 %v2376, %v2375
    %v2433 = vpack.c.bf16 %v2378, %v2377
    %v2434 = vpack.c.bf16 %v2380, %v2379
    %v2435 = vpack.c.bf16 %v2382, %v2381
    %v2436 = vpack.c.bf16 %v2384, %v2383
    %v2437 = vpack.c.bf16 %v2386, %v2385
    %v2438 = vpack.c.bf16 %v2388, %v2387
    %v2439 = vpack.c.bf16 %v2390, %v2389
    %v2440 = vpack.c.bf16 %v2392, %v2391
    %v2441 = vpack.c.bf16 %v2394, %v2393
    %v2442 = vpack.c.bf16 %v2396, %v2395
    %v2443 = vpack.c.bf16 %v2398, %v2397
    %v2444 = vpack.c.bf16 %v2400, %v2399
    %v2445 = vpack.c.bf16 %v2402, %v2401
    %v2446 = vpack.c.bf16 %v2404, %v2403
    %v2447 = vpack.c.bf16 %v2406, %v2405
    %v2448 = vpack.c.bf16 %v2408, %v2407
    %v2449 = vpack.c.bf16 %v2410, %v2409
    %v2450 = vpack.c.bf16 %v2412, %v2411
    %v2451 = vpack.c.bf16 %v2414, %v2413
    %v2452 = vpack.c.bf16 %v2416, %v2415
    %v2453 = vpack.c.bf16 %v2418, %v2417
    %v2454 = vpack.c.bf16 %v2420, %v2419
    %v2455 = vpack.c.bf16 %v2422, %v2421
    %v2456 = vpack.c.bf16 %v2424, %v2423
    %s2457 = scalar_lea.vmem [#allocation10], 64
    %v2458 = vld [vmem:[%s2457] sm:$0xf]
    %v2459 = vld [vmem:[%s2457 + $0x4] sm:$0xf]
    %v2460 = vld [vmem:[%s2457 + $0x8] sm:$0xf]
    %v2461 = vld [vmem:[%s2457 + $0xc] sm:$0xf]
    %v2462 = vld [vmem:[%s2457 + $0x10] sm:$0xf]
    %v2463 = vld [vmem:[%s2457 + $0x14] sm:$0xf]
    %v2464 = vld [vmem:[%s2457 + $0x18] sm:$0xf]
    %v2465 = vld [vmem:[%s2457 + $0x1c] sm:$0xf]
    %v2466 = vld [vmem:[%s2457 + $0x20] sm:$0xf]
    %v2467 = vld [vmem:[%s2457 + $0x24] sm:$0xf]
    %v2468 = vld [vmem:[%s2457 + $0x28] sm:$0xf]
    %v2469 = vld [vmem:[%s2457 + $0x2c] sm:$0xf]
    %v2470 = vld [vmem:[%s2457 + $0x30] sm:$0xf]
    %v2471 = vld [vmem:[%s2457 + $0x34] sm:$0xf]
    %v2472 = vld [vmem:[%s2457 + $0x38] sm:$0xf]
    %v2473 = vld [vmem:[%s2457 + $0x3c] sm:$0xf]
    %v2490 = vunpack.c.l.b16 %v2458
    %v2491 = vunpack.c.l.b16 %v2459
    %v2492 = vunpack.c.l.b16 %v2460
    %v2493 = vunpack.c.l.b16 %v2461
    %v2494 = vunpack.c.l.b16 %v2462
    %v2495 = vunpack.c.l.b16 %v2463
    %v2496 = vunpack.c.l.b16 %v2464
    %v2497 = vunpack.c.l.b16 %v2465
    %v2498 = vunpack.c.l.b16 %v2466
    %v2499 = vunpack.c.l.b16 %v2467
    %v2500 = vunpack.c.l.b16 %v2468
    %v2501 = vunpack.c.l.b16 %v2469
    %v2502 = vunpack.c.l.b16 %v2470
    %v2503 = vunpack.c.l.b16 %v2471
    %v2504 = vunpack.c.l.b16 %v2472
    %v2505 = vunpack.c.l.b16 %v2473
    %v2506 = vpack.c.b16 %v2491, %v2490
    %v2507 = vpack.c.b16 %v2493, %v2492
    %v2508 = vpack.c.b16 %v2495, %v2494
    %v2509 = vpack.c.b16 %v2497, %v2496
    %v2510 = vpack.c.b16 %v2499, %v2498
    %v2511 = vpack.c.b16 %v2501, %v2500
    %v2512 = vpack.c.b16 %v2503, %v2502
    %v2513 = vpack.c.b16 %v2505, %v2504
    %2522 = vmatprep.subr.bf16.mxu0 0
    %2523 = vmatpush1.bf16.msra.mxu0 %v2506
    %2524 = vmatprep.subr.bf16.mxu0 0
    %2525 = vmatpush1.bf16.msra.mxu0 %v2507
    %2526 = vmatprep.subr.bf16.mxu0 0
    %2527 = vmatpush1.bf16.msra.mxu0 %v2508
    %2528 = vmatprep.subr.bf16.mxu0 0
    %2529 = vmatpush1.bf16.msra.mxu0 %v2509
    %2530 = vmatprep.subr.bf16.mxu0 0
    %2531 = vmatpush1.bf16.msra.mxu0 %v2510
    %2532 = vmatprep.subr.bf16.mxu0 0
    %2533 = vmatpush1.bf16.msra.mxu0 %v2511
    %2534 = vmatprep.subr.bf16.mxu0 0
    %2535 = vmatpush1.bf16.msra.mxu0 %v2512
    %2536 = vmatprep.subr.bf16.mxu0 0
    %2537 = vmatpush1.bf16.msra.mxu0 %v2513
    %2538 = vmatprep.subr.bf16.mxu0 0
    %2539 = vmatpush1.bf16.msra.mxu0 0
    %2540 = vmatprep.subr.bf16.mxu0 0
    %2541 = vmatpush1.bf16.msra.mxu0 0
    %2542 = vmatprep.subr.bf16.mxu0 0
    %2543 = vmatpush1.bf16.msra.mxu0 0
    %2544 = vmatprep.subr.bf16.mxu0 0
    %2545 = vmatpush1.bf16.msra.mxu0 0
    %2546 = vmatprep.subr.bf16.mxu0 0
    %2547 = vmatpush1.bf16.msra.mxu0 0
    %2548 = vmatprep.subr.bf16.mxu0 0
    %2549 = vmatpush1.bf16.msra.mxu0 0
    %2550 = vmatprep.subr.bf16.mxu0 0
    %2551 = vmatpush1.bf16.msra.mxu0 0
    %2552 = vmatprep.subr.bf16.mxu0 0
    %2553 = vmatpush1.bf16.msra.mxu0 0
    %2554 = vmatprep.mubr.bf16.mxu0 0
    %2555 = vmatmul.mubr.bf16.gmra.mrb[0].mxu0 %v2425
    %v2556 = vpop.f32.mrb[0].mxu0
    %v2557 = vadd.f32 0.0, %v2556
    %v2558 = vpop.f32.mrb[0].mxu0
    %v2559 = vpop.f32.mrb[0].mxu0
    %v2560 = vadd.f32 0.0, %v2559
    %v2561 = vpop.f32.mrb[0].mxu0
    %2562 = vmatprep.mubr.bf16.mxu0 0
    %2563 = vmatmul.mubr.bf16.gmra.mrb[0].mxu0 %v2426
    %v2564 = vpop.f32.mrb[0].mxu0
    %v2565 = vadd.f32 0.0, %v2564
    %v2566 = vpop.f32.mrb[0].mxu0
    %v2567 = vpop.f32.mrb[0].mxu0
    %v2568 = vadd.f32 0.0, %v2567
    %v2569 = vpop.f32.mrb[0].mxu0
    %2570 = vmatprep.mubr.bf16.mxu0 0
    %2571 = vmatmul.mubr.bf16.gmra.mrb[0].mxu0 %v2427
    %v2572 = vpop.f32.mrb[0].mxu0
    %v2573 = vadd.f32 0.0, %v2572
    %v2574 = vpop.f32.mrb[0].mxu0
    %v2575 = vpop.f32.mrb[0].mxu0
    %v2576 = vadd.f32 0.0, %v2575
    %v2577 = vpop.f32.mrb[0].mxu0
    %2578 = vmatprep.mubr.bf16.mxu0 0
    %2579 = vmatmul.mubr.bf16.gmra.mrb[0].mxu0 %v2428
    %v2580 = vpop.f32.mrb[0].mxu0
    %v2581 = vadd.f32 0.0, %v2580
    %v2582 = vpop.f32.mrb[0].mxu0
    %v2583 = vpop.f32.mrb[0].mxu0
    %v2584 = vadd.f32 0.0, %v2583
    %v2585 = vpop.f32.mrb[0].mxu0
    %2586 = vmatprep.mubr.bf16.mxu0 0
    %2587 = vmatmul.mubr.bf16.gmra.mrb[0].mxu0 %v2429
    %v2588 = vpop.f32.mrb[0].mxu0
    %v2589 = vadd.f32 0.0, %v2588
    %v2590 = vpop.f32.mrb[0].mxu0
    %v2591 = vpop.f32.mrb[0].mxu0
    %v2592 = vadd.f32 0.0, %v2591
    %v2593 = vpop.f32.mrb[0].mxu0
    %2594 = vmatprep.mubr.bf16.mxu0 0
    %2595 = vmatmul.mubr.bf16.gmra.mrb[0].mxu0 %v2430
    %v2596 = vpop.f32.mrb[0].mxu0
    %v2597 = vadd.f32 0.0, %v2596
    %v2598 = vpop.f32.mrb[0].mxu0
    %v2599 = vpop.f32.mrb[0].mxu0
    %v2600 = vadd.f32 0.0, %v2599
    %v2601 = vpop.f32.mrb[0].mxu0
    %2602 = vmatprep.mubr.bf16.mxu0 0
    %2603 = vmatmul.mubr.bf16.gmra.mrb[0].mxu0 %v2431
    %v2604 = vpop.f32.mrb[0].mxu0
    %v2605 = vadd.f32 0.0, %v2604
    %v2606 = vpop.f32.mrb[0].mxu0
    %v2607 = vpop.f32.mrb[0].mxu0
    %v2608 = vadd.f32 0.0, %v2607
    %v2609 = vpop.f32.mrb[0].mxu0
    %2610 = vmatprep.mubr.bf16.mxu0 0
    %2611 = vmatmul.mubr.bf16.gmra.mrb[0].mxu0 %v2432
    %v2612 = vpop.f32.mrb[0].mxu0
    %v2613 = vadd.f32 0.0, %v2612
    %v2614 = vpop.f32.mrb[0].mxu0
    %v2615 = vpop.f32.mrb[0].mxu0
    %v2616 = vadd.f32 0.0, %v2615
    %v2617 = vpop.f32.mrb[0].mxu0
    %2618 = vmatprep.mubr.bf16.mxu0 0
    %2619 = vmatmul.mubr.bf16.gmra.mrb[0].mxu0 %v2433
    %v2620 = vpop.f32.mrb[0].mxu0
    %v2621 = vadd.f32 0.0, %v2620
    %v2622 = vpop.f32.mrb[0].mxu0
    %v2623 = vpop.f32.mrb[0].mxu0
    %v2624 = vadd.f32 0.0, %v2623
    %v2625 = vpop.f32.mrb[0].mxu0
    %2626 = vmatprep.mubr.bf16.mxu0 0
    %2627 = vmatmul.mubr.bf16.gmra.mrb[0].mxu0 %v2434
    %v2628 = vpop.f32.mrb[0].mxu0
    %v2629 = vadd.f32 0.0, %v2628
    %v2630 = vpop.f32.mrb[0].mxu0
    %v2631 = vpop.f32.mrb[0].mxu0
    %v2632 = vadd.f32 0.0, %v2631
    %v2633 = vpop.f32.mrb[0].mxu0
    %2634 = vmatprep.mubr.bf16.mxu0 0
    %2635 = vmatmul.mubr.bf16.gmra.mrb[0].mxu0 %v2435
    %v2636 = vpop.f32.mrb[0].mxu0
    %v2637 = vadd.f32 0.0, %v2636
    %v2638 = vpop.f32.mrb[0].mxu0
    %v2639 = vpop.f32.mrb[0].mxu0
    %v2640 = vadd.f32 0.0, %v2639
    %v2641 = vpop.f32.mrb[0].mxu0
    %2642 = vmatprep.mubr.bf16.mxu0 0
    %2643 = vmatmul.mubr.bf16.gmra.mrb[0].mxu0 %v2436
    %v2644 = vpop.f32.mrb[0].mxu0
    %v2645 = vadd.f32 0.0, %v2644
    %v2646 = vpop.f32.mrb[0].mxu0
    %v2647 = vpop.f32.mrb[0].mxu0
    %v2648 = vadd.f32 0.0, %v2647
    %v2649 = vpop.f32.mrb[0].mxu0
    %2650 = vmatprep.mubr.bf16.mxu0 0
    %2651 = vmatmul.mubr.bf16.gmra.mrb[0].mxu0 %v2437
    %v2652 = vpop.f32.mrb[0].mxu0
    %v2653 = vadd.f32 0.0, %v2652
    %v2654 = vpop.f32.mrb[0].mxu0
    %v2655 = vpop.f32.mrb[0].mxu0
    %v2656 = vadd.f32 0.0, %v2655
    %v2657 = vpop.f32.mrb[0].mxu0
    %2658 = vmatprep.mubr.bf16.mxu0 0
    %2659 = vmatmul.mubr.bf16.gmra.mrb[0].mxu0 %v2438
    %v2660 = vpop.f32.mrb[0].mxu0
    %v2661 = vadd.f32 0.0, %v2660
    %v2662 = vpop.f32.mrb[0].mxu0
    %v2663 = vpop.f32.mrb[0].mxu0
    %v2664 = vadd.f32 0.0, %v2663
    %v2665 = vpop.f32.mrb[0].mxu0
    %2666 = vmatprep.mubr.bf16.mxu0 0
    %2667 = vmatmul.mubr.bf16.gmra.mrb[0].mxu0 %v2439
    %v2668 = vpop.f32.mrb[0].mxu0
    %v2669 = vadd.f32 0.0, %v2668
    %v2670 = vpop.f32.mrb[0].mxu0
    %v2671 = vpop.f32.mrb[0].mxu0
    %v2672 = vadd.f32 0.0, %v2671
    %v2673 = vpop.f32.mrb[0].mxu0
    %2674 = vmatprep.mubr.bf16.mxu0 0
    %2675 = vmatmul.mubr.bf16.gmra.mrb[0].mxu0 %v2440
    %v2676 = vpop.f32.mrb[0].mxu0
    %v2677 = vadd.f32 0.0, %v2676
    %v2678 = vpop.f32.mrb[0].mxu0
    %v2679 = vpop.f32.mrb[0].mxu0
    %v2680 = vadd.f32 0.0, %v2679
    %v2681 = vpop.f32.mrb[0].mxu0
    %2682 = vmatprep.mubr.bf16.mxu0 0
    %2683 = vmatmul.mubr.bf16.gmra.mrb[0].mxu0 %v2441
    %v2684 = vpop.f32.mrb[0].mxu0
    %v2685 = vadd.f32 0.0, %v2684
    %v2686 = vpop.f32.mrb[0].mxu0
    %v2687 = vpop.f32.mrb[0].mxu0
    %v2688 = vadd.f32 0.0, %v2687
    %v2689 = vpop.f32.mrb[0].mxu0
    %2690 = vmatprep.mubr.bf16.mxu0 0
    %2691 = vmatmul.mubr.bf16.gmra.mrb[0].mxu0 %v2442
    %v2692 = vpop.f32.mrb[0].mxu0
    %v2693 = vadd.f32 0.0, %v2692
    %v2694 = vpop.f32.mrb[0].mxu0
    %v2695 = vpop.f32.mrb[0].mxu0
    %v2696 = vadd.f32 0.0, %v2695
    %v2697 = vpop.f32.mrb[0].mxu0
    %2698 = vmatprep.mubr.bf16.mxu0 0
    %2699 = vmatmul.mubr.bf16.gmra.mrb[0].mxu0 %v2443
    %v2700 = vpop.f32.mrb[0].mxu0
    %v2701 = vadd.f32 0.0, %v2700
    %v2702 = vpop.f32.mrb[0].mxu0
    %v2703 = vpop.f32.mrb[0].mxu0
    %v2704 = vadd.f32 0.0, %v2703
    %v2705 = vpop.f32.mrb[0].mxu0
    %2706 = vmatprep.mubr.bf16.mxu0 0
    %2707 = vmatmul.mubr.bf16.gmra.mrb[0].mxu0 %v2444
    %v2708 = vpop.f32.mrb[0].mxu0
    %v2709 = vadd.f32 0.0, %v2708
    %v2710 = vpop.f32.mrb[0].mxu0
    %v2711 = vpop.f32.mrb[0].mxu0
    %v2712 = vadd.f32 0.0, %v2711
    %v2713 = vpop.f32.mrb[0].mxu0
    %2714 = vmatprep.mubr.bf16.mxu0 0
    %2715 = vmatmul.mubr.bf16.gmra.mrb[0].mxu0 %v2445
    %v2716 = vpop.f32.mrb[0].mxu0
    %v2717 = vadd.f32 0.0, %v2716
    %v2718 = vpop.f32.mrb[0].mxu0
    %v2719 = vpop.f32.mrb[0].mxu0
    %v2720 = vadd.f32 0.0, %v2719
    %v2721 = vpop.f32.mrb[0].mxu0
    %2722 = vmatprep.mubr.bf16.mxu0 0
    %2723 = vmatmul.mubr.bf16.gmra.mrb[0].mxu0 %v2446
    %v2724 = vpop.f32.mrb[0].mxu0
    %v2725 = vadd.f32 0.0, %v2724
    %v2726 = vpop.f32.mrb[0].mxu0
    %v2727 = vpop.f32.mrb[0].mxu0
    %v2728 = vadd.f32 0.0, %v2727
    %v2729 = vpop.f32.mrb[0].mxu0
    %2730 = vmatprep.mubr.bf16.mxu0 0
    %2731 = vmatmul.mubr.bf16.gmra.mrb[0].mxu0 %v2447
    %v2732 = vpop.f32.mrb[0].mxu0
    %v2733 = vadd.f32 0.0, %v2732
    %v2734 = vpop.f32.mrb[0].mxu0
    %v2735 = vpop.f32.mrb[0].mxu0
    %v2736 = vadd.f32 0.0, %v2735
    %v2737 = vpop.f32.mrb[0].mxu0
    %2738 = vmatprep.mubr.bf16.mxu0 0
    %2739 = vmatmul.mubr.bf16.gmra.mrb[0].mxu0 %v2448
    %v2740 = vpop.f32.mrb[0].mxu0
    %v2741 = vadd.f32 0.0, %v2740
    %v2742 = vpop.f32.mrb[0].mxu0
    %v2743 = vpop.f32.mrb[0].mxu0
    %v2744 = vadd.f32 0.0, %v2743
    %v2745 = vpop.f32.mrb[0].mxu0
    %2746 = vmatprep.mubr.bf16.mxu0 0
    %2747 = vmatmul.mubr.bf16.gmra.mrb[0].mxu0 %v2449
    %v2748 = vpop.f32.mrb[0].mxu0
    %v2749 = vadd.f32 0.0, %v2748
    %v2750 = vpop.f32.mrb[0].mxu0
    %v2751 = vpop.f32.mrb[0].mxu0
    %v2752 = vadd.f32 0.0, %v2751
    %v2753 = vpop.f32.mrb[0].mxu0
    %2754 = vmatprep.mubr.bf16.mxu0 0
    %2755 = vmatmul.mubr.bf16.gmra.mrb[0].mxu0 %v2450
    %v2756 = vpop.f32.mrb[0].mxu0
    %v2757 = vadd.f32 0.0, %v2756
    %v2758 = vpop.f32.mrb[0].mxu0
    %v2759 = vpop.f32.mrb[0].mxu0
    %v2760 = vadd.f32 0.0, %v2759
    %v2761 = vpop.f32.mrb[0].mxu0
    %2762 = vmatprep.mubr.bf16.mxu0 0
    %2763 = vmatmul.mubr.bf16.gmra.mrb[0].mxu0 %v2451
    %v2764 = vpop.f32.mrb[0].mxu0
    %v2765 = vadd.f32 0.0, %v2764
    %v2766 = vpop.f32.mrb[0].mxu0
    %v2767 = vpop.f32.mrb[0].mxu0
    %v2768 = vadd.f32 0.0, %v2767
    %v2769 = vpop.f32.mrb[0].mxu0
    %2770 = vmatprep.mubr.bf16.mxu0 0
    %2771 = vmatmul.mubr.bf16.gmra.mrb[0].mxu0 %v2452
    %v2772 = vpop.f32.mrb[0].mxu0
    %v2773 = vadd.f32 0.0, %v2772
    %v2774 = vpop.f32.mrb[0].mxu0
    %v2775 = vpop.f32.mrb[0].mxu0
    %v2776 = vadd.f32 0.0, %v2775
    %v2777 = vpop.f32.mrb[0].mxu0
    %2778 = vmatprep.mubr.bf16.mxu0 0
    %2779 = vmatmul.mubr.bf16.gmra.mrb[0].mxu0 %v2453
    %v2780 = vpop.f32.mrb[0].mxu0
    %v2781 = vadd.f32 0.0, %v2780
    %v2782 = vpop.f32.mrb[0].mxu0
    %v2783 = vpop.f32.mrb[0].mxu0
    %v2784 = vadd.f32 0.0, %v2783
    %v2785 = vpop.f32.mrb[0].mxu0
    %2786 = vmatprep.mubr.bf16.mxu0 0
    %2787 = vmatmul.mubr.bf16.gmra.mrb[0].mxu0 %v2454
    %v2788 = vpop.f32.mrb[0].mxu0
    %v2789 = vadd.f32 0.0, %v2788
    %v2790 = vpop.f32.mrb[0].mxu0
    %v2791 = vpop.f32.mrb[0].mxu0
    %v2792 = vadd.f32 0.0, %v2791
    %v2793 = vpop.f32.mrb[0].mxu0
    %2794 = vmatprep.mubr.bf16.mxu0 0
    %2795 = vmatmul.mubr.bf16.gmra.mrb[0].mxu0 %v2455
    %v2796 = vpop.f32.mrb[0].mxu0
    %v2797 = vadd.f32 0.0, %v2796
    %v2798 = vpop.f32.mrb[0].mxu0
    %v2799 = vpop.f32.mrb[0].mxu0
    %v2800 = vadd.f32 0.0, %v2799
    %v2801 = vpop.f32.mrb[0].mxu0
    %2802 = vmatprep.mubr.bf16.mxu0 0
    %2803 = vmatmul.mubr.bf16.gmra.mrb[0].mxu0 %v2456
    %v2804 = vpop.f32.mrb[0].mxu0
    %v2805 = vadd.f32 0.0, %v2804
    %v2806 = vpop.f32.mrb[0].mxu0
    %v2807 = vpop.f32.mrb[0].mxu0
    %v2808 = vadd.f32 0.0, %v2807
    %v2809 = vpop.f32.mrb[0].mxu0
    %2810 = vdwg.mxu0
    %v2811 = vld [vmem:[#allocation3] sm:$0xff]
    %v2812 = vld [vmem:[#allocation3 + $0x8] sm:$0xff]
    %v2813 = vld [vmem:[#allocation3 + $0x10] sm:$0xff]
    %v2814 = vld [vmem:[#allocation3 + $0x18] sm:$0xff]
    %v2815 = vld [vmem:[#allocation3 + $0x20] sm:$0xff]
    %v2816 = vld [vmem:[#allocation3 + $0x28] sm:$0xff]
    %v2817 = vld [vmem:[#allocation3 + $0x30] sm:$0xff]
    %v2818 = vld [vmem:[#allocation3 + $0x38] sm:$0xff]
    %v2819 = vld [vmem:[#allocation3 + $0x40] sm:$0xff]
    %v2820 = vld [vmem:[#allocation3 + $0x48] sm:$0xff]
    %v2821 = vld [vmem:[#allocation3 + $0x50] sm:$0xff]
    %v2822 = vld [vmem:[#allocation3 + $0x58] sm:$0xff]
    %v2823 = vld [vmem:[#allocation3 + $0x60] sm:$0xff]
    %v2824 = vld [vmem:[#allocation3 + $0x68] sm:$0xff]
    %v2825 = vld [vmem:[#allocation3 + $0x70] sm:$0xff]
    %v2826 = vld [vmem:[#allocation3 + $0x78] sm:$0xff]
    %v2827 = vld [vmem:[#allocation3 + $0x80] sm:$0xff]
    %v2828 = vld [vmem:[#allocation3 + $0x88] sm:$0xff]
    %v2829 = vld [vmem:[#allocation3 + $0x90] sm:$0xff]
    %v2830 = vld [vmem:[#allocation3 + $0x98] sm:$0xff]
    %v2831 = vld [vmem:[#allocation3 + $0xa0] sm:$0xff]
    %v2832 = vld [vmem:[#allocation3 + $0xa8] sm:$0xff]
    %v2833 = vld [vmem:[#allocation3 + $0xb0] sm:$0xff]
    %v2834 = vld [vmem:[#allocation3 + $0xb8] sm:$0xff]
    %v2835 = vld [vmem:[#allocation3 + $0xc0] sm:$0xff]
    %v2836 = vld [vmem:[#allocation3 + $0xc8] sm:$0xff]
    %v2837 = vld [vmem:[#allocation3 + $0xd0] sm:$0xff]
    %v2838 = vld [vmem:[#allocation3 + $0xd8] sm:$0xff]
    %v2839 = vld [vmem:[#allocation3 + $0xe0] sm:$0xff]
    %v2840 = vld [vmem:[#allocation3 + $0xe8] sm:$0xff]
    %v2841 = vld [vmem:[#allocation3 + $0xf0] sm:$0xff]
    %v2842 = vld [vmem:[#allocation3 + $0xf8] sm:$0xff]
    %v2843 = vld [vmem:[#allocation3 + $0x100] sm:$0xff]
    %v2844 = vld [vmem:[#allocation3 + $0x108] sm:$0xff]
    %v2845 = vld [vmem:[#allocation3 + $0x110] sm:$0xff]
    %v2846 = vld [vmem:[#allocation3 + $0x118] sm:$0xff]
    %v2847 = vld [vmem:[#allocation3 + $0x120] sm:$0xff]
    %v2848 = vld [vmem:[#allocation3 + $0x128] sm:$0xff]
    %v2849 = vld [vmem:[#allocation3 + $0x130] sm:$0xff]
    %v2850 = vld [vmem:[#allocation3 + $0x138] sm:$0xff]
    %v2851 = vld [vmem:[#allocation3 + $0x140] sm:$0xff]
    %v2852 = vld [vmem:[#allocation3 + $0x148] sm:$0xff]
    %v2853 = vld [vmem:[#allocation3 + $0x150] sm:$0xff]
    %v2854 = vld [vmem:[#allocation3 + $0x158] sm:$0xff]
    %v2855 = vld [vmem:[#allocation3 + $0x160] sm:$0xff]
    %v2856 = vld [vmem:[#allocation3 + $0x168] sm:$0xff]
    %v2857 = vld [vmem:[#allocation3 + $0x170] sm:$0xff]
    %v2858 = vld [vmem:[#allocation3 + $0x178] sm:$0xff]
    %v2859 = vld [vmem:[#allocation3 + $0x180] sm:$0xff]
    %v2860 = vld [vmem:[#allocation3 + $0x188] sm:$0xff]
    %v2861 = vld [vmem:[#allocation3 + $0x190] sm:$0xff]
    %v2862 = vld [vmem:[#allocation3 + $0x198] sm:$0xff]
    %v2863 = vld [vmem:[#allocation3 + $0x1a0] sm:$0xff]
    %v2864 = vld [vmem:[#allocation3 + $0x1a8] sm:$0xff]
    %v2865 = vld [vmem:[#allocation3 + $0x1b0] sm:$0xff]
    %v2866 = vld [vmem:[#allocation3 + $0x1b8] sm:$0xff]
    %v2867 = vld [vmem:[#allocation3 + $0x1c0] sm:$0xff]
    %v2868 = vld [vmem:[#allocation3 + $0x1c8] sm:$0xff]
    %v2869 = vld [vmem:[#allocation3 + $0x1d0] sm:$0xff]
    %v2870 = vld [vmem:[#allocation3 + $0x1d8] sm:$0xff]
    %v2871 = vld [vmem:[#allocation3 + $0x1e0] sm:$0xff]
    %v2872 = vld [vmem:[#allocation3 + $0x1e8] sm:$0xff]
    %v2873 = vld [vmem:[#allocation3 + $0x1f0] sm:$0xff]
    %v2874 = vld [vmem:[#allocation3 + $0x1f8] sm:$0xff]
    %v2875 = vadd.f32 %v2811, %v2557
    %v2876 = vadd.f32 %v2812, %v2560
    %v2877 = vadd.f32 %v2813, %v2565
    %v2878 = vadd.f32 %v2814, %v2568
    %v2879 = vadd.f32 %v2815, %v2573
    %v2880 = vadd.f32 %v2816, %v2576
    %v2881 = vadd.f32 %v2817, %v2581
    %v2882 = vadd.f32 %v2818, %v2584
    %v2883 = vadd.f32 %v2819, %v2589
    %v2884 = vadd.f32 %v2820, %v2592
    %v2885 = vadd.f32 %v2821, %v2597
    %v2886 = vadd.f32 %v2822, %v2600
    %v2887 = vadd.f32 %v2823, %v2605
    %v2888 = vadd.f32 %v2824, %v2608
    %v2889 = vadd.f32 %v2825, %v2613
    %v2890 = vadd.f32 %v2826, %v2616
    %v2891 = vadd.f32 %v2827, %v2621
    %v2892 = vadd.f32 %v2828, %v2624
    %v2893 = vadd.f32 %v2829, %v2629
    %v2894 = vadd.f32 %v2830, %v2632
    %v2895 = vadd.f32 %v2831, %v2637
    %v2896 = vadd.f32 %v2832, %v2640
    %v2897 = vadd.f32 %v2833, %v2645
    %v2898 = vadd.f32 %v2834, %v2648
    %v2899 = vadd.f32 %v2835, %v2653
    %v2900 = vadd.f32 %v2836, %v2656
    %v2901 = vadd.f32 %v2837, %v2661
    %v2902 = vadd.f32 %v2838, %v2664
    %v2903 = vadd.f32 %v2839, %v2669
    %v2904 = vadd.f32 %v2840, %v2672
    %v2905 = vadd.f32 %v2841, %v2677
    %v2906 = vadd.f32 %v2842, %v2680
    %v2907 = vadd.f32 %v2843, %v2685
    %v2908 = vadd.f32 %v2844, %v2688
    %v2909 = vadd.f32 %v2845, %v2693
    %v2910 = vadd.f32 %v2846, %v2696
    %v2911 = vadd.f32 %v2847, %v2701
    %v2912 = vadd.f32 %v2848, %v2704
    %v2913 = vadd.f32 %v2849, %v2709
    %v2914 = vadd.f32 %v2850, %v2712
    %v2915 = vadd.f32 %v2851, %v2717
    %v2916 = vadd.f32 %v2852, %v2720
    %v2917 = vadd.f32 %v2853, %v2725
    %v2918 = vadd.f32 %v2854, %v2728
    %v2919 = vadd.f32 %v2855, %v2733
    %v2920 = vadd.f32 %v2856, %v2736
    %v2921 = vadd.f32 %v2857, %v2741
    %v2922 = vadd.f32 %v2858, %v2744
    %v2923 = vadd.f32 %v2859, %v2749
    %v2924 = vadd.f32 %v2860, %v2752
    %v2925 = vadd.f32 %v2861, %v2757
    %v2926 = vadd.f32 %v2862, %v2760
    %v2927 = vadd.f32 %v2863, %v2765
    %v2928 = vadd.f32 %v2864, %v2768
    %v2929 = vadd.f32 %v2865, %v2773
    %v2930 = vadd.f32 %v2866, %v2776
    %v2931 = vadd.f32 %v2867, %v2781
    %v2932 = vadd.f32 %v2868, %v2784
    %v2933 = vadd.f32 %v2869, %v2789
    %v2934 = vadd.f32 %v2870, %v2792
    %v2935 = vadd.f32 %v2871, %v2797
    %v2936 = vadd.f32 %v2872, %v2800
    %v2937 = vadd.f32 %v2873, %v2805
    %v2938 = vadd.f32 %v2874, %v2808
    %2939 = vst [vmem:[#allocation3] sm:$0xff] %v2875
    %2940 = vst [vmem:[#allocation3 + $0x8] sm:$0xff] %v2876
    %2941 = vst [vmem:[#allocation3 + $0x10] sm:$0xff] %v2877
    %2942 = vst [vmem:[#allocation3 + $0x18] sm:$0xff] %v2878
    %2943 = vst [vmem:[#allocation3 + $0x20] sm:$0xff] %v2879
    %2944 = vst [vmem:[#allocation3 + $0x28] sm:$0xff] %v2880
    %2945 = vst [vmem:[#allocation3 + $0x30] sm:$0xff] %v2881
    %2946 = vst [vmem:[#allocation3 + $0x38] sm:$0xff] %v2882
    %2947 = vst [vmem:[#allocation3 + $0x40] sm:$0xff] %v2883
    %2948 = vst [vmem:[#allocation3 + $0x48] sm:$0xff] %v2884
    %2949 = vst [vmem:[#allocation3 + $0x50] sm:$0xff] %v2885
    %2950 = vst [vmem:[#allocation3 + $0x58] sm:$0xff] %v2886
    %2951 = vst [vmem:[#allocation3 + $0x60] sm:$0xff] %v2887
    %2952 = vst [vmem:[#allocation3 + $0x68] sm:$0xff] %v2888
    %2953 = vst [vmem:[#allocation3 + $0x70] sm:$0xff] %v2889
    %2954 = vst [vmem:[#allocation3 + $0x78] sm:$0xff] %v2890
    %2955 = vst [vmem:[#allocation3 + $0x80] sm:$0xff] %v2891
    %2956 = vst [vmem:[#allocation3 + $0x88] sm:$0xff] %v2892
    %2957 = vst [vmem:[#allocation3 + $0x90] sm:$0xff] %v2893
    %2958 = vst [vmem:[#allocation3 + $0x98] sm:$0xff] %v2894
    %2959 = vst [vmem:[#allocation3 + $0xa0] sm:$0xff] %v2895
    %2960 = vst [vmem:[#allocation3 + $0xa8] sm:$0xff] %v2896
    %2961 = vst [vmem:[#allocation3 + $0xb0] sm:$0xff] %v2897
    %2962 = vst [vmem:[#allocation3 + $0xb8] sm:$0xff] %v2898
    %2963 = vst [vmem:[#allocation3 + $0xc0] sm:$0xff] %v2899
    %2964 = vst [vmem:[#allocation3 + $0xc8] sm:$0xff] %v2900
    %2965 = vst [vmem:[#allocation3 + $0xd0] sm:$0xff] %v2901
    %2966 = vst [vmem:[#allocation3 + $0xd8] sm:$0xff] %v2902
    %2967 = vst [vmem:[#allocation3 + $0xe0] sm:$0xff] %v2903
    %2968 = vst [vmem:[#allocation3 + $0xe8] sm:$0xff] %v2904
    %2969 = vst [vmem:[#allocation3 + $0xf0] sm:$0xff] %v2905
    %2970 = vst [vmem:[#allocation3 + $0xf8] sm:$0xff] %v2906
    %2971 = vst [vmem:[#allocation3 + $0x100] sm:$0xff] %v2907
    %2972 = vst [vmem:[#allocation3 + $0x108] sm:$0xff] %v2908
    %2973 = vst [vmem:[#allocation3 + $0x110] sm:$0xff] %v2909
    %2974 = vst [vmem:[#allocation3 + $0x118] sm:$0xff] %v2910
    %2975 = vst [vmem:[#allocation3 + $0x120] sm:$0xff] %v2911
    %2976 = vst [vmem:[#allocation3 + $0x128] sm:$0xff] %v2912
    %2977 = vst [vmem:[#allocation3 + $0x130] sm:$0xff] %v2913
    %2978 = vst [vmem:[#allocation3 + $0x138] sm:$0xff] %v2914
    %2979 = vst [vmem:[#allocation3 + $0x140] sm:$0xff] %v2915
    %2980 = vst [vmem:[#allocation3 + $0x148] sm:$0xff] %v2916
    %2981 = vst [vmem:[#allocation3 + $0x150] sm:$0xff] %v2917
    %2982 = vst [vmem:[#allocation3 + $0x158] sm:$0xff] %v2918
    %2983 = vst [vmem:[#allocation3 + $0x160] sm:$0xff] %v2919
    %2984 = vst [vmem:[#allocation3 + $0x168] sm:$0xff] %v2920
    %2985 = vst [vmem:[#allocation3 + $0x170] sm:$0xff] %v2921
    %2986 = vst [vmem:[#allocation3 + $0x178] sm:$0xff] %v2922
    %2987 = vst [vmem:[#allocation3 + $0x180] sm:$0xff] %v2923
    %2988 = vst [vmem:[#allocation3 + $0x188] sm:$0xff] %v2924
    %2989 = vst [vmem:[#allocation3 + $0x190] sm:$0xff] %v2925
    %2990 = vst [vmem:[#allocation3 + $0x198] sm:$0xff] %v2926
    %2991 = vst [vmem:[#allocation3 + $0x1a0] sm:$0xff] %v2927
    %2992 = vst [vmem:[#allocation3 + $0x1a8] sm:$0xff] %v2928
    %2993 = vst [vmem:[#allocation3 + $0x1b0] sm:$0xff] %v2929
    %2994 = vst [vmem:[#allocation3 + $0x1b8] sm:$0xff] %v2930
    %2995 = vst [vmem:[#allocation3 + $0x1c0] sm:$0xff] %v2931
    %2996 = vst [vmem:[#allocation3 + $0x1c8] sm:$0xff] %v2932
    %2997 = vst [vmem:[#allocation3 + $0x1d0] sm:$0xff] %v2933
    %2998 = vst [vmem:[#allocation3 + $0x1d8] sm:$0xff] %v2934
    %2999 = vst [vmem:[#allocation3 + $0x1e0] sm:$0xff] %v2935
    %3000 = vst [vmem:[#allocation3 + $0x1e8] sm:$0xff] %v2936
    %3001 = vst [vmem:[#allocation3 + $0x1f0] sm:$0xff] %v2937
    %3002 = vst [vmem:[#allocation3 + $0x1f8] sm:$0xff] %v2938
    %v3003 = vld [vmem:[#allocation2 + $0x9] sm:$0xff]
    %v3004 = vld [vmem:[#allocation2 + $0x11] sm:$0xff]
    %v3005 = vld [vmem:[#allocation2 + $0x29] sm:$0xff]
    %v3006 = vld [vmem:[#allocation2 + $0x31] sm:$0xff]
    %v3007 = vld [vmem:[#allocation2 + $0x49] sm:$0xff]
    %v3008 = vld [vmem:[#allocation2 + $0x51] sm:$0xff]
    %v3009 = vld [vmem:[#allocation2 + $0x69] sm:$0xff]
    %v3010 = vld [vmem:[#allocation2 + $0x71] sm:$0xff]
    %v3011 = vld [vmem:[#allocation2 + $0x89] sm:$0xff]
    %v3012 = vld [vmem:[#allocation2 + $0x91] sm:$0xff]
    %v3013 = vld [vmem:[#allocation2 + $0xa9] sm:$0xff]
    %v3014 = vld [vmem:[#allocation2 + $0xb1] sm:$0xff]
    %v3015 = vld [vmem:[#allocation2 + $0xc9] sm:$0xff]
    %v3016 = vld [vmem:[#allocation2 + $0xd1] sm:$0xff]
    %v3017 = vld [vmem:[#allocation2 + $0xe9] sm:$0xff]
    %v3018 = vld [vmem:[#allocation2 + $0xf1] sm:$0xff]
    %v3019 = vld [vmem:[#allocation2 + $0x109] sm:$0xff]
    %v3020 = vld [vmem:[#allocation2 + $0x111] sm:$0xff]
    %v3021 = vld [vmem:[#allocation2 + $0x129] sm:$0xff]
    %v3022 = vld [vmem:[#allocation2 + $0x131] sm:$0xff]
    %v3023 = vld [vmem:[#allocation2 + $0x149] sm:$0xff]
    %v3024 = vld [vmem:[#allocation2 + $0x151] sm:$0xff]
    %v3025 = vld [vmem:[#allocation2 + $0x169] sm:$0xff]
    %v3026 = vld [vmem:[#allocation2 + $0x171] sm:$0xff]
    %v3027 = vld [vmem:[#allocation2 + $0x189] sm:$0xff]
    %v3028 = vld [vmem:[#allocation2 + $0x191] sm:$0xff]
    %v3029 = vld [vmem:[#allocation2 + $0x1a9] sm:$0xff]
    %v3030 = vld [vmem:[#allocation2 + $0x1b1] sm:$0xff]
    %v3031 = vld [vmem:[#allocation2 + $0x1c9] sm:$0xff]
    %v3032 = vld [vmem:[#allocation2 + $0x1d1] sm:$0xff]
    %v3033 = vld [vmem:[#allocation2 + $0x1e9] sm:$0xff]
    %v3034 = vld [vmem:[#allocation2 + $0x1f1] sm:$0xff]
    %v3035 = vld [vmem:[#allocation2 + $0x249] sm:$0xff]
    %v3036 = vld [vmem:[#allocation2 + $0x251] sm:$0xff]
    %v3037 = vld [vmem:[#allocation2 + $0x269] sm:$0xff]
    %v3038 = vld [vmem:[#allocation2 + $0x271] sm:$0xff]
    %v3039 = vld [vmem:[#allocation2 + $0x289] sm:$0xff]
    %v3040 = vld [vmem:[#allocation2 + $0x291] sm:$0xff]
    %v3041 = vld [vmem:[#allocation2 + $0x2a9] sm:$0xff]
    %v3042 = vld [vmem:[#allocation2 + $0x2b1] sm:$0xff]
    %v3043 = vld [vmem:[#allocation2 + $0x2c9] sm:$0xff]
    %v3044 = vld [vmem:[#allocation2 + $0x2d1] sm:$0xff]
    %v3045 = vld [vmem:[#allocation2 + $0x2e9] sm:$0xff]
    %v3046 = vld [vmem:[#allocation2 + $0x2f1] sm:$0xff]
    %v3047 = vld [vmem:[#allocation2 + $0x309] sm:$0xff]
    %v3048 = vld [vmem:[#allocation2 + $0x311] sm:$0xff]
    %v3049 = vld [vmem:[#allocation2 + $0x329] sm:$0xff]
    %v3050 = vld [vmem:[#allocation2 + $0x331] sm:$0xff]
    %v3051 = vld [vmem:[#allocation2 + $0x349] sm:$0xff]
    %v3052 = vld [vmem:[#allocation2 + $0x351] sm:$0xff]
    %v3053 = vld [vmem:[#allocation2 + $0x369] sm:$0xff]
    %v3054 = vld [vmem:[#allocation2 + $0x371] sm:$0xff]
    %v3055 = vld [vmem:[#allocation2 + $0x389] sm:$0xff]
    %v3056 = vld [vmem:[#allocation2 + $0x391] sm:$0xff]
    %v3057 = vld [vmem:[#allocation2 + $0x3a9] sm:$0xff]
    %v3058 = vld [vmem:[#allocation2 + $0x3b1] sm:$0xff]
    %v3059 = vld [vmem:[#allocation2 + $0x3c9] sm:$0xff]
    %v3060 = vld [vmem:[#allocation2 + $0x3d1] sm:$0xff]
    %v3061 = vld [vmem:[#allocation2 + $0x3e9] sm:$0xff]
    %v3062 = vld [vmem:[#allocation2 + $0x3f1] sm:$0xff]
    %v3063 = vld [vmem:[#allocation2 + $0x409] sm:$0xff]
    %v3064 = vld [vmem:[#allocation2 + $0x411] sm:$0xff]
    %v3065 = vld [vmem:[#allocation2 + $0x429] sm:$0xff]
    %v3066 = vld [vmem:[#allocation2 + $0x431] sm:$0xff]
    %v3067 = vpack.c.bf16 %v3004, %v3003
    %v3068 = vpack.c.bf16 %v3006, %v3005
    %v3069 = vpack.c.bf16 %v3008, %v3007
    %v3070 = vpack.c.bf16 %v3010, %v3009
    %v3071 = vpack.c.bf16 %v3012, %v3011
    %v3072 = vpack.c.bf16 %v3014, %v3013
    %v3073 = vpack.c.bf16 %v3016, %v3015
    %v3074 = vpack.c.bf16 %v3018, %v3017
    %v3075 = vpack.c.bf16 %v3020, %v3019
    %v3076 = vpack.c.bf16 %v3022, %v3021
    %v3077 = vpack.c.bf16 %v3024, %v3023
    %v3078 = vpack.c.bf16 %v3026, %v3025
    %v3079 = vpack.c.bf16 %v3028, %v3027
    %v3080 = vpack.c.bf16 %v3030, %v3029
    %v3081 = vpack.c.bf16 %v3032, %v3031
    %v3082 = vpack.c.bf16 %v3034, %v3033
    %v3083 = vpack.c.bf16 %v3036, %v3035
    %v3084 = vpack.c.bf16 %v3038, %v3037
    %v3085 = vpack.c.bf16 %v3040, %v3039
    %v3086 = vpack.c.bf16 %v3042, %v3041
    %v3087 = vpack.c.bf16 %v3044, %v3043
    %v3088 = vpack.c.bf16 %v3046, %v3045
    %v3089 = vpack.c.bf16 %v3048, %v3047
    %v3090 = vpack.c.bf16 %v3050, %v3049
    %v3091 = vpack.c.bf16 %v3052, %v3051
    %v3092 = vpack.c.bf16 %v3054, %v3053
    %v3093 = vpack.c.bf16 %v3056, %v3055
    %v3094 = vpack.c.bf16 %v3058, %v3057
    %v3095 = vpack.c.bf16 %v3060, %v3059
    %v3096 = vpack.c.bf16 %v3062, %v3061
    %v3097 = vpack.c.bf16 %v3064, %v3063
    %v3098 = vpack.c.bf16 %v3066, %v3065
    %s3099 = scalar_lea.vmem [#allocation10], 128
    %v3100 = vld [vmem:[%s3099] sm:$0xf]
    %v3101 = vld [vmem:[%s3099 + $0x4] sm:$0xf]
    %v3102 = vld [vmem:[%s3099 + $0x8] sm:$0xf]
    %v3103 = vld [vmem:[%s3099 + $0xc] sm:$0xf]
    %v3104 = vld [vmem:[%s3099 + $0x10] sm:$0xf]
    %v3105 = vld [vmem:[%s3099 + $0x14] sm:$0xf]
    %v3106 = vld [vmem:[%s3099 + $0x18] sm:$0xf]
    %v3107 = vld [vmem:[%s3099 + $0x1c] sm:$0xf]
    %v3108 = vld [vmem:[%s3099 + $0x20] sm:$0xf]
    %v3109 = vld [vmem:[%s3099 + $0x24] sm:$0xf]
    %v3110 = vld [vmem:[%s3099 + $0x28] sm:$0xf]
    %v3111 = vld [vmem:[%s3099 + $0x2c] sm:$0xf]
    %v3112 = vld [vmem:[%s3099 + $0x30] sm:$0xf]
    %v3113 = vld [vmem:[%s3099 + $0x34] sm:$0xf]
    %v3114 = vld [vmem:[%s3099 + $0x38] sm:$0xf]
    %v3115 = vld [vmem:[%s3099 + $0x3c] sm:$0xf]
    %v3132 = vunpack.c.l.b16 %v3100
    %v3133 = vunpack.c.l.b16 %v3101
    %v3134 = vunpack.c.l.b16 %v3102
    %v3135 = vunpack.c.l.b16 %v3103
    %v3136 = vunpack.c.l.b16 %v3104
    %v3137 = vunpack.c.l.b16 %v3105
    %v3138 = vunpack.c.l.b16 %v3106
    %v3139 = vunpack.c.l.b16 %v3107
    %v3140 = vunpack.c.l.b16 %v3108
    %v3141 = vunpack.c.l.b16 %v3109
    %v3142 = vunpack.c.l.b16 %v3110
    %v3143 = vunpack.c.l.b16 %v3111
    %v3144 = vunpack.c.l.b16 %v3112
    %v3145 = vunpack.c.l.b16 %v3113
    %v3146 = vunpack.c.l.b16 %v3114
    %v3147 = vunpack.c.l.b16 %v3115
    %v3148 = vpack.c.b16 %v3133, %v3132
    %v3149 = vpack.c.b16 %v3135, %v3134
    %v3150 = vpack.c.b16 %v3137, %v3136
    %v3151 = vpack.c.b16 %v3139, %v3138
    %v3152 = vpack.c.b16 %v3141, %v3140
    %v3153 = vpack.c.b16 %v3143, %v3142
    %v3154 = vpack.c.b16 %v3145, %v3144
    %v3155 = vpack.c.b16 %v3147, %v3146
    %3164 = vmatprep.subr.bf16.mxu0 0
    %3165 = vmatpush1.bf16.msra.mxu0 %v3148
    %3166 = vmatprep.subr.bf16.mxu0 0
    %3167 = vmatpush1.bf16.msra.mxu0 %v3149
    %3168 = vmatprep.subr.bf16.mxu0 0
    %3169 = vmatpush1.bf16.msra.mxu0 %v3150
    %3170 = vmatprep.subr.bf16.mxu0 0
    %3171 = vmatpush1.bf16.msra.mxu0 %v3151
    %3172 = vmatprep.subr.bf16.mxu0 0
    %3173 = vmatpush1.bf16.msra.mxu0 %v3152
    %3174 = vmatprep.subr.bf16.mxu0 0
    %3175 = vmatpush1.bf16.msra.mxu0 %v3153
    %3176 = vmatprep.subr.bf16.mxu0 0
    %3177 = vmatpush1.bf16.msra.mxu0 %v3154
    %3178 = vmatprep.subr.bf16.mxu0 0
    %3179 = vmatpush1.bf16.msra.mxu0 %v3155
    %3180 = vmatprep.subr.bf16.mxu0 0
    %3181 = vmatpush1.bf16.msra.mxu0 0
    %3182 = vmatprep.subr.bf16.mxu0 0
    %3183 = vmatpush1.bf16.msra.mxu0 0
    %3184 = vmatprep.subr.bf16.mxu0 0
    %3185 = vmatpush1.bf16.msra.mxu0 0
    %3186 = vmatprep.subr.bf16.mxu0 0
    %3187 = vmatpush1.bf16.msra.mxu0 0
    %3188 = vmatprep.subr.bf16.mxu0 0
    %3189 = vmatpush1.bf16.msra.mxu0 0
    %3190 = vmatprep.subr.bf16.mxu0 0
    %3191 = vmatpush1.bf16.msra.mxu0 0
    %3192 = vmatprep.subr.bf16.mxu0 0
    %3193 = vmatpush1.bf16.msra.mxu0 0
    %3194 = vmatprep.subr.bf16.mxu0 0
    %3195 = vmatpush1.bf16.msra.mxu0 0
    %3196 = vmatprep.mubr.bf16.mxu0 0
    %3197 = vmatmul.mubr.bf16.gmra.mrb[0].mxu0 %v3067
    %v3198 = vpop.f32.mrb[0].mxu0
    %v3199 = vadd.f32 0.0, %v3198
    %v3200 = vpop.f32.mrb[0].mxu0
    %v3201 = vpop.f32.mrb[0].mxu0
    %v3202 = vadd.f32 0.0, %v3201
    %v3203 = vpop.f32.mrb[0].mxu0
    %3204 = vmatprep.mubr.bf16.mxu0 0
    %3205 = vmatmul.mubr.bf16.gmra.mrb[0].mxu0 %v3068
    %v3206 = vpop.f32.mrb[0].mxu0
    %v3207 = vadd.f32 0.0, %v3206
    %v3208 = vpop.f32.mrb[0].mxu0
    %v3209 = vpop.f32.mrb[0].mxu0
    %v3210 = vadd.f32 0.0, %v3209
    %v3211 = vpop.f32.mrb[0].mxu0
    %3212 = vmatprep.mubr.bf16.mxu0 0
    %3213 = vmatmul.mubr.bf16.gmra.mrb[0].mxu0 %v3069
    %v3214 = vpop.f32.mrb[0].mxu0
    %v3215 = vadd.f32 0.0, %v3214
    %v3216 = vpop.f32.mrb[0].mxu0
    %v3217 = vpop.f32.mrb[0].mxu0
    %v3218 = vadd.f32 0.0, %v3217
    %v3219 = vpop.f32.mrb[0].mxu0
    %3220 = vmatprep.mubr.bf16.mxu0 0
    %3221 = vmatmul.mubr.bf16.gmra.mrb[0].mxu0 %v3070
    %v3222 = vpop.f32.mrb[0].mxu0
    %v3223 = vadd.f32 0.0, %v3222
    %v3224 = vpop.f32.mrb[0].mxu0
    %v3225 = vpop.f32.mrb[0].mxu0
    %v3226 = vadd.f32 0.0, %v3225
    %v3227 = vpop.f32.mrb[0].mxu0
    %3228 = vmatprep.mubr.bf16.mxu0 0
    %3229 = vmatmul.mubr.bf16.gmra.mrb[0].mxu0 %v3071
    %v3230 = vpop.f32.mrb[0].mxu0
    %v3231 = vadd.f32 0.0, %v3230
    %v3232 = vpop.f32.mrb[0].mxu0
    %v3233 = vpop.f32.mrb[0].mxu0
    %v3234 = vadd.f32 0.0, %v3233
    %v3235 = vpop.f32.mrb[0].mxu0
    %3236 = vmatprep.mubr.bf16.mxu0 0
    %3237 = vmatmul.mubr.bf16.gmra.mrb[0].mxu0 %v3072
    %v3238 = vpop.f32.mrb[0].mxu0
    %v3239 = vadd.f32 0.0, %v3238
    %v3240 = vpop.f32.mrb[0].mxu0
    %v3241 = vpop.f32.mrb[0].mxu0
    %v3242 = vadd.f32 0.0, %v3241
    %v3243 = vpop.f32.mrb[0].mxu0
    %3244 = vmatprep.mubr.bf16.mxu0 0
    %3245 = vmatmul.mubr.bf16.gmra.mrb[0].mxu0 %v3073
    %v3246 = vpop.f32.mrb[0].mxu0
    %v3247 = vadd.f32 0.0, %v3246
    %v3248 = vpop.f32.mrb[0].mxu0
    %v3249 = vpop.f32.mrb[0].mxu0
    %v3250 = vadd.f32 0.0, %v3249
    %v3251 = vpop.f32.mrb[0].mxu0
    %3252 = vmatprep.mubr.bf16.mxu0 0
    %3253 = vmatmul.mubr.bf16.gmra.mrb[0].mxu0 %v3074
    %v3254 = vpop.f32.mrb[0].mxu0
    %v3255 = vadd.f32 0.0, %v3254
    %v3256 = vpop.f32.mrb[0].mxu0
    %v3257 = vpop.f32.mrb[0].mxu0
    %v3258 = vadd.f32 0.0, %v3257
    %v3259 = vpop.f32.mrb[0].mxu0
    %3260 = vmatprep.mubr.bf16.mxu0 0
    %3261 = vmatmul.mubr.bf16.gmra.mrb[0].mxu0 %v3075
    %v3262 = vpop.f32.mrb[0].mxu0
    %v3263 = vadd.f32 0.0, %v3262
    %v3264 = vpop.f32.mrb[0].mxu0
    %v3265 = vpop.f32.mrb[0].mxu0
    %v3266 = vadd.f32 0.0, %v3265
    %v3267 = vpop.f32.mrb[0].mxu0
    %3268 = vmatprep.mubr.bf16.mxu0 0
    %3269 = vmatmul.mubr.bf16.gmra.mrb[0].mxu0 %v3076
    %v3270 = vpop.f32.mrb[0].mxu0
    %v3271 = vadd.f32 0.0, %v3270
    %v3272 = vpop.f32.mrb[0].mxu0
    %v3273 = vpop.f32.mrb[0].mxu0
    %v3274 = vadd.f32 0.0, %v3273
    %v3275 = vpop.f32.mrb[0].mxu0
    %3276 = vmatprep.mubr.bf16.mxu0 0
    %3277 = vmatmul.mubr.bf16.gmra.mrb[0].mxu0 %v3077
    %v3278 = vpop.f32.mrb[0].mxu0
    %v3279 = vadd.f32 0.0, %v3278
    %v3280 = vpop.f32.mrb[0].mxu0
    %v3281 = vpop.f32.mrb[0].mxu0
    %v3282 = vadd.f32 0.0, %v3281
    %v3283 = vpop.f32.mrb[0].mxu0
    %3284 = vmatprep.mubr.bf16.mxu0 0
    %3285 = vmatmul.mubr.bf16.gmra.mrb[0].mxu0 %v3078
    %v3286 = vpop.f32.mrb[0].mxu0
    %v3287 = vadd.f32 0.0, %v3286
    %v3288 = vpop.f32.mrb[0].mxu0
    %v3289 = vpop.f32.mrb[0].mxu0
    %v3290 = vadd.f32 0.0, %v3289
    %v3291 = vpop.f32.mrb[0].mxu0
    %3292 = vmatprep.mubr.bf16.mxu0 0
    %3293 = vmatmul.mubr.bf16.gmra.mrb[0].mxu0 %v3079
    %v3294 = vpop.f32.mrb[0].mxu0
    %v3295 = vadd.f32 0.0, %v3294
    %v3296 = vpop.f32.mrb[0].mxu0
    %v3297 = vpop.f32.mrb[0].mxu0
    %v3298 = vadd.f32 0.0, %v3297
    %v3299 = vpop.f32.mrb[0].mxu0
    %3300 = vmatprep.mubr.bf16.mxu0 0
    %3301 = vmatmul.mubr.bf16.gmra.mrb[0].mxu0 %v3080
    %v3302 = vpop.f32.mrb[0].mxu0
    %v3303 = vadd.f32 0.0, %v3302
    %v3304 = vpop.f32.mrb[0].mxu0
    %v3305 = vpop.f32.mrb[0].mxu0
    %v3306 = vadd.f32 0.0, %v3305
    %v3307 = vpop.f32.mrb[0].mxu0
    %3308 = vmatprep.mubr.bf16.mxu0 0
    %3309 = vmatmul.mubr.bf16.gmra.mrb[0].mxu0 %v3081
    %v3310 = vpop.f32.mrb[0].mxu0
    %v3311 = vadd.f32 0.0, %v3310
    %v3312 = vpop.f32.mrb[0].mxu0
    %v3313 = vpop.f32.mrb[0].mxu0
    %v3314 = vadd.f32 0.0, %v3313
    %v3315 = vpop.f32.mrb[0].mxu0
    %3316 = vmatprep.mubr.bf16.mxu0 0
    %3317 = vmatmul.mubr.bf16.gmra.mrb[0].mxu0 %v3082
    %v3318 = vpop.f32.mrb[0].mxu0
    %v3319 = vadd.f32 0.0, %v3318
    %v3320 = vpop.f32.mrb[0].mxu0
    %v3321 = vpop.f32.mrb[0].mxu0
    %v3322 = vadd.f32 0.0, %v3321
    %v3323 = vpop.f32.mrb[0].mxu0
    %3324 = vmatprep.mubr.bf16.mxu0 0
    %3325 = vmatmul.mubr.bf16.gmra.mrb[0].mxu0 %v3083
    %v3326 = vpop.f32.mrb[0].mxu0
    %v3327 = vadd.f32 0.0, %v3326
    %v3328 = vpop.f32.mrb[0].mxu0
    %v3329 = vpop.f32.mrb[0].mxu0
    %v3330 = vadd.f32 0.0, %v3329
    %v3331 = vpop.f32.mrb[0].mxu0
    %3332 = vmatprep.mubr.bf16.mxu0 0
    %3333 = vmatmul.mubr.bf16.gmra.mrb[0].mxu0 %v3084
    %v3334 = vpop.f32.mrb[0].mxu0
    %v3335 = vadd.f32 0.0, %v3334
    %v3336 = vpop.f32.mrb[0].mxu0
    %v3337 = vpop.f32.mrb[0].mxu0
    %v3338 = vadd.f32 0.0, %v3337
    %v3339 = vpop.f32.mrb[0].mxu0
    %3340 = vmatprep.mubr.bf16.mxu0 0
    %3341 = vmatmul.mubr.bf16.gmra.mrb[0].mxu0 %v3085
    %v3342 = vpop.f32.mrb[0].mxu0
    %v3343 = vadd.f32 0.0, %v3342
    %v3344 = vpop.f32.mrb[0].mxu0
    %v3345 = vpop.f32.mrb[0].mxu0
    %v3346 = vadd.f32 0.0, %v3345
    %v3347 = vpop.f32.mrb[0].mxu0
    %3348 = vmatprep.mubr.bf16.mxu0 0
    %3349 = vmatmul.mubr.bf16.gmra.mrb[0].mxu0 %v3086
    %v3350 = vpop.f32.mrb[0].mxu0
    %v3351 = vadd.f32 0.0, %v3350
    %v3352 = vpop.f32.mrb[0].mxu0
    %v3353 = vpop.f32.mrb[0].mxu0
    %v3354 = vadd.f32 0.0, %v3353
    %v3355 = vpop.f32.mrb[0].mxu0
    %3356 = vmatprep.mubr.bf16.mxu0 0
    %3357 = vmatmul.mubr.bf16.gmra.mrb[0].mxu0 %v3087
    %v3358 = vpop.f32.mrb[0].mxu0
    %v3359 = vadd.f32 0.0, %v3358
    %v3360 = vpop.f32.mrb[0].mxu0
    %v3361 = vpop.f32.mrb[0].mxu0
    %v3362 = vadd.f32 0.0, %v3361
    %v3363 = vpop.f32.mrb[0].mxu0
    %3364 = vmatprep.mubr.bf16.mxu0 0
    %3365 = vmatmul.mubr.bf16.gmra.mrb[0].mxu0 %v3088
    %v3366 = vpop.f32.mrb[0].mxu0
    %v3367 = vadd.f32 0.0, %v3366
    %v3368 = vpop.f32.mrb[0].mxu0
    %v3369 = vpop.f32.mrb[0].mxu0
    %v3370 = vadd.f32 0.0, %v3369
    %v3371 = vpop.f32.mrb[0].mxu0
    %3372 = vmatprep.mubr.bf16.mxu0 0
    %3373 = vmatmul.mubr.bf16.gmra.mrb[0].mxu0 %v3089
    %v3374 = vpop.f32.mrb[0].mxu0
    %v3375 = vadd.f32 0.0, %v3374
    %v3376 = vpop.f32.mrb[0].mxu0
    %v3377 = vpop.f32.mrb[0].mxu0
    %v3378 = vadd.f32 0.0, %v3377
    %v3379 = vpop.f32.mrb[0].mxu0
    %3380 = vmatprep.mubr.bf16.mxu0 0
    %3381 = vmatmul.mubr.bf16.gmra.mrb[0].mxu0 %v3090
    %v3382 = vpop.f32.mrb[0].mxu0
    %v3383 = vadd.f32 0.0, %v3382
    %v3384 = vpop.f32.mrb[0].mxu0
    %v3385 = vpop.f32.mrb[0].mxu0
    %v3386 = vadd.f32 0.0, %v3385
    %v3387 = vpop.f32.mrb[0].mxu0
    %3388 = vmatprep.mubr.bf16.mxu0 0
    %3389 = vmatmul.mubr.bf16.gmra.mrb[0].mxu0 %v3091
    %v3390 = vpop.f32.mrb[0].mxu0
    %v3391 = vadd.f32 0.0, %v3390
    %v3392 = vpop.f32.mrb[0].mxu0
    %v3393 = vpop.f32.mrb[0].mxu0
    %v3394 = vadd.f32 0.0, %v3393
    %v3395 = vpop.f32.mrb[0].mxu0
    %3396 = vmatprep.mubr.bf16.mxu0 0
    %3397 = vmatmul.mubr.bf16.gmra.mrb[0].mxu0 %v3092
    %v3398 = vpop.f32.mrb[0].mxu0
    %v3399 = vadd.f32 0.0, %v3398
    %v3400 = vpop.f32.mrb[0].mxu0
    %v3401 = vpop.f32.mrb[0].mxu0
    %v3402 = vadd.f32 0.0, %v3401
    %v3403 = vpop.f32.mrb[0].mxu0
    %3404 = vmatprep.mubr.bf16.mxu0 0
    %3405 = vmatmul.mubr.bf16.gmra.mrb[0].mxu0 %v3093
    %v3406 = vpop.f32.mrb[0].mxu0
    %v3407 = vadd.f32 0.0, %v3406
    %v3408 = vpop.f32.mrb[0].mxu0
    %v3409 = vpop.f32.mrb[0].mxu0
    %v3410 = vadd.f32 0.0, %v3409
    %v3411 = vpop.f32.mrb[0].mxu0
    %3412 = vmatprep.mubr.bf16.mxu0 0
    %3413 = vmatmul.mubr.bf16.gmra.mrb[0].mxu0 %v3094
    %v3414 = vpop.f32.mrb[0].mxu0
    %v3415 = vadd.f32 0.0, %v3414
    %v3416 = vpop.f32.mrb[0].mxu0
    %v3417 = vpop.f32.mrb[0].mxu0
    %v3418 = vadd.f32 0.0, %v3417
    %v3419 = vpop.f32.mrb[0].mxu0
    %3420 = vmatprep.mubr.bf16.mxu0 0
    %3421 = vmatmul.mubr.bf16.gmra.mrb[0].mxu0 %v3095
    %v3422 = vpop.f32.mrb[0].mxu0
    %v3423 = vadd.f32 0.0, %v3422
    %v3424 = vpop.f32.mrb[0].mxu0
    %v3425 = vpop.f32.mrb[0].mxu0
    %v3426 = vadd.f32 0.0, %v3425
    %v3427 = vpop.f32.mrb[0].mxu0
    %3428 = vmatprep.mubr.bf16.mxu0 0
    %3429 = vmatmul.mubr.bf16.gmra.mrb[0].mxu0 %v3096
    %v3430 = vpop.f32.mrb[0].mxu0
    %v3431 = vadd.f32 0.0, %v3430
    %v3432 = vpop.f32.mrb[0].mxu0
    %v3433 = vpop.f32.mrb[0].mxu0
    %v3434 = vadd.f32 0.0, %v3433
    %v3435 = vpop.f32.mrb[0].mxu0
    %3436 = vmatprep.mubr.bf16.mxu0 0
    %3437 = vmatmul.mubr.bf16.gmra.mrb[0].mxu0 %v3097
    %v3438 = vpop.f32.mrb[0].mxu0
    %v3439 = vadd.f32 0.0, %v3438
    %v3440 = vpop.f32.mrb[0].mxu0
    %v3441 = vpop.f32.mrb[0].mxu0
    %v3442 = vadd.f32 0.0, %v3441
    %v3443 = vpop.f32.mrb[0].mxu0
    %3444 = vmatprep.mubr.bf16.mxu0 0
    %3445 = vmatmul.mubr.bf16.gmra.mrb[0].mxu0 %v3098
    %v3446 = vpop.f32.mrb[0].mxu0
    %v3447 = vadd.f32 0.0, %v3446
    %v3448 = vpop.f32.mrb[0].mxu0
    %v3449 = vpop.f32.mrb[0].mxu0
    %v3450 = vadd.f32 0.0, %v3449
    %v3451 = vpop.f32.mrb[0].mxu0
    %3452 = vdwg.mxu0
    %v3453 = vld [vmem:[#allocation3] sm:$0xff]
    %v3454 = vld [vmem:[#allocation3 + $0x8] sm:$0xff]
    %v3455 = vld [vmem:[#allocation3 + $0x10] sm:$0xff]
    %v3456 = vld [vmem:[#allocation3 + $0x18] sm:$0xff]
    %v3457 = vld [vmem:[#allocation3 + $0x20] sm:$0xff]
    %v3458 = vld [vmem:[#allocation3 + $0x28] sm:$0xff]
    %v3459 = vld [vmem:[#allocation3 + $0x30] sm:$0xff]
    %v3460 = vld [vmem:[#allocation3 + $0x38] sm:$0xff]
    %v3461 = vld [vmem:[#allocation3 + $0x40] sm:$0xff]
    %v3462 = vld [vmem:[#allocation3 + $0x48] sm:$0xff]
    %v3463 = vld [vmem:[#allocation3 + $0x50] sm:$0xff]
    %v3464 = vld [vmem:[#allocation3 + $0x58] sm:$0xff]
    %v3465 = vld [vmem:[#allocation3 + $0x60] sm:$0xff]
    %v3466 = vld [vmem:[#allocation3 + $0x68] sm:$0xff]
    %v3467 = vld [vmem:[#allocation3 + $0x70] sm:$0xff]
    %v3468 = vld [vmem:[#allocation3 + $0x78] sm:$0xff]
    %v3469 = vld [vmem:[#allocation3 + $0x80] sm:$0xff]
    %v3470 = vld [vmem:[#allocation3 + $0x88] sm:$0xff]
    %v3471 = vld [vmem:[#allocation3 + $0x90] sm:$0xff]
    %v3472 = vld [vmem:[#allocation3 + $0x98] sm:$0xff]
    %v3473 = vld [vmem:[#allocation3 + $0xa0] sm:$0xff]
    %v3474 = vld [vmem:[#allocation3 + $0xa8] sm:$0xff]
    %v3475 = vld [vmem:[#allocation3 + $0xb0] sm:$0xff]
    %v3476 = vld [vmem:[#allocation3 + $0xb8] sm:$0xff]
    %v3477 = vld [vmem:[#allocation3 + $0xc0] sm:$0xff]
    %v3478 = vld [vmem:[#allocation3 + $0xc8] sm:$0xff]
    %v3479 = vld [vmem:[#allocation3 + $0xd0] sm:$0xff]
    %v3480 = vld [vmem:[#allocation3 + $0xd8] sm:$0xff]
    %v3481 = vld [vmem:[#allocation3 + $0xe0] sm:$0xff]
    %v3482 = vld [vmem:[#allocation3 + $0xe8] sm:$0xff]
    %v3483 = vld [vmem:[#allocation3 + $0xf0] sm:$0xff]
    %v3484 = vld [vmem:[#allocation3 + $0xf8] sm:$0xff]
    %v3485 = vld [vmem:[#allocation3 + $0x100] sm:$0xff]
    %v3486 = vld [vmem:[#allocation3 + $0x108] sm:$0xff]
    %v3487 = vld [vmem:[#allocation3 + $0x110] sm:$0xff]
    %v3488 = vld [vmem:[#allocation3 + $0x118] sm:$0xff]
    %v3489 = vld [vmem:[#allocation3 + $0x120] sm:$0xff]
    %v3490 = vld [vmem:[#allocation3 + $0x128] sm:$0xff]
    %v3491 = vld [vmem:[#allocation3 + $0x130] sm:$0xff]
    %v3492 = vld [vmem:[#allocation3 + $0x138] sm:$0xff]
    %v3493 = vld [vmem:[#allocation3 + $0x140] sm:$0xff]
    %v3494 = vld [vmem:[#allocation3 + $0x148] sm:$0xff]
    %v3495 = vld [vmem:[#allocation3 + $0x150] sm:$0xff]
    %v3496 = vld [vmem:[#allocation3 + $0x158] sm:$0xff]
    %v3497 = vld [vmem:[#allocation3 + $0x160] sm:$0xff]
    %v3498 = vld [vmem:[#allocation3 + $0x168] sm:$0xff]
    %v3499 = vld [vmem:[#allocation3 + $0x170] sm:$0xff]
    %v3500 = vld [vmem:[#allocation3 + $0x178] sm:$0xff]
    %v3501 = vld [vmem:[#allocation3 + $0x180] sm:$0xff]
    %v3502 = vld [vmem:[#allocation3 + $0x188] sm:$0xff]
    %v3503 = vld [vmem:[#allocation3 + $0x190] sm:$0xff]
    %v3504 = vld [vmem:[#allocation3 + $0x198] sm:$0xff]
    %v3505 = vld [vmem:[#allocation3 + $0x1a0] sm:$0xff]
    %v3506 = vld [vmem:[#allocation3 + $0x1a8] sm:$0xff]
    %v3507 = vld [vmem:[#allocation3 + $0x1b0] sm:$0xff]
    %v3508 = vld [vmem:[#allocation3 + $0x1b8] sm:$0xff]
    %v3509 = vld [vmem:[#allocation3 + $0x1c0] sm:$0xff]
    %v3510 = vld [vmem:[#allocation3 + $0x1c8] sm:$0xff]
    %v3511 = vld [vmem:[#allocation3 + $0x1d0] sm:$0xff]
    %v3512 = vld [vmem:[#allocation3 + $0x1d8] sm:$0xff]
    %v3513 = vld [vmem:[#allocation3 + $0x1e0] sm:$0xff]
    %v3514 = vld [vmem:[#allocation3 + $0x1e8] sm:$0xff]
    %v3515 = vld [vmem:[#allocation3 + $0x1f0] sm:$0xff]
    %v3516 = vld [vmem:[#allocation3 + $0x1f8] sm:$0xff]
    %v3517 = vadd.f32 %v3453, %v3199
    %v3518 = vadd.f32 %v3454, %v3202
    %v3519 = vadd.f32 %v3455, %v3207
    %v3520 = vadd.f32 %v3456, %v3210
    %v3521 = vadd.f32 %v3457, %v3215
    %v3522 = vadd.f32 %v3458, %v3218
    %v3523 = vadd.f32 %v3459, %v3223
    %v3524 = vadd.f32 %v3460, %v3226
    %v3525 = vadd.f32 %v3461, %v3231
    %v3526 = vadd.f32 %v3462, %v3234
    %v3527 = vadd.f32 %v3463, %v3239
    %v3528 = vadd.f32 %v3464, %v3242
    %v3529 = vadd.f32 %v3465, %v3247
    %v3530 = vadd.f32 %v3466, %v3250
    %v3531 = vadd.f32 %v3467, %v3255
    %v3532 = vadd.f32 %v3468, %v3258
    %v3533 = vadd.f32 %v3469, %v3263
    %v3534 = vadd.f32 %v3470, %v3266
    %v3535 = vadd.f32 %v3471, %v3271
    %v3536 = vadd.f32 %v3472, %v3274
    %v3537 = vadd.f32 %v3473, %v3279
    %v3538 = vadd.f32 %v3474, %v3282
    %v3539 = vadd.f32 %v3475, %v3287
    %v3540 = vadd.f32 %v3476, %v3290
    %v3541 = vadd.f32 %v3477, %v3295
    %v3542 = vadd.f32 %v3478, %v3298
    %v3543 = vadd.f32 %v3479, %v3303
    %v3544 = vadd.f32 %v3480, %v3306
    %v3545 = vadd.f32 %v3481, %v3311
    %v3546 = vadd.f32 %v3482, %v3314
    %v3547 = vadd.f32 %v3483, %v3319
    %v3548 = vadd.f32 %v3484, %v3322
    %v3549 = vadd.f32 %v3485, %v3327
    %v3550 = vadd.f32 %v3486, %v3330
    %v3551 = vadd.f32 %v3487, %v3335
    %v3552 = vadd.f32 %v3488, %v3338
    %v3553 = vadd.f32 %v3489, %v3343
    %v3554 = vadd.f32 %v3490, %v3346
    %v3555 = vadd.f32 %v3491, %v3351
    %v3556 = vadd.f32 %v3492, %v3354
    %v3557 = vadd.f32 %v3493, %v3359
    %v3558 = vadd.f32 %v3494, %v3362
    %v3559 = vadd.f32 %v3495, %v3367
    %v3560 = vadd.f32 %v3496, %v3370
    %v3561 = vadd.f32 %v3497, %v3375
    %v3562 = vadd.f32 %v3498, %v3378
    %v3563 = vadd.f32 %v3499, %v3383
    %v3564 = vadd.f32 %v3500, %v3386
    %v3565 = vadd.f32 %v3501, %v3391
    %v3566 = vadd.f32 %v3502, %v3394
    %v3567 = vadd.f32 %v3503, %v3399
    %v3568 = vadd.f32 %v3504, %v3402
    %v3569 = vadd.f32 %v3505, %v3407
    %v3570 = vadd.f32 %v3506, %v3410
    %v3571 = vadd.f32 %v3507, %v3415
    %v3572 = vadd.f32 %v3508, %v3418
    %v3573 = vadd.f32 %v3509, %v3423
    %v3574 = vadd.f32 %v3510, %v3426
    %v3575 = vadd.f32 %v3511, %v3431
    %v3576 = vadd.f32 %v3512, %v3434
    %v3577 = vadd.f32 %v3513, %v3439
    %v3578 = vadd.f32 %v3514, %v3442
    %v3579 = vadd.f32 %v3515, %v3447
    %v3580 = vadd.f32 %v3516, %v3450
    %3581 = vst [vmem:[#allocation3] sm:$0xff] %v3517
    %3582 = vst [vmem:[#allocation3 + $0x8] sm:$0xff] %v3518
    %3583 = vst [vmem:[#allocation3 + $0x10] sm:$0xff] %v3519
    %3584 = vst [vmem:[#allocation3 + $0x18] sm:$0xff] %v3520
    %3585 = vst [vmem:[#allocation3 + $0x20] sm:$0xff] %v3521
    %3586 = vst [vmem:[#allocation3 + $0x28] sm:$0xff] %v3522
    %3587 = vst [vmem:[#allocation3 + $0x30] sm:$0xff] %v3523
    %3588 = vst [vmem:[#allocation3 + $0x38] sm:$0xff] %v3524
    %3589 = vst [vmem:[#allocation3 + $0x40] sm:$0xff] %v3525
    %3590 = vst [vmem:[#allocation3 + $0x48] sm:$0xff] %v3526
    %3591 = vst [vmem:[#allocation3 + $0x50] sm:$0xff] %v3527
    %3592 = vst [vmem:[#allocation3 + $0x58] sm:$0xff] %v3528
    %3593 = vst [vmem:[#allocation3 + $0x60] sm:$0xff] %v3529
    %3594 = vst [vmem:[#allocation3 + $0x68] sm:$0xff] %v3530
    %3595 = vst [vmem:[#allocation3 + $0x70] sm:$0xff] %v3531
    %3596 = vst [vmem:[#allocation3 + $0x78] sm:$0xff] %v3532
    %3597 = vst [vmem:[#allocation3 + $0x80] sm:$0xff] %v3533
    %3598 = vst [vmem:[#allocation3 + $0x88] sm:$0xff] %v3534
    %3599 = vst [vmem:[#allocation3 + $0x90] sm:$0xff] %v3535
    %3600 = vst [vmem:[#allocation3 + $0x98] sm:$0xff] %v3536
    %3601 = vst [vmem:[#allocation3 + $0xa0] sm:$0xff] %v3537
    %3602 = vst [vmem:[#allocation3 + $0xa8] sm:$0xff] %v3538
    %3603 = vst [vmem:[#allocation3 + $0xb0] sm:$0xff] %v3539
    %3604 = vst [vmem:[#allocation3 + $0xb8] sm:$0xff] %v3540
    %3605 = vst [vmem:[#allocation3 + $0xc0] sm:$0xff] %v3541
    %3606 = vst [vmem:[#allocation3 + $0xc8] sm:$0xff] %v3542
    %3607 = vst [vmem:[#allocation3 + $0xd0] sm:$0xff] %v3543
    %3608 = vst [vmem:[#allocation3 + $0xd8] sm:$0xff] %v3544
    %3609 = vst [vmem:[#allocation3 + $0xe0] sm:$0xff] %v3545
    %3610 = vst [vmem:[#allocation3 + $0xe8] sm:$0xff] %v3546
    %3611 = vst [vmem:[#allocation3 + $0xf0] sm:$0xff] %v3547
    %3612 = vst [vmem:[#allocation3 + $0xf8] sm:$0xff] %v3548
    %3613 = vst [vmem:[#allocation3 + $0x100] sm:$0xff] %v3549
    %3614 = vst [vmem:[#allocation3 + $0x108] sm:$0xff] %v3550
    %3615 = vst [vmem:[#allocation3 + $0x110] sm:$0xff] %v3551
    %3616 = vst [vmem:[#allocation3 + $0x118] sm:$0xff] %v3552
    %3617 = vst [vmem:[#allocation3 + $0x120] sm:$0xff] %v3553
    %3618 = vst [vmem:[#allocation3 + $0x128] sm:$0xff] %v3554
    %3619 = vst [vmem:[#allocation3 + $0x130] sm:$0xff] %v3555
    %3620 = vst [vmem:[#allocation3 + $0x138] sm:$0xff] %v3556
    %3621 = vst [vmem:[#allocation3 + $0x140] sm:$0xff] %v3557
    %3622 = vst [vmem:[#allocation3 + $0x148] sm:$0xff] %v3558
    %3623 = vst [vmem:[#allocation3 + $0x150] sm:$0xff] %v3559
    %3624 = vst [vmem:[#allocation3 + $0x158] sm:$0xff] %v3560
    %3625 = vst [vmem:[#allocation3 + $0x160] sm:$0xff] %v3561
    %3626 = vst [vmem:[#allocation3 + $0x168] sm:$0xff] %v3562
    %3627 = vst [vmem:[#allocation3 + $0x170] sm:$0xff] %v3563
    %3628 = vst [vmem:[#allocation3 + $0x178] sm:$0xff] %v3564
    %3629 = vst [vmem:[#allocation3 + $0x180] sm:$0xff] %v3565
    %3630 = vst [vmem:[#allocation3 + $0x188] sm:$0xff] %v3566
    %3631 = vst [vmem:[#allocation3 + $0x190] sm:$0xff] %v3567
    %3632 = vst [vmem:[#allocation3 + $0x198] sm:$0xff] %v3568
    %3633 = vst [vmem:[#allocation3 + $0x1a0] sm:$0xff] %v3569
    %3634 = vst [vmem:[#allocation3 + $0x1a8] sm:$0xff] %v3570
    %3635 = vst [vmem:[#allocation3 + $0x1b0] sm:$0xff] %v3571
    %3636 = vst [vmem:[#allocation3 + $0x1b8] sm:$0xff] %v3572
    %3637 = vst [vmem:[#allocation3 + $0x1c0] sm:$0xff] %v3573
    %3638 = vst [vmem:[#allocation3 + $0x1c8] sm:$0xff] %v3574
    %3639 = vst [vmem:[#allocation3 + $0x1d0] sm:$0xff] %v3575
    %3640 = vst [vmem:[#allocation3 + $0x1d8] sm:$0xff] %v3576
    %3641 = vst [vmem:[#allocation3 + $0x1e0] sm:$0xff] %v3577
    %3642 = vst [vmem:[#allocation3 + $0x1e8] sm:$0xff] %v3578
    %3643 = vst [vmem:[#allocation3 + $0x1f0] sm:$0xff] %v3579
    %3644 = vst [vmem:[#allocation3 + $0x1f8] sm:$0xff] %v3580
    %v3645 = vld [vmem:[%s1783 + $0x7] sm:$0xff]
    %v3646 = vld [vmem:[%s1783 + $0xf] sm:$0xff]
    %v3647 = vld [vmem:[%s1783 + $0x27] sm:$0xff]
    %v3648 = vld [vmem:[%s1783 + $0x2f] sm:$0xff]
    %v3649 = vld [vmem:[%s1783 + $0x47] sm:$0xff]
    %v3650 = vld [vmem:[%s1783 + $0x4f] sm:$0xff]
    %v3651 = vld [vmem:[%s1783 + $0x67] sm:$0xff]
    %v3652 = vld [vmem:[%s1783 + $0x6f] sm:$0xff]
    %v3653 = vld [vmem:[%s1783 + $0x87] sm:$0xff]
    %v3654 = vld [vmem:[%s1783 + $0x8f] sm:$0xff]
    %v3655 = vld [vmem:[%s1783 + $0xa7] sm:$0xff]
    %v3656 = vld [vmem:[%s1783 + $0xaf] sm:$0xff]
    %v3657 = vld [vmem:[%s1783 + $0xc7] sm:$0xff]
    %v3658 = vld [vmem:[%s1783 + $0xcf] sm:$0xff]
    %v3659 = vld [vmem:[%s1783 + $0xe7] sm:$0xff]
    %v3660 = vld [vmem:[%s1783 + $0xef] sm:$0xff]
    %v3661 = vld [vmem:[%s1783 + $0x107] sm:$0xff]
    %v3662 = vld [vmem:[%s1783 + $0x10f] sm:$0xff]
    %v3663 = vld [vmem:[%s1783 + $0x127] sm:$0xff]
    %v3664 = vld [vmem:[%s1783 + $0x12f] sm:$0xff]
    %v3665 = vld [vmem:[%s1783 + $0x147] sm:$0xff]
    %v3666 = vld [vmem:[%s1783 + $0x14f] sm:$0xff]
    %v3667 = vld [vmem:[%s1783 + $0x167] sm:$0xff]
    %v3668 = vld [vmem:[%s1783 + $0x16f] sm:$0xff]
    %v3669 = vld [vmem:[%s1783 + $0x187] sm:$0xff]
    %v3670 = vld [vmem:[%s1783 + $0x18f] sm:$0xff]
    %v3671 = vld [vmem:[%s1783 + $0x1a7] sm:$0xff]
    %v3672 = vld [vmem:[%s1783 + $0x1af] sm:$0xff]
    %v3673 = vld [vmem:[%s1783 + $0x1c7] sm:$0xff]
    %v3674 = vld [vmem:[%s1783 + $0x1cf] sm:$0xff]
    %v3675 = vld [vmem:[%s1783 + $0x1e7] sm:$0xff]
    %v3676 = vld [vmem:[%s1783 + $0x1ef] sm:$0xff]
    %v3677 = vld [vmem:[%s1783 + $0x247] sm:$0xff]
    %v3678 = vld [vmem:[%s1783 + $0x24f] sm:$0xff]
    %v3679 = vld [vmem:[%s1783 + $0x267] sm:$0xff]
    %v3680 = vld [vmem:[%s1783 + $0x26f] sm:$0xff]
    %v3681 = vld [vmem:[%s1783 + $0x287] sm:$0xff]
    %v3682 = vld [vmem:[%s1783 + $0x28f] sm:$0xff]
    %v3683 = vld [vmem:[%s1783 + $0x2a7] sm:$0xff]
    %v3684 = vld [vmem:[%s1783 + $0x2af] sm:$0xff]
    %v3685 = vld [vmem:[%s1783 + $0x2c7] sm:$0xff]
    %v3686 = vld [vmem:[%s1783 + $0x2cf] sm:$0xff]
    %v3687 = vld [vmem:[%s1783 + $0x2e7] sm:$0xff]
    %v3688 = vld [vmem:[%s1783 + $0x2ef] sm:$0xff]
    %v3689 = vld [vmem:[%s1783 + $0x307] sm:$0xff]
    %v3690 = vld [vmem:[%s1783 + $0x30f] sm:$0xff]
    %v3691 = vld [vmem:[%s1783 + $0x327] sm:$0xff]
    %v3692 = vld [vmem:[%s1783 + $0x32f] sm:$0xff]
    %v3693 = vld [vmem:[%s1783 + $0x347] sm:$0xff]
    %v3694 = vld [vmem:[%s1783 + $0x34f] sm:$0xff]
    %v3695 = vld [vmem:[%s1783 + $0x367] sm:$0xff]
    %v3696 = vld [vmem:[%s1783 + $0x36f] sm:$0xff]
    %v3697 = vld [vmem:[%s1783 + $0x387] sm:$0xff]
    %v3698 = vld [vmem:[%s1783 + $0x38f] sm:$0xff]
    %v3699 = vld [vmem:[%s1783 + $0x3a7] sm:$0xff]
    %v3700 = vld [vmem:[%s1783 + $0x3af] sm:$0xff]
    %v3701 = vld [vmem:[%s1783 + $0x3c7] sm:$0xff]
    %v3702 = vld [vmem:[%s1783 + $0x3cf] sm:$0xff]
    %v3703 = vld [vmem:[%s1783 + $0x3e7] sm:$0xff]
    %v3704 = vld [vmem:[%s1783 + $0x3ef] sm:$0xff]
    %v3705 = vld [vmem:[%s1783 + $0x407] sm:$0xff]
    %v3706 = vld [vmem:[%s1783 + $0x40f] sm:$0xff]
    %v3707 = vld [vmem:[%s1783 + $0x427] sm:$0xff]
    %v3708 = vld [vmem:[%s1783 + $0x42f] sm:$0xff]
    %v3709 = vpack.c.bf16 %v3646, %v3645
    %v3710 = vpack.c.bf16 %v3648, %v3647
    %v3711 = vpack.c.bf16 %v3650, %v3649
    %v3712 = vpack.c.bf16 %v3652, %v3651
    %v3713 = vpack.c.bf16 %v3654, %v3653
    %v3714 = vpack.c.bf16 %v3656, %v3655
    %v3715 = vpack.c.bf16 %v3658, %v3657
    %v3716 = vpack.c.bf16 %v3660, %v3659
    %v3717 = vpack.c.bf16 %v3662, %v3661
    %v3718 = vpack.c.bf16 %v3664, %v3663
    %v3719 = vpack.c.bf16 %v3666, %v3665
    %v3720 = vpack.c.bf16 %v3668, %v3667
    %v3721 = vpack.c.bf16 %v3670, %v3669
    %v3722 = vpack.c.bf16 %v3672, %v3671
    %v3723 = vpack.c.bf16 %v3674, %v3673
    %v3724 = vpack.c.bf16 %v3676, %v3675
    %v3725 = vpack.c.bf16 %v3678, %v3677
    %v3726 = vpack.c.bf16 %v3680, %v3679
    %v3727 = vpack.c.bf16 %v3682, %v3681
    %v3728 = vpack.c.bf16 %v3684, %v3683
    %v3729 = vpack.c.bf16 %v3686, %v3685
    %v3730 = vpack.c.bf16 %v3688, %v3687
    %v3731 = vpack.c.bf16 %v3690, %v3689
    %v3732 = vpack.c.bf16 %v3692, %v3691
    %v3733 = vpack.c.bf16 %v3694, %v3693
    %v3734 = vpack.c.bf16 %v3696, %v3695
    %v3735 = vpack.c.bf16 %v3698, %v3697
    %v3736 = vpack.c.bf16 %v3700, %v3699
    %v3737 = vpack.c.bf16 %v3702, %v3701
    %v3738 = vpack.c.bf16 %v3704, %v3703
    %v3739 = vpack.c.bf16 %v3706, %v3705
    %v3740 = vpack.c.bf16 %v3708, %v3707
    %s3741 = scalar_lea.vmem [#allocation10], 192
    %v3742 = vld [vmem:[%s3741] sm:$0xf]
    %v3743 = vld [vmem:[%s3741 + $0x4] sm:$0xf]
    %v3744 = vld [vmem:[%s3741 + $0x8] sm:$0xf]
    %v3745 = vld [vmem:[%s3741 + $0xc] sm:$0xf]
    %v3746 = vld [vmem:[%s3741 + $0x10] sm:$0xf]
    %v3747 = vld [vmem:[%s3741 + $0x14] sm:$0xf]
    %v3748 = vld [vmem:[%s3741 + $0x18] sm:$0xf]
    %v3749 = vld [vmem:[%s3741 + $0x1c] sm:$0xf]
    %v3750 = vld [vmem:[%s3741 + $0x20] sm:$0xf]
    %v3751 = vld [vmem:[%s3741 + $0x24] sm:$0xf]
    %v3752 = vld [vmem:[%s3741 + $0x28] sm:$0xf]
    %v3753 = vld [vmem:[%s3741 + $0x2c] sm:$0xf]
    %v3754 = vld [vmem:[%s3741 + $0x30] sm:$0xf]
    %v3755 = vld [vmem:[%s3741 + $0x34] sm:$0xf]
    %v3756 = vld [vmem:[%s3741 + $0x38] sm:$0xf]
    %v3757 = vld [vmem:[%s3741 + $0x3c] sm:$0xf]
    %v3774 = vunpack.c.l.b16 %v3742
    %v3775 = vunpack.c.l.b16 %v3743
    %v3776 = vunpack.c.l.b16 %v3744
    %v3777 = vunpack.c.l.b16 %v3745
    %v3778 = vunpack.c.l.b16 %v3746
    %v3779 = vunpack.c.l.b16 %v3747
    %v3780 = vunpack.c.l.b16 %v3748
    %v3781 = vunpack.c.l.b16 %v3749
    %v3782 = vunpack.c.l.b16 %v3750
    %v3783 = vunpack.c.l.b16 %v3751
    %v3784 = vunpack.c.l.b16 %v3752
    %v3785 = vunpack.c.l.b16 %v3753
    %v3786 = vunpack.c.l.b16 %v3754
    %v3787 = vunpack.c.l.b16 %v3755
    %v3788 = vunpack.c.l.b16 %v3756
    %v3789 = vunpack.c.l.b16 %v3757
    %v3790 = vpack.c.b16 %v3775, %v3774
    %v3791 = vpack.c.b16 %v3777, %v3776
    %v3792 = vpack.c.b16 %v3779, %v3778
    %v3793 = vpack.c.b16 %v3781, %v3780
    %v3794 = vpack.c.b16 %v3783, %v3782
    %v3795 = vpack.c.b16 %v3785, %v3784
    %v3796 = vpack.c.b16 %v3787, %v3786
    %v3797 = vpack.c.b16 %v3789, %v3788
    %3806 = vmatprep.subr.bf16.mxu0 0
    %3807 = vmatpush1.bf16.msra.mxu0 %v3790
    %3808 = vmatprep.subr.bf16.mxu0 0
    %3809 = vmatpush1.bf16.msra.mxu0 %v3791
    %3810 = vmatprep.subr.bf16.mxu0 0
    %3811 = vmatpush1.bf16.msra.mxu0 %v3792
    %3812 = vmatprep.subr.bf16.mxu0 0
    %3813 = vmatpush1.bf16.msra.mxu0 %v3793
    %3814 = vmatprep.subr.bf16.mxu0 0
    %3815 = vmatpush1.bf16.msra.mxu0 %v3794
    %3816 = vmatprep.subr.bf16.mxu0 0
    %3817 = vmatpush1.bf16.msra.mxu0 %v3795
    %3818 = vmatprep.subr.bf16.mxu0 0
    %3819 = vmatpush1.bf16.msra.mxu0 %v3796
    %3820 = vmatprep.subr.bf16.mxu0 0
    %3821 = vmatpush1.bf16.msra.mxu0 %v3797
    %3822 = vmatprep.subr.bf16.mxu0 0
    %3823 = vmatpush1.bf16.msra.mxu0 0
    %3824 = vmatprep.subr.bf16.mxu0 0
    %3825 = vmatpush1.bf16.msra.mxu0 0
    %3826 = vmatprep.subr.bf16.mxu0 0
    %3827 = vmatpush1.bf16.msra.mxu0 0
    %3828 = vmatprep.subr.bf16.mxu0 0
    %3829 = vmatpush1.bf16.msra.mxu0 0
    %3830 = vmatprep.subr.bf16.mxu0 0
    %3831 = vmatpush1.bf16.msra.mxu0 0
    %3832 = vmatprep.subr.bf16.mxu0 0
    %3833 = vmatpush1.bf16.msra.mxu0 0
    %3834 = vmatprep.subr.bf16.mxu0 0
    %3835 = vmatpush1.bf16.msra.mxu0 0
    %3836 = vmatprep.subr.bf16.mxu0 0
    %3837 = vmatpush1.bf16.msra.mxu0 0
    %3838 = vmatprep.mubr.bf16.mxu0 0
    %3839 = vmatmul.mubr.bf16.gmra.mrb[0].mxu0 %v3709
    %v3840 = vpop.f32.mrb[0].mxu0
    %v3841 = vadd.f32 0.0, %v3840
    %v3842 = vpop.f32.mrb[0].mxu0
    %v3843 = vpop.f32.mrb[0].mxu0
    %v3844 = vadd.f32 0.0, %v3843
    %v3845 = vpop.f32.mrb[0].mxu0
    %3846 = vmatprep.mubr.bf16.mxu0 0
    %3847 = vmatmul.mubr.bf16.gmra.mrb[0].mxu0 %v3710
    %v3848 = vpop.f32.mrb[0].mxu0
    %v3849 = vadd.f32 0.0, %v3848
    %v3850 = vpop.f32.mrb[0].mxu0
    %v3851 = vpop.f32.mrb[0].mxu0
    %v3852 = vadd.f32 0.0, %v3851
    %v3853 = vpop.f32.mrb[0].mxu0
    %3854 = vmatprep.mubr.bf16.mxu0 0
    %3855 = vmatmul.mubr.bf16.gmra.mrb[0].mxu0 %v3711
    %v3856 = vpop.f32.mrb[0].mxu0
    %v3857 = vadd.f32 0.0, %v3856
    %v3858 = vpop.f32.mrb[0].mxu0
    %v3859 = vpop.f32.mrb[0].mxu0
    %v3860 = vadd.f32 0.0, %v3859
    %v3861 = vpop.f32.mrb[0].mxu0
    %3862 = vmatprep.mubr.bf16.mxu0 0
    %3863 = vmatmul.mubr.bf16.gmra.mrb[0].mxu0 %v3712
    %v3864 = vpop.f32.mrb[0].mxu0
    %v3865 = vadd.f32 0.0, %v3864
    %v3866 = vpop.f32.mrb[0].mxu0
    %v3867 = vpop.f32.mrb[0].mxu0
    %v3868 = vadd.f32 0.0, %v3867
    %v3869 = vpop.f32.mrb[0].mxu0
    %3870 = vmatprep.mubr.bf16.mxu0 0
    %3871 = vmatmul.mubr.bf16.gmra.mrb[0].mxu0 %v3713
    %v3872 = vpop.f32.mrb[0].mxu0
    %v3873 = vadd.f32 0.0, %v3872
    %v3874 = vpop.f32.mrb[0].mxu0
    %v3875 = vpop.f32.mrb[0].mxu0
    %v3876 = vadd.f32 0.0, %v3875
    %v3877 = vpop.f32.mrb[0].mxu0
    %3878 = vmatprep.mubr.bf16.mxu0 0
    %3879 = vmatmul.mubr.bf16.gmra.mrb[0].mxu0 %v3714
    %v3880 = vpop.f32.mrb[0].mxu0
    %v3881 = vadd.f32 0.0, %v3880
    %v3882 = vpop.f32.mrb[0].mxu0
    %v3883 = vpop.f32.mrb[0].mxu0
    %v3884 = vadd.f32 0.0, %v3883
    %v3885 = vpop.f32.mrb[0].mxu0
    %3886 = vmatprep.mubr.bf16.mxu0 0
    %3887 = vmatmul.mubr.bf16.gmra.mrb[0].mxu0 %v3715
    %v3888 = vpop.f32.mrb[0].mxu0
    %v3889 = vadd.f32 0.0, %v3888
    %v3890 = vpop.f32.mrb[0].mxu0
    %v3891 = vpop.f32.mrb[0].mxu0
    %v3892 = vadd.f32 0.0, %v3891
    %v3893 = vpop.f32.mrb[0].mxu0
    %3894 = vmatprep.mubr.bf16.mxu0 0
    %3895 = vmatmul.mubr.bf16.gmra.mrb[0].mxu0 %v3716
    %v3896 = vpop.f32.mrb[0].mxu0
    %v3897 = vadd.f32 0.0, %v3896
    %v3898 = vpop.f32.mrb[0].mxu0
    %v3899 = vpop.f32.mrb[0].mxu0
    %v3900 = vadd.f32 0.0, %v3899
    %v3901 = vpop.f32.mrb[0].mxu0
    %3902 = vmatprep.mubr.bf16.mxu0 0
    %3903 = vmatmul.mubr.bf16.gmra.mrb[0].mxu0 %v3717
    %v3904 = vpop.f32.mrb[0].mxu0
    %v3905 = vadd.f32 0.0, %v3904
    %v3906 = vpop.f32.mrb[0].mxu0
    %v3907 = vpop.f32.mrb[0].mxu0
    %v3908 = vadd.f32 0.0, %v3907
    %v3909 = vpop.f32.mrb[0].mxu0
    %3910 = vmatprep.mubr.bf16.mxu0 0
    %3911 = vmatmul.mubr.bf16.gmra.mrb[0].mxu0 %v3718
    %v3912 = vpop.f32.mrb[0].mxu0
    %v3913 = vadd.f32 0.0, %v3912
    %v3914 = vpop.f32.mrb[0].mxu0
    %v3915 = vpop.f32.mrb[0].mxu0
    %v3916 = vadd.f32 0.0, %v3915
    %v3917 = vpop.f32.mrb[0].mxu0
    %3918 = vmatprep.mubr.bf16.mxu0 0
    %3919 = vmatmul.mubr.bf16.gmra.mrb[0].mxu0 %v3719
    %v3920 = vpop.f32.mrb[0].mxu0
    %v3921 = vadd.f32 0.0, %v3920
    %v3922 = vpop.f32.mrb[0].mxu0
    %v3923 = vpop.f32.mrb[0].mxu0
    %v3924 = vadd.f32 0.0, %v3923
    %v3925 = vpop.f32.mrb[0].mxu0
    %3926 = vmatprep.mubr.bf16.mxu0 0
    %3927 = vmatmul.mubr.bf16.gmra.mrb[0].mxu0 %v3720
    %v3928 = vpop.f32.mrb[0].mxu0
    %v3929 = vadd.f32 0.0, %v3928
    %v3930 = vpop.f32.mrb[0].mxu0
    %v3931 = vpop.f32.mrb[0].mxu0
    %v3932 = vadd.f32 0.0, %v3931
    %v3933 = vpop.f32.mrb[0].mxu0
    %3934 = vmatprep.mubr.bf16.mxu0 0
    %3935 = vmatmul.mubr.bf16.gmra.mrb[0].mxu0 %v3721
    %v3936 = vpop.f32.mrb[0].mxu0
    %v3937 = vadd.f32 0.0, %v3936
    %v3938 = vpop.f32.mrb[0].mxu0
    %v3939 = vpop.f32.mrb[0].mxu0
    %v3940 = vadd.f32 0.0, %v3939
    %v3941 = vpop.f32.mrb[0].mxu0
    %3942 = vmatprep.mubr.bf16.mxu0 0
    %3943 = vmatmul.mubr.bf16.gmra.mrb[0].mxu0 %v3722
    %v3944 = vpop.f32.mrb[0].mxu0
    %v3945 = vadd.f32 0.0, %v3944
    %v3946 = vpop.f32.mrb[0].mxu0
    %v3947 = vpop.f32.mrb[0].mxu0
    %v3948 = vadd.f32 0.0, %v3947
    %v3949 = vpop.f32.mrb[0].mxu0
    %3950 = vmatprep.mubr.bf16.mxu0 0
    %3951 = vmatmul.mubr.bf16.gmra.mrb[0].mxu0 %v3723
    %v3952 = vpop.f32.mrb[0].mxu0
    %v3953 = vadd.f32 0.0, %v3952
    %v3954 = vpop.f32.mrb[0].mxu0
    %v3955 = vpop.f32.mrb[0].mxu0
    %v3956 = vadd.f32 0.0, %v3955
    %v3957 = vpop.f32.mrb[0].mxu0
    %3958 = vmatprep.mubr.bf16.mxu0 0
    %3959 = vmatmul.mubr.bf16.gmra.mrb[0].mxu0 %v3724
    %v3960 = vpop.f32.mrb[0].mxu0
    %v3961 = vadd.f32 0.0, %v3960
    %v3962 = vpop.f32.mrb[0].mxu0
    %v3963 = vpop.f32.mrb[0].mxu0
    %v3964 = vadd.f32 0.0, %v3963
    %v3965 = vpop.f32.mrb[0].mxu0
    %3966 = vmatprep.mubr.bf16.mxu0 0
    %3967 = vmatmul.mubr.bf16.gmra.mrb[0].mxu0 %v3725
    %v3968 = vpop.f32.mrb[0].mxu0
    %v3969 = vadd.f32 0.0, %v3968
    %v3970 = vpop.f32.mrb[0].mxu0
    %v3971 = vpop.f32.mrb[0].mxu0
    %v3972 = vadd.f32 0.0, %v3971
    %v3973 = vpop.f32.mrb[0].mxu0
    %3974 = vmatprep.mubr.bf16.mxu0 0
    %3975 = vmatmul.mubr.bf16.gmra.mrb[0].mxu0 %v3726
    %v3976 = vpop.f32.mrb[0].mxu0
    %v3977 = vadd.f32 0.0, %v3976
    %v3978 = vpop.f32.mrb[0].mxu0
    %v3979 = vpop.f32.mrb[0].mxu0
    %v3980 = vadd.f32 0.0, %v3979
    %v3981 = vpop.f32.mrb[0].mxu0
    %3982 = vmatprep.mubr.bf16.mxu0 0
    %3983 = vmatmul.mubr.bf16.gmra.mrb[0].mxu0 %v3727
    %v3984 = vpop.f32.mrb[0].mxu0
    %v3985 = vadd.f32 0.0, %v3984
    %v3986 = vpop.f32.mrb[0].mxu0
    %v3987 = vpop.f32.mrb[0].mxu0
    %v3988 = vadd.f32 0.0, %v3987
    %v3989 = vpop.f32.mrb[0].mxu0
    %3990 = vmatprep.mubr.bf16.mxu0 0
    %3991 = vmatmul.mubr.bf16.gmra.mrb[0].mxu0 %v3728
    %v3992 = vpop.f32.mrb[0].mxu0
    %v3993 = vadd.f32 0.0, %v3992
    %v3994 = vpop.f32.mrb[0].mxu0
    %v3995 = vpop.f32.mrb[0].mxu0
    %v3996 = vadd.f32 0.0, %v3995
    %v3997 = vpop.f32.mrb[0].mxu0
    %3998 = vmatprep.mubr.bf16.mxu0 0
    %3999 = vmatmul.mubr.bf16.gmra.mrb[0].mxu0 %v3729
    %v4000 = vpop.f32.mrb[0].mxu0
    %v4001 = vadd.f32 0.0, %v4000
    %v4002 = vpop.f32.mrb[0].mxu0
    %v4003 = vpop.f32.mrb[0].mxu0
    %v4004 = vadd.f32 0.0, %v4003
    %v4005 = vpop.f32.mrb[0].mxu0
    %4006 = vmatprep.mubr.bf16.mxu0 0
    %4007 = vmatmul.mubr.bf16.gmra.mrb[0].mxu0 %v3730
    %v4008 = vpop.f32.mrb[0].mxu0
    %v4009 = vadd.f32 0.0, %v4008
    %v4010 = vpop.f32.mrb[0].mxu0
    %v4011 = vpop.f32.mrb[0].mxu0
    %v4012 = vadd.f32 0.0, %v4011
    %v4013 = vpop.f32.mrb[0].mxu0
    %4014 = vmatprep.mubr.bf16.mxu0 0
    %4015 = vmatmul.mubr.bf16.gmra.mrb[0].mxu0 %v3731
    %v4016 = vpop.f32.mrb[0].mxu0
    %v4017 = vadd.f32 0.0, %v4016
    %v4018 = vpop.f32.mrb[0].mxu0
    %v4019 = vpop.f32.mrb[0].mxu0
    %v4020 = vadd.f32 0.0, %v4019
    %v4021 = vpop.f32.mrb[0].mxu0
    %4022 = vmatprep.mubr.bf16.mxu0 0
    %4023 = vmatmul.mubr.bf16.gmra.mrb[0].mxu0 %v3732
    %v4024 = vpop.f32.mrb[0].mxu0
    %v4025 = vadd.f32 0.0, %v4024
    %v4026 = vpop.f32.mrb[0].mxu0
    %v4027 = vpop.f32.mrb[0].mxu0
    %v4028 = vadd.f32 0.0, %v4027
    %v4029 = vpop.f32.mrb[0].mxu0
    %4030 = vmatprep.mubr.bf16.mxu0 0
    %4031 = vmatmul.mubr.bf16.gmra.mrb[0].mxu0 %v3733
    %v4032 = vpop.f32.mrb[0].mxu0
    %v4033 = vadd.f32 0.0, %v4032
    %v4034 = vpop.f32.mrb[0].mxu0
    %v4035 = vpop.f32.mrb[0].mxu0
    %v4036 = vadd.f32 0.0, %v4035
    %v4037 = vpop.f32.mrb[0].mxu0
    %4038 = vmatprep.mubr.bf16.mxu0 0
    %4039 = vmatmul.mubr.bf16.gmra.mrb[0].mxu0 %v3734
    %v4040 = vpop.f32.mrb[0].mxu0
    %v4041 = vadd.f32 0.0, %v4040
    %v4042 = vpop.f32.mrb[0].mxu0
    %v4043 = vpop.f32.mrb[0].mxu0
    %v4044 = vadd.f32 0.0, %v4043
    %v4045 = vpop.f32.mrb[0].mxu0
    %4046 = vmatprep.mubr.bf16.mxu0 0
    %4047 = vmatmul.mubr.bf16.gmra.mrb[0].mxu0 %v3735
    %v4048 = vpop.f32.mrb[0].mxu0
    %v4049 = vadd.f32 0.0, %v4048
    %v4050 = vpop.f32.mrb[0].mxu0
    %v4051 = vpop.f32.mrb[0].mxu0
    %v4052 = vadd.f32 0.0, %v4051
    %v4053 = vpop.f32.mrb[0].mxu0
    %4054 = vmatprep.mubr.bf16.mxu0 0
    %4055 = vmatmul.mubr.bf16.gmra.mrb[0].mxu0 %v3736
    %v4056 = vpop.f32.mrb[0].mxu0
    %v4057 = vadd.f32 0.0, %v4056
    %v4058 = vpop.f32.mrb[0].mxu0
    %v4059 = vpop.f32.mrb[0].mxu0
    %v4060 = vadd.f32 0.0, %v4059
    %v4061 = vpop.f32.mrb[0].mxu0
    %4062 = vmatprep.mubr.bf16.mxu0 0
    %4063 = vmatmul.mubr.bf16.gmra.mrb[0].mxu0 %v3737
    %v4064 = vpop.f32.mrb[0].mxu0
    %v4065 = vadd.f32 0.0, %v4064
    %v4066 = vpop.f32.mrb[0].mxu0
    %v4067 = vpop.f32.mrb[0].mxu0
    %v4068 = vadd.f32 0.0, %v4067
    %v4069 = vpop.f32.mrb[0].mxu0
    %4070 = vmatprep.mubr.bf16.mxu0 0
    %4071 = vmatmul.mubr.bf16.gmra.mrb[0].mxu0 %v3738
    %v4072 = vpop.f32.mrb[0].mxu0
    %v4073 = vadd.f32 0.0, %v4072
    %v4074 = vpop.f32.mrb[0].mxu0
    %v4075 = vpop.f32.mrb[0].mxu0
    %v4076 = vadd.f32 0.0, %v4075
    %v4077 = vpop.f32.mrb[0].mxu0
    %4078 = vmatprep.mubr.bf16.mxu0 0
    %4079 = vmatmul.mubr.bf16.gmra.mrb[0].mxu0 %v3739
    %v4080 = vpop.f32.mrb[0].mxu0
    %v4081 = vadd.f32 0.0, %v4080
    %v4082 = vpop.f32.mrb[0].mxu0
    %v4083 = vpop.f32.mrb[0].mxu0
    %v4084 = vadd.f32 0.0, %v4083
    %v4085 = vpop.f32.mrb[0].mxu0
    %4086 = vmatprep.mubr.bf16.mxu0 0
    %4087 = vmatmul.mubr.bf16.gmra.mrb[0].mxu0 %v3740
    %v4088 = vpop.f32.mrb[0].mxu0
    %v4089 = vadd.f32 0.0, %v4088
    %v4090 = vpop.f32.mrb[0].mxu0
    %v4091 = vpop.f32.mrb[0].mxu0
    %v4092 = vadd.f32 0.0, %v4091
    %v4093 = vpop.f32.mrb[0].mxu0
    %4094 = vdwg.mxu0
    %v4095 = vld [vmem:[#allocation3] sm:$0xff]
    %v4096 = vld [vmem:[#allocation3 + $0x8] sm:$0xff]
    %v4097 = vld [vmem:[#allocation3 + $0x10] sm:$0xff]
    %v4098 = vld [vmem:[#allocation3 + $0x18] sm:$0xff]
    %v4099 = vld [vmem:[#allocation3 + $0x20] sm:$0xff]
    %v4100 = vld [vmem:[#allocation3 + $0x28] sm:$0xff]
    %v4101 = vld [vmem:[#allocation3 + $0x30] sm:$0xff]
    %v4102 = vld [vmem:[#allocation3 + $0x38] sm:$0xff]
    %v4103 = vld [vmem:[#allocation3 + $0x40] sm:$0xff]
    %v4104 = vld [vmem:[#allocation3 + $0x48] sm:$0xff]
    %v4105 = vld [vmem:[#allocation3 + $0x50] sm:$0xff]
    %v4106 = vld [vmem:[#allocation3 + $0x58] sm:$0xff]
    %v4107 = vld [vmem:[#allocation3 + $0x60] sm:$0xff]
    %v4108 = vld [vmem:[#allocation3 + $0x68] sm:$0xff]
    %v4109 = vld [vmem:[#allocation3 + $0x70] sm:$0xff]
    %v4110 = vld [vmem:[#allocation3 + $0x78] sm:$0xff]
    %v4111 = vld [vmem:[#allocation3 + $0x80] sm:$0xff]
    %v4112 = vld [vmem:[#allocation3 + $0x88] sm:$0xff]
    %v4113 = vld [vmem:[#allocation3 + $0x90] sm:$0xff]
    %v4114 = vld [vmem:[#allocation3 + $0x98] sm:$0xff]
    %v4115 = vld [vmem:[#allocation3 + $0xa0] sm:$0xff]
    %v4116 = vld [vmem:[#allocation3 + $0xa8] sm:$0xff]
    %v4117 = vld [vmem:[#allocation3 + $0xb0] sm:$0xff]
    %v4118 = vld [vmem:[#allocation3 + $0xb8] sm:$0xff]
    %v4119 = vld [vmem:[#allocation3 + $0xc0] sm:$0xff]
    %v4120 = vld [vmem:[#allocation3 + $0xc8] sm:$0xff]
    %v4121 = vld [vmem:[#allocation3 + $0xd0] sm:$0xff]
    %v4122 = vld [vmem:[#allocation3 + $0xd8] sm:$0xff]
    %v4123 = vld [vmem:[#allocation3 + $0xe0] sm:$0xff]
    %v4124 = vld [vmem:[#allocation3 + $0xe8] sm:$0xff]
    %v4125 = vld [vmem:[#allocation3 + $0xf0] sm:$0xff]
    %v4126 = vld [vmem:[#allocation3 + $0xf8] sm:$0xff]
    %v4127 = vld [vmem:[#allocation3 + $0x100] sm:$0xff]
    %v4128 = vld [vmem:[#allocation3 + $0x108] sm:$0xff]
    %v4129 = vld [vmem:[#allocation3 + $0x110] sm:$0xff]
    %v4130 = vld [vmem:[#allocation3 + $0x118] sm:$0xff]
    %v4131 = vld [vmem:[#allocation3 + $0x120] sm:$0xff]
    %v4132 = vld [vmem:[#allocation3 + $0x128] sm:$0xff]
    %v4133 = vld [vmem:[#allocation3 + $0x130] sm:$0xff]
    %v4134 = vld [vmem:[#allocation3 + $0x138] sm:$0xff]
    %v4135 = vld [vmem:[#allocation3 + $0x140] sm:$0xff]
    %v4136 = vld [vmem:[#allocation3 + $0x148] sm:$0xff]
    %v4137 = vld [vmem:[#allocation3 + $0x150] sm:$0xff]
    %v4138 = vld [vmem:[#allocation3 + $0x158] sm:$0xff]
    %v4139 = vld [vmem:[#allocation3 + $0x160] sm:$0xff]
    %v4140 = vld [vmem:[#allocation3 + $0x168] sm:$0xff]
    %v4141 = vld [vmem:[#allocation3 + $0x170] sm:$0xff]
    %v4142 = vld [vmem:[#allocation3 + $0x178] sm:$0xff]
    %v4143 = vld [vmem:[#allocation3 + $0x180] sm:$0xff]
    %v4144 = vld [vmem:[#allocation3 + $0x188] sm:$0xff]
    %v4145 = vld [vmem:[#allocation3 + $0x190] sm:$0xff]
    %v4146 = vld [vmem:[#allocation3 + $0x198] sm:$0xff]
    %v4147 = vld [vmem:[#allocation3 + $0x1a0] sm:$0xff]
    %v4148 = vld [vmem:[#allocation3 + $0x1a8] sm:$0xff]
    %v4149 = vld [vmem:[#allocation3 + $0x1b0] sm:$0xff]
    %v4150 = vld [vmem:[#allocation3 + $0x1b8] sm:$0xff]
    %v4151 = vld [vmem:[#allocation3 + $0x1c0] sm:$0xff]
    %v4152 = vld [vmem:[#allocation3 + $0x1c8] sm:$0xff]
    %v4153 = vld [vmem:[#allocation3 + $0x1d0] sm:$0xff]
    %v4154 = vld [vmem:[#allocation3 + $0x1d8] sm:$0xff]
    %v4155 = vld [vmem:[#allocation3 + $0x1e0] sm:$0xff]
    %v4156 = vld [vmem:[#allocation3 + $0x1e8] sm:$0xff]
    %v4157 = vld [vmem:[#allocation3 + $0x1f0] sm:$0xff]
    %v4158 = vld [vmem:[#allocation3 + $0x1f8] sm:$0xff]
    %v4159 = vadd.f32 %v4095, %v3841
    %v4160 = vadd.f32 %v4096, %v3844
    %v4161 = vadd.f32 %v4097, %v3849
    %v4162 = vadd.f32 %v4098, %v3852
    %v4163 = vadd.f32 %v4099, %v3857
    %v4164 = vadd.f32 %v4100, %v3860
    %v4165 = vadd.f32 %v4101, %v3865
    %v4166 = vadd.f32 %v4102, %v3868
    %v4167 = vadd.f32 %v4103, %v3873
    %v4168 = vadd.f32 %v4104, %v3876
    %v4169 = vadd.f32 %v4105, %v3881
    %v4170 = vadd.f32 %v4106, %v3884
    %v4171 = vadd.f32 %v4107, %v3889
    %v4172 = vadd.f32 %v4108, %v3892
    %v4173 = vadd.f32 %v4109, %v3897
    %v4174 = vadd.f32 %v4110, %v3900
    %v4175 = vadd.f32 %v4111, %v3905
    %v4176 = vadd.f32 %v4112, %v3908
    %v4177 = vadd.f32 %v4113, %v3913
    %v4178 = vadd.f32 %v4114, %v3916
    %v4179 = vadd.f32 %v4115, %v3921
    %v4180 = vadd.f32 %v4116, %v3924
    %v4181 = vadd.f32 %v4117, %v3929
    %v4182 = vadd.f32 %v4118, %v3932
    %v4183 = vadd.f32 %v4119, %v3937
    %v4184 = vadd.f32 %v4120, %v3940
    %v4185 = vadd.f32 %v4121, %v3945
    %v4186 = vadd.f32 %v4122, %v3948
    %v4187 = vadd.f32 %v4123, %v3953
    %v4188 = vadd.f32 %v4124, %v3956
    %v4189 = vadd.f32 %v4125, %v3961
    %v4190 = vadd.f32 %v4126, %v3964
    %v4191 = vadd.f32 %v4127, %v3969
    %v4192 = vadd.f32 %v4128, %v3972
    %v4193 = vadd.f32 %v4129, %v3977
    %v4194 = vadd.f32 %v4130, %v3980
    %v4195 = vadd.f32 %v4131, %v3985
    %v4196 = vadd.f32 %v4132, %v3988
    %v4197 = vadd.f32 %v4133, %v3993
    %v4198 = vadd.f32 %v4134, %v3996
    %v4199 = vadd.f32 %v4135, %v4001
    %v4200 = vadd.f32 %v4136, %v4004
    %v4201 = vadd.f32 %v4137, %v4009
    %v4202 = vadd.f32 %v4138, %v4012
    %v4203 = vadd.f32 %v4139, %v4017
    %v4204 = vadd.f32 %v4140, %v4020
    %v4205 = vadd.f32 %v4141, %v4025
    %v4206 = vadd.f32 %v4142, %v4028
    %v4207 = vadd.f32 %v4143, %v4033
    %v4208 = vadd.f32 %v4144, %v4036
    %v4209 = vadd.f32 %v4145, %v4041
    %v4210 = vadd.f32 %v4146, %v4044
    %v4211 = vadd.f32 %v4147, %v4049
    %v4212 = vadd.f32 %v4148, %v4052
    %v4213 = vadd.f32 %v4149, %v4057
    %v4214 = vadd.f32 %v4150, %v4060
    %v4215 = vadd.f32 %v4151, %v4065
    %v4216 = vadd.f32 %v4152, %v4068
    %v4217 = vadd.f32 %v4153, %v4073
    %v4218 = vadd.f32 %v4154, %v4076
    %v4219 = vadd.f32 %v4155, %v4081
    %v4220 = vadd.f32 %v4156, %v4084
    %v4221 = vadd.f32 %v4157, %v4089
    %v4222 = vadd.f32 %v4158, %v4092
    %4223 = vst [vmem:[#allocation3] sm:$0xff] %v4159
    %4224 = vst [vmem:[#allocation3 + $0x8] sm:$0xff] %v4160
    %4225 = vst [vmem:[#allocation3 + $0x10] sm:$0xff] %v4161
    %4226 = vst [vmem:[#allocation3 + $0x18] sm:$0xff] %v4162
    %4227 = vst [vmem:[#allocation3 + $0x20] sm:$0xff] %v4163
    %4228 = vst [vmem:[#allocation3 + $0x28] sm:$0xff] %v4164
    %4229 = vst [vmem:[#allocation3 + $0x30] sm:$0xff] %v4165
    %4230 = vst [vmem:[#allocation3 + $0x38] sm:$0xff] %v4166
    %4231 = vst [vmem:[#allocation3 + $0x40] sm:$0xff] %v4167
    %4232 = vst [vmem:[#allocation3 + $0x48] sm:$0xff] %v4168
    %4233 = vst [vmem:[#allocation3 + $0x50] sm:$0xff] %v4169
    %4234 = vst [vmem:[#allocation3 + $0x58] sm:$0xff] %v4170
    %4235 = vst [vmem:[#allocation3 + $0x60] sm:$0xff] %v4171
    %4236 = vst [vmem:[#allocation3 + $0x68] sm:$0xff] %v4172
    %4237 = vst [vmem:[#allocation3 + $0x70] sm:$0xff] %v4173
    %4238 = vst [vmem:[#allocation3 + $0x78] sm:$0xff] %v4174
    %4239 = vst [vmem:[#allocation3 + $0x80] sm:$0xff] %v4175
    %4240 = vst [vmem:[#allocation3 + $0x88] sm:$0xff] %v4176
    %4241 = vst [vmem:[#allocation3 + $0x90] sm:$0xff] %v4177
    %4242 = vst [vmem:[#allocation3 + $0x98] sm:$0xff] %v4178
    %4243 = vst [vmem:[#allocation3 + $0xa0] sm:$0xff] %v4179
    %4244 = vst [vmem:[#allocation3 + $0xa8] sm:$0xff] %v4180
    %4245 = vst [vmem:[#allocation3 + $0xb0] sm:$0xff] %v4181
    %4246 = vst [vmem:[#allocation3 + $0xb8] sm:$0xff] %v4182
    %4247 = vst [vmem:[#allocation3 + $0xc0] sm:$0xff] %v4183
    %4248 = vst [vmem:[#allocation3 + $0xc8] sm:$0xff] %v4184
    %4249 = vst [vmem:[#allocation3 + $0xd0] sm:$0xff] %v4185
    %4250 = vst [vmem:[#allocation3 + $0xd8] sm:$0xff] %v4186
    %4251 = vst [vmem:[#allocation3 + $0xe0] sm:$0xff] %v4187
    %4252 = vst [vmem:[#allocation3 + $0xe8] sm:$0xff] %v4188
    %4253 = vst [vmem:[#allocation3 + $0xf0] sm:$0xff] %v4189
    %4254 = vst [vmem:[#allocation3 + $0xf8] sm:$0xff] %v4190
    %4255 = vst [vmem:[#allocation3 + $0x100] sm:$0xff] %v4191
    %4256 = vst [vmem:[#allocation3 + $0x108] sm:$0xff] %v4192
    %4257 = vst [vmem:[#allocation3 + $0x110] sm:$0xff] %v4193
    %4258 = vst [vmem:[#allocation3 + $0x118] sm:$0xff] %v4194
    %4259 = vst [vmem:[#allocation3 + $0x120] sm:$0xff] %v4195
    %4260 = vst [vmem:[#allocation3 + $0x128] sm:$0xff] %v4196
    %4261 = vst [vmem:[#allocation3 + $0x130] sm:$0xff] %v4197
    %4262 = vst [vmem:[#allocation3 + $0x138] sm:$0xff] %v4198
    %4263 = vst [vmem:[#allocation3 + $0x140] sm:$0xff] %v4199
    %4264 = vst [vmem:[#allocation3 + $0x148] sm:$0xff] %v4200
    %4265 = vst [vmem:[#allocation3 + $0x150] sm:$0xff] %v4201
    %4266 = vst [vmem:[#allocation3 + $0x158] sm:$0xff] %v4202
    %4267 = vst [vmem:[#allocation3 + $0x160] sm:$0xff] %v4203
    %4268 = vst [vmem:[#allocation3 + $0x168] sm:$0xff] %v4204
    %4269 = vst [vmem:[#allocation3 + $0x170] sm:$0xff] %v4205
    %4270 = vst [vmem:[#allocation3 + $0x178] sm:$0xff] %v4206
    %4271 = vst [vmem:[#allocation3 + $0x180] sm:$0xff] %v4207
    %4272 = vst [vmem:[#allocation3 + $0x188] sm:$0xff] %v4208
    %4273 = vst [vmem:[#allocation3 + $0x190] sm:$0xff] %v4209
    %4274 = vst [vmem:[#allocation3 + $0x198] sm:$0xff] %v4210
    %4275 = vst [vmem:[#allocation3 + $0x1a0] sm:$0xff] %v4211
    %4276 = vst [vmem:[#allocation3 + $0x1a8] sm:$0xff] %v4212
    %4277 = vst [vmem:[#allocation3 + $0x1b0] sm:$0xff] %v4213
    %4278 = vst [vmem:[#allocation3 + $0x1b8] sm:$0xff] %v4214
    %4279 = vst [vmem:[#allocation3 + $0x1c0] sm:$0xff] %v4215
    %4280 = vst [vmem:[#allocation3 + $0x1c8] sm:$0xff] %v4216
    %4281 = vst [vmem:[#allocation3 + $0x1d0] sm:$0xff] %v4217
    %4282 = vst [vmem:[#allocation3 + $0x1d8] sm:$0xff] %v4218
    %4283 = vst [vmem:[#allocation3 + $0x1e0] sm:$0xff] %v4219
    %4284 = vst [vmem:[#allocation3 + $0x1e8] sm:$0xff] %v4220
    %4285 = vst [vmem:[#allocation3 + $0x1f0] sm:$0xff] %v4221
    %4286 = vst [vmem:[#allocation3 + $0x1f8] sm:$0xff] %v4222
    %v4287 = vld [vmem:[%s1783 + $0x8] sm:$0xff]
    %v4288 = vld [vmem:[%s1783 + $0x10] sm:$0xff]
    %v4289 = vld [vmem:[%s1783 + $0x28] sm:$0xff]
    %v4290 = vld [vmem:[%s1783 + $0x30] sm:$0xff]
    %v4291 = vld [vmem:[%s1783 + $0x48] sm:$0xff]
    %v4292 = vld [vmem:[%s1783 + $0x50] sm:$0xff]
    %v4293 = vld [vmem:[%s1783 + $0x68] sm:$0xff]
    %v4294 = vld [vmem:[%s1783 + $0x70] sm:$0xff]
    %v4295 = vld [vmem:[%s1783 + $0x88] sm:$0xff]
    %v4296 = vld [vmem:[%s1783 + $0x90] sm:$0xff]
    %v4297 = vld [vmem:[%s1783 + $0xa8] sm:$0xff]
    %v4298 = vld [vmem:[%s1783 + $0xb0] sm:$0xff]
    %v4299 = vld [vmem:[%s1783 + $0xc8] sm:$0xff]
    %v4300 = vld [vmem:[%s1783 + $0xd0] sm:$0xff]
    %v4301 = vld [vmem:[%s1783 + $0xe8] sm:$0xff]
    %v4302 = vld [vmem:[%s1783 + $0xf0] sm:$0xff]
    %v4303 = vld [vmem:[%s1783 + $0x108] sm:$0xff]
    %v4304 = vld [vmem:[%s1783 + $0x110] sm:$0xff]
    %v4305 = vld [vmem:[%s1783 + $0x128] sm:$0xff]
    %v4306 = vld [vmem:[%s1783 + $0x130] sm:$0xff]
    %v4307 = vld [vmem:[%s1783 + $0x148] sm:$0xff]
    %v4308 = vld [vmem:[%s1783 + $0x150] sm:$0xff]
    %v4309 = vld [vmem:[%s1783 + $0x168] sm:$0xff]
    %v4310 = vld [vmem:[%s1783 + $0x170] sm:$0xff]
    %v4311 = vld [vmem:[%s1783 + $0x188] sm:$0xff]
    %v4312 = vld [vmem:[%s1783 + $0x190] sm:$0xff]
    %v4313 = vld [vmem:[%s1783 + $0x1a8] sm:$0xff]
    %v4314 = vld [vmem:[%s1783 + $0x1b0] sm:$0xff]
    %v4315 = vld [vmem:[%s1783 + $0x1c8] sm:$0xff]
    %v4316 = vld [vmem:[%s1783 + $0x1d0] sm:$0xff]
    %v4317 = vld [vmem:[%s1783 + $0x1e8] sm:$0xff]
    %v4318 = vld [vmem:[%s1783 + $0x1f0] sm:$0xff]
    %v4319 = vld [vmem:[%s1783 + $0x248] sm:$0xff]
    %v4320 = vld [vmem:[%s1783 + $0x250] sm:$0xff]
    %v4321 = vld [vmem:[%s1783 + $0x268] sm:$0xff]
    %v4322 = vld [vmem:[%s1783 + $0x270] sm:$0xff]
    %v4323 = vld [vmem:[%s1783 + $0x288] sm:$0xff]
    %v4324 = vld [vmem:[%s1783 + $0x290] sm:$0xff]
    %v4325 = vld [vmem:[%s1783 + $0x2a8] sm:$0xff]
    %v4326 = vld [vmem:[%s1783 + $0x2b0] sm:$0xff]
    %v4327 = vld [vmem:[%s1783 + $0x2c8] sm:$0xff]
    %v4328 = vld [vmem:[%s1783 + $0x2d0] sm:$0xff]
    %v4329 = vld [vmem:[%s1783 + $0x2e8] sm:$0xff]
    %v4330 = vld [vmem:[%s1783 + $0x2f0] sm:$0xff]
    %v4331 = vld [vmem:[%s1783 + $0x308] sm:$0xff]
    %v4332 = vld [vmem:[%s1783 + $0x310] sm:$0xff]
    %v4333 = vld [vmem:[%s1783 + $0x328] sm:$0xff]
    %v4334 = vld [vmem:[%s1783 + $0x330] sm:$0xff]
    %v4335 = vld [vmem:[%s1783 + $0x348] sm:$0xff]
    %v4336 = vld [vmem:[%s1783 + $0x350] sm:$0xff]
    %v4337 = vld [vmem:[%s1783 + $0x368] sm:$0xff]
    %v4338 = vld [vmem:[%s1783 + $0x370] sm:$0xff]
    %v4339 = vld [vmem:[%s1783 + $0x388] sm:$0xff]
    %v4340 = vld [vmem:[%s1783 + $0x390] sm:$0xff]
    %v4341 = vld [vmem:[%s1783 + $0x3a8] sm:$0xff]
    %v4342 = vld [vmem:[%s1783 + $0x3b0] sm:$0xff]
    %v4343 = vld [vmem:[%s1783 + $0x3c8] sm:$0xff]
    %v4344 = vld [vmem:[%s1783 + $0x3d0] sm:$0xff]
    %v4345 = vld [vmem:[%s1783 + $0x3e8] sm:$0xff]
    %v4346 = vld [vmem:[%s1783 + $0x3f0] sm:$0xff]
    %v4347 = vld [vmem:[%s1783 + $0x408] sm:$0xff]
    %v4348 = vld [vmem:[%s1783 + $0x410] sm:$0xff]
    %v4349 = vld [vmem:[%s1783 + $0x428] sm:$0xff]
    %v4350 = vld [vmem:[%s1783 + $0x430] sm:$0xff]
    %v4351 = vpack.c.bf16 %v4288, %v4287
    %v4352 = vpack.c.bf16 %v4290, %v4289
    %v4353 = vpack.c.bf16 %v4292, %v4291
    %v4354 = vpack.c.bf16 %v4294, %v4293
    %v4355 = vpack.c.bf16 %v4296, %v4295
    %v4356 = vpack.c.bf16 %v4298, %v4297
    %v4357 = vpack.c.bf16 %v4300, %v4299
    %v4358 = vpack.c.bf16 %v4302, %v4301
    %v4359 = vpack.c.bf16 %v4304, %v4303
    %v4360 = vpack.c.bf16 %v4306, %v4305
    %v4361 = vpack.c.bf16 %v4308, %v4307
    %v4362 = vpack.c.bf16 %v4310, %v4309
    %v4363 = vpack.c.bf16 %v4312, %v4311
    %v4364 = vpack.c.bf16 %v4314, %v4313
    %v4365 = vpack.c.bf16 %v4316, %v4315
    %v4366 = vpack.c.bf16 %v4318, %v4317
    %v4367 = vpack.c.bf16 %v4320, %v4319
    %v4368 = vpack.c.bf16 %v4322, %v4321
    %v4369 = vpack.c.bf16 %v4324, %v4323
    %v4370 = vpack.c.bf16 %v4326, %v4325
    %v4371 = vpack.c.bf16 %v4328, %v4327
    %v4372 = vpack.c.bf16 %v4330, %v4329
    %v4373 = vpack.c.bf16 %v4332, %v4331
    %v4374 = vpack.c.bf16 %v4334, %v4333
    %v4375 = vpack.c.bf16 %v4336, %v4335
    %v4376 = vpack.c.bf16 %v4338, %v4337
    %v4377 = vpack.c.bf16 %v4340, %v4339
    %v4378 = vpack.c.bf16 %v4342, %v4341
    %v4379 = vpack.c.bf16 %v4344, %v4343
    %v4380 = vpack.c.bf16 %v4346, %v4345
    %v4381 = vpack.c.bf16 %v4348, %v4347
    %v4382 = vpack.c.bf16 %v4350, %v4349
    %s4383 = scalar_lea.vmem [#allocation10], 256
    %v4384 = vld [vmem:[%s4383] sm:$0xf]
    %v4385 = vld [vmem:[%s4383 + $0x4] sm:$0xf]
    %v4386 = vld [vmem:[%s4383 + $0x8] sm:$0xf]
    %v4387 = vld [vmem:[%s4383 + $0xc] sm:$0xf]
    %v4388 = vld [vmem:[%s4383 + $0x10] sm:$0xf]
    %v4389 = vld [vmem:[%s4383 + $0x14] sm:$0xf]
    %v4390 = vld [vmem:[%s4383 + $0x18] sm:$0xf]
    %v4391 = vld [vmem:[%s4383 + $0x1c] sm:$0xf]
    %v4392 = vld [vmem:[%s4383 + $0x20] sm:$0xf]
    %v4393 = vld [vmem:[%s4383 + $0x24] sm:$0xf]
    %v4394 = vld [vmem:[%s4383 + $0x28] sm:$0xf]
    %v4395 = vld [vmem:[%s4383 + $0x2c] sm:$0xf]
    %v4396 = vld [vmem:[%s4383 + $0x30] sm:$0xf]
    %v4397 = vld [vmem:[%s4383 + $0x34] sm:$0xf]
    %v4398 = vld [vmem:[%s4383 + $0x38] sm:$0xf]
    %v4399 = vld [vmem:[%s4383 + $0x3c] sm:$0xf]
    %v4416 = vunpack.c.l.b16 %v4384
    %v4417 = vunpack.c.l.b16 %v4385
    %v4418 = vunpack.c.l.b16 %v4386
    %v4419 = vunpack.c.l.b16 %v4387
    %v4420 = vunpack.c.l.b16 %v4388
    %v4421 = vunpack.c.l.b16 %v4389
    %v4422 = vunpack.c.l.b16 %v4390
    %v4423 = vunpack.c.l.b16 %v4391
    %v4424 = vunpack.c.l.b16 %v4392
    %v4425 = vunpack.c.l.b16 %v4393
    %v4426 = vunpack.c.l.b16 %v4394
    %v4427 = vunpack.c.l.b16 %v4395
    %v4428 = vunpack.c.l.b16 %v4396
    %v4429 = vunpack.c.l.b16 %v4397
    %v4430 = vunpack.c.l.b16 %v4398
    %v4431 = vunpack.c.l.b16 %v4399
    %v4432 = vpack.c.b16 %v4417, %v4416
    %v4433 = vpack.c.b16 %v4419, %v4418
    %v4434 = vpack.c.b16 %v4421, %v4420
    %v4435 = vpack.c.b16 %v4423, %v4422
    %v4436 = vpack.c.b16 %v4425, %v4424
    %v4437 = vpack.c.b16 %v4427, %v4426
    %v4438 = vpack.c.b16 %v4429, %v4428
    %v4439 = vpack.c.b16 %v4431, %v4430
    %4448 = vmatprep.subr.bf16.mxu0 0
    %4449 = vmatpush1.bf16.msra.mxu0 %v4432
    %4450 = vmatprep.subr.bf16.mxu0 0
    %4451 = vmatpush1.bf16.msra.mxu0 %v4433
    %4452 = vmatprep.subr.bf16.mxu0 0
    %4453 = vmatpush1.bf16.msra.mxu0 %v4434
    %4454 = vmatprep.subr.bf16.mxu0 0
    %4455 = vmatpush1.bf16.msra.mxu0 %v4435
    %4456 = vmatprep.subr.bf16.mxu0 0
    %4457 = vmatpush1.bf16.msra.mxu0 %v4436
    %4458 = vmatprep.subr.bf16.mxu0 0
    %4459 = vmatpush1.bf16.msra.mxu0 %v4437
    %4460 = vmatprep.subr.bf16.mxu0 0
    %4461 = vmatpush1.bf16.msra.mxu0 %v4438
    %4462 = vmatprep.subr.bf16.mxu0 0
    %4463 = vmatpush1.bf16.msra.mxu0 %v4439
    %4464 = vmatprep.subr.bf16.mxu0 0
    %4465 = vmatpush1.bf16.msra.mxu0 0
    %4466 = vmatprep.subr.bf16.mxu0 0
    %4467 = vmatpush1.bf16.msra.mxu0 0
    %4468 = vmatprep.subr.bf16.mxu0 0
    %4469 = vmatpush1.bf16.msra.mxu0 0
    %4470 = vmatprep.subr.bf16.mxu0 0
    %4471 = vmatpush1.bf16.msra.mxu0 0
    %4472 = vmatprep.subr.bf16.mxu0 0
    %4473 = vmatpush1.bf16.msra.mxu0 0
    %4474 = vmatprep.subr.bf16.mxu0 0
    %4475 = vmatpush1.bf16.msra.mxu0 0
    %4476 = vmatprep.subr.bf16.mxu0 0
    %4477 = vmatpush1.bf16.msra.mxu0 0
    %4478 = vmatprep.subr.bf16.mxu0 0
    %4479 = vmatpush1.bf16.msra.mxu0 0
    %4480 = vmatprep.mubr.bf16.mxu0 0
    %4481 = vmatmul.mubr.bf16.gmra.mrb[0].mxu0 %v4351
    %v4482 = vpop.f32.mrb[0].mxu0
    %v4483 = vadd.f32 0.0, %v4482
    %v4484 = vpop.f32.mrb[0].mxu0
    %v4485 = vpop.f32.mrb[0].mxu0
    %v4486 = vadd.f32 0.0, %v4485
    %v4487 = vpop.f32.mrb[0].mxu0
    %4488 = vmatprep.mubr.bf16.mxu0 0
    %4489 = vmatmul.mubr.bf16.gmra.mrb[0].mxu0 %v4352
    %v4490 = vpop.f32.mrb[0].mxu0
    %v4491 = vadd.f32 0.0, %v4490
    %v4492 = vpop.f32.mrb[0].mxu0
    %v4493 = vpop.f32.mrb[0].mxu0
    %v4494 = vadd.f32 0.0, %v4493
    %v4495 = vpop.f32.mrb[0].mxu0
    %4496 = vmatprep.mubr.bf16.mxu0 0
    %4497 = vmatmul.mubr.bf16.gmra.mrb[0].mxu0 %v4353
    %v4498 = vpop.f32.mrb[0].mxu0
    %v4499 = vadd.f32 0.0, %v4498
    %v4500 = vpop.f32.mrb[0].mxu0
    %v4501 = vpop.f32.mrb[0].mxu0
    %v4502 = vadd.f32 0.0, %v4501
    %v4503 = vpop.f32.mrb[0].mxu0
    %4504 = vmatprep.mubr.bf16.mxu0 0
    %4505 = vmatmul.mubr.bf16.gmra.mrb[0].mxu0 %v4354
    %v4506 = vpop.f32.mrb[0].mxu0
    %v4507 = vadd.f32 0.0, %v4506
    %v4508 = vpop.f32.mrb[0].mxu0
    %v4509 = vpop.f32.mrb[0].mxu0
    %v4510 = vadd.f32 0.0, %v4509
    %v4511 = vpop.f32.mrb[0].mxu0
    %4512 = vmatprep.mubr.bf16.mxu0 0
    %4513 = vmatmul.mubr.bf16.gmra.mrb[0].mxu0 %v4355
    %v4514 = vpop.f32.mrb[0].mxu0
    %v4515 = vadd.f32 0.0, %v4514
    %v4516 = vpop.f32.mrb[0].mxu0
    %v4517 = vpop.f32.mrb[0].mxu0
    %v4518 = vadd.f32 0.0, %v4517
    %v4519 = vpop.f32.mrb[0].mxu0
    %4520 = vmatprep.mubr.bf16.mxu0 0
    %4521 = vmatmul.mubr.bf16.gmra.mrb[0].mxu0 %v4356
    %v4522 = vpop.f32.mrb[0].mxu0
    %v4523 = vadd.f32 0.0, %v4522
    %v4524 = vpop.f32.mrb[0].mxu0
    %v4525 = vpop.f32.mrb[0].mxu0
    %v4526 = vadd.f32 0.0, %v4525
    %v4527 = vpop.f32.mrb[0].mxu0
    %4528 = vmatprep.mubr.bf16.mxu0 0
    %4529 = vmatmul.mubr.bf16.gmra.mrb[0].mxu0 %v4357
    %v4530 = vpop.f32.mrb[0].mxu0
    %v4531 = vadd.f32 0.0, %v4530
    %v4532 = vpop.f32.mrb[0].mxu0
    %v4533 = vpop.f32.mrb[0].mxu0
    %v4534 = vadd.f32 0.0, %v4533
    %v4535 = vpop.f32.mrb[0].mxu0
    %4536 = vmatprep.mubr.bf16.mxu0 0
    %4537 = vmatmul.mubr.bf16.gmra.mrb[0].mxu0 %v4358
    %v4538 = vpop.f32.mrb[0].mxu0
    %v4539 = vadd.f32 0.0, %v4538
    %v4540 = vpop.f32.mrb[0].mxu0
    %v4541 = vpop.f32.mrb[0].mxu0
    %v4542 = vadd.f32 0.0, %v4541
    %v4543 = vpop.f32.mrb[0].mxu0
    %4544 = vmatprep.mubr.bf16.mxu0 0
    %4545 = vmatmul.mubr.bf16.gmra.mrb[0].mxu0 %v4359
    %v4546 = vpop.f32.mrb[0].mxu0
    %v4547 = vadd.f32 0.0, %v4546
    %v4548 = vpop.f32.mrb[0].mxu0
    %v4549 = vpop.f32.mrb[0].mxu0
    %v4550 = vadd.f32 0.0, %v4549
    %v4551 = vpop.f32.mrb[0].mxu0
    %4552 = vmatprep.mubr.bf16.mxu0 0
    %4553 = vmatmul.mubr.bf16.gmra.mrb[0].mxu0 %v4360
    %v4554 = vpop.f32.mrb[0].mxu0
    %v4555 = vadd.f32 0.0, %v4554
    %v4556 = vpop.f32.mrb[0].mxu0
    %v4557 = vpop.f32.mrb[0].mxu0
    %v4558 = vadd.f32 0.0, %v4557
    %v4559 = vpop.f32.mrb[0].mxu0
    %4560 = vmatprep.mubr.bf16.mxu0 0
    %4561 = vmatmul.mubr.bf16.gmra.mrb[0].mxu0 %v4361
    %v4562 = vpop.f32.mrb[0].mxu0
    %v4563 = vadd.f32 0.0, %v4562
    %v4564 = vpop.f32.mrb[0].mxu0
    %v4565 = vpop.f32.mrb[0].mxu0
    %v4566 = vadd.f32 0.0, %v4565
    %v4567 = vpop.f32.mrb[0].mxu0
    %4568 = vmatprep.mubr.bf16.mxu0 0
    %4569 = vmatmul.mubr.bf16.gmra.mrb[0].mxu0 %v4362
    %v4570 = vpop.f32.mrb[0].mxu0
    %v4571 = vadd.f32 0.0, %v4570
    %v4572 = vpop.f32.mrb[0].mxu0
    %v4573 = vpop.f32.mrb[0].mxu0
    %v4574 = vadd.f32 0.0, %v4573
    %v4575 = vpop.f32.mrb[0].mxu0
    %4576 = vmatprep.mubr.bf16.mxu0 0
    %4577 = vmatmul.mubr.bf16.gmra.mrb[0].mxu0 %v4363
    %v4578 = vpop.f32.mrb[0].mxu0
    %v4579 = vadd.f32 0.0, %v4578
    %v4580 = vpop.f32.mrb[0].mxu0
    %v4581 = vpop.f32.mrb[0].mxu0
    %v4582 = vadd.f32 0.0, %v4581
    %v4583 = vpop.f32.mrb[0].mxu0
    %4584 = vmatprep.mubr.bf16.mxu0 0
    %4585 = vmatmul.mubr.bf16.gmra.mrb[0].mxu0 %v4364
    %v4586 = vpop.f32.mrb[0].mxu0
    %v4587 = vadd.f32 0.0, %v4586
    %v4588 = vpop.f32.mrb[0].mxu0
    %v4589 = vpop.f32.mrb[0].mxu0
    %v4590 = vadd.f32 0.0, %v4589
    %v4591 = vpop.f32.mrb[0].mxu0
    %4592 = vmatprep.mubr.bf16.mxu0 0
    %4593 = vmatmul.mubr.bf16.gmra.mrb[0].mxu0 %v4365
    %v4594 = vpop.f32.mrb[0].mxu0
    %v4595 = vadd.f32 0.0, %v4594
    %v4596 = vpop.f32.mrb[0].mxu0
    %v4597 = vpop.f32.mrb[0].mxu0
    %v4598 = vadd.f32 0.0, %v4597
    %v4599 = vpop.f32.mrb[0].mxu0
    %4600 = vmatprep.mubr.bf16.mxu0 0
    %4601 = vmatmul.mubr.bf16.gmra.mrb[0].mxu0 %v4366
    %v4602 = vpop.f32.mrb[0].mxu0
    %v4603 = vadd.f32 0.0, %v4602
    %v4604 = vpop.f32.mrb[0].mxu0
    %v4605 = vpop.f32.mrb[0].mxu0
    %v4606 = vadd.f32 0.0, %v4605
    %v4607 = vpop.f32.mrb[0].mxu0
    %4608 = vmatprep.mubr.bf16.mxu0 0
    %4609 = vmatmul.mubr.bf16.gmra.mrb[0].mxu0 %v4367
    %v4610 = vpop.f32.mrb[0].mxu0
    %v4611 = vadd.f32 0.0, %v4610
    %v4612 = vpop.f32.mrb[0].mxu0
    %v4613 = vpop.f32.mrb[0].mxu0
    %v4614 = vadd.f32 0.0, %v4613
    %v4615 = vpop.f32.mrb[0].mxu0
    %4616 = vmatprep.mubr.bf16.mxu0 0
    %4617 = vmatmul.mubr.bf16.gmra.mrb[0].mxu0 %v4368
    %v4618 = vpop.f32.mrb[0].mxu0
    %v4619 = vadd.f32 0.0, %v4618
    %v4620 = vpop.f32.mrb[0].mxu0
    %v4621 = vpop.f32.mrb[0].mxu0
    %v4622 = vadd.f32 0.0, %v4621
    %v4623 = vpop.f32.mrb[0].mxu0
    %4624 = vmatprep.mubr.bf16.mxu0 0
    %4625 = vmatmul.mubr.bf16.gmra.mrb[0].mxu0 %v4369
    %v4626 = vpop.f32.mrb[0].mxu0
    %v4627 = vadd.f32 0.0, %v4626
    %v4628 = vpop.f32.mrb[0].mxu0
    %v4629 = vpop.f32.mrb[0].mxu0
    %v4630 = vadd.f32 0.0, %v4629
    %v4631 = vpop.f32.mrb[0].mxu0
    %4632 = vmatprep.mubr.bf16.mxu0 0
    %4633 = vmatmul.mubr.bf16.gmra.mrb[0].mxu0 %v4370
    %v4634 = vpop.f32.mrb[0].mxu0
    %v4635 = vadd.f32 0.0, %v4634
    %v4636 = vpop.f32.mrb[0].mxu0
    %v4637 = vpop.f32.mrb[0].mxu0
    %v4638 = vadd.f32 0.0, %v4637
    %v4639 = vpop.f32.mrb[0].mxu0
    %4640 = vmatprep.mubr.bf16.mxu0 0
    %4641 = vmatmul.mubr.bf16.gmra.mrb[0].mxu0 %v4371
    %v4642 = vpop.f32.mrb[0].mxu0
    %v4643 = vadd.f32 0.0, %v4642
    %v4644 = vpop.f32.mrb[0].mxu0
    %v4645 = vpop.f32.mrb[0].mxu0
    %v4646 = vadd.f32 0.0, %v4645
    %v4647 = vpop.f32.mrb[0].mxu0
    %4648 = vmatprep.mubr.bf16.mxu0 0
    %4649 = vmatmul.mubr.bf16.gmra.mrb[0].mxu0 %v4372
    %v4650 = vpop.f32.mrb[0].mxu0
    %v4651 = vadd.f32 0.0, %v4650
    %v4652 = vpop.f32.mrb[0].mxu0
    %v4653 = vpop.f32.mrb[0].mxu0
    %v4654 = vadd.f32 0.0, %v4653
    %v4655 = vpop.f32.mrb[0].mxu0
    %4656 = vmatprep.mubr.bf16.mxu0 0
    %4657 = vmatmul.mubr.bf16.gmra.mrb[0].mxu0 %v4373
    %v4658 = vpop.f32.mrb[0].mxu0
    %v4659 = vadd.f32 0.0, %v4658
    %v4660 = vpop.f32.mrb[0].mxu0
    %v4661 = vpop.f32.mrb[0].mxu0
    %v4662 = vadd.f32 0.0, %v4661
    %v4663 = vpop.f32.mrb[0].mxu0
    %4664 = vmatprep.mubr.bf16.mxu0 0
    %4665 = vmatmul.mubr.bf16.gmra.mrb[0].mxu0 %v4374
    %v4666 = vpop.f32.mrb[0].mxu0
    %v4667 = vadd.f32 0.0, %v4666
    %v4668 = vpop.f32.mrb[0].mxu0
    %v4669 = vpop.f32.mrb[0].mxu0
    %v4670 = vadd.f32 0.0, %v4669
    %v4671 = vpop.f32.mrb[0].mxu0
    %4672 = vmatprep.mubr.bf16.mxu0 0
    %4673 = vmatmul.mubr.bf16.gmra.mrb[0].mxu0 %v4375
    %v4674 = vpop.f32.mrb[0].mxu0
    %v4675 = vadd.f32 0.0, %v4674
    %v4676 = vpop.f32.mrb[0].mxu0
    %v4677 = vpop.f32.mrb[0].mxu0
    %v4678 = vadd.f32 0.0, %v4677
    %v4679 = vpop.f32.mrb[0].mxu0
    %4680 = vmatprep.mubr.bf16.mxu0 0
    %4681 = vmatmul.mubr.bf16.gmra.mrb[0].mxu0 %v4376
    %v4682 = vpop.f32.mrb[0].mxu0
    %v4683 = vadd.f32 0.0, %v4682
    %v4684 = vpop.f32.mrb[0].mxu0
    %v4685 = vpop.f32.mrb[0].mxu0
    %v4686 = vadd.f32 0.0, %v4685
    %v4687 = vpop.f32.mrb[0].mxu0
    %4688 = vmatprep.mubr.bf16.mxu0 0
    %4689 = vmatmul.mubr.bf16.gmra.mrb[0].mxu0 %v4377
    %v4690 = vpop.f32.mrb[0].mxu0
    %v4691 = vadd.f32 0.0, %v4690
    %v4692 = vpop.f32.mrb[0].mxu0
    %v4693 = vpop.f32.mrb[0].mxu0
    %v4694 = vadd.f32 0.0, %v4693
    %v4695 = vpop.f32.mrb[0].mxu0
    %4696 = vmatprep.mubr.bf16.mxu0 0
    %4697 = vmatmul.mubr.bf16.gmra.mrb[0].mxu0 %v4378
    %v4698 = vpop.f32.mrb[0].mxu0
    %v4699 = vadd.f32 0.0, %v4698
    %v4700 = vpop.f32.mrb[0].mxu0
    %v4701 = vpop.f32.mrb[0].mxu0
    %v4702 = vadd.f32 0.0, %v4701
    %v4703 = vpop.f32.mrb[0].mxu0
    %4704 = vmatprep.mubr.bf16.mxu0 0
    %4705 = vmatmul.mubr.bf16.gmra.mrb[0].mxu0 %v4379
    %v4706 = vpop.f32.mrb[0].mxu0
    %v4707 = vadd.f32 0.0, %v4706
    %v4708 = vpop.f32.mrb[0].mxu0
    %v4709 = vpop.f32.mrb[0].mxu0
    %v4710 = vadd.f32 0.0, %v4709
    %v4711 = vpop.f32.mrb[0].mxu0
    %4712 = vmatprep.mubr.bf16.mxu0 0
    %4713 = vmatmul.mubr.bf16.gmra.mrb[0].mxu0 %v4380
    %v4714 = vpop.f32.mrb[0].mxu0
    %v4715 = vadd.f32 0.0, %v4714
    %v4716 = vpop.f32.mrb[0].mxu0
    %v4717 = vpop.f32.mrb[0].mxu0
    %v4718 = vadd.f32 0.0, %v4717
    %v4719 = vpop.f32.mrb[0].mxu0
    %4720 = vmatprep.mubr.bf16.mxu0 0
    %4721 = vmatmul.mubr.bf16.gmra.mrb[0].mxu0 %v4381
    %v4722 = vpop.f32.mrb[0].mxu0
    %v4723 = vadd.f32 0.0, %v4722
    %v4724 = vpop.f32.mrb[0].mxu0
    %v4725 = vpop.f32.mrb[0].mxu0
    %v4726 = vadd.f32 0.0, %v4725
    %v4727 = vpop.f32.mrb[0].mxu0
    %4728 = vmatprep.mubr.bf16.mxu0 0
    %4729 = vmatmul.mubr.bf16.gmra.mrb[0].mxu0 %v4382
    %v4730 = vpop.f32.mrb[0].mxu0
    %v4731 = vadd.f32 0.0, %v4730
    %v4732 = vpop.f32.mrb[0].mxu0
    %v4733 = vpop.f32.mrb[0].mxu0
    %v4734 = vadd.f32 0.0, %v4733
    %v4735 = vpop.f32.mrb[0].mxu0
    %4736 = vdwg.mxu0
    %v4737 = vld [vmem:[#allocation3] sm:$0xff]
    %v4738 = vld [vmem:[#allocation3 + $0x8] sm:$0xff]
    %v4739 = vld [vmem:[#allocation3 + $0x10] sm:$0xff]
    %v4740 = vld [vmem:[#allocation3 + $0x18] sm:$0xff]
    %v4741 = vld [vmem:[#allocation3 + $0x20] sm:$0xff]
    %v4742 = vld [vmem:[#allocation3 + $0x28] sm:$0xff]
    %v4743 = vld [vmem:[#allocation3 + $0x30] sm:$0xff]
    %v4744 = vld [vmem:[#allocation3 + $0x38] sm:$0xff]
    %v4745 = vld [vmem:[#allocation3 + $0x40] sm:$0xff]
    %v4746 = vld [vmem:[#allocation3 + $0x48] sm:$0xff]
    %v4747 = vld [vmem:[#allocation3 + $0x50] sm:$0xff]
    %v4748 = vld [vmem:[#allocation3 + $0x58] sm:$0xff]
    %v4749 = vld [vmem:[#allocation3 + $0x60] sm:$0xff]
    %v4750 = vld [vmem:[#allocation3 + $0x68] sm:$0xff]
    %v4751 = vld [vmem:[#allocation3 + $0x70] sm:$0xff]
    %v4752 = vld [vmem:[#allocation3 + $0x78] sm:$0xff]
    %v4753 = vld [vmem:[#allocation3 + $0x80] sm:$0xff]
    %v4754 = vld [vmem:[#allocation3 + $0x88] sm:$0xff]
    %v4755 = vld [vmem:[#allocation3 + $0x90] sm:$0xff]
    %v4756 = vld [vmem:[#allocation3 + $0x98] sm:$0xff]
    %v4757 = vld [vmem:[#allocation3 + $0xa0] sm:$0xff]
    %v4758 = vld [vmem:[#allocation3 + $0xa8] sm:$0xff]
    %v4759 = vld [vmem:[#allocation3 + $0xb0] sm:$0xff]
    %v4760 = vld [vmem:[#allocation3 + $0xb8] sm:$0xff]
    %v4761 = vld [vmem:[#allocation3 + $0xc0] sm:$0xff]
    %v4762 = vld [vmem:[#allocation3 + $0xc8] sm:$0xff]
    %v4763 = vld [vmem:[#allocation3 + $0xd0] sm:$0xff]
    %v4764 = vld [vmem:[#allocation3 + $0xd8] sm:$0xff]
    %v4765 = vld [vmem:[#allocation3 + $0xe0] sm:$0xff]
    %v4766 = vld [vmem:[#allocation3 + $0xe8] sm:$0xff]
    %v4767 = vld [vmem:[#allocation3 + $0xf0] sm:$0xff]
    %v4768 = vld [vmem:[#allocation3 + $0xf8] sm:$0xff]
    %v4769 = vld [vmem:[#allocation3 + $0x100] sm:$0xff]
    %v4770 = vld [vmem:[#allocation3 + $0x108] sm:$0xff]
    %v4771 = vld [vmem:[#allocation3 + $0x110] sm:$0xff]
    %v4772 = vld [vmem:[#allocation3 + $0x118] sm:$0xff]
    %v4773 = vld [vmem:[#allocation3 + $0x120] sm:$0xff]
    %v4774 = vld [vmem:[#allocation3 + $0x128] sm:$0xff]
    %v4775 = vld [vmem:[#allocation3 + $0x130] sm:$0xff]
    %v4776 = vld [vmem:[#allocation3 + $0x138] sm:$0xff]
    %v4777 = vld [vmem:[#allocation3 + $0x140] sm:$0xff]
    %v4778 = vld [vmem:[#allocation3 + $0x148] sm:$0xff]
    %v4779 = vld [vmem:[#allocation3 + $0x150] sm:$0xff]
    %v4780 = vld [vmem:[#allocation3 + $0x158] sm:$0xff]
    %v4781 = vld [vmem:[#allocation3 + $0x160] sm:$0xff]
    %v4782 = vld [vmem:[#allocation3 + $0x168] sm:$0xff]
    %v4783 = vld [vmem:[#allocation3 + $0x170] sm:$0xff]
    %v4784 = vld [vmem:[#allocation3 + $0x178] sm:$0xff]
    %v4785 = vld [vmem:[#allocation3 + $0x180] sm:$0xff]
    %v4786 = vld [vmem:[#allocation3 + $0x188] sm:$0xff]
    %v4787 = vld [vmem:[#allocation3 + $0x190] sm:$0xff]
    %v4788 = vld [vmem:[#allocation3 + $0x198] sm:$0xff]
    %v4789 = vld [vmem:[#allocation3 + $0x1a0] sm:$0xff]
    %v4790 = vld [vmem:[#allocation3 + $0x1a8] sm:$0xff]
    %v4791 = vld [vmem:[#allocation3 + $0x1b0] sm:$0xff]
    %v4792 = vld [vmem:[#allocation3 + $0x1b8] sm:$0xff]
    %v4793 = vld [vmem:[#allocation3 + $0x1c0] sm:$0xff]
    %v4794 = vld [vmem:[#allocation3 + $0x1c8] sm:$0xff]
    %v4795 = vld [vmem:[#allocation3 + $0x1d0] sm:$0xff]
    %v4796 = vld [vmem:[#allocation3 + $0x1d8] sm:$0xff]
    %v4797 = vld [vmem:[#allocation3 + $0x1e0] sm:$0xff]
    %v4798 = vld [vmem:[#allocation3 + $0x1e8] sm:$0xff]
    %v4799 = vld [vmem:[#allocation3 + $0x1f0] sm:$0xff]
    %v4800 = vld [vmem:[#allocation3 + $0x1f8] sm:$0xff]
    %v4801 = vadd.f32 %v4737, %v4483
    %v4802 = vadd.f32 %v4738, %v4486
    %v4803 = vadd.f32 %v4739, %v4491
    %v4804 = vadd.f32 %v4740, %v4494
    %v4805 = vadd.f32 %v4741, %v4499
    %v4806 = vadd.f32 %v4742, %v4502
    %v4807 = vadd.f32 %v4743, %v4507
    %v4808 = vadd.f32 %v4744, %v4510
    %v4809 = vadd.f32 %v4745, %v4515
    %v4810 = vadd.f32 %v4746, %v4518
    %v4811 = vadd.f32 %v4747, %v4523
    %v4812 = vadd.f32 %v4748, %v4526
    %v4813 = vadd.f32 %v4749, %v4531
    %v4814 = vadd.f32 %v4750, %v4534
    %v4815 = vadd.f32 %v4751, %v4539
    %v4816 = vadd.f32 %v4752, %v4542
    %v4817 = vadd.f32 %v4753, %v4547
    %v4818 = vadd.f32 %v4754, %v4550
    %v4819 = vadd.f32 %v4755, %v4555
    %v4820 = vadd.f32 %v4756, %v4558
    %v4821 = vadd.f32 %v4757, %v4563
    %v4822 = vadd.f32 %v4758, %v4566
    %v4823 = vadd.f32 %v4759, %v4571
    %v4824 = vadd.f32 %v4760, %v4574
    %v4825 = vadd.f32 %v4761, %v4579
    %v4826 = vadd.f32 %v4762, %v4582
    %v4827 = vadd.f32 %v4763, %v4587
    %v4828 = vadd.f32 %v4764, %v4590
    %v4829 = vadd.f32 %v4765, %v4595
    %v4830 = vadd.f32 %v4766, %v4598
    %v4831 = vadd.f32 %v4767, %v4603
    %v4832 = vadd.f32 %v4768, %v4606
    %v4833 = vadd.f32 %v4769, %v4611
    %v4834 = vadd.f32 %v4770, %v4614
    %v4835 = vadd.f32 %v4771, %v4619
    %v4836 = vadd.f32 %v4772, %v4622
    %v4837 = vadd.f32 %v4773, %v4627
    %v4838 = vadd.f32 %v4774, %v4630
    %v4839 = vadd.f32 %v4775, %v4635
    %v4840 = vadd.f32 %v4776, %v4638
    %v4841 = vadd.f32 %v4777, %v4643
    %v4842 = vadd.f32 %v4778, %v4646
    %v4843 = vadd.f32 %v4779, %v4651
    %v4844 = vadd.f32 %v4780, %v4654
    %v4845 = vadd.f32 %v4781, %v4659
    %v4846 = vadd.f32 %v4782, %v4662
    %v4847 = vadd.f32 %v4783, %v4667
    %v4848 = vadd.f32 %v4784, %v4670
    %v4849 = vadd.f32 %v4785, %v4675
    %v4850 = vadd.f32 %v4786, %v4678
    %v4851 = vadd.f32 %v4787, %v4683
    %v4852 = vadd.f32 %v4788, %v4686
    %v4853 = vadd.f32 %v4789, %v4691
    %v4854 = vadd.f32 %v4790, %v4694
    %v4855 = vadd.f32 %v4791, %v4699
    %v4856 = vadd.f32 %v4792, %v4702
    %v4857 = vadd.f32 %v4793, %v4707
    %v4858 = vadd.f32 %v4794, %v4710
    %v4859 = vadd.f32 %v4795, %v4715
    %v4860 = vadd.f32 %v4796, %v4718
    %v4861 = vadd.f32 %v4797, %v4723
    %v4862 = vadd.f32 %v4798, %v4726
    %v4863 = vadd.f32 %v4799, %v4731
    %v4864 = vadd.f32 %v4800, %v4734
    %4865 = vst [vmem:[#allocation3] sm:$0xff] %v4801
    %4866 = vst [vmem:[#allocation3 + $0x8] sm:$0xff] %v4802
    %4867 = vst [vmem:[#allocation3 + $0x10] sm:$0xff] %v4803
    %4868 = vst [vmem:[#allocation3 + $0x18] sm:$0xff] %v4804
    %4869 = vst [vmem:[#allocation3 + $0x20] sm:$0xff] %v4805
    %4870 = vst [vmem:[#allocation3 + $0x28] sm:$0xff] %v4806
    %4871 = vst [vmem:[#allocation3 + $0x30] sm:$0xff] %v4807
    %4872 = vst [vmem:[#allocation3 + $0x38] sm:$0xff] %v4808
    %4873 = vst [vmem:[#allocation3 + $0x40] sm:$0xff] %v4809
    %4874 = vst [vmem:[#allocation3 + $0x48] sm:$0xff] %v4810
    %4875 = vst [vmem:[#allocation3 + $0x50] sm:$0xff] %v4811
    %4876 = vst [vmem:[#allocation3 + $0x58] sm:$0xff] %v4812
    %4877 = vst [vmem:[#allocation3 + $0x60] sm:$0xff] %v4813
    %4878 = vst [vmem:[#allocation3 + $0x68] sm:$0xff] %v4814
    %4879 = vst [vmem:[#allocation3 + $0x70] sm:$0xff] %v4815
    %4880 = vst [vmem:[#allocation3 + $0x78] sm:$0xff] %v4816
    %4881 = vst [vmem:[#allocation3 + $0x80] sm:$0xff] %v4817
    %4882 = vst [vmem:[#allocation3 + $0x88] sm:$0xff] %v4818
    %4883 = vst [vmem:[#allocation3 + $0x90] sm:$0xff] %v4819
    %4884 = vst [vmem:[#allocation3 + $0x98] sm:$0xff] %v4820
    %4885 = vst [vmem:[#allocation3 + $0xa0] sm:$0xff] %v4821
    %4886 = vst [vmem:[#allocation3 + $0xa8] sm:$0xff] %v4822
    %4887 = vst [vmem:[#allocation3 + $0xb0] sm:$0xff] %v4823
    %4888 = vst [vmem:[#allocation3 + $0xb8] sm:$0xff] %v4824
    %4889 = vst [vmem:[#allocation3 + $0xc0] sm:$0xff] %v4825
    %4890 = vst [vmem:[#allocation3 + $0xc8] sm:$0xff] %v4826
    %4891 = vst [vmem:[#allocation3 + $0xd0] sm:$0xff] %v4827
    %4892 = vst [vmem:[#allocation3 + $0xd8] sm:$0xff] %v4828
    %4893 = vst [vmem:[#allocation3 + $0xe0] sm:$0xff] %v4829
    %4894 = vst [vmem:[#allocation3 + $0xe8] sm:$0xff] %v4830
    %4895 = vst [vmem:[#allocation3 + $0xf0] sm:$0xff] %v4831
    %4896 = vst [vmem:[#allocation3 + $0xf8] sm:$0xff] %v4832
    %4897 = vst [vmem:[#allocation3 + $0x100] sm:$0xff] %v4833
    %4898 = vst [vmem:[#allocation3 + $0x108] sm:$0xff] %v4834
    %4899 = vst [vmem:[#allocation3 + $0x110] sm:$0xff] %v4835
    %4900 = vst [vmem:[#allocation3 + $0x118] sm:$0xff] %v4836
    %4901 = vst [vmem:[#allocation3 + $0x120] sm:$0xff] %v4837
    %4902 = vst [vmem:[#allocation3 + $0x128] sm:$0xff] %v4838
    %4903 = vst [vmem:[#allocation3 + $0x130] sm:$0xff] %v4839
    %4904 = vst [vmem:[#allocation3 + $0x138] sm:$0xff] %v4840
    %4905 = vst [vmem:[#allocation3 + $0x140] sm:$0xff] %v4841
    %4906 = vst [vmem:[#allocation3 + $0x148] sm:$0xff] %v4842
    %4907 = vst [vmem:[#allocation3 + $0x150] sm:$0xff] %v4843
    %4908 = vst [vmem:[#allocation3 + $0x158] sm:$0xff] %v4844
    %4909 = vst [vmem:[#allocation3 + $0x160] sm:$0xff] %v4845
    %4910 = vst [vmem:[#allocation3 + $0x168] sm:$0xff] %v4846
    %4911 = vst [vmem:[#allocation3 + $0x170] sm:$0xff] %v4847
    %4912 = vst [vmem:[#allocation3 + $0x178] sm:$0xff] %v4848
    %4913 = vst [vmem:[#allocation3 + $0x180] sm:$0xff] %v4849
    %4914 = vst [vmem:[#allocation3 + $0x188] sm:$0xff] %v4850
    %4915 = vst [vmem:[#allocation3 + $0x190] sm:$0xff] %v4851
    %4916 = vst [vmem:[#allocation3 + $0x198] sm:$0xff] %v4852
    %4917 = vst [vmem:[#allocation3 + $0x1a0] sm:$0xff] %v4853
    %4918 = vst [vmem:[#allocation3 + $0x1a8] sm:$0xff] %v4854
    %4919 = vst [vmem:[#allocation3 + $0x1b0] sm:$0xff] %v4855
    %4920 = vst [vmem:[#allocation3 + $0x1b8] sm:$0xff] %v4856
    %4921 = vst [vmem:[#allocation3 + $0x1c0] sm:$0xff] %v4857
    %4922 = vst [vmem:[#allocation3 + $0x1c8] sm:$0xff] %v4858
    %4923 = vst [vmem:[#allocation3 + $0x1d0] sm:$0xff] %v4859
    %4924 = vst [vmem:[#allocation3 + $0x1d8] sm:$0xff] %v4860
    %4925 = vst [vmem:[#allocation3 + $0x1e0] sm:$0xff] %v4861
    %4926 = vst [vmem:[#allocation3 + $0x1e8] sm:$0xff] %v4862
    %4927 = vst [vmem:[#allocation3 + $0x1f0] sm:$0xff] %v4863
    %4928 = vst [vmem:[#allocation3 + $0x1f8] sm:$0xff] %v4864
    %v4929 = vld [vmem:[%s1783 + $0x9] sm:$0xff]
    %v4930 = vld [vmem:[%s1783 + $0x11] sm:$0xff]
    %v4931 = vld [vmem:[%s1783 + $0x29] sm:$0xff]
    %v4932 = vld [vmem:[%s1783 + $0x31] sm:$0xff]
    %v4933 = vld [vmem:[%s1783 + $0x49] sm:$0xff]
    %v4934 = vld [vmem:[%s1783 + $0x51] sm:$0xff]
    %v4935 = vld [vmem:[%s1783 + $0x69] sm:$0xff]
    %v4936 = vld [vmem:[%s1783 + $0x71] sm:$0xff]
    %v4937 = vld [vmem:[%s1783 + $0x89] sm:$0xff]
    %v4938 = vld [vmem:[%s1783 + $0x91] sm:$0xff]
    %v4939 = vld [vmem:[%s1783 + $0xa9] sm:$0xff]
    %v4940 = vld [vmem:[%s1783 + $0xb1] sm:$0xff]
    %v4941 = vld [vmem:[%s1783 + $0xc9] sm:$0xff]
    %v4942 = vld [vmem:[%s1783 + $0xd1] sm:$0xff]
    %v4943 = vld [vmem:[%s1783 + $0xe9] sm:$0xff]
    %v4944 = vld [vmem:[%s1783 + $0xf1] sm:$0xff]
    %v4945 = vld [vmem:[%s1783 + $0x109] sm:$0xff]
    %v4946 = vld [vmem:[%s1783 + $0x111] sm:$0xff]
    %v4947 = vld [vmem:[%s1783 + $0x129] sm:$0xff]
    %v4948 = vld [vmem:[%s1783 + $0x131] sm:$0xff]
    %v4949 = vld [vmem:[%s1783 + $0x149] sm:$0xff]
    %v4950 = vld [vmem:[%s1783 + $0x151] sm:$0xff]
    %v4951 = vld [vmem:[%s1783 + $0x169] sm:$0xff]
    %v4952 = vld [vmem:[%s1783 + $0x171] sm:$0xff]
    %v4953 = vld [vmem:[%s1783 + $0x189] sm:$0xff]
    %v4954 = vld [vmem:[%s1783 + $0x191] sm:$0xff]
    %v4955 = vld [vmem:[%s1783 + $0x1a9] sm:$0xff]
    %v4956 = vld [vmem:[%s1783 + $0x1b1] sm:$0xff]
    %v4957 = vld [vmem:[%s1783 + $0x1c9] sm:$0xff]
    %v4958 = vld [vmem:[%s1783 + $0x1d1] sm:$0xff]
    %v4959 = vld [vmem:[%s1783 + $0x1e9] sm:$0xff]
    %v4960 = vld [vmem:[%s1783 + $0x1f1] sm:$0xff]
    %v4961 = vld [vmem:[%s1783 + $0x249] sm:$0xff]
    %v4962 = vld [vmem:[%s1783 + $0x251] sm:$0xff]
    %v4963 = vld [vmem:[%s1783 + $0x269] sm:$0xff]
    %v4964 = vld [vmem:[%s1783 + $0x271] sm:$0xff]
    %v4965 = vld [vmem:[%s1783 + $0x289] sm:$0xff]
    %v4966 = vld [vmem:[%s1783 + $0x291] sm:$0xff]
    %v4967 = vld [vmem:[%s1783 + $0x2a9] sm:$0xff]
    %v4968 = vld [vmem:[%s1783 + $0x2b1] sm:$0xff]
    %v4969 = vld [vmem:[%s1783 + $0x2c9] sm:$0xff]
    %v4970 = vld [vmem:[%s1783 + $0x2d1] sm:$0xff]
    %v4971 = vld [vmem:[%s1783 + $0x2e9] sm:$0xff]
    %v4972 = vld [vmem:[%s1783 + $0x2f1] sm:$0xff]
    %v4973 = vld [vmem:[%s1783 + $0x309] sm:$0xff]
    %v4974 = vld [vmem:[%s1783 + $0x311] sm:$0xff]
    %v4975 = vld [vmem:[%s1783 + $0x329] sm:$0xff]
    %v4976 = vld [vmem:[%s1783 + $0x331] sm:$0xff]
    %v4977 = vld [vmem:[%s1783 + $0x349] sm:$0xff]
    %v4978 = vld [vmem:[%s1783 + $0x351] sm:$0xff]
    %v4979 = vld [vmem:[%s1783 + $0x369] sm:$0xff]
    %v4980 = vld [vmem:[%s1783 + $0x371] sm:$0xff]
    %v4981 = vld [vmem:[%s1783 + $0x389] sm:$0xff]
    %v4982 = vld [vmem:[%s1783 + $0x391] sm:$0xff]
    %v4983 = vld [vmem:[%s1783 + $0x3a9] sm:$0xff]
    %v4984 = vld [vmem:[%s1783 + $0x3b1] sm:$0xff]
    %v4985 = vld [vmem:[%s1783 + $0x3c9] sm:$0xff]
    %v4986 = vld [vmem:[%s1783 + $0x3d1] sm:$0xff]
    %v4987 = vld [vmem:[%s1783 + $0x3e9] sm:$0xff]
    %v4988 = vld [vmem:[%s1783 + $0x3f1] sm:$0xff]
    %v4989 = vld [vmem:[%s1783 + $0x409] sm:$0xff]
    %v4990 = vld [vmem:[%s1783 + $0x411] sm:$0xff]
    %v4991 = vld [vmem:[%s1783 + $0x429] sm:$0xff]
    %v4992 = vld [vmem:[%s1783 + $0x431] sm:$0xff]
    %v4993 = vpack.c.bf16 %v4930, %v4929
    %v4994 = vpack.c.bf16 %v4932, %v4931
    %v4995 = vpack.c.bf16 %v4934, %v4933
    %v4996 = vpack.c.bf16 %v4936, %v4935
    %v4997 = vpack.c.bf16 %v4938, %v4937
    %v4998 = vpack.c.bf16 %v4940, %v4939
    %v4999 = vpack.c.bf16 %v4942, %v4941
    %v5000 = vpack.c.bf16 %v4944, %v4943
    %v5001 = vpack.c.bf16 %v4946, %v4945
    %v5002 = vpack.c.bf16 %v4948, %v4947
    %v5003 = vpack.c.bf16 %v4950, %v4949
    %v5004 = vpack.c.bf16 %v4952, %v4951
    %v5005 = vpack.c.bf16 %v4954, %v4953
    %v5006 = vpack.c.bf16 %v4956, %v4955
    %v5007 = vpack.c.bf16 %v4958, %v4957
    %v5008 = vpack.c.bf16 %v4960, %v4959
    %v5009 = vpack.c.bf16 %v4962, %v4961
    %v5010 = vpack.c.bf16 %v4964, %v4963
    %v5011 = vpack.c.bf16 %v4966, %v4965
    %v5012 = vpack.c.bf16 %v4968, %v4967
    %v5013 = vpack.c.bf16 %v4970, %v4969
    %v5014 = vpack.c.bf16 %v4972, %v4971
    %v5015 = vpack.c.bf16 %v4974, %v4973
    %v5016 = vpack.c.bf16 %v4976, %v4975
    %v5017 = vpack.c.bf16 %v4978, %v4977
    %v5018 = vpack.c.bf16 %v4980, %v4979
    %v5019 = vpack.c.bf16 %v4982, %v4981
    %v5020 = vpack.c.bf16 %v4984, %v4983
    %v5021 = vpack.c.bf16 %v4986, %v4985
    %v5022 = vpack.c.bf16 %v4988, %v4987
    %v5023 = vpack.c.bf16 %v4990, %v4989
    %v5024 = vpack.c.bf16 %v4992, %v4991
    %s5025 = scalar_lea.vmem [#allocation10], 320
    %v5026 = vld [vmem:[%s5025] sm:$0xf]
    %v5027 = vld [vmem:[%s5025 + $0x4] sm:$0xf]
    %v5028 = vld [vmem:[%s5025 + $0x8] sm:$0xf]
    %v5029 = vld [vmem:[%s5025 + $0xc] sm:$0xf]
    %v5030 = vld [vmem:[%s5025 + $0x10] sm:$0xf]
    %v5031 = vld [vmem:[%s5025 + $0x14] sm:$0xf]
    %v5032 = vld [vmem:[%s5025 + $0x18] sm:$0xf]
    %v5033 = vld [vmem:[%s5025 + $0x1c] sm:$0xf]
    %v5034 = vld [vmem:[%s5025 + $0x20] sm:$0xf]
    %v5035 = vld [vmem:[%s5025 + $0x24] sm:$0xf]
    %v5036 = vld [vmem:[%s5025 + $0x28] sm:$0xf]
    %v5037 = vld [vmem:[%s5025 + $0x2c] sm:$0xf]
    %v5038 = vld [vmem:[%s5025 + $0x30] sm:$0xf]
    %v5039 = vld [vmem:[%s5025 + $0x34] sm:$0xf]
    %v5040 = vld [vmem:[%s5025 + $0x38] sm:$0xf]
    %v5041 = vld [vmem:[%s5025 + $0x3c] sm:$0xf]
    %v5058 = vunpack.c.l.b16 %v5026
    %v5059 = vunpack.c.l.b16 %v5027
    %v5060 = vunpack.c.l.b16 %v5028
    %v5061 = vunpack.c.l.b16 %v5029
    %v5062 = vunpack.c.l.b16 %v5030
    %v5063 = vunpack.c.l.b16 %v5031
    %v5064 = vunpack.c.l.b16 %v5032
    %v5065 = vunpack.c.l.b16 %v5033
    %v5066 = vunpack.c.l.b16 %v5034
    %v5067 = vunpack.c.l.b16 %v5035
    %v5068 = vunpack.c.l.b16 %v5036
    %v5069 = vunpack.c.l.b16 %v5037
    %v5070 = vunpack.c.l.b16 %v5038
    %v5071 = vunpack.c.l.b16 %v5039
    %v5072 = vunpack.c.l.b16 %v5040
    %v5073 = vunpack.c.l.b16 %v5041
    %v5074 = vpack.c.b16 %v5059, %v5058
    %v5075 = vpack.c.b16 %v5061, %v5060
    %v5076 = vpack.c.b16 %v5063, %v5062
    %v5077 = vpack.c.b16 %v5065, %v5064
    %v5078 = vpack.c.b16 %v5067, %v5066
    %v5079 = vpack.c.b16 %v5069, %v5068
    %v5080 = vpack.c.b16 %v5071, %v5070
    %v5081 = vpack.c.b16 %v5073, %v5072
    %5090 = vmatprep.subr.bf16.mxu0 0
    %5091 = vmatpush1.bf16.msra.mxu0 %v5074
    %5092 = vmatprep.subr.bf16.mxu0 0
    %5093 = vmatpush1.bf16.msra.mxu0 %v5075
    %5094 = vmatprep.subr.bf16.mxu0 0
    %5095 = vmatpush1.bf16.msra.mxu0 %v5076
    %5096 = vmatprep.subr.bf16.mxu0 0
    %5097 = vmatpush1.bf16.msra.mxu0 %v5077
    %5098 = vmatprep.subr.bf16.mxu0 0
    %5099 = vmatpush1.bf16.msra.mxu0 %v5078
    %5100 = vmatprep.subr.bf16.mxu0 0
    %5101 = vmatpush1.bf16.msra.mxu0 %v5079
    %5102 = vmatprep.subr.bf16.mxu0 0
    %5103 = vmatpush1.bf16.msra.mxu0 %v5080
    %5104 = vmatprep.subr.bf16.mxu0 0
    %5105 = vmatpush1.bf16.msra.mxu0 %v5081
    %5106 = vmatprep.subr.bf16.mxu0 0
    %5107 = vmatpush1.bf16.msra.mxu0 0
    %5108 = vmatprep.subr.bf16.mxu0 0
    %5109 = vmatpush1.bf16.msra.mxu0 0
    %5110 = vmatprep.subr.bf16.mxu0 0
    %5111 = vmatpush1.bf16.msra.mxu0 0
    %5112 = vmatprep.subr.bf16.mxu0 0
    %5113 = vmatpush1.bf16.msra.mxu0 0
    %5114 = vmatprep.subr.bf16.mxu0 0
    %5115 = vmatpush1.bf16.msra.mxu0 0
    %5116 = vmatprep.subr.bf16.mxu0 0
    %5117 = vmatpush1.bf16.msra.mxu0 0
    %5118 = vmatprep.subr.bf16.mxu0 0
    %5119 = vmatpush1.bf16.msra.mxu0 0
    %5120 = vmatprep.subr.bf16.mxu0 0
    %5121 = vmatpush1.bf16.msra.mxu0 0
    %5122 = vmatprep.mubr.bf16.mxu0 0
    %5123 = vmatmul.mubr.bf16.gmra.mrb[0].mxu0 %v4993
    %v5124 = vpop.f32.mrb[0].mxu0
    %v5125 = vadd.f32 0.0, %v5124
    %v5126 = vpop.f32.mrb[0].mxu0
    %v5127 = vpop.f32.mrb[0].mxu0
    %v5128 = vadd.f32 0.0, %v5127
    %v5129 = vpop.f32.mrb[0].mxu0
    %5130 = vmatprep.mubr.bf16.mxu0 0
    %5131 = vmatmul.mubr.bf16.gmra.mrb[0].mxu0 %v4994
    %v5132 = vpop.f32.mrb[0].mxu0
    %v5133 = vadd.f32 0.0, %v5132
    %v5134 = vpop.f32.mrb[0].mxu0
    %v5135 = vpop.f32.mrb[0].mxu0
    %v5136 = vadd.f32 0.0, %v5135
    %v5137 = vpop.f32.mrb[0].mxu0
    %5138 = vmatprep.mubr.bf16.mxu0 0
    %5139 = vmatmul.mubr.bf16.gmra.mrb[0].mxu0 %v4995
    %v5140 = vpop.f32.mrb[0].mxu0
    %v5141 = vadd.f32 0.0, %v5140
    %v5142 = vpop.f32.mrb[0].mxu0
    %v5143 = vpop.f32.mrb[0].mxu0
    %v5144 = vadd.f32 0.0, %v5143
    %v5145 = vpop.f32.mrb[0].mxu0
    %5146 = vmatprep.mubr.bf16.mxu0 0
    %5147 = vmatmul.mubr.bf16.gmra.mrb[0].mxu0 %v4996
    %v5148 = vpop.f32.mrb[0].mxu0
    %v5149 = vadd.f32 0.0, %v5148
    %v5150 = vpop.f32.mrb[0].mxu0
    %v5151 = vpop.f32.mrb[0].mxu0
    %v5152 = vadd.f32 0.0, %v5151
    %v5153 = vpop.f32.mrb[0].mxu0
    %5154 = vmatprep.mubr.bf16.mxu0 0
    %5155 = vmatmul.mubr.bf16.gmra.mrb[0].mxu0 %v4997
    %v5156 = vpop.f32.mrb[0].mxu0
    %v5157 = vadd.f32 0.0, %v5156
    %v5158 = vpop.f32.mrb[0].mxu0
    %v5159 = vpop.f32.mrb[0].mxu0
    %v5160 = vadd.f32 0.0, %v5159
    %v5161 = vpop.f32.mrb[0].mxu0
    %5162 = vmatprep.mubr.bf16.mxu0 0
    %5163 = vmatmul.mubr.bf16.gmra.mrb[0].mxu0 %v4998
    %v5164 = vpop.f32.mrb[0].mxu0
    %v5165 = vadd.f32 0.0, %v5164
    %v5166 = vpop.f32.mrb[0].mxu0
    %v5167 = vpop.f32.mrb[0].mxu0
    %v5168 = vadd.f32 0.0, %v5167
    %v5169 = vpop.f32.mrb[0].mxu0
    %5170 = vmatprep.mubr.bf16.mxu0 0
    %5171 = vmatmul.mubr.bf16.gmra.mrb[0].mxu0 %v4999
    %v5172 = vpop.f32.mrb[0].mxu0
    %v5173 = vadd.f32 0.0, %v5172
    %v5174 = vpop.f32.mrb[0].mxu0
    %v5175 = vpop.f32.mrb[0].mxu0
    %v5176 = vadd.f32 0.0, %v5175
    %v5177 = vpop.f32.mrb[0].mxu0
    %5178 = vmatprep.mubr.bf16.mxu0 0
    %5179 = vmatmul.mubr.bf16.gmra.mrb[0].mxu0 %v5000
    %v5180 = vpop.f32.mrb[0].mxu0
    %v5181 = vadd.f32 0.0, %v5180
    %v5182 = vpop.f32.mrb[0].mxu0
    %v5183 = vpop.f32.mrb[0].mxu0
    %v5184 = vadd.f32 0.0, %v5183
    %v5185 = vpop.f32.mrb[0].mxu0
    %5186 = vmatprep.mubr.bf16.mxu0 0
    %5187 = vmatmul.mubr.bf16.gmra.mrb[0].mxu0 %v5001
    %v5188 = vpop.f32.mrb[0].mxu0
    %v5189 = vadd.f32 0.0, %v5188
    %v5190 = vpop.f32.mrb[0].mxu0
    %v5191 = vpop.f32.mrb[0].mxu0
    %v5192 = vadd.f32 0.0, %v5191
    %v5193 = vpop.f32.mrb[0].mxu0
    %5194 = vmatprep.mubr.bf16.mxu0 0
    %5195 = vmatmul.mubr.bf16.gmra.mrb[0].mxu0 %v5002
    %v5196 = vpop.f32.mrb[0].mxu0
    %v5197 = vadd.f32 0.0, %v5196
    %v5198 = vpop.f32.mrb[0].mxu0
    %v5199 = vpop.f32.mrb[0].mxu0
    %v5200 = vadd.f32 0.0, %v5199
    %v5201 = vpop.f32.mrb[0].mxu0
    %5202 = vmatprep.mubr.bf16.mxu0 0
    %5203 = vmatmul.mubr.bf16.gmra.mrb[0].mxu0 %v5003
    %v5204 = vpop.f32.mrb[0].mxu0
    %v5205 = vadd.f32 0.0, %v5204
    %v5206 = vpop.f32.mrb[0].mxu0
    %v5207 = vpop.f32.mrb[0].mxu0
    %v5208 = vadd.f32 0.0, %v5207
    %v5209 = vpop.f32.mrb[0].mxu0
    %5210 = vmatprep.mubr.bf16.mxu0 0
    %5211 = vmatmul.mubr.bf16.gmra.mrb[0].mxu0 %v5004
    %v5212 = vpop.f32.mrb[0].mxu0
    %v5213 = vadd.f32 0.0, %v5212
    %v5214 = vpop.f32.mrb[0].mxu0
    %v5215 = vpop.f32.mrb[0].mxu0
    %v5216 = vadd.f32 0.0, %v5215
    %v5217 = vpop.f32.mrb[0].mxu0
    %5218 = vmatprep.mubr.bf16.mxu0 0
    %5219 = vmatmul.mubr.bf16.gmra.mrb[0].mxu0 %v5005
    %v5220 = vpop.f32.mrb[0].mxu0
    %v5221 = vadd.f32 0.0, %v5220
    %v5222 = vpop.f32.mrb[0].mxu0
    %v5223 = vpop.f32.mrb[0].mxu0
    %v5224 = vadd.f32 0.0, %v5223
    %v5225 = vpop.f32.mrb[0].mxu0
    %5226 = vmatprep.mubr.bf16.mxu0 0
    %5227 = vmatmul.mubr.bf16.gmra.mrb[0].mxu0 %v5006
    %v5228 = vpop.f32.mrb[0].mxu0
    %v5229 = vadd.f32 0.0, %v5228
    %v5230 = vpop.f32.mrb[0].mxu0
    %v5231 = vpop.f32.mrb[0].mxu0
    %v5232 = vadd.f32 0.0, %v5231
    %v5233 = vpop.f32.mrb[0].mxu0
    %5234 = vmatprep.mubr.bf16.mxu0 0
    %5235 = vmatmul.mubr.bf16.gmra.mrb[0].mxu0 %v5007
    %v5236 = vpop.f32.mrb[0].mxu0
    %v5237 = vadd.f32 0.0, %v5236
    %v5238 = vpop.f32.mrb[0].mxu0
    %v5239 = vpop.f32.mrb[0].mxu0
    %v5240 = vadd.f32 0.0, %v5239
    %v5241 = vpop.f32.mrb[0].mxu0
    %5242 = vmatprep.mubr.bf16.mxu0 0
    %5243 = vmatmul.mubr.bf16.gmra.mrb[0].mxu0 %v5008
    %v5244 = vpop.f32.mrb[0].mxu0
    %v5245 = vadd.f32 0.0, %v5244
    %v5246 = vpop.f32.mrb[0].mxu0
    %v5247 = vpop.f32.mrb[0].mxu0
    %v5248 = vadd.f32 0.0, %v5247
    %v5249 = vpop.f32.mrb[0].mxu0
    %5250 = vmatprep.mubr.bf16.mxu0 0
    %5251 = vmatmul.mubr.bf16.gmra.mrb[0].mxu0 %v5009
    %v5252 = vpop.f32.mrb[0].mxu0
    %v5253 = vadd.f32 0.0, %v5252
    %v5254 = vpop.f32.mrb[0].mxu0
    %v5255 = vpop.f32.mrb[0].mxu0
    %v5256 = vadd.f32 0.0, %v5255
    %v5257 = vpop.f32.mrb[0].mxu0
    %5258 = vmatprep.mubr.bf16.mxu0 0
    %5259 = vmatmul.mubr.bf16.gmra.mrb[0].mxu0 %v5010
    %v5260 = vpop.f32.mrb[0].mxu0
    %v5261 = vadd.f32 0.0, %v5260
    %v5262 = vpop.f32.mrb[0].mxu0
    %v5263 = vpop.f32.mrb[0].mxu0
    %v5264 = vadd.f32 0.0, %v5263
    %v5265 = vpop.f32.mrb[0].mxu0
    %5266 = vmatprep.mubr.bf16.mxu0 0
    %5267 = vmatmul.mubr.bf16.gmra.mrb[0].mxu0 %v5011
    %v5268 = vpop.f32.mrb[0].mxu0
    %v5269 = vadd.f32 0.0, %v5268
    %v5270 = vpop.f32.mrb[0].mxu0
    %v5271 = vpop.f32.mrb[0].mxu0
    %v5272 = vadd.f32 0.0, %v5271
    %v5273 = vpop.f32.mrb[0].mxu0
    %5274 = vmatprep.mubr.bf16.mxu0 0
    %5275 = vmatmul.mubr.bf16.gmra.mrb[0].mxu0 %v5012
    %v5276 = vpop.f32.mrb[0].mxu0
    %v5277 = vadd.f32 0.0, %v5276
    %v5278 = vpop.f32.mrb[0].mxu0
    %v5279 = vpop.f32.mrb[0].mxu0
    %v5280 = vadd.f32 0.0, %v5279
    %v5281 = vpop.f32.mrb[0].mxu0
    %5282 = vmatprep.mubr.bf16.mxu0 0
    %5283 = vmatmul.mubr.bf16.gmra.mrb[0].mxu0 %v5013
    %v5284 = vpop.f32.mrb[0].mxu0
    %v5285 = vadd.f32 0.0, %v5284
    %v5286 = vpop.f32.mrb[0].mxu0
    %v5287 = vpop.f32.mrb[0].mxu0
    %v5288 = vadd.f32 0.0, %v5287
    %v5289 = vpop.f32.mrb[0].mxu0
    %5290 = vmatprep.mubr.bf16.mxu0 0
    %5291 = vmatmul.mubr.bf16.gmra.mrb[0].mxu0 %v5014
    %v5292 = vpop.f32.mrb[0].mxu0
    %v5293 = vadd.f32 0.0, %v5292
    %v5294 = vpop.f32.mrb[0].mxu0
    %v5295 = vpop.f32.mrb[0].mxu0
    %v5296 = vadd.f32 0.0, %v5295
    %v5297 = vpop.f32.mrb[0].mxu0
    %5298 = vmatprep.mubr.bf16.mxu0 0
    %5299 = vmatmul.mubr.bf16.gmra.mrb[0].mxu0 %v5015
    %v5300 = vpop.f32.mrb[0].mxu0
    %v5301 = vadd.f32 0.0, %v5300
    %v5302 = vpop.f32.mrb[0].mxu0
    %v5303 = vpop.f32.mrb[0].mxu0
    %v5304 = vadd.f32 0.0, %v5303
    %v5305 = vpop.f32.mrb[0].mxu0
    %5306 = vmatprep.mubr.bf16.mxu0 0
    %5307 = vmatmul.mubr.bf16.gmra.mrb[0].mxu0 %v5016
    %v5308 = vpop.f32.mrb[0].mxu0
    %v5309 = vadd.f32 0.0, %v5308
    %v5310 = vpop.f32.mrb[0].mxu0
    %v5311 = vpop.f32.mrb[0].mxu0
    %v5312 = vadd.f32 0.0, %v5311
    %v5313 = vpop.f32.mrb[0].mxu0
    %5314 = vmatprep.mubr.bf16.mxu0 0
    %5315 = vmatmul.mubr.bf16.gmra.mrb[0].mxu0 %v5017
    %v5316 = vpop.f32.mrb[0].mxu0
    %v5317 = vadd.f32 0.0, %v5316
    %v5318 = vpop.f32.mrb[0].mxu0
    %v5319 = vpop.f32.mrb[0].mxu0
    %v5320 = vadd.f32 0.0, %v5319
    %v5321 = vpop.f32.mrb[0].mxu0
    %5322 = vmatprep.mubr.bf16.mxu0 0
    %5323 = vmatmul.mubr.bf16.gmra.mrb[0].mxu0 %v5018
    %v5324 = vpop.f32.mrb[0].mxu0
    %v5325 = vadd.f32 0.0, %v5324
    %v5326 = vpop.f32.mrb[0].mxu0
    %v5327 = vpop.f32.mrb[0].mxu0
    %v5328 = vadd.f32 0.0, %v5327
    %v5329 = vpop.f32.mrb[0].mxu0
    %5330 = vmatprep.mubr.bf16.mxu0 0
    %5331 = vmatmul.mubr.bf16.gmra.mrb[0].mxu0 %v5019
    %v5332 = vpop.f32.mrb[0].mxu0
    %v5333 = vadd.f32 0.0, %v5332
    %v5334 = vpop.f32.mrb[0].mxu0
    %v5335 = vpop.f32.mrb[0].mxu0
    %v5336 = vadd.f32 0.0, %v5335
    %v5337 = vpop.f32.mrb[0].mxu0
    %5338 = vmatprep.mubr.bf16.mxu0 0
    %5339 = vmatmul.mubr.bf16.gmra.mrb[0].mxu0 %v5020
    %v5340 = vpop.f32.mrb[0].mxu0
    %v5341 = vadd.f32 0.0, %v5340
    %v5342 = vpop.f32.mrb[0].mxu0
    %v5343 = vpop.f32.mrb[0].mxu0
    %v5344 = vadd.f32 0.0, %v5343
    %v5345 = vpop.f32.mrb[0].mxu0
    %5346 = vmatprep.mubr.bf16.mxu0 0
    %5347 = vmatmul.mubr.bf16.gmra.mrb[0].mxu0 %v5021
    %v5348 = vpop.f32.mrb[0].mxu0
    %v5349 = vadd.f32 0.0, %v5348
    %v5350 = vpop.f32.mrb[0].mxu0
    %v5351 = vpop.f32.mrb[0].mxu0
    %v5352 = vadd.f32 0.0, %v5351
    %v5353 = vpop.f32.mrb[0].mxu0
    %5354 = vmatprep.mubr.bf16.mxu0 0
    %5355 = vmatmul.mubr.bf16.gmra.mrb[0].mxu0 %v5022
    %v5356 = vpop.f32.mrb[0].mxu0
    %v5357 = vadd.f32 0.0, %v5356
    %v5358 = vpop.f32.mrb[0].mxu0
    %v5359 = vpop.f32.mrb[0].mxu0
    %v5360 = vadd.f32 0.0, %v5359
    %v5361 = vpop.f32.mrb[0].mxu0
    %5362 = vmatprep.mubr.bf16.mxu0 0
    %5363 = vmatmul.mubr.bf16.gmra.mrb[0].mxu0 %v5023
    %v5364 = vpop.f32.mrb[0].mxu0
    %v5365 = vadd.f32 0.0, %v5364
    %v5366 = vpop.f32.mrb[0].mxu0
    %v5367 = vpop.f32.mrb[0].mxu0
    %v5368 = vadd.f32 0.0, %v5367
    %v5369 = vpop.f32.mrb[0].mxu0
    %5370 = vmatprep.mubr.bf16.mxu0 0
    %5371 = vmatmul.mubr.bf16.gmra.mrb[0].mxu0 %v5024
    %v5372 = vpop.f32.mrb[0].mxu0
    %v5373 = vadd.f32 0.0, %v5372
    %v5374 = vpop.f32.mrb[0].mxu0
    %v5375 = vpop.f32.mrb[0].mxu0
    %v5376 = vadd.f32 0.0, %v5375
    %v5377 = vpop.f32.mrb[0].mxu0
    %5378 = vdwg.mxu0
    %v5379 = vld [vmem:[#allocation3] sm:$0xff]
    %v5380 = vld [vmem:[#allocation3 + $0x8] sm:$0xff]
    %v5381 = vld [vmem:[#allocation3 + $0x10] sm:$0xff]
    %v5382 = vld [vmem:[#allocation3 + $0x18] sm:$0xff]
    %v5383 = vld [vmem:[#allocation3 + $0x20] sm:$0xff]
    %v5384 = vld [vmem:[#allocation3 + $0x28] sm:$0xff]
    %v5385 = vld [vmem:[#allocation3 + $0x30] sm:$0xff]
    %v5386 = vld [vmem:[#allocation3 + $0x38] sm:$0xff]
    %v5387 = vld [vmem:[#allocation3 + $0x40] sm:$0xff]
    %v5388 = vld [vmem:[#allocation3 + $0x48] sm:$0xff]
    %v5389 = vld [vmem:[#allocation3 + $0x50] sm:$0xff]
    %v5390 = vld [vmem:[#allocation3 + $0x58] sm:$0xff]
    %v5391 = vld [vmem:[#allocation3 + $0x60] sm:$0xff]
    %v5392 = vld [vmem:[#allocation3 + $0x68] sm:$0xff]
    %v5393 = vld [vmem:[#allocation3 + $0x70] sm:$0xff]
    %v5394 = vld [vmem:[#allocation3 + $0x78] sm:$0xff]
    %v5395 = vld [vmem:[#allocation3 + $0x80] sm:$0xff]
    %v5396 = vld [vmem:[#allocation3 + $0x88] sm:$0xff]
    %v5397 = vld [vmem:[#allocation3 + $0x90] sm:$0xff]
    %v5398 = vld [vmem:[#allocation3 + $0x98] sm:$0xff]
    %v5399 = vld [vmem:[#allocation3 + $0xa0] sm:$0xff]
    %v5400 = vld [vmem:[#allocation3 + $0xa8] sm:$0xff]
    %v5401 = vld [vmem:[#allocation3 + $0xb0] sm:$0xff]
    %v5402 = vld [vmem:[#allocation3 + $0xb8] sm:$0xff]
    %v5403 = vld [vmem:[#allocation3 + $0xc0] sm:$0xff]
    %v5404 = vld [vmem:[#allocation3 + $0xc8] sm:$0xff]
    %v5405 = vld [vmem:[#allocation3 + $0xd0] sm:$0xff]
    %v5406 = vld [vmem:[#allocation3 + $0xd8] sm:$0xff]
    %v5407 = vld [vmem:[#allocation3 + $0xe0] sm:$0xff]
    %v5408 = vld [vmem:[#allocation3 + $0xe8] sm:$0xff]
    %v5409 = vld [vmem:[#allocation3 + $0xf0] sm:$0xff]
    %v5410 = vld [vmem:[#allocation3 + $0xf8] sm:$0xff]
    %v5411 = vld [vmem:[#allocation3 + $0x100] sm:$0xff]
    %v5412 = vld [vmem:[#allocation3 + $0x108] sm:$0xff]
    %v5413 = vld [vmem:[#allocation3 + $0x110] sm:$0xff]
    %v5414 = vld [vmem:[#allocation3 + $0x118] sm:$0xff]
    %v5415 = vld [vmem:[#allocation3 + $0x120] sm:$0xff]
    %v5416 = vld [vmem:[#allocation3 + $0x128] sm:$0xff]
    %v5417 = vld [vmem:[#allocation3 + $0x130] sm:$0xff]
    %v5418 = vld [vmem:[#allocation3 + $0x138] sm:$0xff]
    %v5419 = vld [vmem:[#allocation3 + $0x140] sm:$0xff]
    %v5420 = vld [vmem:[#allocation3 + $0x148] sm:$0xff]
    %v5421 = vld [vmem:[#allocation3 + $0x150] sm:$0xff]
    %v5422 = vld [vmem:[#allocation3 + $0x158] sm:$0xff]
    %v5423 = vld [vmem:[#allocation3 + $0x160] sm:$0xff]
    %v5424 = vld [vmem:[#allocation3 + $0x168] sm:$0xff]
    %v5425 = vld [vmem:[#allocation3 + $0x170] sm:$0xff]
    %v5426 = vld [vmem:[#allocation3 + $0x178] sm:$0xff]
    %v5427 = vld [vmem:[#allocation3 + $0x180] sm:$0xff]
    %v5428 = vld [vmem:[#allocation3 + $0x188] sm:$0xff]
    %v5429 = vld [vmem:[#allocation3 + $0x190] sm:$0xff]
    %v5430 = vld [vmem:[#allocation3 + $0x198] sm:$0xff]
    %v5431 = vld [vmem:[#allocation3 + $0x1a0] sm:$0xff]
    %v5432 = vld [vmem:[#allocation3 + $0x1a8] sm:$0xff]
    %v5433 = vld [vmem:[#allocation3 + $0x1b0] sm:$0xff]
    %v5434 = vld [vmem:[#allocation3 + $0x1b8] sm:$0xff]
    %v5435 = vld [vmem:[#allocation3 + $0x1c0] sm:$0xff]
    %v5436 = vld [vmem:[#allocation3 + $0x1c8] sm:$0xff]
    %v5437 = vld [vmem:[#allocation3 + $0x1d0] sm:$0xff]
    %v5438 = vld [vmem:[#allocation3 + $0x1d8] sm:$0xff]
    %v5439 = vld [vmem:[#allocation3 + $0x1e0] sm:$0xff]
    %v5440 = vld [vmem:[#allocation3 + $0x1e8] sm:$0xff]
    %v5441 = vld [vmem:[#allocation3 + $0x1f0] sm:$0xff]
    %v5442 = vld [vmem:[#allocation3 + $0x1f8] sm:$0xff]
    %v5443 = vadd.f32 %v5379, %v5125
    %v5444 = vadd.f32 %v5380, %v5128
    %v5445 = vadd.f32 %v5381, %v5133
    %v5446 = vadd.f32 %v5382, %v5136
    %v5447 = vadd.f32 %v5383, %v5141
    %v5448 = vadd.f32 %v5384, %v5144
    %v5449 = vadd.f32 %v5385, %v5149
    %v5450 = vadd.f32 %v5386, %v5152
    %v5451 = vadd.f32 %v5387, %v5157
    %v5452 = vadd.f32 %v5388, %v5160
    %v5453 = vadd.f32 %v5389, %v5165
    %v5454 = vadd.f32 %v5390, %v5168
    %v5455 = vadd.f32 %v5391, %v5173
    %v5456 = vadd.f32 %v5392, %v5176
    %v5457 = vadd.f32 %v5393, %v5181
    %v5458 = vadd.f32 %v5394, %v5184
    %v5459 = vadd.f32 %v5395, %v5189
    %v5460 = vadd.f32 %v5396, %v5192
    %v5461 = vadd.f32 %v5397, %v5197
    %v5462 = vadd.f32 %v5398, %v5200
    %v5463 = vadd.f32 %v5399, %v5205
    %v5464 = vadd.f32 %v5400, %v5208
    %v5465 = vadd.f32 %v5401, %v5213
    %v5466 = vadd.f32 %v5402, %v5216
    %v5467 = vadd.f32 %v5403, %v5221
    %v5468 = vadd.f32 %v5404, %v5224
    %v5469 = vadd.f32 %v5405, %v5229
    %v5470 = vadd.f32 %v5406, %v5232
    %v5471 = vadd.f32 %v5407, %v5237
    %v5472 = vadd.f32 %v5408, %v5240
    %v5473 = vadd.f32 %v5409, %v5245
    %v5474 = vadd.f32 %v5410, %v5248
    %v5475 = vadd.f32 %v5411, %v5253
    %v5476 = vadd.f32 %v5412, %v5256
    %v5477 = vadd.f32 %v5413, %v5261
    %v5478 = vadd.f32 %v5414, %v5264
    %v5479 = vadd.f32 %v5415, %v5269
    %v5480 = vadd.f32 %v5416, %v5272
    %v5481 = vadd.f32 %v5417, %v5277
    %v5482 = vadd.f32 %v5418, %v5280
    %v5483 = vadd.f32 %v5419, %v5285
    %v5484 = vadd.f32 %v5420, %v5288
    %v5485 = vadd.f32 %v5421, %v5293
    %v5486 = vadd.f32 %v5422, %v5296
    %v5487 = vadd.f32 %v5423, %v5301
    %v5488 = vadd.f32 %v5424, %v5304
    %v5489 = vadd.f32 %v5425, %v5309
    %v5490 = vadd.f32 %v5426, %v5312
    %v5491 = vadd.f32 %v5427, %v5317
    %v5492 = vadd.f32 %v5428, %v5320
    %v5493 = vadd.f32 %v5429, %v5325
    %v5494 = vadd.f32 %v5430, %v5328
    %v5495 = vadd.f32 %v5431, %v5333
    %v5496 = vadd.f32 %v5432, %v5336
    %v5497 = vadd.f32 %v5433, %v5341
    %v5498 = vadd.f32 %v5434, %v5344
    %v5499 = vadd.f32 %v5435, %v5349
    %v5500 = vadd.f32 %v5436, %v5352
    %v5501 = vadd.f32 %v5437, %v5357
    %v5502 = vadd.f32 %v5438, %v5360
    %v5503 = vadd.f32 %v5439, %v5365
    %v5504 = vadd.f32 %v5440, %v5368
    %v5505 = vadd.f32 %v5441, %v5373
    %v5506 = vadd.f32 %v5442, %v5376
    %5507 = vst [vmem:[#allocation3] sm:$0xff] %v5443
    %5508 = vst [vmem:[#allocation3 + $0x8] sm:$0xff] %v5444
    %5509 = vst [vmem:[#allocation3 + $0x10] sm:$0xff] %v5445
    %5510 = vst [vmem:[#allocation3 + $0x18] sm:$0xff] %v5446
    %5511 = vst [vmem:[#allocation3 + $0x20] sm:$0xff] %v5447
    %5512 = vst [vmem:[#allocation3 + $0x28] sm:$0xff] %v5448
    %5513 = vst [vmem:[#allocation3 + $0x30] sm:$0xff] %v5449
    %5514 = vst [vmem:[#allocation3 + $0x38] sm:$0xff] %v5450
    %5515 = vst [vmem:[#allocation3 + $0x40] sm:$0xff] %v5451
    %5516 = vst [vmem:[#allocation3 + $0x48] sm:$0xff] %v5452
    %5517 = vst [vmem:[#allocation3 + $0x50] sm:$0xff] %v5453
    %5518 = vst [vmem:[#allocation3 + $0x58] sm:$0xff] %v5454
    %5519 = vst [vmem:[#allocation3 + $0x60] sm:$0xff] %v5455
    %5520 = vst [vmem:[#allocation3 + $0x68] sm:$0xff] %v5456
    %5521 = vst [vmem:[#allocation3 + $0x70] sm:$0xff] %v5457
    %5522 = vst [vmem:[#allocation3 + $0x78] sm:$0xff] %v5458
    %5523 = vst [vmem:[#allocation3 + $0x80] sm:$0xff] %v5459
    %5524 = vst [vmem:[#allocation3 + $0x88] sm:$0xff] %v5460
    %5525 = vst [vmem:[#allocation3 + $0x90] sm:$0xff] %v5461
    %5526 = vst [vmem:[#allocation3 + $0x98] sm:$0xff] %v5462
    %5527 = vst [vmem:[#allocation3 + $0xa0] sm:$0xff] %v5463
    %5528 = vst [vmem:[#allocation3 + $0xa8] sm:$0xff] %v5464
    %5529 = vst [vmem:[#allocation3 + $0xb0] sm:$0xff] %v5465
    %5530 = vst [vmem:[#allocation3 + $0xb8] sm:$0xff] %v5466
    %5531 = vst [vmem:[#allocation3 + $0xc0] sm:$0xff] %v5467
    %5532 = vst [vmem:[#allocation3 + $0xc8] sm:$0xff] %v5468
    %5533 = vst [vmem:[#allocation3 + $0xd0] sm:$0xff] %v5469
    %5534 = vst [vmem:[#allocation3 + $0xd8] sm:$0xff] %v5470
    %5535 = vst [vmem:[#allocation3 + $0xe0] sm:$0xff] %v5471
    %5536 = vst [vmem:[#allocation3 + $0xe8] sm:$0xff] %v5472
    %5537 = vst [vmem:[#allocation3 + $0xf0] sm:$0xff] %v5473
    %5538 = vst [vmem:[#allocation3 + $0xf8] sm:$0xff] %v5474
    %5539 = vst [vmem:[#allocation3 + $0x100] sm:$0xff] %v5475
    %5540 = vst [vmem:[#allocation3 + $0x108] sm:$0xff] %v5476
    %5541 = vst [vmem:[#allocation3 + $0x110] sm:$0xff] %v5477
    %5542 = vst [vmem:[#allocation3 + $0x118] sm:$0xff] %v5478
    %5543 = vst [vmem:[#allocation3 + $0x120] sm:$0xff] %v5479
    %5544 = vst [vmem:[#allocation3 + $0x128] sm:$0xff] %v5480
    %5545 = vst [vmem:[#allocation3 + $0x130] sm:$0xff] %v5481
    %5546 = vst [vmem:[#allocation3 + $0x138] sm:$0xff] %v5482
    %5547 = vst [vmem:[#allocation3 + $0x140] sm:$0xff] %v5483
    %5548 = vst [vmem:[#allocation3 + $0x148] sm:$0xff] %v5484
    %5549 = vst [vmem:[#allocation3 + $0x150] sm:$0xff] %v5485
    %5550 = vst [vmem:[#allocation3 + $0x158] sm:$0xff] %v5486
    %5551 = vst [vmem:[#allocation3 + $0x160] sm:$0xff] %v5487
    %5552 = vst [vmem:[#allocation3 + $0x168] sm:$0xff] %v5488
    %5553 = vst [vmem:[#allocation3 + $0x170] sm:$0xff] %v5489
    %5554 = vst [vmem:[#allocation3 + $0x178] sm:$0xff] %v5490
    %5555 = vst [vmem:[#allocation3 + $0x180] sm:$0xff] %v5491
    %5556 = vst [vmem:[#allocation3 + $0x188] sm:$0xff] %v5492
    %5557 = vst [vmem:[#allocation3 + $0x190] sm:$0xff] %v5493
    %5558 = vst [vmem:[#allocation3 + $0x198] sm:$0xff] %v5494
    %5559 = vst [vmem:[#allocation3 + $0x1a0] sm:$0xff] %v5495
    %5560 = vst [vmem:[#allocation3 + $0x1a8] sm:$0xff] %v5496
    %5561 = vst [vmem:[#allocation3 + $0x1b0] sm:$0xff] %v5497
    %5562 = vst [vmem:[#allocation3 + $0x1b8] sm:$0xff] %v5498
    %5563 = vst [vmem:[#allocation3 + $0x1c0] sm:$0xff] %v5499
    %5564 = vst [vmem:[#allocation3 + $0x1c8] sm:$0xff] %v5500
    %5565 = vst [vmem:[#allocation3 + $0x1d0] sm:$0xff] %v5501
    %5566 = vst [vmem:[#allocation3 + $0x1d8] sm:$0xff] %v5502
    %5567 = vst [vmem:[#allocation3 + $0x1e0] sm:$0xff] %v5503
    %5568 = vst [vmem:[#allocation3 + $0x1e8] sm:$0xff] %v5504
    %5569 = vst [vmem:[#allocation3 + $0x1f0] sm:$0xff] %v5505
    %5570 = vst [vmem:[#allocation3 + $0x1f8] sm:$0xff] %v5506
    %s5571 = scalar_lea.vmem [#allocation2], 64
    %v5572 = vld [vmem:[%s5571 + $0x7] sm:$0xff]
    %v5573 = vld [vmem:[%s5571 + $0xf] sm:$0xff]
    %v5574 = vld [vmem:[%s5571 + $0x27] sm:$0xff]
    %v5575 = vld [vmem:[%s5571 + $0x2f] sm:$0xff]
    %v5576 = vld [vmem:[%s5571 + $0x47] sm:$0xff]
    %v5577 = vld [vmem:[%s5571 + $0x4f] sm:$0xff]
    %v5578 = vld [vmem:[%s5571 + $0x67] sm:$0xff]
    %v5579 = vld [vmem:[%s5571 + $0x6f] sm:$0xff]
    %v5580 = vld [vmem:[%s5571 + $0x87] sm:$0xff]
    %v5581 = vld [vmem:[%s5571 + $0x8f] sm:$0xff]
    %v5582 = vld [vmem:[%s5571 + $0xa7] sm:$0xff]
    %v5583 = vld [vmem:[%s5571 + $0xaf] sm:$0xff]
    %v5584 = vld [vmem:[%s5571 + $0xc7] sm:$0xff]
    %v5585 = vld [vmem:[%s5571 + $0xcf] sm:$0xff]
    %v5586 = vld [vmem:[%s5571 + $0xe7] sm:$0xff]
    %v5587 = vld [vmem:[%s5571 + $0xef] sm:$0xff]
    %v5588 = vld [vmem:[%s5571 + $0x107] sm:$0xff]
    %v5589 = vld [vmem:[%s5571 + $0x10f] sm:$0xff]
    %v5590 = vld [vmem:[%s5571 + $0x127] sm:$0xff]
    %v5591 = vld [vmem:[%s5571 + $0x12f] sm:$0xff]
    %v5592 = vld [vmem:[%s5571 + $0x147] sm:$0xff]
    %v5593 = vld [vmem:[%s5571 + $0x14f] sm:$0xff]
    %v5594 = vld [vmem:[%s5571 + $0x167] sm:$0xff]
    %v5595 = vld [vmem:[%s5571 + $0x16f] sm:$0xff]
    %v5596 = vld [vmem:[%s5571 + $0x187] sm:$0xff]
    %v5597 = vld [vmem:[%s5571 + $0x18f] sm:$0xff]
    %v5598 = vld [vmem:[%s5571 + $0x1a7] sm:$0xff]
    %v5599 = vld [vmem:[%s5571 + $0x1af] sm:$0xff]
    %v5600 = vld [vmem:[%s5571 + $0x1c7] sm:$0xff]
    %v5601 = vld [vmem:[%s5571 + $0x1cf] sm:$0xff]
    %v5602 = vld [vmem:[%s5571 + $0x1e7] sm:$0xff]
    %v5603 = vld [vmem:[%s5571 + $0x1ef] sm:$0xff]
    %v5604 = vld [vmem:[%s5571 + $0x247] sm:$0xff]
    %v5605 = vld [vmem:[%s5571 + $0x24f] sm:$0xff]
    %v5606 = vld [vmem:[%s5571 + $0x267] sm:$0xff]
    %v5607 = vld [vmem:[%s5571 + $0x26f] sm:$0xff]
    %v5608 = vld [vmem:[%s5571 + $0x287] sm:$0xff]
    %v5609 = vld [vmem:[%s5571 + $0x28f] sm:$0xff]
    %v5610 = vld [vmem:[%s5571 + $0x2a7] sm:$0xff]
    %v5611 = vld [vmem:[%s5571 + $0x2af] sm:$0xff]
    %v5612 = vld [vmem:[%s5571 + $0x2c7] sm:$0xff]
    %v5613 = vld [vmem:[%s5571 + $0x2cf] sm:$0xff]
    %v5614 = vld [vmem:[%s5571 + $0x2e7] sm:$0xff]
    %v5615 = vld [vmem:[%s5571 + $0x2ef] sm:$0xff]
    %v5616 = vld [vmem:[%s5571 + $0x307] sm:$0xff]
    %v5617 = vld [vmem:[%s5571 + $0x30f] sm:$0xff]
    %v5618 = vld [vmem:[%s5571 + $0x327] sm:$0xff]
    %v5619 = vld [vmem:[%s5571 + $0x32f] sm:$0xff]
    %v5620 = vld [vmem:[%s5571 + $0x347] sm:$0xff]
    %v5621 = vld [vmem:[%s5571 + $0x34f] sm:$0xff]
    %v5622 = vld [vmem:[%s5571 + $0x367] sm:$0xff]
    %v5623 = vld [vmem:[%s5571 + $0x36f] sm:$0xff]
    %v5624 = vld [vmem:[%s5571 + $0x387] sm:$0xff]
    %v5625 = vld [vmem:[%s5571 + $0x38f] sm:$0xff]
    %v5626 = vld [vmem:[%s5571 + $0x3a7] sm:$0xff]
    %v5627 = vld [vmem:[%s5571 + $0x3af] sm:$0xff]
    %v5628 = vld [vmem:[%s5571 + $0x3c7] sm:$0xff]
    %v5629 = vld [vmem:[%s5571 + $0x3cf] sm:$0xff]
    %v5630 = vld [vmem:[%s5571 + $0x3e7] sm:$0xff]
    %v5631 = vld [vmem:[%s5571 + $0x3ef] sm:$0xff]
    %v5632 = vld [vmem:[%s5571 + $0x407] sm:$0xff]
    %v5633 = vld [vmem:[%s5571 + $0x40f] sm:$0xff]
    %v5634 = vld [vmem:[%s5571 + $0x427] sm:$0xff]
    %v5635 = vld [vmem:[%s5571 + $0x42f] sm:$0xff]
    %v5636 = vpack.c.bf16 %v5573, %v5572
    %v5637 = vpack.c.bf16 %v5575, %v5574
    %v5638 = vpack.c.bf16 %v5577, %v5576
    %v5639 = vpack.c.bf16 %v5579, %v5578
    %v5640 = vpack.c.bf16 %v5581, %v5580
    %v5641 = vpack.c.bf16 %v5583, %v5582
    %v5642 = vpack.c.bf16 %v5585, %v5584
    %v5643 = vpack.c.bf16 %v5587, %v5586
    %v5644 = vpack.c.bf16 %v5589, %v5588
    %v5645 = vpack.c.bf16 %v5591, %v5590
    %v5646 = vpack.c.bf16 %v5593, %v5592
    %v5647 = vpack.c.bf16 %v5595, %v5594
    %v5648 = vpack.c.bf16 %v5597, %v5596
    %v5649 = vpack.c.bf16 %v5599, %v5598
    %v5650 = vpack.c.bf16 %v5601, %v5600
    %v5651 = vpack.c.bf16 %v5603, %v5602
    %v5652 = vpack.c.bf16 %v5605, %v5604
    %v5653 = vpack.c.bf16 %v5607, %v5606
    %v5654 = vpack.c.bf16 %v5609, %v5608
    %v5655 = vpack.c.bf16 %v5611, %v5610
    %v5656 = vpack.c.bf16 %v5613, %v5612
    %v5657 = vpack.c.bf16 %v5615, %v5614
    %v5658 = vpack.c.bf16 %v5617, %v5616
    %v5659 = vpack.c.bf16 %v5619, %v5618
    %v5660 = vpack.c.bf16 %v5621, %v5620
    %v5661 = vpack.c.bf16 %v5623, %v5622
    %v5662 = vpack.c.bf16 %v5625, %v5624
    %v5663 = vpack.c.bf16 %v5627, %v5626
    %v5664 = vpack.c.bf16 %v5629, %v5628
    %v5665 = vpack.c.bf16 %v5631, %v5630
    %v5666 = vpack.c.bf16 %v5633, %v5632
    %v5667 = vpack.c.bf16 %v5635, %v5634
    %s5668 = scalar_lea.vmem [#allocation10], 384
    %v5669 = vld [vmem:[%s5668] sm:$0xf]
    %v5670 = vld [vmem:[%s5668 + $0x4] sm:$0xf]
    %v5671 = vld [vmem:[%s5668 + $0x8] sm:$0xf]
    %v5672 = vld [vmem:[%s5668 + $0xc] sm:$0xf]
    %v5673 = vld [vmem:[%s5668 + $0x10] sm:$0xf]
    %v5674 = vld [vmem:[%s5668 + $0x14] sm:$0xf]
    %v5675 = vld [vmem:[%s5668 + $0x18] sm:$0xf]
    %v5676 = vld [vmem:[%s5668 + $0x1c] sm:$0xf]
    %v5677 = vld [vmem:[%s5668 + $0x20] sm:$0xf]
    %v5678 = vld [vmem:[%s5668 + $0x24] sm:$0xf]
    %v5679 = vld [vmem:[%s5668 + $0x28] sm:$0xf]
    %v5680 = vld [vmem:[%s5668 + $0x2c] sm:$0xf]
    %v5681 = vld [vmem:[%s5668 + $0x30] sm:$0xf]
    %v5682 = vld [vmem:[%s5668 + $0x34] sm:$0xf]
    %v5683 = vld [vmem:[%s5668 + $0x38] sm:$0xf]
    %v5684 = vld [vmem:[%s5668 + $0x3c] sm:$0xf]
    %v5701 = vunpack.c.l.b16 %v5669
    %v5702 = vunpack.c.l.b16 %v5670
    %v5703 = vunpack.c.l.b16 %v5671
    %v5704 = vunpack.c.l.b16 %v5672
    %v5705 = vunpack.c.l.b16 %v5673
    %v5706 = vunpack.c.l.b16 %v5674
    %v5707 = vunpack.c.l.b16 %v5675
    %v5708 = vunpack.c.l.b16 %v5676
    %v5709 = vunpack.c.l.b16 %v5677
    %v5710 = vunpack.c.l.b16 %v5678
    %v5711 = vunpack.c.l.b16 %v5679
    %v5712 = vunpack.c.l.b16 %v5680
    %v5713 = vunpack.c.l.b16 %v5681
    %v5714 = vunpack.c.l.b16 %v5682
    %v5715 = vunpack.c.l.b16 %v5683
    %v5716 = vunpack.c.l.b16 %v5684
    %v5717 = vpack.c.b16 %v5702, %v5701
    %v5718 = vpack.c.b16 %v5704, %v5703
    %v5719 = vpack.c.b16 %v5706, %v5705
    %v5720 = vpack.c.b16 %v5708, %v5707
    %v5721 = vpack.c.b16 %v5710, %v5709
    %v5722 = vpack.c.b16 %v5712, %v5711
    %v5723 = vpack.c.b16 %v5714, %v5713
    %v5724 = vpack.c.b16 %v5716, %v5715
    %5733 = vmatprep.subr.bf16.mxu0 0
    %5734 = vmatpush1.bf16.msra.mxu0 %v5717
    %5735 = vmatprep.subr.bf16.mxu0 0
    %5736 = vmatpush1.bf16.msra.mxu0 %v5718
    %5737 = vmatprep.subr.bf16.mxu0 0
    %5738 = vmatpush1.bf16.msra.mxu0 %v5719
    %5739 = vmatprep.subr.bf16.mxu0 0
    %5740 = vmatpush1.bf16.msra.mxu0 %v5720
    %5741 = vmatprep.subr.bf16.mxu0 0
    %5742 = vmatpush1.bf16.msra.mxu0 %v5721
    %5743 = vmatprep.subr.bf16.mxu0 0
    %5744 = vmatpush1.bf16.msra.mxu0 %v5722
    %5745 = vmatprep.subr.bf16.mxu0 0
    %5746 = vmatpush1.bf16.msra.mxu0 %v5723
    %5747 = vmatprep.subr.bf16.mxu0 0
    %5748 = vmatpush1.bf16.msra.mxu0 %v5724
    %5749 = vmatprep.subr.bf16.mxu0 0
    %5750 = vmatpush1.bf16.msra.mxu0 0
    %5751 = vmatprep.subr.bf16.mxu0 0
    %5752 = vmatpush1.bf16.msra.mxu0 0
    %5753 = vmatprep.subr.bf16.mxu0 0
    %5754 = vmatpush1.bf16.msra.mxu0 0
    %5755 = vmatprep.subr.bf16.mxu0 0
    %5756 = vmatpush1.bf16.msra.mxu0 0
    %5757 = vmatprep.subr.bf16.mxu0 0
    %5758 = vmatpush1.bf16.msra.mxu0 0
    %5759 = vmatprep.subr.bf16.mxu0 0
    %5760 = vmatpush1.bf16.msra.mxu0 0
    %5761 = vmatprep.subr.bf16.mxu0 0
    %5762 = vmatpush1.bf16.msra.mxu0 0
    %5763 = vmatprep.subr.bf16.mxu0 0
    %5764 = vmatpush1.bf16.msra.mxu0 0
    %5765 = vmatprep.mubr.bf16.mxu0 0
    %5766 = vmatmul.mubr.bf16.gmra.mrb[0].mxu0 %v5636
    %v5767 = vpop.f32.mrb[0].mxu0
    %v5768 = vadd.f32 0.0, %v5767
    %v5769 = vpop.f32.mrb[0].mxu0
    %v5770 = vpop.f32.mrb[0].mxu0
    %v5771 = vadd.f32 0.0, %v5770
    %v5772 = vpop.f32.mrb[0].mxu0
    %5773 = vmatprep.mubr.bf16.mxu0 0
    %5774 = vmatmul.mubr.bf16.gmra.mrb[0].mxu0 %v5637
    %v5775 = vpop.f32.mrb[0].mxu0
    %v5776 = vadd.f32 0.0, %v5775
    %v5777 = vpop.f32.mrb[0].mxu0
    %v5778 = vpop.f32.mrb[0].mxu0
    %v5779 = vadd.f32 0.0, %v5778
    %v5780 = vpop.f32.mrb[0].mxu0
    %5781 = vmatprep.mubr.bf16.mxu0 0
    %5782 = vmatmul.mubr.bf16.gmra.mrb[0].mxu0 %v5638
    %v5783 = vpop.f32.mrb[0].mxu0
    %v5784 = vadd.f32 0.0, %v5783
    %v5785 = vpop.f32.mrb[0].mxu0
    %v5786 = vpop.f32.mrb[0].mxu0
    %v5787 = vadd.f32 0.0, %v5786
    %v5788 = vpop.f32.mrb[0].mxu0
    %5789 = vmatprep.mubr.bf16.mxu0 0
    %5790 = vmatmul.mubr.bf16.gmra.mrb[0].mxu0 %v5639
    %v5791 = vpop.f32.mrb[0].mxu0
    %v5792 = vadd.f32 0.0, %v5791
    %v5793 = vpop.f32.mrb[0].mxu0
    %v5794 = vpop.f32.mrb[0].mxu0
    %v5795 = vadd.f32 0.0, %v5794
    %v5796 = vpop.f32.mrb[0].mxu0
    %5797 = vmatprep.mubr.bf16.mxu0 0
    %5798 = vmatmul.mubr.bf16.gmra.mrb[0].mxu0 %v5640
    %v5799 = vpop.f32.mrb[0].mxu0
    %v5800 = vadd.f32 0.0, %v5799
    %v5801 = vpop.f32.mrb[0].mxu0
    %v5802 = vpop.f32.mrb[0].mxu0
    %v5803 = vadd.f32 0.0, %v5802
    %v5804 = vpop.f32.mrb[0].mxu0
    %5805 = vmatprep.mubr.bf16.mxu0 0
    %5806 = vmatmul.mubr.bf16.gmra.mrb[0].mxu0 %v5641
    %v5807 = vpop.f32.mrb[0].mxu0
    %v5808 = vadd.f32 0.0, %v5807
    %v5809 = vpop.f32.mrb[0].mxu0
    %v5810 = vpop.f32.mrb[0].mxu0
    %v5811 = vadd.f32 0.0, %v5810
    %v5812 = vpop.f32.mrb[0].mxu0
    %5813 = vmatprep.mubr.bf16.mxu0 0
    %5814 = vmatmul.mubr.bf16.gmra.mrb[0].mxu0 %v5642
    %v5815 = vpop.f32.mrb[0].mxu0
    %v5816 = vadd.f32 0.0, %v5815
    %v5817 = vpop.f32.mrb[0].mxu0
    %v5818 = vpop.f32.mrb[0].mxu0
    %v5819 = vadd.f32 0.0, %v5818
    %v5820 = vpop.f32.mrb[0].mxu0
    %5821 = vmatprep.mubr.bf16.mxu0 0
    %5822 = vmatmul.mubr.bf16.gmra.mrb[0].mxu0 %v5643
    %v5823 = vpop.f32.mrb[0].mxu0
    %v5824 = vadd.f32 0.0, %v5823
    %v5825 = vpop.f32.mrb[0].mxu0
    %v5826 = vpop.f32.mrb[0].mxu0
    %v5827 = vadd.f32 0.0, %v5826
    %v5828 = vpop.f32.mrb[0].mxu0
    %5829 = vmatprep.mubr.bf16.mxu0 0
    %5830 = vmatmul.mubr.bf16.gmra.mrb[0].mxu0 %v5644
    %v5831 = vpop.f32.mrb[0].mxu0
    %v5832 = vadd.f32 0.0, %v5831
    %v5833 = vpop.f32.mrb[0].mxu0
    %v5834 = vpop.f32.mrb[0].mxu0
    %v5835 = vadd.f32 0.0, %v5834
    %v5836 = vpop.f32.mrb[0].mxu0
    %5837 = vmatprep.mubr.bf16.mxu0 0
    %5838 = vmatmul.mubr.bf16.gmra.mrb[0].mxu0 %v5645
    %v5839 = vpop.f32.mrb[0].mxu0
    %v5840 = vadd.f32 0.0, %v5839
    %v5841 = vpop.f32.mrb[0].mxu0
    %v5842 = vpop.f32.mrb[0].mxu0
    %v5843 = vadd.f32 0.0, %v5842
    %v5844 = vpop.f32.mrb[0].mxu0
    %5845 = vmatprep.mubr.bf16.mxu0 0
    %5846 = vmatmul.mubr.bf16.gmra.mrb[0].mxu0 %v5646
    %v5847 = vpop.f32.mrb[0].mxu0
    %v5848 = vadd.f32 0.0, %v5847
    %v5849 = vpop.f32.mrb[0].mxu0
    %v5850 = vpop.f32.mrb[0].mxu0
    %v5851 = vadd.f32 0.0, %v5850
    %v5852 = vpop.f32.mrb[0].mxu0
    %5853 = vmatprep.mubr.bf16.mxu0 0
    %5854 = vmatmul.mubr.bf16.gmra.mrb[0].mxu0 %v5647
    %v5855 = vpop.f32.mrb[0].mxu0
    %v5856 = vadd.f32 0.0, %v5855
    %v5857 = vpop.f32.mrb[0].mxu0
    %v5858 = vpop.f32.mrb[0].mxu0
    %v5859 = vadd.f32 0.0, %v5858
    %v5860 = vpop.f32.mrb[0].mxu0
    %5861 = vmatprep.mubr.bf16.mxu0 0
    %5862 = vmatmul.mubr.bf16.gmra.mrb[0].mxu0 %v5648
    %v5863 = vpop.f32.mrb[0].mxu0
    %v5864 = vadd.f32 0.0, %v5863
    %v5865 = vpop.f32.mrb[0].mxu0
    %v5866 = vpop.f32.mrb[0].mxu0
    %v5867 = vadd.f32 0.0, %v5866
    %v5868 = vpop.f32.mrb[0].mxu0
    %5869 = vmatprep.mubr.bf16.mxu0 0
    %5870 = vmatmul.mubr.bf16.gmra.mrb[0].mxu0 %v5649
    %v5871 = vpop.f32.mrb[0].mxu0
    %v5872 = vadd.f32 0.0, %v5871
    %v5873 = vpop.f32.mrb[0].mxu0
    %v5874 = vpop.f32.mrb[0].mxu0
    %v5875 = vadd.f32 0.0, %v5874
    %v5876 = vpop.f32.mrb[0].mxu0
    %5877 = vmatprep.mubr.bf16.mxu0 0
    %5878 = vmatmul.mubr.bf16.gmra.mrb[0].mxu0 %v5650
    %v5879 = vpop.f32.mrb[0].mxu0
    %v5880 = vadd.f32 0.0, %v5879
    %v5881 = vpop.f32.mrb[0].mxu0
    %v5882 = vpop.f32.mrb[0].mxu0
    %v5883 = vadd.f32 0.0, %v5882
    %v5884 = vpop.f32.mrb[0].mxu0
    %5885 = vmatprep.mubr.bf16.mxu0 0
    %5886 = vmatmul.mubr.bf16.gmra.mrb[0].mxu0 %v5651
    %v5887 = vpop.f32.mrb[0].mxu0
    %v5888 = vadd.f32 0.0, %v5887
    %v5889 = vpop.f32.mrb[0].mxu0
    %v5890 = vpop.f32.mrb[0].mxu0
    %v5891 = vadd.f32 0.0, %v5890
    %v5892 = vpop.f32.mrb[0].mxu0
    %5893 = vmatprep.mubr.bf16.mxu0 0
    %5894 = vmatmul.mubr.bf16.gmra.mrb[0].mxu0 %v5652
    %v5895 = vpop.f32.mrb[0].mxu0
    %v5896 = vadd.f32 0.0, %v5895
    %v5897 = vpop.f32.mrb[0].mxu0
    %v5898 = vpop.f32.mrb[0].mxu0
    %v5899 = vadd.f32 0.0, %v5898
    %v5900 = vpop.f32.mrb[0].mxu0
    %5901 = vmatprep.mubr.bf16.mxu0 0
    %5902 = vmatmul.mubr.bf16.gmra.mrb[0].mxu0 %v5653
    %v5903 = vpop.f32.mrb[0].mxu0
    %v5904 = vadd.f32 0.0, %v5903
    %v5905 = vpop.f32.mrb[0].mxu0
    %v5906 = vpop.f32.mrb[0].mxu0
    %v5907 = vadd.f32 0.0, %v5906
    %v5908 = vpop.f32.mrb[0].mxu0
    %5909 = vmatprep.mubr.bf16.mxu0 0
    %5910 = vmatmul.mubr.bf16.gmra.mrb[0].mxu0 %v5654
    %v5911 = vpop.f32.mrb[0].mxu0
    %v5912 = vadd.f32 0.0, %v5911
    %v5913 = vpop.f32.mrb[0].mxu0
    %v5914 = vpop.f32.mrb[0].mxu0
    %v5915 = vadd.f32 0.0, %v5914
    %v5916 = vpop.f32.mrb[0].mxu0
    %5917 = vmatprep.mubr.bf16.mxu0 0
    %5918 = vmatmul.mubr.bf16.gmra.mrb[0].mxu0 %v5655
    %v5919 = vpop.f32.mrb[0].mxu0
    %v5920 = vadd.f32 0.0, %v5919
    %v5921 = vpop.f32.mrb[0].mxu0
    %v5922 = vpop.f32.mrb[0].mxu0
    %v5923 = vadd.f32 0.0, %v5922
    %v5924 = vpop.f32.mrb[0].mxu0
    %5925 = vmatprep.mubr.bf16.mxu0 0
    %5926 = vmatmul.mubr.bf16.gmra.mrb[0].mxu0 %v5656
    %v5927 = vpop.f32.mrb[0].mxu0
    %v5928 = vadd.f32 0.0, %v5927
    %v5929 = vpop.f32.mrb[0].mxu0
    %v5930 = vpop.f32.mrb[0].mxu0
    %v5931 = vadd.f32 0.0, %v5930
    %v5932 = vpop.f32.mrb[0].mxu0
    %5933 = vmatprep.mubr.bf16.mxu0 0
    %5934 = vmatmul.mubr.bf16.gmra.mrb[0].mxu0 %v5657
    %v5935 = vpop.f32.mrb[0].mxu0
    %v5936 = vadd.f32 0.0, %v5935
    %v5937 = vpop.f32.mrb[0].mxu0
    %v5938 = vpop.f32.mrb[0].mxu0
    %v5939 = vadd.f32 0.0, %v5938
    %v5940 = vpop.f32.mrb[0].mxu0
    %5941 = vmatprep.mubr.bf16.mxu0 0
    %5942 = vmatmul.mubr.bf16.gmra.mrb[0].mxu0 %v5658
    %v5943 = vpop.f32.mrb[0].mxu0
    %v5944 = vadd.f32 0.0, %v5943
    %v5945 = vpop.f32.mrb[0].mxu0
    %v5946 = vpop.f32.mrb[0].mxu0
    %v5947 = vadd.f32 0.0, %v5946
    %v5948 = vpop.f32.mrb[0].mxu0
    %5949 = vmatprep.mubr.bf16.mxu0 0
    %5950 = vmatmul.mubr.bf16.gmra.mrb[0].mxu0 %v5659
    %v5951 = vpop.f32.mrb[0].mxu0
    %v5952 = vadd.f32 0.0, %v5951
    %v5953 = vpop.f32.mrb[0].mxu0
    %v5954 = vpop.f32.mrb[0].mxu0
    %v5955 = vadd.f32 0.0, %v5954
    %v5956 = vpop.f32.mrb[0].mxu0
    %5957 = vmatprep.mubr.bf16.mxu0 0
    %5958 = vmatmul.mubr.bf16.gmra.mrb[0].mxu0 %v5660
    %v5959 = vpop.f32.mrb[0].mxu0
    %v5960 = vadd.f32 0.0, %v5959
    %v5961 = vpop.f32.mrb[0].mxu0
    %v5962 = vpop.f32.mrb[0].mxu0
    %v5963 = vadd.f32 0.0, %v5962
    %v5964 = vpop.f32.mrb[0].mxu0
    %5965 = vmatprep.mubr.bf16.mxu0 0
    %5966 = vmatmul.mubr.bf16.gmra.mrb[0].mxu0 %v5661
    %v5967 = vpop.f32.mrb[0].mxu0
    %v5968 = vadd.f32 0.0, %v5967
    %v5969 = vpop.f32.mrb[0].mxu0
    %v5970 = vpop.f32.mrb[0].mxu0
    %v5971 = vadd.f32 0.0, %v5970
    %v5972 = vpop.f32.mrb[0].mxu0
    %5973 = vmatprep.mubr.bf16.mxu0 0
    %5974 = vmatmul.mubr.bf16.gmra.mrb[0].mxu0 %v5662
    %v5975 = vpop.f32.mrb[0].mxu0
    %v5976 = vadd.f32 0.0, %v5975
    %v5977 = vpop.f32.mrb[0].mxu0
    %v5978 = vpop.f32.mrb[0].mxu0
    %v5979 = vadd.f32 0.0, %v5978
    %v5980 = vpop.f32.mrb[0].mxu0
    %5981 = vmatprep.mubr.bf16.mxu0 0
    %5982 = vmatmul.mubr.bf16.gmra.mrb[0].mxu0 %v5663
    %v5983 = vpop.f32.mrb[0].mxu0
    %v5984 = vadd.f32 0.0, %v5983
    %v5985 = vpop.f32.mrb[0].mxu0
    %v5986 = vpop.f32.mrb[0].mxu0
    %v5987 = vadd.f32 0.0, %v5986
    %v5988 = vpop.f32.mrb[0].mxu0
    %5989 = vmatprep.mubr.bf16.mxu0 0
    %5990 = vmatmul.mubr.bf16.gmra.mrb[0].mxu0 %v5664
    %v5991 = vpop.f32.mrb[0].mxu0
    %v5992 = vadd.f32 0.0, %v5991
    %v5993 = vpop.f32.mrb[0].mxu0
    %v5994 = vpop.f32.mrb[0].mxu0
    %v5995 = vadd.f32 0.0, %v5994
    %v5996 = vpop.f32.mrb[0].mxu0
    %5997 = vmatprep.mubr.bf16.mxu0 0
    %5998 = vmatmul.mubr.bf16.gmra.mrb[0].mxu0 %v5665
    %v5999 = vpop.f32.mrb[0].mxu0
    %v6000 = vadd.f32 0.0, %v5999
    %v6001 = vpop.f32.mrb[0].mxu0
    %v6002 = vpop.f32.mrb[0].mxu0
    %v6003 = vadd.f32 0.0, %v6002
    %v6004 = vpop.f32.mrb[0].mxu0
    %6005 = vmatprep.mubr.bf16.mxu0 0
    %6006 = vmatmul.mubr.bf16.gmra.mrb[0].mxu0 %v5666
    %v6007 = vpop.f32.mrb[0].mxu0
    %v6008 = vadd.f32 0.0, %v6007
    %v6009 = vpop.f32.mrb[0].mxu0
    %v6010 = vpop.f32.mrb[0].mxu0
    %v6011 = vadd.f32 0.0, %v6010
    %v6012 = vpop.f32.mrb[0].mxu0
    %6013 = vmatprep.mubr.bf16.mxu0 0
    %6014 = vmatmul.mubr.bf16.gmra.mrb[0].mxu0 %v5667
    %v6015 = vpop.f32.mrb[0].mxu0
    %v6016 = vadd.f32 0.0, %v6015
    %v6017 = vpop.f32.mrb[0].mxu0
    %v6018 = vpop.f32.mrb[0].mxu0
    %v6019 = vadd.f32 0.0, %v6018
    %v6020 = vpop.f32.mrb[0].mxu0
    %6021 = vdwg.mxu0
    %v6022 = vld [vmem:[#allocation3] sm:$0xff]
    %v6023 = vld [vmem:[#allocation3 + $0x8] sm:$0xff]
    %v6024 = vld [vmem:[#allocation3 + $0x10] sm:$0xff]
    %v6025 = vld [vmem:[#allocation3 + $0x18] sm:$0xff]
    %v6026 = vld [vmem:[#allocation3 + $0x20] sm:$0xff]
    %v6027 = vld [vmem:[#allocation3 + $0x28] sm:$0xff]
    %v6028 = vld [vmem:[#allocation3 + $0x30] sm:$0xff]
    %v6029 = vld [vmem:[#allocation3 + $0x38] sm:$0xff]
    %v6030 = vld [vmem:[#allocation3 + $0x40] sm:$0xff]
    %v6031 = vld [vmem:[#allocation3 + $0x48] sm:$0xff]
    %v6032 = vld [vmem:[#allocation3 + $0x50] sm:$0xff]
    %v6033 = vld [vmem:[#allocation3 + $0x58] sm:$0xff]
    %v6034 = vld [vmem:[#allocation3 + $0x60] sm:$0xff]
    %v6035 = vld [vmem:[#allocation3 + $0x68] sm:$0xff]
    %v6036 = vld [vmem:[#allocation3 + $0x70] sm:$0xff]
    %v6037 = vld [vmem:[#allocation3 + $0x78] sm:$0xff]
    %v6038 = vld [vmem:[#allocation3 + $0x80] sm:$0xff]
    %v6039 = vld [vmem:[#allocation3 + $0x88] sm:$0xff]
    %v6040 = vld [vmem:[#allocation3 + $0x90] sm:$0xff]
    %v6041 = vld [vmem:[#allocation3 + $0x98] sm:$0xff]
    %v6042 = vld [vmem:[#allocation3 + $0xa0] sm:$0xff]
    %v6043 = vld [vmem:[#allocation3 + $0xa8] sm:$0xff]
    %v6044 = vld [vmem:[#allocation3 + $0xb0] sm:$0xff]
    %v6045 = vld [vmem:[#allocation3 + $0xb8] sm:$0xff]
    %v6046 = vld [vmem:[#allocation3 + $0xc0] sm:$0xff]
    %v6047 = vld [vmem:[#allocation3 + $0xc8] sm:$0xff]
    %v6048 = vld [vmem:[#allocation3 + $0xd0] sm:$0xff]
    %v6049 = vld [vmem:[#allocation3 + $0xd8] sm:$0xff]
    %v6050 = vld [vmem:[#allocation3 + $0xe0] sm:$0xff]
    %v6051 = vld [vmem:[#allocation3 + $0xe8] sm:$0xff]
    %v6052 = vld [vmem:[#allocation3 + $0xf0] sm:$0xff]
    %v6053 = vld [vmem:[#allocation3 + $0xf8] sm:$0xff]
    %v6054 = vld [vmem:[#allocation3 + $0x100] sm:$0xff]
    %v6055 = vld [vmem:[#allocation3 + $0x108] sm:$0xff]
    %v6056 = vld [vmem:[#allocation3 + $0x110] sm:$0xff]
    %v6057 = vld [vmem:[#allocation3 + $0x118] sm:$0xff]
    %v6058 = vld [vmem:[#allocation3 + $0x120] sm:$0xff]
    %v6059 = vld [vmem:[#allocation3 + $0x128] sm:$0xff]
    %v6060 = vld [vmem:[#allocation3 + $0x130] sm:$0xff]
    %v6061 = vld [vmem:[#allocation3 + $0x138] sm:$0xff]
    %v6062 = vld [vmem:[#allocation3 + $0x140] sm:$0xff]
    %v6063 = vld [vmem:[#allocation3 + $0x148] sm:$0xff]
    %v6064 = vld [vmem:[#allocation3 + $0x150] sm:$0xff]
    %v6065 = vld [vmem:[#allocation3 + $0x158] sm:$0xff]
    %v6066 = vld [vmem:[#allocation3 + $0x160] sm:$0xff]
    %v6067 = vld [vmem:[#allocation3 + $0x168] sm:$0xff]
    %v6068 = vld [vmem:[#allocation3 + $0x170] sm:$0xff]
    %v6069 = vld [vmem:[#allocation3 + $0x178] sm:$0xff]
    %v6070 = vld [vmem:[#allocation3 + $0x180] sm:$0xff]
    %v6071 = vld [vmem:[#allocation3 + $0x188] sm:$0xff]
    %v6072 = vld [vmem:[#allocation3 + $0x190] sm:$0xff]
    %v6073 = vld [vmem:[#allocation3 + $0x198] sm:$0xff]
    %v6074 = vld [vmem:[#allocation3 + $0x1a0] sm:$0xff]
    %v6075 = vld [vmem:[#allocation3 + $0x1a8] sm:$0xff]
    %v6076 = vld [vmem:[#allocation3 + $0x1b0] sm:$0xff]
    %v6077 = vld [vmem:[#allocation3 + $0x1b8] sm:$0xff]
    %v6078 = vld [vmem:[#allocation3 + $0x1c0] sm:$0xff]
    %v6079 = vld [vmem:[#allocation3 + $0x1c8] sm:$0xff]
    %v6080 = vld [vmem:[#allocation3 + $0x1d0] sm:$0xff]
    %v6081 = vld [vmem:[#allocation3 + $0x1d8] sm:$0xff]
    %v6082 = vld [vmem:[#allocation3 + $0x1e0] sm:$0xff]
    %v6083 = vld [vmem:[#allocation3 + $0x1e8] sm:$0xff]
    %v6084 = vld [vmem:[#allocation3 + $0x1f0] sm:$0xff]
    %v6085 = vld [vmem:[#allocation3 + $0x1f8] sm:$0xff]
    %v6086 = vadd.f32 %v6022, %v5768
    %v6087 = vadd.f32 %v6023, %v5771
    %v6088 = vadd.f32 %v6024, %v5776
    %v6089 = vadd.f32 %v6025, %v5779
    %v6090 = vadd.f32 %v6026, %v5784
    %v6091 = vadd.f32 %v6027, %v5787
    %v6092 = vadd.f32 %v6028, %v5792
    %v6093 = vadd.f32 %v6029, %v5795
    %v6094 = vadd.f32 %v6030, %v5800
    %v6095 = vadd.f32 %v6031, %v5803
    %v6096 = vadd.f32 %v6032, %v5808
    %v6097 = vadd.f32 %v6033, %v5811
    %v6098 = vadd.f32 %v6034, %v5816
    %v6099 = vadd.f32 %v6035, %v5819
    %v6100 = vadd.f32 %v6036, %v5824
    %v6101 = vadd.f32 %v6037, %v5827
    %v6102 = vadd.f32 %v6038, %v5832
    %v6103 = vadd.f32 %v6039, %v5835
    %v6104 = vadd.f32 %v6040, %v5840
    %v6105 = vadd.f32 %v6041, %v5843
    %v6106 = vadd.f32 %v6042, %v5848
    %v6107 = vadd.f32 %v6043, %v5851
    %v6108 = vadd.f32 %v6044, %v5856
    %v6109 = vadd.f32 %v6045, %v5859
    %v6110 = vadd.f32 %v6046, %v5864
    %v6111 = vadd.f32 %v6047, %v5867
    %v6112 = vadd.f32 %v6048, %v5872
    %v6113 = vadd.f32 %v6049, %v5875
    %v6114 = vadd.f32 %v6050, %v5880
    %v6115 = vadd.f32 %v6051, %v5883
    %v6116 = vadd.f32 %v6052, %v5888
    %v6117 = vadd.f32 %v6053, %v5891
    %v6118 = vadd.f32 %v6054, %v5896
    %v6119 = vadd.f32 %v6055, %v5899
    %v6120 = vadd.f32 %v6056, %v5904
    %v6121 = vadd.f32 %v6057, %v5907
    %v6122 = vadd.f32 %v6058, %v5912
    %v6123 = vadd.f32 %v6059, %v5915
    %v6124 = vadd.f32 %v6060, %v5920
    %v6125 = vadd.f32 %v6061, %v5923
    %v6126 = vadd.f32 %v6062, %v5928
    %v6127 = vadd.f32 %v6063, %v5931
    %v6128 = vadd.f32 %v6064, %v5936
    %v6129 = vadd.f32 %v6065, %v5939
    %v6130 = vadd.f32 %v6066, %v5944
    %v6131 = vadd.f32 %v6067, %v5947
    %v6132 = vadd.f32 %v6068, %v5952
    %v6133 = vadd.f32 %v6069, %v5955
    %v6134 = vadd.f32 %v6070, %v5960
    %v6135 = vadd.f32 %v6071, %v5963
    %v6136 = vadd.f32 %v6072, %v5968
    %v6137 = vadd.f32 %v6073, %v5971
    %v6138 = vadd.f32 %v6074, %v5976
    %v6139 = vadd.f32 %v6075, %v5979
    %v6140 = vadd.f32 %v6076, %v5984
    %v6141 = vadd.f32 %v6077, %v5987
    %v6142 = vadd.f32 %v6078, %v5992
    %v6143 = vadd.f32 %v6079, %v5995
    %v6144 = vadd.f32 %v6080, %v6000
    %v6145 = vadd.f32 %v6081, %v6003
    %v6146 = vadd.f32 %v6082, %v6008
    %v6147 = vadd.f32 %v6083, %v6011
    %v6148 = vadd.f32 %v6084, %v6016
    %v6149 = vadd.f32 %v6085, %v6019
    %6150 = vst [vmem:[#allocation3] sm:$0xff] %v6086
    %6151 = vst [vmem:[#allocation3 + $0x8] sm:$0xff] %v6087
    %6152 = vst [vmem:[#allocation3 + $0x10] sm:$0xff] %v6088
    %6153 = vst [vmem:[#allocation3 + $0x18] sm:$0xff] %v6089
    %6154 = vst [vmem:[#allocation3 + $0x20] sm:$0xff] %v6090
    %6155 = vst [vmem:[#allocation3 + $0x28] sm:$0xff] %v6091
    %6156 = vst [vmem:[#allocation3 + $0x30] sm:$0xff] %v6092
    %6157 = vst [vmem:[#allocation3 + $0x38] sm:$0xff] %v6093
    %6158 = vst [vmem:[#allocation3 + $0x40] sm:$0xff] %v6094
    %6159 = vst [vmem:[#allocation3 + $0x48] sm:$0xff] %v6095
    %6160 = vst [vmem:[#allocation3 + $0x50] sm:$0xff] %v6096
    %6161 = vst [vmem:[#allocation3 + $0x58] sm:$0xff] %v6097
    %6162 = vst [vmem:[#allocation3 + $0x60] sm:$0xff] %v6098
    %6163 = vst [vmem:[#allocation3 + $0x68] sm:$0xff] %v6099
    %6164 = vst [vmem:[#allocation3 + $0x70] sm:$0xff] %v6100
    %6165 = vst [vmem:[#allocation3 + $0x78] sm:$0xff] %v6101
    %6166 = vst [vmem:[#allocation3 + $0x80] sm:$0xff] %v6102
    %6167 = vst [vmem:[#allocation3 + $0x88] sm:$0xff] %v6103
    %6168 = vst [vmem:[#allocation3 + $0x90] sm:$0xff] %v6104
    %6169 = vst [vmem:[#allocation3 + $0x98] sm:$0xff] %v6105
    %6170 = vst [vmem:[#allocation3 + $0xa0] sm:$0xff] %v6106
    %6171 = vst [vmem:[#allocation3 + $0xa8] sm:$0xff] %v6107
    %6172 = vst [vmem:[#allocation3 + $0xb0] sm:$0xff] %v6108
    %6173 = vst [vmem:[#allocation3 + $0xb8] sm:$0xff] %v6109
    %6174 = vst [vmem:[#allocation3 + $0xc0] sm:$0xff] %v6110
    %6175 = vst [vmem:[#allocation3 + $0xc8] sm:$0xff] %v6111
    %6176 = vst [vmem:[#allocation3 + $0xd0] sm:$0xff] %v6112
    %6177 = vst [vmem:[#allocation3 + $0xd8] sm:$0xff] %v6113
    %6178 = vst [vmem:[#allocation3 + $0xe0] sm:$0xff] %v6114
    %6179 = vst [vmem:[#allocation3 + $0xe8] sm:$0xff] %v6115
    %6180 = vst [vmem:[#allocation3 + $0xf0] sm:$0xff] %v6116
    %6181 = vst [vmem:[#allocation3 + $0xf8] sm:$0xff] %v6117
    %6182 = vst [vmem:[#allocation3 + $0x100] sm:$0xff] %v6118
    %6183 = vst [vmem:[#allocation3 + $0x108] sm:$0xff] %v6119
    %6184 = vst [vmem:[#allocation3 + $0x110] sm:$0xff] %v6120
    %6185 = vst [vmem:[#allocation3 + $0x118] sm:$0xff] %v6121
    %6186 = vst [vmem:[#allocation3 + $0x120] sm:$0xff] %v6122
    %6187 = vst [vmem:[#allocation3 + $0x128] sm:$0xff] %v6123
    %6188 = vst [vmem:[#allocation3 + $0x130] sm:$0xff] %v6124
    %6189 = vst [vmem:[#allocation3 + $0x138] sm:$0xff] %v6125
    %6190 = vst [vmem:[#allocation3 + $0x140] sm:$0xff] %v6126
    %6191 = vst [vmem:[#allocation3 + $0x148] sm:$0xff] %v6127
    %6192 = vst [vmem:[#allocation3 + $0x150] sm:$0xff] %v6128
    %6193 = vst [vmem:[#allocation3 + $0x158] sm:$0xff] %v6129
    %6194 = vst [vmem:[#allocation3 + $0x160] sm:$0xff] %v6130
    %6195 = vst [vmem:[#allocation3 + $0x168] sm:$0xff] %v6131
    %6196 = vst [vmem:[#allocation3 + $0x170] sm:$0xff] %v6132
    %6197 = vst [vmem:[#allocation3 + $0x178] sm:$0xff] %v6133
    %6198 = vst [vmem:[#allocation3 + $0x180] sm:$0xff] %v6134
    %6199 = vst [vmem:[#allocation3 + $0x188] sm:$0xff] %v6135
    %6200 = vst [vmem:[#allocation3 + $0x190] sm:$0xff] %v6136
    %6201 = vst [vmem:[#allocation3 + $0x198] sm:$0xff] %v6137
    %6202 = vst [vmem:[#allocation3 + $0x1a0] sm:$0xff] %v6138
    %6203 = vst [vmem:[#allocation3 + $0x1a8] sm:$0xff] %v6139
    %6204 = vst [vmem:[#allocation3 + $0x1b0] sm:$0xff] %v6140
    %6205 = vst [vmem:[#allocation3 + $0x1b8] sm:$0xff] %v6141
    %6206 = vst [vmem:[#allocation3 + $0x1c0] sm:$0xff] %v6142
    %6207 = vst [vmem:[#allocation3 + $0x1c8] sm:$0xff] %v6143
    %6208 = vst [vmem:[#allocation3 + $0x1d0] sm:$0xff] %v6144
    %6209 = vst [vmem:[#allocation3 + $0x1d8] sm:$0xff] %v6145
    %6210 = vst [vmem:[#allocation3 + $0x1e0] sm:$0xff] %v6146
    %6211 = vst [vmem:[#allocation3 + $0x1e8] sm:$0xff] %v6147
    %6212 = vst [vmem:[#allocation3 + $0x1f0] sm:$0xff] %v6148
    %6213 = vst [vmem:[#allocation3 + $0x1f8] sm:$0xff] %v6149
    %v6214 = vld [vmem:[%s5571 + $0x8] sm:$0xff]
    %v6215 = vld [vmem:[%s5571 + $0x10] sm:$0xff]
    %v6216 = vld [vmem:[%s5571 + $0x28] sm:$0xff]
    %v6217 = vld [vmem:[%s5571 + $0x30] sm:$0xff]
    %v6218 = vld [vmem:[%s5571 + $0x48] sm:$0xff]
    %v6219 = vld [vmem:[%s5571 + $0x50] sm:$0xff]
    %v6220 = vld [vmem:[%s5571 + $0x68] sm:$0xff]
    %v6221 = vld [vmem:[%s5571 + $0x70] sm:$0xff]
    %v6222 = vld [vmem:[%s5571 + $0x88] sm:$0xff]
    %v6223 = vld [vmem:[%s5571 + $0x90] sm:$0xff]
    %v6224 = vld [vmem:[%s5571 + $0xa8] sm:$0xff]
    %v6225 = vld [vmem:[%s5571 + $0xb0] sm:$0xff]
    %v6226 = vld [vmem:[%s5571 + $0xc8] sm:$0xff]
    %v6227 = vld [vmem:[%s5571 + $0xd0] sm:$0xff]
    %v6228 = vld [vmem:[%s5571 + $0xe8] sm:$0xff]
    %v6229 = vld [vmem:[%s5571 + $0xf0] sm:$0xff]
    %v6230 = vld [vmem:[%s5571 + $0x108] sm:$0xff]
    %v6231 = vld [vmem:[%s5571 + $0x110] sm:$0xff]
    %v6232 = vld [vmem:[%s5571 + $0x128] sm:$0xff]
    %v6233 = vld [vmem:[%s5571 + $0x130] sm:$0xff]
    %v6234 = vld [vmem:[%s5571 + $0x148] sm:$0xff]
    %v6235 = vld [vmem:[%s5571 + $0x150] sm:$0xff]
    %v6236 = vld [vmem:[%s5571 + $0x168] sm:$0xff]
    %v6237 = vld [vmem:[%s5571 + $0x170] sm:$0xff]
    %v6238 = vld [vmem:[%s5571 + $0x188] sm:$0xff]
    %v6239 = vld [vmem:[%s5571 + $0x190] sm:$0xff]
    %v6240 = vld [vmem:[%s5571 + $0x1a8] sm:$0xff]
    %v6241 = vld [vmem:[%s5571 + $0x1b0] sm:$0xff]
    %v6242 = vld [vmem:[%s5571 + $0x1c8] sm:$0xff]
    %v6243 = vld [vmem:[%s5571 + $0x1d0] sm:$0xff]
    %v6244 = vld [vmem:[%s5571 + $0x1e8] sm:$0xff]
    %v6245 = vld [vmem:[%s5571 + $0x1f0] sm:$0xff]
    %v6246 = vld [vmem:[%s5571 + $0x248] sm:$0xff]
    %v6247 = vld [vmem:[%s5571 + $0x250] sm:$0xff]
    %v6248 = vld [vmem:[%s5571 + $0x268] sm:$0xff]
    %v6249 = vld [vmem:[%s5571 + $0x270] sm:$0xff]
    %v6250 = vld [vmem:[%s5571 + $0x288] sm:$0xff]
    %v6251 = vld [vmem:[%s5571 + $0x290] sm:$0xff]
    %v6252 = vld [vmem:[%s5571 + $0x2a8] sm:$0xff]
    %v6253 = vld [vmem:[%s5571 + $0x2b0] sm:$0xff]
    %v6254 = vld [vmem:[%s5571 + $0x2c8] sm:$0xff]
    %v6255 = vld [vmem:[%s5571 + $0x2d0] sm:$0xff]
    %v6256 = vld [vmem:[%s5571 + $0x2e8] sm:$0xff]
    %v6257 = vld [vmem:[%s5571 + $0x2f0] sm:$0xff]
    %v6258 = vld [vmem:[%s5571 + $0x308] sm:$0xff]
    %v6259 = vld [vmem:[%s5571 + $0x310] sm:$0xff]
    %v6260 = vld [vmem:[%s5571 + $0x328] sm:$0xff]
    %v6261 = vld [vmem:[%s5571 + $0x330] sm:$0xff]
    %v6262 = vld [vmem:[%s5571 + $0x348] sm:$0xff]
    %v6263 = vld [vmem:[%s5571 + $0x350] sm:$0xff]
    %v6264 = vld [vmem:[%s5571 + $0x368] sm:$0xff]
    %v6265 = vld [vmem:[%s5571 + $0x370] sm:$0xff]
    %v6266 = vld [vmem:[%s5571 + $0x388] sm:$0xff]
    %v6267 = vld [vmem:[%s5571 + $0x390] sm:$0xff]
    %v6268 = vld [vmem:[%s5571 + $0x3a8] sm:$0xff]
    %v6269 = vld [vmem:[%s5571 + $0x3b0] sm:$0xff]
    %v6270 = vld [vmem:[%s5571 + $0x3c8] sm:$0xff]
    %v6271 = vld [vmem:[%s5571 + $0x3d0] sm:$0xff]
    %v6272 = vld [vmem:[%s5571 + $0x3e8] sm:$0xff]
    %v6273 = vld [vmem:[%s5571 + $0x3f0] sm:$0xff]
    %v6274 = vld [vmem:[%s5571 + $0x408] sm:$0xff]
    %v6275 = vld [vmem:[%s5571 + $0x410] sm:$0xff]
    %v6276 = vld [vmem:[%s5571 + $0x428] sm:$0xff]
    %v6277 = vld [vmem:[%s5571 + $0x430] sm:$0xff]
    %v6278 = vpack.c.bf16 %v6215, %v6214
    %v6279 = vpack.c.bf16 %v6217, %v6216
    %v6280 = vpack.c.bf16 %v6219, %v6218
    %v6281 = vpack.c.bf16 %v6221, %v6220
    %v6282 = vpack.c.bf16 %v6223, %v6222
    %v6283 = vpack.c.bf16 %v6225, %v6224
    %v6284 = vpack.c.bf16 %v6227, %v6226
    %v6285 = vpack.c.bf16 %v6229, %v6228
    %v6286 = vpack.c.bf16 %v6231, %v6230
    %v6287 = vpack.c.bf16 %v6233, %v6232
    %v6288 = vpack.c.bf16 %v6235, %v6234
    %v6289 = vpack.c.bf16 %v6237, %v6236
    %v6290 = vpack.c.bf16 %v6239, %v6238
    %v6291 = vpack.c.bf16 %v6241, %v6240
    %v6292 = vpack.c.bf16 %v6243, %v6242
    %v6293 = vpack.c.bf16 %v6245, %v6244
    %v6294 = vpack.c.bf16 %v6247, %v6246
    %v6295 = vpack.c.bf16 %v6249, %v6248
    %v6296 = vpack.c.bf16 %v6251, %v6250
    %v6297 = vpack.c.bf16 %v6253, %v6252
    %v6298 = vpack.c.bf16 %v6255, %v6254
    %v6299 = vpack.c.bf16 %v6257, %v6256
    %v6300 = vpack.c.bf16 %v6259, %v6258
    %v6301 = vpack.c.bf16 %v6261, %v6260
    %v6302 = vpack.c.bf16 %v6263, %v6262
    %v6303 = vpack.c.bf16 %v6265, %v6264
    %v6304 = vpack.c.bf16 %v6267, %v6266
    %v6305 = vpack.c.bf16 %v6269, %v6268
    %v6306 = vpack.c.bf16 %v6271, %v6270
    %v6307 = vpack.c.bf16 %v6273, %v6272
    %v6308 = vpack.c.bf16 %v6275, %v6274
    %v6309 = vpack.c.bf16 %v6277, %v6276
    %s6310 = scalar_lea.vmem [#allocation10], 448
    %v6311 = vld [vmem:[%s6310] sm:$0xf]
    %v6312 = vld [vmem:[%s6310 + $0x4] sm:$0xf]
    %v6313 = vld [vmem:[%s6310 + $0x8] sm:$0xf]
    %v6314 = vld [vmem:[%s6310 + $0xc] sm:$0xf]
    %v6315 = vld [vmem:[%s6310 + $0x10] sm:$0xf]
    %v6316 = vld [vmem:[%s6310 + $0x14] sm:$0xf]
    %v6317 = vld [vmem:[%s6310 + $0x18] sm:$0xf]
    %v6318 = vld [vmem:[%s6310 + $0x1c] sm:$0xf]
    %v6319 = vld [vmem:[%s6310 + $0x20] sm:$0xf]
    %v6320 = vld [vmem:[%s6310 + $0x24] sm:$0xf]
    %v6321 = vld [vmem:[%s6310 + $0x28] sm:$0xf]
    %v6322 = vld [vmem:[%s6310 + $0x2c] sm:$0xf]
    %v6323 = vld [vmem:[%s6310 + $0x30] sm:$0xf]
    %v6324 = vld [vmem:[%s6310 + $0x34] sm:$0xf]
    %v6325 = vld [vmem:[%s6310 + $0x38] sm:$0xf]
    %v6326 = vld [vmem:[%s6310 + $0x3c] sm:$0xf]
    %v6343 = vunpack.c.l.b16 %v6311
    %v6344 = vunpack.c.l.b16 %v6312
    %v6345 = vunpack.c.l.b16 %v6313
    %v6346 = vunpack.c.l.b16 %v6314
    %v6347 = vunpack.c.l.b16 %v6315
    %v6348 = vunpack.c.l.b16 %v6316
    %v6349 = vunpack.c.l.b16 %v6317
    %v6350 = vunpack.c.l.b16 %v6318
    %v6351 = vunpack.c.l.b16 %v6319
    %v6352 = vunpack.c.l.b16 %v6320
    %v6353 = vunpack.c.l.b16 %v6321
    %v6354 = vunpack.c.l.b16 %v6322
    %v6355 = vunpack.c.l.b16 %v6323
    %v6356 = vunpack.c.l.b16 %v6324
    %v6357 = vunpack.c.l.b16 %v6325
    %v6358 = vunpack.c.l.b16 %v6326
    %v6359 = vpack.c.b16 %v6344, %v6343
    %v6360 = vpack.c.b16 %v6346, %v6345
    %v6361 = vpack.c.b16 %v6348, %v6347
    %v6362 = vpack.c.b16 %v6350, %v6349
    %v6363 = vpack.c.b16 %v6352, %v6351
    %v6364 = vpack.c.b16 %v6354, %v6353
    %v6365 = vpack.c.b16 %v6356, %v6355
    %v6366 = vpack.c.b16 %v6358, %v6357
    %6375 = vmatprep.subr.bf16.mxu0 0
    %6376 = vmatpush1.bf16.msra.mxu0 %v6359
    %6377 = vmatprep.subr.bf16.mxu0 0
    %6378 = vmatpush1.bf16.msra.mxu0 %v6360
    %6379 = vmatprep.subr.bf16.mxu0 0
    %6380 = vmatpush1.bf16.msra.mxu0 %v6361
    %6381 = vmatprep.subr.bf16.mxu0 0
    %6382 = vmatpush1.bf16.msra.mxu0 %v6362
    %6383 = vmatprep.subr.bf16.mxu0 0
    %6384 = vmatpush1.bf16.msra.mxu0 %v6363
    %6385 = vmatprep.subr.bf16.mxu0 0
    %6386 = vmatpush1.bf16.msra.mxu0 %v6364
    %6387 = vmatprep.subr.bf16.mxu0 0
    %6388 = vmatpush1.bf16.msra.mxu0 %v6365
    %6389 = vmatprep.subr.bf16.mxu0 0
    %6390 = vmatpush1.bf16.msra.mxu0 %v6366
    %6391 = vmatprep.subr.bf16.mxu0 0
    %6392 = vmatpush1.bf16.msra.mxu0 0
    %6393 = vmatprep.subr.bf16.mxu0 0
    %6394 = vmatpush1.bf16.msra.mxu0 0
    %6395 = vmatprep.subr.bf16.mxu0 0
    %6396 = vmatpush1.bf16.msra.mxu0 0
    %6397 = vmatprep.subr.bf16.mxu0 0
    %6398 = vmatpush1.bf16.msra.mxu0 0
    %6399 = vmatprep.subr.bf16.mxu0 0
    %6400 = vmatpush1.bf16.msra.mxu0 0
    %6401 = vmatprep.subr.bf16.mxu0 0
    %6402 = vmatpush1.bf16.msra.mxu0 0
    %6403 = vmatprep.subr.bf16.mxu0 0
    %6404 = vmatpush1.bf16.msra.mxu0 0
    %6405 = vmatprep.subr.bf16.mxu0 0
    %6406 = vmatpush1.bf16.msra.mxu0 0
    %6407 = vmatprep.mubr.bf16.mxu0 0
    %6408 = vmatmul.mubr.bf16.gmra.mrb[0].mxu0 %v6278
    %v6409 = vpop.f32.mrb[0].mxu0
    %v6410 = vadd.f32 0.0, %v6409
    %v6411 = vpop.f32.mrb[0].mxu0
    %v6412 = vpop.f32.mrb[0].mxu0
    %v6413 = vadd.f32 0.0, %v6412
    %v6414 = vpop.f32.mrb[0].mxu0
    %6415 = vmatprep.mubr.bf16.mxu0 0
    %6416 = vmatmul.mubr.bf16.gmra.mrb[0].mxu0 %v6279
    %v6417 = vpop.f32.mrb[0].mxu0
    %v6418 = vadd.f32 0.0, %v6417
    %v6419 = vpop.f32.mrb[0].mxu0
    %v6420 = vpop.f32.mrb[0].mxu0
    %v6421 = vadd.f32 0.0, %v6420
    %v6422 = vpop.f32.mrb[0].mxu0
    %6423 = vmatprep.mubr.bf16.mxu0 0
    %6424 = vmatmul.mubr.bf16.gmra.mrb[0].mxu0 %v6280
    %v6425 = vpop.f32.mrb[0].mxu0
    %v6426 = vadd.f32 0.0, %v6425
    %v6427 = vpop.f32.mrb[0].mxu0
    %v6428 = vpop.f32.mrb[0].mxu0
    %v6429 = vadd.f32 0.0, %v6428
    %v6430 = vpop.f32.mrb[0].mxu0
    %6431 = vmatprep.mubr.bf16.mxu0 0
    %6432 = vmatmul.mubr.bf16.gmra.mrb[0].mxu0 %v6281
    %v6433 = vpop.f32.mrb[0].mxu0
    %v6434 = vadd.f32 0.0, %v6433
    %v6435 = vpop.f32.mrb[0].mxu0
    %v6436 = vpop.f32.mrb[0].mxu0
    %v6437 = vadd.f32 0.0, %v6436
    %v6438 = vpop.f32.mrb[0].mxu0
    %6439 = vmatprep.mubr.bf16.mxu0 0
    %6440 = vmatmul.mubr.bf16.gmra.mrb[0].mxu0 %v6282
    %v6441 = vpop.f32.mrb[0].mxu0
    %v6442 = vadd.f32 0.0, %v6441
    %v6443 = vpop.f32.mrb[0].mxu0
    %v6444 = vpop.f32.mrb[0].mxu0
    %v6445 = vadd.f32 0.0, %v6444
    %v6446 = vpop.f32.mrb[0].mxu0
    %6447 = vmatprep.mubr.bf16.mxu0 0
    %6448 = vmatmul.mubr.bf16.gmra.mrb[0].mxu0 %v6283
    %v6449 = vpop.f32.mrb[0].mxu0
    %v6450 = vadd.f32 0.0, %v6449
    %v6451 = vpop.f32.mrb[0].mxu0
    %v6452 = vpop.f32.mrb[0].mxu0
    %v6453 = vadd.f32 0.0, %v6452
    %v6454 = vpop.f32.mrb[0].mxu0
    %6455 = vmatprep.mubr.bf16.mxu0 0
    %6456 = vmatmul.mubr.bf16.gmra.mrb[0].mxu0 %v6284
    %v6457 = vpop.f32.mrb[0].mxu0
    %v6458 = vadd.f32 0.0, %v6457
    %v6459 = vpop.f32.mrb[0].mxu0
    %v6460 = vpop.f32.mrb[0].mxu0
    %v6461 = vadd.f32 0.0, %v6460
    %v6462 = vpop.f32.mrb[0].mxu0
    %6463 = vmatprep.mubr.bf16.mxu0 0
    %6464 = vmatmul.mubr.bf16.gmra.mrb[0].mxu0 %v6285
    %v6465 = vpop.f32.mrb[0].mxu0
    %v6466 = vadd.f32 0.0, %v6465
    %v6467 = vpop.f32.mrb[0].mxu0
    %v6468 = vpop.f32.mrb[0].mxu0
    %v6469 = vadd.f32 0.0, %v6468
    %v6470 = vpop.f32.mrb[0].mxu0
    %6471 = vmatprep.mubr.bf16.mxu0 0
    %6472 = vmatmul.mubr.bf16.gmra.mrb[0].mxu0 %v6286
    %v6473 = vpop.f32.mrb[0].mxu0
    %v6474 = vadd.f32 0.0, %v6473
    %v6475 = vpop.f32.mrb[0].mxu0
    %v6476 = vpop.f32.mrb[0].mxu0
    %v6477 = vadd.f32 0.0, %v6476
    %v6478 = vpop.f32.mrb[0].mxu0
    %6479 = vmatprep.mubr.bf16.mxu0 0
    %6480 = vmatmul.mubr.bf16.gmra.mrb[0].mxu0 %v6287
    %v6481 = vpop.f32.mrb[0].mxu0
    %v6482 = vadd.f32 0.0, %v6481
    %v6483 = vpop.f32.mrb[0].mxu0
    %v6484 = vpop.f32.mrb[0].mxu0
    %v6485 = vadd.f32 0.0, %v6484
    %v6486 = vpop.f32.mrb[0].mxu0
    %6487 = vmatprep.mubr.bf16.mxu0 0
    %6488 = vmatmul.mubr.bf16.gmra.mrb[0].mxu0 %v6288
    %v6489 = vpop.f32.mrb[0].mxu0
    %v6490 = vadd.f32 0.0, %v6489
    %v6491 = vpop.f32.mrb[0].mxu0
    %v6492 = vpop.f32.mrb[0].mxu0
    %v6493 = vadd.f32 0.0, %v6492
    %v6494 = vpop.f32.mrb[0].mxu0
    %6495 = vmatprep.mubr.bf16.mxu0 0
    %6496 = vmatmul.mubr.bf16.gmra.mrb[0].mxu0 %v6289
    %v6497 = vpop.f32.mrb[0].mxu0
    %v6498 = vadd.f32 0.0, %v6497
    %v6499 = vpop.f32.mrb[0].mxu0
    %v6500 = vpop.f32.mrb[0].mxu0
    %v6501 = vadd.f32 0.0, %v6500
    %v6502 = vpop.f32.mrb[0].mxu0
    %6503 = vmatprep.mubr.bf16.mxu0 0
    %6504 = vmatmul.mubr.bf16.gmra.mrb[0].mxu0 %v6290
    %v6505 = vpop.f32.mrb[0].mxu0
    %v6506 = vadd.f32 0.0, %v6505
    %v6507 = vpop.f32.mrb[0].mxu0
    %v6508 = vpop.f32.mrb[0].mxu0
    %v6509 = vadd.f32 0.0, %v6508
    %v6510 = vpop.f32.mrb[0].mxu0
    %6511 = vmatprep.mubr.bf16.mxu0 0
    %6512 = vmatmul.mubr.bf16.gmra.mrb[0].mxu0 %v6291
    %v6513 = vpop.f32.mrb[0].mxu0
    %v6514 = vadd.f32 0.0, %v6513
    %v6515 = vpop.f32.mrb[0].mxu0
    %v6516 = vpop.f32.mrb[0].mxu0
    %v6517 = vadd.f32 0.0, %v6516
    %v6518 = vpop.f32.mrb[0].mxu0
    %6519 = vmatprep.mubr.bf16.mxu0 0
    %6520 = vmatmul.mubr.bf16.gmra.mrb[0].mxu0 %v6292
    %v6521 = vpop.f32.mrb[0].mxu0
    %v6522 = vadd.f32 0.0, %v6521
    %v6523 = vpop.f32.mrb[0].mxu0
    %v6524 = vpop.f32.mrb[0].mxu0
    %v6525 = vadd.f32 0.0, %v6524
    %v6526 = vpop.f32.mrb[0].mxu0
    %6527 = vmatprep.mubr.bf16.mxu0 0
    %6528 = vmatmul.mubr.bf16.gmra.mrb[0].mxu0 %v6293
    %v6529 = vpop.f32.mrb[0].mxu0
    %v6530 = vadd.f32 0.0, %v6529
    %v6531 = vpop.f32.mrb[0].mxu0
    %v6532 = vpop.f32.mrb[0].mxu0
    %v6533 = vadd.f32 0.0, %v6532
    %v6534 = vpop.f32.mrb[0].mxu0
    %6535 = vmatprep.mubr.bf16.mxu0 0
    %6536 = vmatmul.mubr.bf16.gmra.mrb[0].mxu0 %v6294
    %v6537 = vpop.f32.mrb[0].mxu0
    %v6538 = vadd.f32 0.0, %v6537
    %v6539 = vpop.f32.mrb[0].mxu0
    %v6540 = vpop.f32.mrb[0].mxu0
    %v6541 = vadd.f32 0.0, %v6540
    %v6542 = vpop.f32.mrb[0].mxu0
    %6543 = vmatprep.mubr.bf16.mxu0 0
    %6544 = vmatmul.mubr.bf16.gmra.mrb[0].mxu0 %v6295
    %v6545 = vpop.f32.mrb[0].mxu0
    %v6546 = vadd.f32 0.0, %v6545
    %v6547 = vpop.f32.mrb[0].mxu0
    %v6548 = vpop.f32.mrb[0].mxu0
    %v6549 = vadd.f32 0.0, %v6548
    %v6550 = vpop.f32.mrb[0].mxu0
    %6551 = vmatprep.mubr.bf16.mxu0 0
    %6552 = vmatmul.mubr.bf16.gmra.mrb[0].mxu0 %v6296
    %v6553 = vpop.f32.mrb[0].mxu0
    %v6554 = vadd.f32 0.0, %v6553
    %v6555 = vpop.f32.mrb[0].mxu0
    %v6556 = vpop.f32.mrb[0].mxu0
    %v6557 = vadd.f32 0.0, %v6556
    %v6558 = vpop.f32.mrb[0].mxu0
    %6559 = vmatprep.mubr.bf16.mxu0 0
    %6560 = vmatmul.mubr.bf16.gmra.mrb[0].mxu0 %v6297
    %v6561 = vpop.f32.mrb[0].mxu0
    %v6562 = vadd.f32 0.0, %v6561
    %v6563 = vpop.f32.mrb[0].mxu0
    %v6564 = vpop.f32.mrb[0].mxu0
    %v6565 = vadd.f32 0.0, %v6564
    %v6566 = vpop.f32.mrb[0].mxu0
    %6567 = vmatprep.mubr.bf16.mxu0 0
    %6568 = vmatmul.mubr.bf16.gmra.mrb[0].mxu0 %v6298
    %v6569 = vpop.f32.mrb[0].mxu0
    %v6570 = vadd.f32 0.0, %v6569
    %v6571 = vpop.f32.mrb[0].mxu0
    %v6572 = vpop.f32.mrb[0].mxu0
    %v6573 = vadd.f32 0.0, %v6572
    %v6574 = vpop.f32.mrb[0].mxu0
    %6575 = vmatprep.mubr.bf16.mxu0 0
    %6576 = vmatmul.mubr.bf16.gmra.mrb[0].mxu0 %v6299
    %v6577 = vpop.f32.mrb[0].mxu0
    %v6578 = vadd.f32 0.0, %v6577
    %v6579 = vpop.f32.mrb[0].mxu0
    %v6580 = vpop.f32.mrb[0].mxu0
    %v6581 = vadd.f32 0.0, %v6580
    %v6582 = vpop.f32.mrb[0].mxu0
    %6583 = vmatprep.mubr.bf16.mxu0 0
    %6584 = vmatmul.mubr.bf16.gmra.mrb[0].mxu0 %v6300
    %v6585 = vpop.f32.mrb[0].mxu0
    %v6586 = vadd.f32 0.0, %v6585
    %v6587 = vpop.f32.mrb[0].mxu0
    %v6588 = vpop.f32.mrb[0].mxu0
    %v6589 = vadd.f32 0.0, %v6588
    %v6590 = vpop.f32.mrb[0].mxu0
    %6591 = vmatprep.mubr.bf16.mxu0 0
    %6592 = vmatmul.mubr.bf16.gmra.mrb[0].mxu0 %v6301
    %v6593 = vpop.f32.mrb[0].mxu0
    %v6594 = vadd.f32 0.0, %v6593
    %v6595 = vpop.f32.mrb[0].mxu0
    %v6596 = vpop.f32.mrb[0].mxu0
    %v6597 = vadd.f32 0.0, %v6596
    %v6598 = vpop.f32.mrb[0].mxu0
    %6599 = vmatprep.mubr.bf16.mxu0 0
    %6600 = vmatmul.mubr.bf16.gmra.mrb[0].mxu0 %v6302
    %v6601 = vpop.f32.mrb[0].mxu0
    %v6602 = vadd.f32 0.0, %v6601
    %v6603 = vpop.f32.mrb[0].mxu0
    %v6604 = vpop.f32.mrb[0].mxu0
    %v6605 = vadd.f32 0.0, %v6604
    %v6606 = vpop.f32.mrb[0].mxu0
    %6607 = vmatprep.mubr.bf16.mxu0 0
    %6608 = vmatmul.mubr.bf16.gmra.mrb[0].mxu0 %v6303
    %v6609 = vpop.f32.mrb[0].mxu0
    %v6610 = vadd.f32 0.0, %v6609
    %v6611 = vpop.f32.mrb[0].mxu0
    %v6612 = vpop.f32.mrb[0].mxu0
    %v6613 = vadd.f32 0.0, %v6612
    %v6614 = vpop.f32.mrb[0].mxu0
    %6615 = vmatprep.mubr.bf16.mxu0 0
    %6616 = vmatmul.mubr.bf16.gmra.mrb[0].mxu0 %v6304
    %v6617 = vpop.f32.mrb[0].mxu0
    %v6618 = vadd.f32 0.0, %v6617
    %v6619 = vpop.f32.mrb[0].mxu0
    %v6620 = vpop.f32.mrb[0].mxu0
    %v6621 = vadd.f32 0.0, %v6620
    %v6622 = vpop.f32.mrb[0].mxu0
    %6623 = vmatprep.mubr.bf16.mxu0 0
    %6624 = vmatmul.mubr.bf16.gmra.mrb[0].mxu0 %v6305
    %v6625 = vpop.f32.mrb[0].mxu0
    %v6626 = vadd.f32 0.0, %v6625
    %v6627 = vpop.f32.mrb[0].mxu0
    %v6628 = vpop.f32.mrb[0].mxu0
    %v6629 = vadd.f32 0.0, %v6628
    %v6630 = vpop.f32.mrb[0].mxu0
    %6631 = vmatprep.mubr.bf16.mxu0 0
    %6632 = vmatmul.mubr.bf16.gmra.mrb[0].mxu0 %v6306
    %v6633 = vpop.f32.mrb[0].mxu0
    %v6634 = vadd.f32 0.0, %v6633
    %v6635 = vpop.f32.mrb[0].mxu0
    %v6636 = vpop.f32.mrb[0].mxu0
    %v6637 = vadd.f32 0.0, %v6636
    %v6638 = vpop.f32.mrb[0].mxu0
    %6639 = vmatprep.mubr.bf16.mxu0 0
    %6640 = vmatmul.mubr.bf16.gmra.mrb[0].mxu0 %v6307
    %v6641 = vpop.f32.mrb[0].mxu0
    %v6642 = vadd.f32 0.0, %v6641
    %v6643 = vpop.f32.mrb[0].mxu0
    %v6644 = vpop.f32.mrb[0].mxu0
    %v6645 = vadd.f32 0.0, %v6644
    %v6646 = vpop.f32.mrb[0].mxu0
    %6647 = vmatprep.mubr.bf16.mxu0 0
    %6648 = vmatmul.mubr.bf16.gmra.mrb[0].mxu0 %v6308
    %v6649 = vpop.f32.mrb[0].mxu0
    %v6650 = vadd.f32 0.0, %v6649
    %v6651 = vpop.f32.mrb[0].mxu0
    %v6652 = vpop.f32.mrb[0].mxu0
    %v6653 = vadd.f32 0.0, %v6652
    %v6654 = vpop.f32.mrb[0].mxu0
    %6655 = vmatprep.mubr.bf16.mxu0 0
    %6656 = vmatmul.mubr.bf16.gmra.mrb[0].mxu0 %v6309
    %v6657 = vpop.f32.mrb[0].mxu0
    %v6658 = vadd.f32 0.0, %v6657
    %v6659 = vpop.f32.mrb[0].mxu0
    %v6660 = vpop.f32.mrb[0].mxu0
    %v6661 = vadd.f32 0.0, %v6660
    %v6662 = vpop.f32.mrb[0].mxu0
    %6663 = vdwg.mxu0
    %v6664 = vld [vmem:[#allocation3] sm:$0xff]
    %v6665 = vld [vmem:[#allocation3 + $0x8] sm:$0xff]
    %v6666 = vld [vmem:[#allocation3 + $0x10] sm:$0xff]
    %v6667 = vld [vmem:[#allocation3 + $0x18] sm:$0xff]
    %v6668 = vld [vmem:[#allocation3 + $0x20] sm:$0xff]
    %v6669 = vld [vmem:[#allocation3 + $0x28] sm:$0xff]
    %v6670 = vld [vmem:[#allocation3 + $0x30] sm:$0xff]
    %v6671 = vld [vmem:[#allocation3 + $0x38] sm:$0xff]
    %v6672 = vld [vmem:[#allocation3 + $0x40] sm:$0xff]
    %v6673 = vld [vmem:[#allocation3 + $0x48] sm:$0xff]
    %v6674 = vld [vmem:[#allocation3 + $0x50] sm:$0xff]
    %v6675 = vld [vmem:[#allocation3 + $0x58] sm:$0xff]
    %v6676 = vld [vmem:[#allocation3 + $0x60] sm:$0xff]
    %v6677 = vld [vmem:[#allocation3 + $0x68] sm:$0xff]
    %v6678 = vld [vmem:[#allocation3 + $0x70] sm:$0xff]
    %v6679 = vld [vmem:[#allocation3 + $0x78] sm:$0xff]
    %v6680 = vld [vmem:[#allocation3 + $0x80] sm:$0xff]
    %v6681 = vld [vmem:[#allocation3 + $0x88] sm:$0xff]
    %v6682 = vld [vmem:[#allocation3 + $0x90] sm:$0xff]
    %v6683 = vld [vmem:[#allocation3 + $0x98] sm:$0xff]
    %v6684 = vld [vmem:[#allocation3 + $0xa0] sm:$0xff]
    %v6685 = vld [vmem:[#allocation3 + $0xa8] sm:$0xff]
    %v6686 = vld [vmem:[#allocation3 + $0xb0] sm:$0xff]
    %v6687 = vld [vmem:[#allocation3 + $0xb8] sm:$0xff]
    %v6688 = vld [vmem:[#allocation3 + $0xc0] sm:$0xff]
    %v6689 = vld [vmem:[#allocation3 + $0xc8] sm:$0xff]
    %v6690 = vld [vmem:[#allocation3 + $0xd0] sm:$0xff]
    %v6691 = vld [vmem:[#allocation3 + $0xd8] sm:$0xff]
    %v6692 = vld [vmem:[#allocation3 + $0xe0] sm:$0xff]
    %v6693 = vld [vmem:[#allocation3 + $0xe8] sm:$0xff]
    %v6694 = vld [vmem:[#allocation3 + $0xf0] sm:$0xff]
    %v6695 = vld [vmem:[#allocation3 + $0xf8] sm:$0xff]
    %v6696 = vld [vmem:[#allocation3 + $0x100] sm:$0xff]
    %v6697 = vld [vmem:[#allocation3 + $0x108] sm:$0xff]
    %v6698 = vld [vmem:[#allocation3 + $0x110] sm:$0xff]
    %v6699 = vld [vmem:[#allocation3 + $0x118] sm:$0xff]
    %v6700 = vld [vmem:[#allocation3 + $0x120] sm:$0xff]
    %v6701 = vld [vmem:[#allocation3 + $0x128] sm:$0xff]
    %v6702 = vld [vmem:[#allocation3 + $0x130] sm:$0xff]
    %v6703 = vld [vmem:[#allocation3 + $0x138] sm:$0xff]
    %v6704 = vld [vmem:[#allocation3 + $0x140] sm:$0xff]
    %v6705 = vld [vmem:[#allocation3 + $0x148] sm:$0xff]
    %v6706 = vld [vmem:[#allocation3 + $0x150] sm:$0xff]
    %v6707 = vld [vmem:[#allocation3 + $0x158] sm:$0xff]
    %v6708 = vld [vmem:[#allocation3 + $0x160] sm:$0xff]
    %v6709 = vld [vmem:[#allocation3 + $0x168] sm:$0xff]
    %v6710 = vld [vmem:[#allocation3 + $0x170] sm:$0xff]
    %v6711 = vld [vmem:[#allocation3 + $0x178] sm:$0xff]
    %v6712 = vld [vmem:[#allocation3 + $0x180] sm:$0xff]
    %v6713 = vld [vmem:[#allocation3 + $0x188] sm:$0xff]
    %v6714 = vld [vmem:[#allocation3 + $0x190] sm:$0xff]
    %v6715 = vld [vmem:[#allocation3 + $0x198] sm:$0xff]
    %v6716 = vld [vmem:[#allocation3 + $0x1a0] sm:$0xff]
    %v6717 = vld [vmem:[#allocation3 + $0x1a8] sm:$0xff]
    %v6718 = vld [vmem:[#allocation3 + $0x1b0] sm:$0xff]
    %v6719 = vld [vmem:[#allocation3 + $0x1b8] sm:$0xff]
    %v6720 = vld [vmem:[#allocation3 + $0x1c0] sm:$0xff]
    %v6721 = vld [vmem:[#allocation3 + $0x1c8] sm:$0xff]
    %v6722 = vld [vmem:[#allocation3 + $0x1d0] sm:$0xff]
    %v6723 = vld [vmem:[#allocation3 + $0x1d8] sm:$0xff]
    %v6724 = vld [vmem:[#allocation3 + $0x1e0] sm:$0xff]
    %v6725 = vld [vmem:[#allocation3 + $0x1e8] sm:$0xff]
    %v6726 = vld [vmem:[#allocation3 + $0x1f0] sm:$0xff]
    %v6727 = vld [vmem:[#allocation3 + $0x1f8] sm:$0xff]
    %v6728 = vadd.f32 %v6664, %v6410
    %v6729 = vadd.f32 %v6665, %v6413
    %v6730 = vadd.f32 %v6666, %v6418
    %v6731 = vadd.f32 %v6667, %v6421
    %v6732 = vadd.f32 %v6668, %v6426
    %v6733 = vadd.f32 %v6669, %v6429
    %v6734 = vadd.f32 %v6670, %v6434
    %v6735 = vadd.f32 %v6671, %v6437
    %v6736 = vadd.f32 %v6672, %v6442
    %v6737 = vadd.f32 %v6673, %v6445
    %v6738 = vadd.f32 %v6674, %v6450
    %v6739 = vadd.f32 %v6675, %v6453
    %v6740 = vadd.f32 %v6676, %v6458
    %v6741 = vadd.f32 %v6677, %v6461
    %v6742 = vadd.f32 %v6678, %v6466
    %v6743 = vadd.f32 %v6679, %v6469
    %v6744 = vadd.f32 %v6680, %v6474
    %v6745 = vadd.f32 %v6681, %v6477
    %v6746 = vadd.f32 %v6682, %v6482
    %v6747 = vadd.f32 %v6683, %v6485
    %v6748 = vadd.f32 %v6684, %v6490
    %v6749 = vadd.f32 %v6685, %v6493
    %v6750 = vadd.f32 %v6686, %v6498
    %v6751 = vadd.f32 %v6687, %v6501
    %v6752 = vadd.f32 %v6688, %v6506
    %v6753 = vadd.f32 %v6689, %v6509
    %v6754 = vadd.f32 %v6690, %v6514
    %v6755 = vadd.f32 %v6691, %v6517
    %v6756 = vadd.f32 %v6692, %v6522
    %v6757 = vadd.f32 %v6693, %v6525
    %v6758 = vadd.f32 %v6694, %v6530
    %v6759 = vadd.f32 %v6695, %v6533
    %v6760 = vadd.f32 %v6696, %v6538
    %v6761 = vadd.f32 %v6697, %v6541
    %v6762 = vadd.f32 %v6698, %v6546
    %v6763 = vadd.f32 %v6699, %v6549
    %v6764 = vadd.f32 %v6700, %v6554
    %v6765 = vadd.f32 %v6701, %v6557
    %v6766 = vadd.f32 %v6702, %v6562
    %v6767 = vadd.f32 %v6703, %v6565
    %v6768 = vadd.f32 %v6704, %v6570
    %v6769 = vadd.f32 %v6705, %v6573
    %v6770 = vadd.f32 %v6706, %v6578
    %v6771 = vadd.f32 %v6707, %v6581
    %v6772 = vadd.f32 %v6708, %v6586
    %v6773 = vadd.f32 %v6709, %v6589
    %v6774 = vadd.f32 %v6710, %v6594
    %v6775 = vadd.f32 %v6711, %v6597
    %v6776 = vadd.f32 %v6712, %v6602
    %v6777 = vadd.f32 %v6713, %v6605
    %v6778 = vadd.f32 %v6714, %v6610
    %v6779 = vadd.f32 %v6715, %v6613
    %v6780 = vadd.f32 %v6716, %v6618
    %v6781 = vadd.f32 %v6717, %v6621
    %v6782 = vadd.f32 %v6718, %v6626
    %v6783 = vadd.f32 %v6719, %v6629
    %v6784 = vadd.f32 %v6720, %v6634
    %v6785 = vadd.f32 %v6721, %v6637
    %v6786 = vadd.f32 %v6722, %v6642
    %v6787 = vadd.f32 %v6723, %v6645
    %v6788 = vadd.f32 %v6724, %v6650
    %v6789 = vadd.f32 %v6725, %v6653
    %v6790 = vadd.f32 %v6726, %v6658
    %v6791 = vadd.f32 %v6727, %v6661
    %6792 = vst [vmem:[#allocation3] sm:$0xff] %v6728
    %6793 = vst [vmem:[#allocation3 + $0x8] sm:$0xff] %v6729
    %6794 = vst [vmem:[#allocation3 + $0x10] sm:$0xff] %v6730
    %6795 = vst [vmem:[#allocation3 + $0x18] sm:$0xff] %v6731
    %6796 = vst [vmem:[#allocation3 + $0x20] sm:$0xff] %v6732
    %6797 = vst [vmem:[#allocation3 + $0x28] sm:$0xff] %v6733
    %6798 = vst [vmem:[#allocation3 + $0x30] sm:$0xff] %v6734
    %6799 = vst [vmem:[#allocation3 + $0x38] sm:$0xff] %v6735
    %6800 = vst [vmem:[#allocation3 + $0x40] sm:$0xff] %v6736
    %6801 = vst [vmem:[#allocation3 + $0x48] sm:$0xff] %v6737
    %6802 = vst [vmem:[#allocation3 + $0x50] sm:$0xff] %v6738
    %6803 = vst [vmem:[#allocation3 + $0x58] sm:$0xff] %v6739
    %6804 = vst [vmem:[#allocation3 + $0x60] sm:$0xff] %v6740
    %6805 = vst [vmem:[#allocation3 + $0x68] sm:$0xff] %v6741
    %6806 = vst [vmem:[#allocation3 + $0x70] sm:$0xff] %v6742
    %6807 = vst [vmem:[#allocation3 + $0x78] sm:$0xff] %v6743
    %6808 = vst [vmem:[#allocation3 + $0x80] sm:$0xff] %v6744
    %6809 = vst [vmem:[#allocation3 + $0x88] sm:$0xff] %v6745
    %6810 = vst [vmem:[#allocation3 + $0x90] sm:$0xff] %v6746
    %6811 = vst [vmem:[#allocation3 + $0x98] sm:$0xff] %v6747
    %6812 = vst [vmem:[#allocation3 + $0xa0] sm:$0xff] %v6748
    %6813 = vst [vmem:[#allocation3 + $0xa8] sm:$0xff] %v6749
    %6814 = vst [vmem:[#allocation3 + $0xb0] sm:$0xff] %v6750
    %6815 = vst [vmem:[#allocation3 + $0xb8] sm:$0xff] %v6751
    %6816 = vst [vmem:[#allocation3 + $0xc0] sm:$0xff] %v6752
    %6817 = vst [vmem:[#allocation3 + $0xc8] sm:$0xff] %v6753
    %6818 = vst [vmem:[#allocation3 + $0xd0] sm:$0xff] %v6754
    %6819 = vst [vmem:[#allocation3 + $0xd8] sm:$0xff] %v6755
    %6820 = vst [vmem:[#allocation3 + $0xe0] sm:$0xff] %v6756
    %6821 = vst [vmem:[#allocation3 + $0xe8] sm:$0xff] %v6757
    %6822 = vst [vmem:[#allocation3 + $0xf0] sm:$0xff] %v6758
    %6823 = vst [vmem:[#allocation3 + $0xf8] sm:$0xff] %v6759
    %6824 = vst [vmem:[#allocation3 + $0x100] sm:$0xff] %v6760
    %6825 = vst [vmem:[#allocation3 + $0x108] sm:$0xff] %v6761
    %6826 = vst [vmem:[#allocation3 + $0x110] sm:$0xff] %v6762
    %6827 = vst [vmem:[#allocation3 + $0x118] sm:$0xff] %v6763
    %6828 = vst [vmem:[#allocation3 + $0x120] sm:$0xff] %v6764
    %6829 = vst [vmem:[#allocation3 + $0x128] sm:$0xff] %v6765
    %6830 = vst [vmem:[#allocation3 + $0x130] sm:$0xff] %v6766
    %6831 = vst [vmem:[#allocation3 + $0x138] sm:$0xff] %v6767
    %6832 = vst [vmem:[#allocation3 + $0x140] sm:$0xff] %v6768
    %6833 = vst [vmem:[#allocation3 + $0x148] sm:$0xff] %v6769
    %6834 = vst [vmem:[#allocation3 + $0x150] sm:$0xff] %v6770
    %6835 = vst [vmem:[#allocation3 + $0x158] sm:$0xff] %v6771
    %6836 = vst [vmem:[#allocation3 + $0x160] sm:$0xff] %v6772
    %6837 = vst [vmem:[#allocation3 + $0x168] sm:$0xff] %v6773
    %6838 = vst [vmem:[#allocation3 + $0x170] sm:$0xff] %v6774
    %6839 = vst [vmem:[#allocation3 + $0x178] sm:$0xff] %v6775
    %6840 = vst [vmem:[#allocation3 + $0x180] sm:$0xff] %v6776
    %6841 = vst [vmem:[#allocation3 + $0x188] sm:$0xff] %v6777
    %6842 = vst [vmem:[#allocation3 + $0x190] sm:$0xff] %v6778
    %6843 = vst [vmem:[#allocation3 + $0x198] sm:$0xff] %v6779
    %6844 = vst [vmem:[#allocation3 + $0x1a0] sm:$0xff] %v6780
    %6845 = vst [vmem:[#allocation3 + $0x1a8] sm:$0xff] %v6781
    %6846 = vst [vmem:[#allocation3 + $0x1b0] sm:$0xff] %v6782
    %6847 = vst [vmem:[#allocation3 + $0x1b8] sm:$0xff] %v6783
    %6848 = vst [vmem:[#allocation3 + $0x1c0] sm:$0xff] %v6784
    %6849 = vst [vmem:[#allocation3 + $0x1c8] sm:$0xff] %v6785
    %6850 = vst [vmem:[#allocation3 + $0x1d0] sm:$0xff] %v6786
    %6851 = vst [vmem:[#allocation3 + $0x1d8] sm:$0xff] %v6787
    %6852 = vst [vmem:[#allocation3 + $0x1e0] sm:$0xff] %v6788
    %6853 = vst [vmem:[#allocation3 + $0x1e8] sm:$0xff] %v6789
    %6854 = vst [vmem:[#allocation3 + $0x1f0] sm:$0xff] %v6790
    %6855 = vst [vmem:[#allocation3 + $0x1f8] sm:$0xff] %v6791
    %v6856 = vld [vmem:[%s5571 + $0x9] sm:$0xff]
    %v6857 = vld [vmem:[%s5571 + $0x11] sm:$0xff]
    %v6858 = vld [vmem:[%s5571 + $0x29] sm:$0xff]
    %v6859 = vld [vmem:[%s5571 + $0x31] sm:$0xff]
    %v6860 = vld [vmem:[%s5571 + $0x49] sm:$0xff]
    %v6861 = vld [vmem:[%s5571 + $0x51] sm:$0xff]
    %v6862 = vld [vmem:[%s5571 + $0x69] sm:$0xff]
    %v6863 = vld [vmem:[%s5571 + $0x71] sm:$0xff]
    %v6864 = vld [vmem:[%s5571 + $0x89] sm:$0xff]
    %v6865 = vld [vmem:[%s5571 + $0x91] sm:$0xff]
    %v6866 = vld [vmem:[%s5571 + $0xa9] sm:$0xff]
    %v6867 = vld [vmem:[%s5571 + $0xb1] sm:$0xff]
    %v6868 = vld [vmem:[%s5571 + $0xc9] sm:$0xff]
    %v6869 = vld [vmem:[%s5571 + $0xd1] sm:$0xff]
    %v6870 = vld [vmem:[%s5571 + $0xe9] sm:$0xff]
    %v6871 = vld [vmem:[%s5571 + $0xf1] sm:$0xff]
    %v6872 = vld [vmem:[%s5571 + $0x109] sm:$0xff]
    %v6873 = vld [vmem:[%s5571 + $0x111] sm:$0xff]
    %v6874 = vld [vmem:[%s5571 + $0x129] sm:$0xff]
    %v6875 = vld [vmem:[%s5571 + $0x131] sm:$0xff]
    %v6876 = vld [vmem:[%s5571 + $0x149] sm:$0xff]
    %v6877 = vld [vmem:[%s5571 + $0x151] sm:$0xff]
    %v6878 = vld [vmem:[%s5571 + $0x169] sm:$0xff]
    %v6879 = vld [vmem:[%s5571 + $0x171] sm:$0xff]
    %v6880 = vld [vmem:[%s5571 + $0x189] sm:$0xff]
    %v6881 = vld [vmem:[%s5571 + $0x191] sm:$0xff]
    %v6882 = vld [vmem:[%s5571 + $0x1a9] sm:$0xff]
    %v6883 = vld [vmem:[%s5571 + $0x1b1] sm:$0xff]
    %v6884 = vld [vmem:[%s5571 + $0x1c9] sm:$0xff]
    %v6885 = vld [vmem:[%s5571 + $0x1d1] sm:$0xff]
    %v6886 = vld [vmem:[%s5571 + $0x1e9] sm:$0xff]
    %v6887 = vld [vmem:[%s5571 + $0x1f1] sm:$0xff]
    %v6888 = vld [vmem:[%s5571 + $0x249] sm:$0xff]
    %v6889 = vld [vmem:[%s5571 + $0x251] sm:$0xff]
    %v6890 = vld [vmem:[%s5571 + $0x269] sm:$0xff]
    %v6891 = vld [vmem:[%s5571 + $0x271] sm:$0xff]
    %v6892 = vld [vmem:[%s5571 + $0x289] sm:$0xff]
    %v6893 = vld [vmem:[%s5571 + $0x291] sm:$0xff]
    %v6894 = vld [vmem:[%s5571 + $0x2a9] sm:$0xff]
    %v6895 = vld [vmem:[%s5571 + $0x2b1] sm:$0xff]
    %v6896 = vld [vmem:[%s5571 + $0x2c9] sm:$0xff]
    %v6897 = vld [vmem:[%s5571 + $0x2d1] sm:$0xff]
    %v6898 = vld [vmem:[%s5571 + $0x2e9] sm:$0xff]
    %v6899 = vld [vmem:[%s5571 + $0x2f1] sm:$0xff]
    %v6900 = vld [vmem:[%s5571 + $0x309] sm:$0xff]
    %v6901 = vld [vmem:[%s5571 + $0x311] sm:$0xff]
    %v6902 = vld [vmem:[%s5571 + $0x329] sm:$0xff]
    %v6903 = vld [vmem:[%s5571 + $0x331] sm:$0xff]
    %v6904 = vld [vmem:[%s5571 + $0x349] sm:$0xff]
    %v6905 = vld [vmem:[%s5571 + $0x351] sm:$0xff]
    %v6906 = vld [vmem:[%s5571 + $0x369] sm:$0xff]
    %v6907 = vld [vmem:[%s5571 + $0x371] sm:$0xff]
    %v6908 = vld [vmem:[%s5571 + $0x389] sm:$0xff]
    %v6909 = vld [vmem:[%s5571 + $0x391] sm:$0xff]
    %v6910 = vld [vmem:[%s5571 + $0x3a9] sm:$0xff]
    %v6911 = vld [vmem:[%s5571 + $0x3b1] sm:$0xff]
    %v6912 = vld [vmem:[%s5571 + $0x3c9] sm:$0xff]
    %v6913 = vld [vmem:[%s5571 + $0x3d1] sm:$0xff]
    %v6914 = vld [vmem:[%s5571 + $0x3e9] sm:$0xff]
    %v6915 = vld [vmem:[%s5571 + $0x3f1] sm:$0xff]
    %v6916 = vld [vmem:[%s5571 + $0x409] sm:$0xff]
    %v6917 = vld [vmem:[%s5571 + $0x411] sm:$0xff]
    %v6918 = vld [vmem:[%s5571 + $0x429] sm:$0xff]
    %v6919 = vld [vmem:[%s5571 + $0x431] sm:$0xff]
    %v6920 = vpack.c.bf16 %v6857, %v6856
    %v6921 = vpack.c.bf16 %v6859, %v6858
    %v6922 = vpack.c.bf16 %v6861, %v6860
    %v6923 = vpack.c.bf16 %v6863, %v6862
    %v6924 = vpack.c.bf16 %v6865, %v6864
    %v6925 = vpack.c.bf16 %v6867, %v6866
    %v6926 = vpack.c.bf16 %v6869, %v6868
    %v6927 = vpack.c.bf16 %v6871, %v6870
    %v6928 = vpack.c.bf16 %v6873, %v6872
    %v6929 = vpack.c.bf16 %v6875, %v6874
    %v6930 = vpack.c.bf16 %v6877, %v6876
    %v6931 = vpack.c.bf16 %v6879, %v6878
    %v6932 = vpack.c.bf16 %v6881, %v6880
    %v6933 = vpack.c.bf16 %v6883, %v6882
    %v6934 = vpack.c.bf16 %v6885, %v6884
    %v6935 = vpack.c.bf16 %v6887, %v6886
    %v6936 = vpack.c.bf16 %v6889, %v6888
    %v6937 = vpack.c.bf16 %v6891, %v6890
    %v6938 = vpack.c.bf16 %v6893, %v6892
    %v6939 = vpack.c.bf16 %v6895, %v6894
    %v6940 = vpack.c.bf16 %v6897, %v6896
    %v6941 = vpack.c.bf16 %v6899, %v6898
    %v6942 = vpack.c.bf16 %v6901, %v6900
    %v6943 = vpack.c.bf16 %v6903, %v6902
    %v6944 = vpack.c.bf16 %v6905, %v6904
    %v6945 = vpack.c.bf16 %v6907, %v6906
    %v6946 = vpack.c.bf16 %v6909, %v6908
    %v6947 = vpack.c.bf16 %v6911, %v6910
    %v6948 = vpack.c.bf16 %v6913, %v6912
    %v6949 = vpack.c.bf16 %v6915, %v6914
    %v6950 = vpack.c.bf16 %v6917, %v6916
    %v6951 = vpack.c.bf16 %v6919, %v6918
    %s6952 = scalar_lea.vmem [#allocation10], 512
    %v6953 = vld [vmem:[%s6952] sm:$0xf]
    %v6954 = vld [vmem:[%s6952 + $0x4] sm:$0xf]
    %v6955 = vld [vmem:[%s6952 + $0x8] sm:$0xf]
    %v6956 = vld [vmem:[%s6952 + $0xc] sm:$0xf]
    %v6957 = vld [vmem:[%s6952 + $0x10] sm:$0xf]
    %v6958 = vld [vmem:[%s6952 + $0x14] sm:$0xf]
    %v6959 = vld [vmem:[%s6952 + $0x18] sm:$0xf]
    %v6960 = vld [vmem:[%s6952 + $0x1c] sm:$0xf]
    %v6961 = vld [vmem:[%s6952 + $0x20] sm:$0xf]
    %v6962 = vld [vmem:[%s6952 + $0x24] sm:$0xf]
    %v6963 = vld [vmem:[%s6952 + $0x28] sm:$0xf]
    %v6964 = vld [vmem:[%s6952 + $0x2c] sm:$0xf]
    %v6965 = vld [vmem:[%s6952 + $0x30] sm:$0xf]
    %v6966 = vld [vmem:[%s6952 + $0x34] sm:$0xf]
    %v6967 = vld [vmem:[%s6952 + $0x38] sm:$0xf]
    %v6968 = vld [vmem:[%s6952 + $0x3c] sm:$0xf]
    %v6985 = vunpack.c.l.b16 %v6953
    %v6986 = vunpack.c.l.b16 %v6954
    %v6987 = vunpack.c.l.b16 %v6955
    %v6988 = vunpack.c.l.b16 %v6956
    %v6989 = vunpack.c.l.b16 %v6957
    %v6990 = vunpack.c.l.b16 %v6958
    %v6991 = vunpack.c.l.b16 %v6959
    %v6992 = vunpack.c.l.b16 %v6960
    %v6993 = vunpack.c.l.b16 %v6961
    %v6994 = vunpack.c.l.b16 %v6962
    %v6995 = vunpack.c.l.b16 %v6963
    %v6996 = vunpack.c.l.b16 %v6964
    %v6997 = vunpack.c.l.b16 %v6965
    %v6998 = vunpack.c.l.b16 %v6966
    %v6999 = vunpack.c.l.b16 %v6967
    %v7000 = vunpack.c.l.b16 %v6968
    %v7001 = vpack.c.b16 %v6986, %v6985
    %v7002 = vpack.c.b16 %v6988, %v6987
    %v7003 = vpack.c.b16 %v6990, %v6989
    %v7004 = vpack.c.b16 %v6992, %v6991
    %v7005 = vpack.c.b16 %v6994, %v6993
    %v7006 = vpack.c.b16 %v6996, %v6995
    %v7007 = vpack.c.b16 %v6998, %v6997
    %v7008 = vpack.c.b16 %v7000, %v6999
    %7017 = vmatprep.subr.bf16.mxu0 0
    %7018 = vmatpush1.bf16.msra.mxu0 %v7001
    %7019 = vmatprep.subr.bf16.mxu0 0
    %7020 = vmatpush1.bf16.msra.mxu0 %v7002
    %7021 = vmatprep.subr.bf16.mxu0 0
    %7022 = vmatpush1.bf16.msra.mxu0 %v7003
    %7023 = vmatprep.subr.bf16.mxu0 0
    %7024 = vmatpush1.bf16.msra.mxu0 %v7004
    %7025 = vmatprep.subr.bf16.mxu0 0
    %7026 = vmatpush1.bf16.msra.mxu0 %v7005
    %7027 = vmatprep.subr.bf16.mxu0 0
    %7028 = vmatpush1.bf16.msra.mxu0 %v7006
    %7029 = vmatprep.subr.bf16.mxu0 0
    %7030 = vmatpush1.bf16.msra.mxu0 %v7007
    %7031 = vmatprep.subr.bf16.mxu0 0
    %7032 = vmatpush1.bf16.msra.mxu0 %v7008
    %7033 = vmatprep.subr.bf16.mxu0 0
    %7034 = vmatpush1.bf16.msra.mxu0 0
    %7035 = vmatprep.subr.bf16.mxu0 0
    %7036 = vmatpush1.bf16.msra.mxu0 0
    %7037 = vmatprep.subr.bf16.mxu0 0
    %7038 = vmatpush1.bf16.msra.mxu0 0
    %7039 = vmatprep.subr.bf16.mxu0 0
    %7040 = vmatpush1.bf16.msra.mxu0 0
    %7041 = vmatprep.subr.bf16.mxu0 0
    %7042 = vmatpush1.bf16.msra.mxu0 0
    %7043 = vmatprep.subr.bf16.mxu0 0
    %7044 = vmatpush1.bf16.msra.mxu0 0
    %7045 = vmatprep.subr.bf16.mxu0 0
    %7046 = vmatpush1.bf16.msra.mxu0 0
    %7047 = vmatprep.subr.bf16.mxu0 0
    %7048 = vmatpush1.bf16.msra.mxu0 0
    %7049 = vmatprep.mubr.bf16.mxu0 0
    %7050 = vmatmul.mubr.bf16.gmra.mrb[0].mxu0 %v6920
    %v7051 = vpop.f32.mrb[0].mxu0
    %v7052 = vadd.f32 0.0, %v7051
    %v7053 = vpop.f32.mrb[0].mxu0
    %v7054 = vpop.f32.mrb[0].mxu0
    %v7055 = vadd.f32 0.0, %v7054
    %v7056 = vpop.f32.mrb[0].mxu0
    %7057 = vmatprep.mubr.bf16.mxu0 0
    %7058 = vmatmul.mubr.bf16.gmra.mrb[0].mxu0 %v6921
    %v7059 = vpop.f32.mrb[0].mxu0
    %v7060 = vadd.f32 0.0, %v7059
    %v7061 = vpop.f32.mrb[0].mxu0
    %v7062 = vpop.f32.mrb[0].mxu0
    %v7063 = vadd.f32 0.0, %v7062
    %v7064 = vpop.f32.mrb[0].mxu0
    %7065 = vmatprep.mubr.bf16.mxu0 0
    %7066 = vmatmul.mubr.bf16.gmra.mrb[0].mxu0 %v6922
    %v7067 = vpop.f32.mrb[0].mxu0
    %v7068 = vadd.f32 0.0, %v7067
    %v7069 = vpop.f32.mrb[0].mxu0
    %v7070 = vpop.f32.mrb[0].mxu0
    %v7071 = vadd.f32 0.0, %v7070
    %v7072 = vpop.f32.mrb[0].mxu0
    %7073 = vmatprep.mubr.bf16.mxu0 0
    %7074 = vmatmul.mubr.bf16.gmra.mrb[0].mxu0 %v6923
    %v7075 = vpop.f32.mrb[0].mxu0
    %v7076 = vadd.f32 0.0, %v7075
    %v7077 = vpop.f32.mrb[0].mxu0
    %v7078 = vpop.f32.mrb[0].mxu0
    %v7079 = vadd.f32 0.0, %v7078
    %v7080 = vpop.f32.mrb[0].mxu0
    %7081 = vmatprep.mubr.bf16.mxu0 0
    %7082 = vmatmul.mubr.bf16.gmra.mrb[0].mxu0 %v6924
    %v7083 = vpop.f32.mrb[0].mxu0
    %v7084 = vadd.f32 0.0, %v7083
    %v7085 = vpop.f32.mrb[0].mxu0
    %v7086 = vpop.f32.mrb[0].mxu0
    %v7087 = vadd.f32 0.0, %v7086
    %v7088 = vpop.f32.mrb[0].mxu0
    %7089 = vmatprep.mubr.bf16.mxu0 0
    %7090 = vmatmul.mubr.bf16.gmra.mrb[0].mxu0 %v6925
    %v7091 = vpop.f32.mrb[0].mxu0
    %v7092 = vadd.f32 0.0, %v7091
    %v7093 = vpop.f32.mrb[0].mxu0
    %v7094 = vpop.f32.mrb[0].mxu0
    %v7095 = vadd.f32 0.0, %v7094
    %v7096 = vpop.f32.mrb[0].mxu0
    %7097 = vmatprep.mubr.bf16.mxu0 0
    %7098 = vmatmul.mubr.bf16.gmra.mrb[0].mxu0 %v6926
    %v7099 = vpop.f32.mrb[0].mxu0
    %v7100 = vadd.f32 0.0, %v7099
    %v7101 = vpop.f32.mrb[0].mxu0
    %v7102 = vpop.f32.mrb[0].mxu0
    %v7103 = vadd.f32 0.0, %v7102
    %v7104 = vpop.f32.mrb[0].mxu0
    %7105 = vmatprep.mubr.bf16.mxu0 0
    %7106 = vmatmul.mubr.bf16.gmra.mrb[0].mxu0 %v6927
    %v7107 = vpop.f32.mrb[0].mxu0
    %v7108 = vadd.f32 0.0, %v7107
    %v7109 = vpop.f32.mrb[0].mxu0
    %v7110 = vpop.f32.mrb[0].mxu0
    %v7111 = vadd.f32 0.0, %v7110
    %v7112 = vpop.f32.mrb[0].mxu0
    %7113 = vmatprep.mubr.bf16.mxu0 0
    %7114 = vmatmul.mubr.bf16.gmra.mrb[0].mxu0 %v6928
    %v7115 = vpop.f32.mrb[0].mxu0
    %v7116 = vadd.f32 0.0, %v7115
    %v7117 = vpop.f32.mrb[0].mxu0
    %v7118 = vpop.f32.mrb[0].mxu0
    %v7119 = vadd.f32 0.0, %v7118
    %v7120 = vpop.f32.mrb[0].mxu0
    %7121 = vmatprep.mubr.bf16.mxu0 0
    %7122 = vmatmul.mubr.bf16.gmra.mrb[0].mxu0 %v6929
    %v7123 = vpop.f32.mrb[0].mxu0
    %v7124 = vadd.f32 0.0, %v7123
    %v7125 = vpop.f32.mrb[0].mxu0
    %v7126 = vpop.f32.mrb[0].mxu0
    %v7127 = vadd.f32 0.0, %v7126
    %v7128 = vpop.f32.mrb[0].mxu0
    %7129 = vmatprep.mubr.bf16.mxu0 0
    %7130 = vmatmul.mubr.bf16.gmra.mrb[0].mxu0 %v6930
    %v7131 = vpop.f32.mrb[0].mxu0
    %v7132 = vadd.f32 0.0, %v7131
    %v7133 = vpop.f32.mrb[0].mxu0
    %v7134 = vpop.f32.mrb[0].mxu0
    %v7135 = vadd.f32 0.0, %v7134
    %v7136 = vpop.f32.mrb[0].mxu0
    %7137 = vmatprep.mubr.bf16.mxu0 0
    %7138 = vmatmul.mubr.bf16.gmra.mrb[0].mxu0 %v6931
    %v7139 = vpop.f32.mrb[0].mxu0
    %v7140 = vadd.f32 0.0, %v7139
    %v7141 = vpop.f32.mrb[0].mxu0
    %v7142 = vpop.f32.mrb[0].mxu0
    %v7143 = vadd.f32 0.0, %v7142
    %v7144 = vpop.f32.mrb[0].mxu0
    %7145 = vmatprep.mubr.bf16.mxu0 0
    %7146 = vmatmul.mubr.bf16.gmra.mrb[0].mxu0 %v6932
    %v7147 = vpop.f32.mrb[0].mxu0
    %v7148 = vadd.f32 0.0, %v7147
    %v7149 = vpop.f32.mrb[0].mxu0
    %v7150 = vpop.f32.mrb[0].mxu0
    %v7151 = vadd.f32 0.0, %v7150
    %v7152 = vpop.f32.mrb[0].mxu0
    %7153 = vmatprep.mubr.bf16.mxu0 0
    %7154 = vmatmul.mubr.bf16.gmra.mrb[0].mxu0 %v6933
    %v7155 = vpop.f32.mrb[0].mxu0
    %v7156 = vadd.f32 0.0, %v7155
    %v7157 = vpop.f32.mrb[0].mxu0
    %v7158 = vpop.f32.mrb[0].mxu0
    %v7159 = vadd.f32 0.0, %v7158
    %v7160 = vpop.f32.mrb[0].mxu0
    %7161 = vmatprep.mubr.bf16.mxu0 0
    %7162 = vmatmul.mubr.bf16.gmra.mrb[0].mxu0 %v6934
    %v7163 = vpop.f32.mrb[0].mxu0
    %v7164 = vadd.f32 0.0, %v7163
    %v7165 = vpop.f32.mrb[0].mxu0
    %v7166 = vpop.f32.mrb[0].mxu0
    %v7167 = vadd.f32 0.0, %v7166
    %v7168 = vpop.f32.mrb[0].mxu0
    %7169 = vmatprep.mubr.bf16.mxu0 0
    %7170 = vmatmul.mubr.bf16.gmra.mrb[0].mxu0 %v6935
    %v7171 = vpop.f32.mrb[0].mxu0
    %v7172 = vadd.f32 0.0, %v7171
    %v7173 = vpop.f32.mrb[0].mxu0
    %v7174 = vpop.f32.mrb[0].mxu0
    %v7175 = vadd.f32 0.0, %v7174
    %v7176 = vpop.f32.mrb[0].mxu0
    %7177 = vmatprep.mubr.bf16.mxu0 0
    %7178 = vmatmul.mubr.bf16.gmra.mrb[0].mxu0 %v6936
    %v7179 = vpop.f32.mrb[0].mxu0
    %v7180 = vadd.f32 0.0, %v7179
    %v7181 = vpop.f32.mrb[0].mxu0
    %v7182 = vpop.f32.mrb[0].mxu0
    %v7183 = vadd.f32 0.0, %v7182
    %v7184 = vpop.f32.mrb[0].mxu0
    %7185 = vmatprep.mubr.bf16.mxu0 0
    %7186 = vmatmul.mubr.bf16.gmra.mrb[0].mxu0 %v6937
    %v7187 = vpop.f32.mrb[0].mxu0
    %v7188 = vadd.f32 0.0, %v7187
    %v7189 = vpop.f32.mrb[0].mxu0
    %v7190 = vpop.f32.mrb[0].mxu0
    %v7191 = vadd.f32 0.0, %v7190
    %v7192 = vpop.f32.mrb[0].mxu0
    %7193 = vmatprep.mubr.bf16.mxu0 0
    %7194 = vmatmul.mubr.bf16.gmra.mrb[0].mxu0 %v6938
    %v7195 = vpop.f32.mrb[0].mxu0
    %v7196 = vadd.f32 0.0, %v7195
    %v7197 = vpop.f32.mrb[0].mxu0
    %v7198 = vpop.f32.mrb[0].mxu0
    %v7199 = vadd.f32 0.0, %v7198
    %v7200 = vpop.f32.mrb[0].mxu0
    %7201 = vmatprep.mubr.bf16.mxu0 0
    %7202 = vmatmul.mubr.bf16.gmra.mrb[0].mxu0 %v6939
    %v7203 = vpop.f32.mrb[0].mxu0
    %v7204 = vadd.f32 0.0, %v7203
    %v7205 = vpop.f32.mrb[0].mxu0
    %v7206 = vpop.f32.mrb[0].mxu0
    %v7207 = vadd.f32 0.0, %v7206
    %v7208 = vpop.f32.mrb[0].mxu0
    %7209 = vmatprep.mubr.bf16.mxu0 0
    %7210 = vmatmul.mubr.bf16.gmra.mrb[0].mxu0 %v6940
    %v7211 = vpop.f32.mrb[0].mxu0
    %v7212 = vadd.f32 0.0, %v7211
    %v7213 = vpop.f32.mrb[0].mxu0
    %v7214 = vpop.f32.mrb[0].mxu0
    %v7215 = vadd.f32 0.0, %v7214
    %v7216 = vpop.f32.mrb[0].mxu0
    %7217 = vmatprep.mubr.bf16.mxu0 0
    %7218 = vmatmul.mubr.bf16.gmra.mrb[0].mxu0 %v6941
    %v7219 = vpop.f32.mrb[0].mxu0
    %v7220 = vadd.f32 0.0, %v7219
    %v7221 = vpop.f32.mrb[0].mxu0
    %v7222 = vpop.f32.mrb[0].mxu0
    %v7223 = vadd.f32 0.0, %v7222
    %v7224 = vpop.f32.mrb[0].mxu0
    %7225 = vmatprep.mubr.bf16.mxu0 0
    %7226 = vmatmul.mubr.bf16.gmra.mrb[0].mxu0 %v6942
    %v7227 = vpop.f32.mrb[0].mxu0
    %v7228 = vadd.f32 0.0, %v7227
    %v7229 = vpop.f32.mrb[0].mxu0
    %v7230 = vpop.f32.mrb[0].mxu0
    %v7231 = vadd.f32 0.0, %v7230
    %v7232 = vpop.f32.mrb[0].mxu0
    %7233 = vmatprep.mubr.bf16.mxu0 0
    %7234 = vmatmul.mubr.bf16.gmra.mrb[0].mxu0 %v6943
    %v7235 = vpop.f32.mrb[0].mxu0
    %v7236 = vadd.f32 0.0, %v7235
    %v7237 = vpop.f32.mrb[0].mxu0
    %v7238 = vpop.f32.mrb[0].mxu0
    %v7239 = vadd.f32 0.0, %v7238
    %v7240 = vpop.f32.mrb[0].mxu0
    %7241 = vmatprep.mubr.bf16.mxu0 0
    %7242 = vmatmul.mubr.bf16.gmra.mrb[0].mxu0 %v6944
    %v7243 = vpop.f32.mrb[0].mxu0
    %v7244 = vadd.f32 0.0, %v7243
    %v7245 = vpop.f32.mrb[0].mxu0
    %v7246 = vpop.f32.mrb[0].mxu0
    %v7247 = vadd.f32 0.0, %v7246
    %v7248 = vpop.f32.mrb[0].mxu0
    %7249 = vmatprep.mubr.bf16.mxu0 0
    %7250 = vmatmul.mubr.bf16.gmra.mrb[0].mxu0 %v6945
    %v7251 = vpop.f32.mrb[0].mxu0
    %v7252 = vadd.f32 0.0, %v7251
    %v7253 = vpop.f32.mrb[0].mxu0
    %v7254 = vpop.f32.mrb[0].mxu0
    %v7255 = vadd.f32 0.0, %v7254
    %v7256 = vpop.f32.mrb[0].mxu0
    %7257 = vmatprep.mubr.bf16.mxu0 0
    %7258 = vmatmul.mubr.bf16.gmra.mrb[0].mxu0 %v6946
    %v7259 = vpop.f32.mrb[0].mxu0
    %v7260 = vadd.f32 0.0, %v7259
    %v7261 = vpop.f32.mrb[0].mxu0
    %v7262 = vpop.f32.mrb[0].mxu0
    %v7263 = vadd.f32 0.0, %v7262
    %v7264 = vpop.f32.mrb[0].mxu0
    %7265 = vmatprep.mubr.bf16.mxu0 0
    %7266 = vmatmul.mubr.bf16.gmra.mrb[0].mxu0 %v6947
    %v7267 = vpop.f32.mrb[0].mxu0
    %v7268 = vadd.f32 0.0, %v7267
    %v7269 = vpop.f32.mrb[0].mxu0
    %v7270 = vpop.f32.mrb[0].mxu0
    %v7271 = vadd.f32 0.0, %v7270
    %v7272 = vpop.f32.mrb[0].mxu0
    %7273 = vmatprep.mubr.bf16.mxu0 0
    %7274 = vmatmul.mubr.bf16.gmra.mrb[0].mxu0 %v6948
    %v7275 = vpop.f32.mrb[0].mxu0
    %v7276 = vadd.f32 0.0, %v7275
    %v7277 = vpop.f32.mrb[0].mxu0
    %v7278 = vpop.f32.mrb[0].mxu0
    %v7279 = vadd.f32 0.0, %v7278
    %v7280 = vpop.f32.mrb[0].mxu0
    %7281 = vmatprep.mubr.bf16.mxu0 0
    %7282 = vmatmul.mubr.bf16.gmra.mrb[0].mxu0 %v6949
    %v7283 = vpop.f32.mrb[0].mxu0
    %v7284 = vadd.f32 0.0, %v7283
    %v7285 = vpop.f32.mrb[0].mxu0
    %v7286 = vpop.f32.mrb[0].mxu0
    %v7287 = vadd.f32 0.0, %v7286
    %v7288 = vpop.f32.mrb[0].mxu0
    %7289 = vmatprep.mubr.bf16.mxu0 0
    %7290 = vmatmul.mubr.bf16.gmra.mrb[0].mxu0 %v6950
    %v7291 = vpop.f32.mrb[0].mxu0
    %v7292 = vadd.f32 0.0, %v7291
    %v7293 = vpop.f32.mrb[0].mxu0
    %v7294 = vpop.f32.mrb[0].mxu0
    %v7295 = vadd.f32 0.0, %v7294
    %v7296 = vpop.f32.mrb[0].mxu0
    %7297 = vmatprep.mubr.bf16.mxu0 0
    %7298 = vmatmul.mubr.bf16.gmra.mrb[0].mxu0 %v6951
    %v7299 = vpop.f32.mrb[0].mxu0
    %v7300 = vadd.f32 0.0, %v7299
    %v7301 = vpop.f32.mrb[0].mxu0
    %v7302 = vpop.f32.mrb[0].mxu0
    %v7303 = vadd.f32 0.0, %v7302
    %v7304 = vpop.f32.mrb[0].mxu0
    %7305 = vdwg.mxu0
    %v7306 = vld [vmem:[#allocation3] sm:$0xff]
    %v7307 = vld [vmem:[#allocation3 + $0x8] sm:$0xff]
    %v7308 = vld [vmem:[#allocation3 + $0x10] sm:$0xff]
    %v7309 = vld [vmem:[#allocation3 + $0x18] sm:$0xff]
    %v7310 = vld [vmem:[#allocation3 + $0x20] sm:$0xff]
    %v7311 = vld [vmem:[#allocation3 + $0x28] sm:$0xff]
    %v7312 = vld [vmem:[#allocation3 + $0x30] sm:$0xff]
    %v7313 = vld [vmem:[#allocation3 + $0x38] sm:$0xff]
    %v7314 = vld [vmem:[#allocation3 + $0x40] sm:$0xff]
    %v7315 = vld [vmem:[#allocation3 + $0x48] sm:$0xff]
    %v7316 = vld [vmem:[#allocation3 + $0x50] sm:$0xff]
    %v7317 = vld [vmem:[#allocation3 + $0x58] sm:$0xff]
    %v7318 = vld [vmem:[#allocation3 + $0x60] sm:$0xff]
    %v7319 = vld [vmem:[#allocation3 + $0x68] sm:$0xff]
    %v7320 = vld [vmem:[#allocation3 + $0x70] sm:$0xff]
    %v7321 = vld [vmem:[#allocation3 + $0x78] sm:$0xff]
    %v7322 = vld [vmem:[#allocation3 + $0x80] sm:$0xff]
    %v7323 = vld [vmem:[#allocation3 + $0x88] sm:$0xff]
    %v7324 = vld [vmem:[#allocation3 + $0x90] sm:$0xff]
    %v7325 = vld [vmem:[#allocation3 + $0x98] sm:$0xff]
    %v7326 = vld [vmem:[#allocation3 + $0xa0] sm:$0xff]
    %v7327 = vld [vmem:[#allocation3 + $0xa8] sm:$0xff]
    %v7328 = vld [vmem:[#allocation3 + $0xb0] sm:$0xff]
    %v7329 = vld [vmem:[#allocation3 + $0xb8] sm:$0xff]
    %v7330 = vld [vmem:[#allocation3 + $0xc0] sm:$0xff]
    %v7331 = vld [vmem:[#allocation3 + $0xc8] sm:$0xff]
    %v7332 = vld [vmem:[#allocation3 + $0xd0] sm:$0xff]
    %v7333 = vld [vmem:[#allocation3 + $0xd8] sm:$0xff]
    %v7334 = vld [vmem:[#allocation3 + $0xe0] sm:$0xff]
    %v7335 = vld [vmem:[#allocation3 + $0xe8] sm:$0xff]
    %v7336 = vld [vmem:[#allocation3 + $0xf0] sm:$0xff]
    %v7337 = vld [vmem:[#allocation3 + $0xf8] sm:$0xff]
    %v7338 = vld [vmem:[#allocation3 + $0x100] sm:$0xff]
    %v7339 = vld [vmem:[#allocation3 + $0x108] sm:$0xff]
    %v7340 = vld [vmem:[#allocation3 + $0x110] sm:$0xff]
    %v7341 = vld [vmem:[#allocation3 + $0x118] sm:$0xff]
    %v7342 = vld [vmem:[#allocation3 + $0x120] sm:$0xff]
    %v7343 = vld [vmem:[#allocation3 + $0x128] sm:$0xff]
    %v7344 = vld [vmem:[#allocation3 + $0x130] sm:$0xff]
    %v7345 = vld [vmem:[#allocation3 + $0x138] sm:$0xff]
    %v7346 = vld [vmem:[#allocation3 + $0x140] sm:$0xff]
    %v7347 = vld [vmem:[#allocation3 + $0x148] sm:$0xff]
    %v7348 = vld [vmem:[#allocation3 + $0x150] sm:$0xff]
    %v7349 = vld [vmem:[#allocation3 + $0x158] sm:$0xff]
    %v7350 = vld [vmem:[#allocation3 + $0x160] sm:$0xff]
    %v7351 = vld [vmem:[#allocation3 + $0x168] sm:$0xff]
    %v7352 = vld [vmem:[#allocation3 + $0x170] sm:$0xff]
    %v7353 = vld [vmem:[#allocation3 + $0x178] sm:$0xff]
    %v7354 = vld [vmem:[#allocation3 + $0x180] sm:$0xff]
    %v7355 = vld [vmem:[#allocation3 + $0x188] sm:$0xff]
    %v7356 = vld [vmem:[#allocation3 + $0x190] sm:$0xff]
    %v7357 = vld [vmem:[#allocation3 + $0x198] sm:$0xff]
    %v7358 = vld [vmem:[#allocation3 + $0x1a0] sm:$0xff]
    %v7359 = vld [vmem:[#allocation3 + $0x1a8] sm:$0xff]
    %v7360 = vld [vmem:[#allocation3 + $0x1b0] sm:$0xff]
    %v7361 = vld [vmem:[#allocation3 + $0x1b8] sm:$0xff]
    %v7362 = vld [vmem:[#allocation3 + $0x1c0] sm:$0xff]
    %v7363 = vld [vmem:[#allocation3 + $0x1c8] sm:$0xff]
    %v7364 = vld [vmem:[#allocation3 + $0x1d0] sm:$0xff]
    %v7365 = vld [vmem:[#allocation3 + $0x1d8] sm:$0xff]
    %v7366 = vld [vmem:[#allocation3 + $0x1e0] sm:$0xff]
    %v7367 = vld [vmem:[#allocation3 + $0x1e8] sm:$0xff]
    %v7368 = vld [vmem:[#allocation3 + $0x1f0] sm:$0xff]
    %v7369 = vld [vmem:[#allocation3 + $0x1f8] sm:$0xff]
    %v7370 = vadd.f32 %v7306, %v7052
    %v7371 = vadd.f32 %v7307, %v7055
    %v7372 = vadd.f32 %v7308, %v7060
    %v7373 = vadd.f32 %v7309, %v7063
    %v7374 = vadd.f32 %v7310, %v7068
    %v7375 = vadd.f32 %v7311, %v7071
    %v7376 = vadd.f32 %v7312, %v7076
    %v7377 = vadd.f32 %v7313, %v7079
    %v7378 = vadd.f32 %v7314, %v7084
    %v7379 = vadd.f32 %v7315, %v7087
    %v7380 = vadd.f32 %v7316, %v7092
    %v7381 = vadd.f32 %v7317, %v7095
    %v7382 = vadd.f32 %v7318, %v7100
    %v7383 = vadd.f32 %v7319, %v7103
    %v7384 = vadd.f32 %v7320, %v7108
    %v7385 = vadd.f32 %v7321, %v7111
    %v7386 = vadd.f32 %v7322, %v7116
    %v7387 = vadd.f32 %v7323, %v7119
    %v7388 = vadd.f32 %v7324, %v7124
    %v7389 = vadd.f32 %v7325, %v7127
    %v7390 = vadd.f32 %v7326, %v7132
    %v7391 = vadd.f32 %v7327, %v7135
    %v7392 = vadd.f32 %v7328, %v7140
    %v7393 = vadd.f32 %v7329, %v7143
    %v7394 = vadd.f32 %v7330, %v7148
    %v7395 = vadd.f32 %v7331, %v7151
    %v7396 = vadd.f32 %v7332, %v7156
    %v7397 = vadd.f32 %v7333, %v7159
    %v7398 = vadd.f32 %v7334, %v7164
    %v7399 = vadd.f32 %v7335, %v7167
    %v7400 = vadd.f32 %v7336, %v7172
    %v7401 = vadd.f32 %v7337, %v7175
    %v7402 = vadd.f32 %v7338, %v7180
    %v7403 = vadd.f32 %v7339, %v7183
    %v7404 = vadd.f32 %v7340, %v7188
    %v7405 = vadd.f32 %v7341, %v7191
    %v7406 = vadd.f32 %v7342, %v7196
    %v7407 = vadd.f32 %v7343, %v7199
    %v7408 = vadd.f32 %v7344, %v7204
    %v7409 = vadd.f32 %v7345, %v7207
    %v7410 = vadd.f32 %v7346, %v7212
    %v7411 = vadd.f32 %v7347, %v7215
    %v7412 = vadd.f32 %v7348, %v7220
    %v7413 = vadd.f32 %v7349, %v7223
    %v7414 = vadd.f32 %v7350, %v7228
    %v7415 = vadd.f32 %v7351, %v7231
    %v7416 = vadd.f32 %v7352, %v7236
    %v7417 = vadd.f32 %v7353, %v7239
    %v7418 = vadd.f32 %v7354, %v7244
    %v7419 = vadd.f32 %v7355, %v7247
    %v7420 = vadd.f32 %v7356, %v7252
    %v7421 = vadd.f32 %v7357, %v7255
    %v7422 = vadd.f32 %v7358, %v7260
    %v7423 = vadd.f32 %v7359, %v7263
    %v7424 = vadd.f32 %v7360, %v7268
    %v7425 = vadd.f32 %v7361, %v7271
    %v7426 = vadd.f32 %v7362, %v7276
    %v7427 = vadd.f32 %v7363, %v7279
    %v7428 = vadd.f32 %v7364, %v7284
    %v7429 = vadd.f32 %v7365, %v7287
    %v7430 = vadd.f32 %v7366, %v7292
    %v7431 = vadd.f32 %v7367, %v7295
    %v7432 = vadd.f32 %v7368, %v7300
    %v7433 = vadd.f32 %v7369, %v7303
    %7434 = vst [vmem:[#allocation3] sm:$0xff] %v7370
    %7435 = vst [vmem:[#allocation3 + $0x8] sm:$0xff] %v7371
    %7436 = vst [vmem:[#allocation3 + $0x10] sm:$0xff] %v7372
    %7437 = vst [vmem:[#allocation3 + $0x18] sm:$0xff] %v7373
    %7438 = vst [vmem:[#allocation3 + $0x20] sm:$0xff] %v7374
    %7439 = vst [vmem:[#allocation3 + $0x28] sm:$0xff] %v7375
    %7440 = vst [vmem:[#allocation3 + $0x30] sm:$0xff] %v7376
    %7441 = vst [vmem:[#allocation3 + $0x38] sm:$0xff] %v7377
    %7442 = vst [vmem:[#allocation3 + $0x40] sm:$0xff] %v7378
    %7443 = vst [vmem:[#allocation3 + $0x48] sm:$0xff] %v7379
    %7444 = vst [vmem:[#allocation3 + $0x50] sm:$0xff] %v7380
    %7445 = vst [vmem:[#allocation3 + $0x58] sm:$0xff] %v7381
    %7446 = vst [vmem:[#allocation3 + $0x60] sm:$0xff] %v7382
    %7447 = vst [vmem:[#allocation3 + $0x68] sm:$0xff] %v7383
    %7448 = vst [vmem:[#allocation3 + $0x70] sm:$0xff] %v7384
    %7449 = vst [vmem:[#allocation3 + $0x78] sm:$0xff] %v7385
    %7450 = vst [vmem:[#allocation3 + $0x80] sm:$0xff] %v7386
    %7451 = vst [vmem:[#allocation3 + $0x88] sm:$0xff] %v7387
    %7452 = vst [vmem:[#allocation3 + $0x90] sm:$0xff] %v7388
    %7453 = vst [vmem:[#allocation3 + $0x98] sm:$0xff] %v7389
    %7454 = vst [vmem:[#allocation3 + $0xa0] sm:$0xff] %v7390
    %7455 = vst [vmem:[#allocation3 + $0xa8] sm:$0xff] %v7391
    %7456 = vst [vmem:[#allocation3 + $0xb0] sm:$0xff] %v7392
    %7457 = vst [vmem:[#allocation3 + $0xb8] sm:$0xff] %v7393
    %7458 = vst [vmem:[#allocation3 + $0xc0] sm:$0xff] %v7394
    %7459 = vst [vmem:[#allocation3 + $0xc8] sm:$0xff] %v7395
    %7460 = vst [vmem:[#allocation3 + $0xd0] sm:$0xff] %v7396
    %7461 = vst [vmem:[#allocation3 + $0xd8] sm:$0xff] %v7397
    %7462 = vst [vmem:[#allocation3 + $0xe0] sm:$0xff] %v7398
    %7463 = vst [vmem:[#allocation3 + $0xe8] sm:$0xff] %v7399
    %7464 = vst [vmem:[#allocation3 + $0xf0] sm:$0xff] %v7400
    %7465 = vst [vmem:[#allocation3 + $0xf8] sm:$0xff] %v7401
    %7466 = vst [vmem:[#allocation3 + $0x100] sm:$0xff] %v7402
    %7467 = vst [vmem:[#allocation3 + $0x108] sm:$0xff] %v7403
    %7468 = vst [vmem:[#allocation3 + $0x110] sm:$0xff] %v7404
    %7469 = vst [vmem:[#allocation3 + $0x118] sm:$0xff] %v7405
    %7470 = vst [vmem:[#allocation3 + $0x120] sm:$0xff] %v7406
    %7471 = vst [vmem:[#allocation3 + $0x128] sm:$0xff] %v7407
    %7472 = vst [vmem:[#allocation3 + $0x130] sm:$0xff] %v7408
    %7473 = vst [vmem:[#allocation3 + $0x138] sm:$0xff] %v7409
    %7474 = vst [vmem:[#allocation3 + $0x140] sm:$0xff] %v7410
    %7475 = vst [vmem:[#allocation3 + $0x148] sm:$0xff] %v7411
    %7476 = vst [vmem:[#allocation3 + $0x150] sm:$0xff] %v7412
    %7477 = vst [vmem:[#allocation3 + $0x158] sm:$0xff] %v7413
    %7478 = vst [vmem:[#allocation3 + $0x160] sm:$0xff] %v7414
    %7479 = vst [vmem:[#allocation3 + $0x168] sm:$0xff] %v7415
    %7480 = vst [vmem:[#allocation3 + $0x170] sm:$0xff] %v7416
    %7481 = vst [vmem:[#allocation3 + $0x178] sm:$0xff] %v7417
    %7482 = vst [vmem:[#allocation3 + $0x180] sm:$0xff] %v7418
    %7483 = vst [vmem:[#allocation3 + $0x188] sm:$0xff] %v7419
    %7484 = vst [vmem:[#allocation3 + $0x190] sm:$0xff] %v7420
    %7485 = vst [vmem:[#allocation3 + $0x198] sm:$0xff] %v7421
    %7486 = vst [vmem:[#allocation3 + $0x1a0] sm:$0xff] %v7422
    %7487 = vst [vmem:[#allocation3 + $0x1a8] sm:$0xff] %v7423
    %7488 = vst [vmem:[#allocation3 + $0x1b0] sm:$0xff] %v7424
    %7489 = vst [vmem:[#allocation3 + $0x1b8] sm:$0xff] %v7425
    %7490 = vst [vmem:[#allocation3 + $0x1c0] sm:$0xff] %v7426
    %7491 = vst [vmem:[#allocation3 + $0x1c8] sm:$0xff] %v7427
    %7492 = vst [vmem:[#allocation3 + $0x1d0] sm:$0xff] %v7428
    %7493 = vst [vmem:[#allocation3 + $0x1d8] sm:$0xff] %v7429
    %7494 = vst [vmem:[#allocation3 + $0x1e0] sm:$0xff] %v7430
    %7495 = vst [vmem:[#allocation3 + $0x1e8] sm:$0xff] %v7431
    %7496 = vst [vmem:[#allocation3 + $0x1f0] sm:$0xff] %v7432
    %7497 = vst [vmem:[#allocation3 + $0x1f8] sm:$0xff] %v7433
    %v7498 = vld [vmem:[#allocation3] sm:$0xff]
    %v7499 = vld [vmem:[#allocation3 + $0x8] sm:$0xff]
    %v7500 = vld [vmem:[#allocation3 + $0x10] sm:$0xff]
    %v7501 = vld [vmem:[#allocation3 + $0x18] sm:$0xff]
    %v7502 = vld [vmem:[#allocation3 + $0x20] sm:$0xff]
    %v7503 = vld [vmem:[#allocation3 + $0x28] sm:$0xff]
    %v7504 = vld [vmem:[#allocation3 + $0x30] sm:$0xff]
    %v7505 = vld [vmem:[#allocation3 + $0x38] sm:$0xff]
    %v7506 = vld [vmem:[#allocation3 + $0x40] sm:$0xff]
    %v7507 = vld [vmem:[#allocation3 + $0x48] sm:$0xff]
    %v7508 = vld [vmem:[#allocation3 + $0x50] sm:$0xff]
    %v7509 = vld [vmem:[#allocation3 + $0x58] sm:$0xff]
    %v7510 = vld [vmem:[#allocation3 + $0x60] sm:$0xff]
    %v7511 = vld [vmem:[#allocation3 + $0x68] sm:$0xff]
    %v7512 = vld [vmem:[#allocation3 + $0x70] sm:$0xff]
    %v7513 = vld [vmem:[#allocation3 + $0x78] sm:$0xff]
    %v7514 = vld [vmem:[#allocation3 + $0x80] sm:$0xff]
    %v7515 = vld [vmem:[#allocation3 + $0x88] sm:$0xff]
    %v7516 = vld [vmem:[#allocation3 + $0x90] sm:$0xff]
    %v7517 = vld [vmem:[#allocation3 + $0x98] sm:$0xff]
    %v7518 = vld [vmem:[#allocation3 + $0xa0] sm:$0xff]
    %v7519 = vld [vmem:[#allocation3 + $0xa8] sm:$0xff]
    %v7520 = vld [vmem:[#allocation3 + $0xb0] sm:$0xff]
    %v7521 = vld [vmem:[#allocation3 + $0xb8] sm:$0xff]
    %v7522 = vld [vmem:[#allocation3 + $0xc0] sm:$0xff]
    %v7523 = vld [vmem:[#allocation3 + $0xc8] sm:$0xff]
    %v7524 = vld [vmem:[#allocation3 + $0xd0] sm:$0xff]
    %v7525 = vld [vmem:[#allocation3 + $0xd8] sm:$0xff]
    %v7526 = vld [vmem:[#allocation3 + $0xe0] sm:$0xff]
    %v7527 = vld [vmem:[#allocation3 + $0xe8] sm:$0xff]
    %v7528 = vld [vmem:[#allocation3 + $0xf0] sm:$0xff]
    %v7529 = vld [vmem:[#allocation3 + $0xf8] sm:$0xff]
    %v7530 = vld [vmem:[#allocation3 + $0x100] sm:$0xff]
    %v7531 = vld [vmem:[#allocation3 + $0x108] sm:$0xff]
    %v7532 = vld [vmem:[#allocation3 + $0x110] sm:$0xff]
    %v7533 = vld [vmem:[#allocation3 + $0x118] sm:$0xff]
    %v7534 = vld [vmem:[#allocation3 + $0x120] sm:$0xff]
    %v7535 = vld [vmem:[#allocation3 + $0x128] sm:$0xff]
    %v7536 = vld [vmem:[#allocation3 + $0x130] sm:$0xff]
    %v7537 = vld [vmem:[#allocation3 + $0x138] sm:$0xff]
    %v7538 = vld [vmem:[#allocation3 + $0x140] sm:$0xff]
    %v7539 = vld [vmem:[#allocation3 + $0x148] sm:$0xff]
    %v7540 = vld [vmem:[#allocation3 + $0x150] sm:$0xff]
    %v7541 = vld [vmem:[#allocation3 + $0x158] sm:$0xff]
    %v7542 = vld [vmem:[#allocation3 + $0x160] sm:$0xff]
    %v7543 = vld [vmem:[#allocation3 + $0x168] sm:$0xff]
    %v7544 = vld [vmem:[#allocation3 + $0x170] sm:$0xff]
    %v7545 = vld [vmem:[#allocation3 + $0x178] sm:$0xff]
    %v7546 = vld [vmem:[#allocation3 + $0x180] sm:$0xff]
    %v7547 = vld [vmem:[#allocation3 + $0x188] sm:$0xff]
    %v7548 = vld [vmem:[#allocation3 + $0x190] sm:$0xff]
    %v7549 = vld [vmem:[#allocation3 + $0x198] sm:$0xff]
    %v7550 = vld [vmem:[#allocation3 + $0x1a0] sm:$0xff]
    %v7551 = vld [vmem:[#allocation3 + $0x1a8] sm:$0xff]
    %v7552 = vld [vmem:[#allocation3 + $0x1b0] sm:$0xff]
    %v7553 = vld [vmem:[#allocation3 + $0x1b8] sm:$0xff]
    %v7554 = vld [vmem:[#allocation3 + $0x1c0] sm:$0xff]
    %v7555 = vld [vmem:[#allocation3 + $0x1c8] sm:$0xff]
    %v7556 = vld [vmem:[#allocation3 + $0x1d0] sm:$0xff]
    %v7557 = vld [vmem:[#allocation3 + $0x1d8] sm:$0xff]
    %v7558 = vld [vmem:[#allocation3 + $0x1e0] sm:$0xff]
    %v7559 = vld [vmem:[#allocation3 + $0x1e8] sm:$0xff]
    %v7560 = vld [vmem:[#allocation3 + $0x1f0] sm:$0xff]
    %v7561 = vld [vmem:[#allocation3 + $0x1f8] sm:$0xff]
    %v7562 = vld [vmem:[%s6] sm:$0x1]
    %v7563 = vld [vmem:[%s7] sm:$0x1]
    %v7564 = vadd.f32 %v7498, %v7499
    %v7565 = vadd.f32 %v7564, %v7500
    %v7566 = vadd.f32 %v7565, %v7501
    %v7567 = vadd.f32 %v7566, %v7502
    %v7568 = vadd.f32 %v7567, %v7503
    %v7569 = vadd.f32 %v7568, %v7504
    %v7570 = vadd.f32 %v7569, %v7505
    %v7571 = vadd.f32 %v7570, %v7506
    %v7572 = vadd.f32 %v7571, %v7507
    %v7573 = vadd.f32 %v7572, %v7508
    %v7574 = vadd.f32 %v7573, %v7509
    %v7575 = vadd.f32 %v7574, %v7510
    %v7576 = vadd.f32 %v7575, %v7511
    %v7577 = vadd.f32 %v7576, %v7512
    %v7578 = vadd.f32 %v7577, %v7513
    %v7579 = vadd.f32 %v7578, %v7514
    %v7580 = vadd.f32 %v7579, %v7515
    %v7581 = vadd.f32 %v7580, %v7516
    %v7582 = vadd.f32 %v7581, %v7517
    %v7583 = vadd.f32 %v7582, %v7518
    %v7584 = vadd.f32 %v7583, %v7519
    %v7585 = vadd.f32 %v7584, %v7520
    %v7586 = vadd.f32 %v7585, %v7521
    %v7587 = vadd.f32 %v7586, %v7522
    %v7588 = vadd.f32 %v7587, %v7523
    %v7589 = vadd.f32 %v7588, %v7524
    %v7590 = vadd.f32 %v7589, %v7525
    %v7591 = vadd.f32 %v7590, %v7526
    %v7592 = vadd.f32 %v7591, %v7527
    %v7593 = vadd.f32 %v7592, %v7528
    %v7594 = vadd.f32 %v7593, %v7529
    %v7595 = vadd.f32 %v7594, %v7530
    %v7596 = vadd.f32 %v7595, %v7531
    %v7597 = vadd.f32 %v7596, %v7532
    %v7598 = vadd.f32 %v7597, %v7533
    %v7599 = vadd.f32 %v7598, %v7534
    %v7600 = vadd.f32 %v7599, %v7535
    %v7601 = vadd.f32 %v7600, %v7536
    %v7602 = vadd.f32 %v7601, %v7537
    %v7603 = vadd.f32 %v7602, %v7538
    %v7604 = vadd.f32 %v7603, %v7539
    %v7605 = vadd.f32 %v7604, %v7540
    %v7606 = vadd.f32 %v7605, %v7541
    %v7607 = vadd.f32 %v7606, %v7542
    %v7608 = vadd.f32 %v7607, %v7543
    %v7609 = vadd.f32 %v7608, %v7544
    %v7610 = vadd.f32 %v7609, %v7545
    %v7611 = vadd.f32 %v7610, %v7546
    %v7612 = vadd.f32 %v7611, %v7547
    %v7613 = vadd.f32 %v7612, %v7548
    %v7614 = vadd.f32 %v7613, %v7549
    %v7615 = vadd.f32 %v7614, %v7550
    %v7616 = vadd.f32 %v7615, %v7551
    %v7617 = vadd.f32 %v7616, %v7552
    %v7618 = vadd.f32 %v7617, %v7553
    %v7619 = vadd.f32 %v7618, %v7554
    %v7620 = vadd.f32 %v7619, %v7555
    %v7621 = vadd.f32 %v7620, %v7556
    %v7622 = vadd.f32 %v7621, %v7557
    %v7623 = vadd.f32 %v7622, %v7558
    %v7624 = vadd.f32 %v7623, %v7559
    %v7625 = vadd.f32 %v7624, %v7560
    %v7626 = vadd.f32 %v7625, %v7561
    %v7627 = vrot.slane %v7626, 4
    %v7628 = vadd.f32 %v7626, %v7627
    %v7629 = vrot.slane %v7628, 2
    %v7630 = vadd.f32 %v7628, %v7629
    %v7631 = vrot.slane %v7630, 1
    %v7632 = vadd.f32 %v7630, %v7631
    %v7633 = vmul.f32 %v7632, 0.001953125
    %v7634 = vmul.f32 %v7498, %v7498
    %v7635 = vmul.f32 %v7499, %v7499
    %v7636 = vmul.f32 %v7500, %v7500
    %v7637 = vmul.f32 %v7501, %v7501
    %v7638 = vmul.f32 %v7502, %v7502
    %v7639 = vmul.f32 %v7503, %v7503
    %v7640 = vmul.f32 %v7504, %v7504
    %v7641 = vmul.f32 %v7505, %v7505
    %v7642 = vmul.f32 %v7506, %v7506
    %v7643 = vmul.f32 %v7507, %v7507
    %v7644 = vmul.f32 %v7508, %v7508
    %v7645 = vmul.f32 %v7509, %v7509
    %v7646 = vmul.f32 %v7510, %v7510
    %v7647 = vmul.f32 %v7511, %v7511
    %v7648 = vmul.f32 %v7512, %v7512
    %v7649 = vmul.f32 %v7513, %v7513
    %v7650 = vmul.f32 %v7514, %v7514
    %v7651 = vmul.f32 %v7515, %v7515
    %v7652 = vmul.f32 %v7516, %v7516
    %v7653 = vmul.f32 %v7517, %v7517
    %v7654 = vmul.f32 %v7518, %v7518
    %v7655 = vmul.f32 %v7519, %v7519
    %v7656 = vmul.f32 %v7520, %v7520
    %v7657 = vmul.f32 %v7521, %v7521
    %v7658 = vmul.f32 %v7522, %v7522
    %v7659 = vmul.f32 %v7523, %v7523
    %v7660 = vmul.f32 %v7524, %v7524
    %v7661 = vmul.f32 %v7525, %v7525
    %v7662 = vmul.f32 %v7526, %v7526
    %v7663 = vmul.f32 %v7527, %v7527
    %v7664 = vmul.f32 %v7528, %v7528
    %v7665 = vmul.f32 %v7529, %v7529
    %v7666 = vmul.f32 %v7530, %v7530
    %v7667 = vmul.f32 %v7531, %v7531
    %v7668 = vmul.f32 %v7532, %v7532
    %v7669 = vmul.f32 %v7533, %v7533
    %v7670 = vmul.f32 %v7534, %v7534
    %v7671 = vmul.f32 %v7535, %v7535
    %v7672 = vmul.f32 %v7536, %v7536
    %v7673 = vmul.f32 %v7537, %v7537
    %v7674 = vmul.f32 %v7538, %v7538
    %v7675 = vmul.f32 %v7539, %v7539
    %v7676 = vmul.f32 %v7540, %v7540
    %v7677 = vmul.f32 %v7541, %v7541
    %v7678 = vmul.f32 %v7542, %v7542
    %v7679 = vmul.f32 %v7543, %v7543
    %v7680 = vmul.f32 %v7544, %v7544
    %v7681 = vmul.f32 %v7545, %v7545
    %v7682 = vmul.f32 %v7546, %v7546
    %v7683 = vmul.f32 %v7547, %v7547
    %v7684 = vmul.f32 %v7548, %v7548
    %v7685 = vmul.f32 %v7549, %v7549
    %v7686 = vmul.f32 %v7550, %v7550
    %v7687 = vmul.f32 %v7551, %v7551
    %v7688 = vmul.f32 %v7552, %v7552
    %v7689 = vmul.f32 %v7553, %v7553
    %v7690 = vmul.f32 %v7554, %v7554
    %v7691 = vmul.f32 %v7555, %v7555
    %v7692 = vmul.f32 %v7556, %v7556
    %v7693 = vmul.f32 %v7557, %v7557
    %v7694 = vmul.f32 %v7558, %v7558
    %v7695 = vmul.f32 %v7559, %v7559
    %v7696 = vmul.f32 %v7560, %v7560
    %v7697 = vmul.f32 %v7561, %v7561
    %v7698 = vadd.f32 %v7634, %v7635
    %v7699 = vadd.f32 %v7698, %v7636
    %v7700 = vadd.f32 %v7699, %v7637
    %v7701 = vadd.f32 %v7700, %v7638
    %v7702 = vadd.f32 %v7701, %v7639
    %v7703 = vadd.f32 %v7702, %v7640
    %v7704 = vadd.f32 %v7703, %v7641
    %v7705 = vadd.f32 %v7704, %v7642
    %v7706 = vadd.f32 %v7705, %v7643
    %v7707 = vadd.f32 %v7706, %v7644
    %v7708 = vadd.f32 %v7707, %v7645
    %v7709 = vadd.f32 %v7708, %v7646
    %v7710 = vadd.f32 %v7709, %v7647
    %v7711 = vadd.f32 %v7710, %v7648
    %v7712 = vadd.f32 %v7711, %v7649
    %v7713 = vadd.f32 %v7712, %v7650
    %v7714 = vadd.f32 %v7713, %v7651
    %v7715 = vadd.f32 %v7714, %v7652
    %v7716 = vadd.f32 %v7715, %v7653
    %v7717 = vadd.f32 %v7716, %v7654
    %v7718 = vadd.f32 %v7717, %v7655
    %v7719 = vadd.f32 %v7718, %v7656
    %v7720 = vadd.f32 %v7719, %v7657
    %v7721 = vadd.f32 %v7720, %v7658
    %v7722 = vadd.f32 %v7721, %v7659
    %v7723 = vadd.f32 %v7722, %v7660
    %v7724 = vadd.f32 %v7723, %v7661
    %v7725 = vadd.f32 %v7724, %v7662
    %v7726 = vadd.f32 %v7725, %v7663
    %v7727 = vadd.f32 %v7726, %v7664
    %v7728 = vadd.f32 %v7727, %v7665
    %v7729 = vadd.f32 %v7728, %v7666
    %v7730 = vadd.f32 %v7729, %v7667
    %v7731 = vadd.f32 %v7730, %v7668
    %v7732 = vadd.f32 %v7731, %v7669
    %v7733 = vadd.f32 %v7732, %v7670
    %v7734 = vadd.f32 %v7733, %v7671
    %v7735 = vadd.f32 %v7734, %v7672
    %v7736 = vadd.f32 %v7735, %v7673
    %v7737 = vadd.f32 %v7736, %v7674
    %v7738 = vadd.f32 %v7737, %v7675
    %v7739 = vadd.f32 %v7738, %v7676
    %v7740 = vadd.f32 %v7739, %v7677
    %v7741 = vadd.f32 %v7740, %v7678
    %v7742 = vadd.f32 %v7741, %v7679
    %v7743 = vadd.f32 %v7742, %v7680
    %v7744 = vadd.f32 %v7743, %v7681
    %v7745 = vadd.f32 %v7744, %v7682
    %v7746 = vadd.f32 %v7745, %v7683
    %v7747 = vadd.f32 %v7746, %v7684
    %v7748 = vadd.f32 %v7747, %v7685
    %v7749 = vadd.f32 %v7748, %v7686
    %v7750 = vadd.f32 %v7749, %v7687
    %v7751 = vadd.f32 %v7750, %v7688
    %v7752 = vadd.f32 %v7751, %v7689
    %v7753 = vadd.f32 %v7752, %v7690
    %v7754 = vadd.f32 %v7753, %v7691
    %v7755 = vadd.f32 %v7754, %v7692
    %v7756 = vadd.f32 %v7755, %v7693
    %v7757 = vadd.f32 %v7756, %v7694
    %v7758 = vadd.f32 %v7757, %v7695
    %v7759 = vadd.f32 %v7758, %v7696
    %v7760 = vadd.f32 %v7759, %v7697
    %v7761 = vrot.slane %v7760, 4
    %v7762 = vadd.f32 %v7760, %v7761
    %v7763 = vrot.slane %v7762, 2
    %v7764 = vadd.f32 %v7762, %v7763
    %v7765 = vrot.slane %v7764, 1
    %v7766 = vadd.f32 %v7764, %v7765
    %v7767 = vmul.f32 %v7766, 0.001953125
    %v7768 = vmul.f32 %v7633, %v7633
    %v7769 = vsub.f32 %v7767, %v7768
    %v7770 = vmax.f32 %v7769, 0.0
    %v7771 = vadd.f32 %v7770, 1e-05
    %v7772 = vrsqrt.pop %v7771
    %v7773 = vmul.f32 %v7562, %v7772
    %v7774 = vmul.f32 %v7633, %v7773
    %v7775 = vsub.f32 %v7563, %v7774
    %v7777 = vlaneseq
    %v7778 = vshrl.u32 %v7777, 7
    %v7779 = vsub.s32 0, %v7778
    %v7780 = vrot.slane %v7773, %v7779
    %v7782 = vmul.f32 %v7498, %v7780
    %v7783 = vmul.f32 %v7499, %v7780
    %v7784 = vmul.f32 %v7500, %v7780
    %v7785 = vmul.f32 %v7501, %v7780
    %v7786 = vmul.f32 %v7502, %v7780
    %v7787 = vmul.f32 %v7503, %v7780
    %v7788 = vmul.f32 %v7504, %v7780
    %v7789 = vmul.f32 %v7505, %v7780
    %v7790 = vmul.f32 %v7506, %v7780
    %v7791 = vmul.f32 %v7507, %v7780
    %v7792 = vmul.f32 %v7508, %v7780
    %v7793 = vmul.f32 %v7509, %v7780
    %v7794 = vmul.f32 %v7510, %v7780
    %v7795 = vmul.f32 %v7511, %v7780
    %v7796 = vmul.f32 %v7512, %v7780
    %v7797 = vmul.f32 %v7513, %v7780
    %v7798 = vmul.f32 %v7514, %v7780
    %v7799 = vmul.f32 %v7515, %v7780
    %v7800 = vmul.f32 %v7516, %v7780
    %v7801 = vmul.f32 %v7517, %v7780
    %v7802 = vmul.f32 %v7518, %v7780
    %v7803 = vmul.f32 %v7519, %v7780
    %v7804 = vmul.f32 %v7520, %v7780
    %v7805 = vmul.f32 %v7521, %v7780
    %v7806 = vmul.f32 %v7522, %v7780
    %v7807 = vmul.f32 %v7523, %v7780
    %v7808 = vmul.f32 %v7524, %v7780
    %v7809 = vmul.f32 %v7525, %v7780
    %v7810 = vmul.f32 %v7526, %v7780
    %v7811 = vmul.f32 %v7527, %v7780
    %v7812 = vmul.f32 %v7528, %v7780
    %v7813 = vmul.f32 %v7529, %v7780
    %v7814 = vmul.f32 %v7530, %v7780
    %v7815 = vmul.f32 %v7531, %v7780
    %v7816 = vmul.f32 %v7532, %v7780
    %v7817 = vmul.f32 %v7533, %v7780
    %v7818 = vmul.f32 %v7534, %v7780
    %v7819 = vmul.f32 %v7535, %v7780
    %v7820 = vmul.f32 %v7536, %v7780
    %v7821 = vmul.f32 %v7537, %v7780
    %v7822 = vmul.f32 %v7538, %v7780
    %v7823 = vmul.f32 %v7539, %v7780
    %v7824 = vmul.f32 %v7540, %v7780
    %v7825 = vmul.f32 %v7541, %v7780
    %v7826 = vmul.f32 %v7542, %v7780
    %v7827 = vmul.f32 %v7543, %v7780
    %v7828 = vmul.f32 %v7544, %v7780
    %v7829 = vmul.f32 %v7545, %v7780
    %v7830 = vmul.f32 %v7546, %v7780
    %v7831 = vmul.f32 %v7547, %v7780
    %v7832 = vmul.f32 %v7548, %v7780
    %v7833 = vmul.f32 %v7549, %v7780
    %v7834 = vmul.f32 %v7550, %v7780
    %v7835 = vmul.f32 %v7551, %v7780
    %v7836 = vmul.f32 %v7552, %v7780
    %v7837 = vmul.f32 %v7553, %v7780
    %v7838 = vmul.f32 %v7554, %v7780
    %v7839 = vmul.f32 %v7555, %v7780
    %v7840 = vmul.f32 %v7556, %v7780
    %v7841 = vmul.f32 %v7557, %v7780
    %v7842 = vmul.f32 %v7558, %v7780
    %v7843 = vmul.f32 %v7559, %v7780
    %v7844 = vmul.f32 %v7560, %v7780
    %v7845 = vmul.f32 %v7561, %v7780
    %v7847 = vlaneseq
    %v7848 = vshrl.u32 %v7847, 7
    %v7849 = vsub.s32 0, %v7848
    %v7850 = vrot.slane %v7775, %v7849
    %v7852 = vadd.f32 %v7782, %v7850
    %v7853 = vadd.f32 %v7783, %v7850
    %v7854 = vadd.f32 %v7784, %v7850
    %v7855 = vadd.f32 %v7785, %v7850
    %v7856 = vadd.f32 %v7786, %v7850
    %v7857 = vadd.f32 %v7787, %v7850
    %v7858 = vadd.f32 %v7788, %v7850
    %v7859 = vadd.f32 %v7789, %v7850
    %v7860 = vadd.f32 %v7790, %v7850
    %v7861 = vadd.f32 %v7791, %v7850
    %v7862 = vadd.f32 %v7792, %v7850
    %v7863 = vadd.f32 %v7793, %v7850
    %v7864 = vadd.f32 %v7794, %v7850
    %v7865 = vadd.f32 %v7795, %v7850
    %v7866 = vadd.f32 %v7796, %v7850
    %v7867 = vadd.f32 %v7797, %v7850
    %v7868 = vadd.f32 %v7798, %v7850
    %v7869 = vadd.f32 %v7799, %v7850
    %v7870 = vadd.f32 %v7800, %v7850
    %v7871 = vadd.f32 %v7801, %v7850
    %v7872 = vadd.f32 %v7802, %v7850
    %v7873 = vadd.f32 %v7803, %v7850
    %v7874 = vadd.f32 %v7804, %v7850
    %v7875 = vadd.f32 %v7805, %v7850
    %v7876 = vadd.f32 %v7806, %v7850
    %v7877 = vadd.f32 %v7807, %v7850
    %v7878 = vadd.f32 %v7808, %v7850
    %v7879 = vadd.f32 %v7809, %v7850
    %v7880 = vadd.f32 %v7810, %v7850
    %v7881 = vadd.f32 %v7811, %v7850
    %v7882 = vadd.f32 %v7812, %v7850
    %v7883 = vadd.f32 %v7813, %v7850
    %v7884 = vadd.f32 %v7814, %v7850
    %v7885 = vadd.f32 %v7815, %v7850
    %v7886 = vadd.f32 %v7816, %v7850
    %v7887 = vadd.f32 %v7817, %v7850
    %v7888 = vadd.f32 %v7818, %v7850
    %v7889 = vadd.f32 %v7819, %v7850
    %v7890 = vadd.f32 %v7820, %v7850
    %v7891 = vadd.f32 %v7821, %v7850
    %v7892 = vadd.f32 %v7822, %v7850
    %v7893 = vadd.f32 %v7823, %v7850
    %v7894 = vadd.f32 %v7824, %v7850
    %v7895 = vadd.f32 %v7825, %v7850
    %v7896 = vadd.f32 %v7826, %v7850
    %v7897 = vadd.f32 %v7827, %v7850
    %v7898 = vadd.f32 %v7828, %v7850
    %v7899 = vadd.f32 %v7829, %v7850
    %v7900 = vadd.f32 %v7830, %v7850
    %v7901 = vadd.f32 %v7831, %v7850
    %v7902 = vadd.f32 %v7832, %v7850
    %v7903 = vadd.f32 %v7833, %v7850
    %v7904 = vadd.f32 %v7834, %v7850
    %v7905 = vadd.f32 %v7835, %v7850
    %v7906 = vadd.f32 %v7836, %v7850
    %v7907 = vadd.f32 %v7837, %v7850
    %v7908 = vadd.f32 %v7838, %v7850
    %v7909 = vadd.f32 %v7839, %v7850
    %v7910 = vadd.f32 %v7840, %v7850
    %v7911 = vadd.f32 %v7841, %v7850
    %v7912 = vadd.f32 %v7842, %v7850
    %v7913 = vadd.f32 %v7843, %v7850
    %v7914 = vadd.f32 %v7844, %v7850
    %v7915 = vadd.f32 %v7845, %v7850
    %v7916 = vmax.f32 %v7852, 0.0
    %v7917 = vmax.f32 %v7853, 0.0
    %v7918 = vmax.f32 %v7854, 0.0
    %v7919 = vmax.f32 %v7855, 0.0
    %v7920 = vmax.f32 %v7856, 0.0
    %v7921 = vmax.f32 %v7857, 0.0
    %v7922 = vmax.f32 %v7858, 0.0
    %v7923 = vmax.f32 %v7859, 0.0
    %v7924 = vmax.f32 %v7860, 0.0
    %v7925 = vmax.f32 %v7861, 0.0
    %v7926 = vmax.f32 %v7862, 0.0
    %v7927 = vmax.f32 %v7863, 0.0
    %v7928 = vmax.f32 %v7864, 0.0
    %v7929 = vmax.f32 %v7865, 0.0
    %v7930 = vmax.f32 %v7866, 0.0
    %v7931 = vmax.f32 %v7867, 0.0
    %v7932 = vmax.f32 %v7868, 0.0
    %v7933 = vmax.f32 %v7869, 0.0
    %v7934 = vmax.f32 %v7870, 0.0
    %v7935 = vmax.f32 %v7871, 0.0
    %v7936 = vmax.f32 %v7872, 0.0
    %v7937 = vmax.f32 %v7873, 0.0
    %v7938 = vmax.f32 %v7874, 0.0
    %v7939 = vmax.f32 %v7875, 0.0
    %v7940 = vmax.f32 %v7876, 0.0
    %v7941 = vmax.f32 %v7877, 0.0
    %v7942 = vmax.f32 %v7878, 0.0
    %v7943 = vmax.f32 %v7879, 0.0
    %v7944 = vmax.f32 %v7880, 0.0
    %v7945 = vmax.f32 %v7881, 0.0
    %v7946 = vmax.f32 %v7882, 0.0
    %v7947 = vmax.f32 %v7883, 0.0
    %v7948 = vmax.f32 %v7884, 0.0
    %v7949 = vmax.f32 %v7885, 0.0
    %v7950 = vmax.f32 %v7886, 0.0
    %v7951 = vmax.f32 %v7887, 0.0
    %v7952 = vmax.f32 %v7888, 0.0
    %v7953 = vmax.f32 %v7889, 0.0
    %v7954 = vmax.f32 %v7890, 0.0
    %v7955 = vmax.f32 %v7891, 0.0
    %v7956 = vmax.f32 %v7892, 0.0
    %v7957 = vmax.f32 %v7893, 0.0
    %v7958 = vmax.f32 %v7894, 0.0
    %v7959 = vmax.f32 %v7895, 0.0
    %v7960 = vmax.f32 %v7896, 0.0
    %v7961 = vmax.f32 %v7897, 0.0
    %v7962 = vmax.f32 %v7898, 0.0
    %v7963 = vmax.f32 %v7899, 0.0
    %v7964 = vmax.f32 %v7900, 0.0
    %v7965 = vmax.f32 %v7901, 0.0
    %v7966 = vmax.f32 %v7902, 0.0
    %v7967 = vmax.f32 %v7903, 0.0
    %v7968 = vmax.f32 %v7904, 0.0
    %v7969 = vmax.f32 %v7905, 0.0
    %v7970 = vmax.f32 %v7906, 0.0
    %v7971 = vmax.f32 %v7907, 0.0
    %v7972 = vmax.f32 %v7908, 0.0
    %v7973 = vmax.f32 %v7909, 0.0
    %v7974 = vmax.f32 %v7910, 0.0
    %v7975 = vmax.f32 %v7911, 0.0
    %v7976 = vmax.f32 %v7912, 0.0
    %v7977 = vmax.f32 %v7913, 0.0
    %v7978 = vmax.f32 %v7914, 0.0
    %v7979 = vmax.f32 %v7915, 0.0
    %v7980 = vpack.c.bf16 %v7917, %v7916
    %v7981 = vpack.c.bf16 %v7919, %v7918
    %v7982 = vpack.c.bf16 %v7921, %v7920
    %v7983 = vpack.c.bf16 %v7923, %v7922
    %v7984 = vpack.c.bf16 %v7925, %v7924
    %v7985 = vpack.c.bf16 %v7927, %v7926
    %v7986 = vpack.c.bf16 %v7929, %v7928
    %v7987 = vpack.c.bf16 %v7931, %v7930
    %v7988 = vpack.c.bf16 %v7933, %v7932
    %v7989 = vpack.c.bf16 %v7935, %v7934
    %v7990 = vpack.c.bf16 %v7937, %v7936
    %v7991 = vpack.c.bf16 %v7939, %v7938
    %v7992 = vpack.c.bf16 %v7941, %v7940
    %v7993 = vpack.c.bf16 %v7943, %v7942
    %v7994 = vpack.c.bf16 %v7945, %v7944
    %v7995 = vpack.c.bf16 %v7947, %v7946
    %v7996 = vpack.c.bf16 %v7949, %v7948
    %v7997 = vpack.c.bf16 %v7951, %v7950
    %v7998 = vpack.c.bf16 %v7953, %v7952
    %v7999 = vpack.c.bf16 %v7955, %v7954
    %v8000 = vpack.c.bf16 %v7957, %v7956
    %v8001 = vpack.c.bf16 %v7959, %v7958
    %v8002 = vpack.c.bf16 %v7961, %v7960
    %v8003 = vpack.c.bf16 %v7963, %v7962
    %v8004 = vpack.c.bf16 %v7965, %v7964
    %v8005 = vpack.c.bf16 %v7967, %v7966
    %v8006 = vpack.c.bf16 %v7969, %v7968
    %v8007 = vpack.c.bf16 %v7971, %v7970
    %v8008 = vpack.c.bf16 %v7973, %v7972
    %v8009 = vpack.c.bf16 %v7975, %v7974
    %v8010 = vpack.c.bf16 %v7977, %v7976
    %v8011 = vpack.c.bf16 %v7979, %v7978
    %v8012 = vld [vmem:[#allocation11] sm:$0xf]
    %v8013 = vld [vmem:[#allocation11 + $0x4] sm:$0xf]
    %v8014 = vld [vmem:[#allocation11 + $0x8] sm:$0xf]
    %v8015 = vld [vmem:[#allocation11 + $0xc] sm:$0xf]
    %v8016 = vld [vmem:[#allocation11 + $0x10] sm:$0xf]
    %v8017 = vld [vmem:[#allocation11 + $0x14] sm:$0xf]
    %v8018 = vld [vmem:[#allocation11 + $0x18] sm:$0xf]
    %v8019 = vld [vmem:[#allocation11 + $0x1c] sm:$0xf]
    %v8020 = vld [vmem:[#allocation11 + $0x20] sm:$0xf]
    %v8021 = vld [vmem:[#allocation11 + $0x24] sm:$0xf]
    %v8022 = vld [vmem:[#allocation11 + $0x28] sm:$0xf]
    %v8023 = vld [vmem:[#allocation11 + $0x2c] sm:$0xf]
    %v8024 = vld [vmem:[#allocation11 + $0x30] sm:$0xf]
    %v8025 = vld [vmem:[#allocation11 + $0x34] sm:$0xf]
    %v8026 = vld [vmem:[#allocation11 + $0x38] sm:$0xf]
    %v8027 = vld [vmem:[#allocation11 + $0x3c] sm:$0xf]
    %v8044 = vunpack.c.l.b16 %v8012
    %v8045 = vunpack.c.l.b16 %v8013
    %v8046 = vunpack.c.l.b16 %v8014
    %v8047 = vunpack.c.l.b16 %v8015
    %v8048 = vunpack.c.l.b16 %v8016
    %v8049 = vunpack.c.l.b16 %v8017
    %v8050 = vunpack.c.l.b16 %v8018
    %v8051 = vunpack.c.l.b16 %v8019
    %v8052 = vunpack.c.l.b16 %v8020
    %v8053 = vunpack.c.l.b16 %v8021
    %v8054 = vunpack.c.l.b16 %v8022
    %v8055 = vunpack.c.l.b16 %v8023
    %v8056 = vunpack.c.l.b16 %v8024
    %v8057 = vunpack.c.l.b16 %v8025
    %v8058 = vunpack.c.l.b16 %v8026
    %v8059 = vunpack.c.l.b16 %v8027
    %v8060 = vpack.c.b16 %v8045, %v8044
    %v8061 = vpack.c.b16 %v8047, %v8046
    %v8062 = vpack.c.b16 %v8049, %v8048
    %v8063 = vpack.c.b16 %v8051, %v8050
    %v8064 = vpack.c.b16 %v8053, %v8052
    %v8065 = vpack.c.b16 %v8055, %v8054
    %v8066 = vpack.c.b16 %v8057, %v8056
    %v8067 = vpack.c.b16 %v8059, %v8058
    %8076 = vmatprep.subr.bf16.mxu0 0
    %8077 = vmatpush1.bf16.msra.mxu0 %v8060
    %8078 = vmatprep.subr.bf16.mxu0 0
    %8079 = vmatpush1.bf16.msra.mxu0 %v8061
    %8080 = vmatprep.subr.bf16.mxu0 0
    %8081 = vmatpush1.bf16.msra.mxu0 %v8062
    %8082 = vmatprep.subr.bf16.mxu0 0
    %8083 = vmatpush1.bf16.msra.mxu0 %v8063
    %8084 = vmatprep.subr.bf16.mxu0 0
    %8085 = vmatpush1.bf16.msra.mxu0 %v8064
    %8086 = vmatprep.subr.bf16.mxu0 0
    %8087 = vmatpush1.bf16.msra.mxu0 %v8065
    %8088 = vmatprep.subr.bf16.mxu0 0
    %8089 = vmatpush1.bf16.msra.mxu0 %v8066
    %8090 = vmatprep.subr.bf16.mxu0 0
    %8091 = vmatpush1.bf16.msra.mxu0 %v8067
    %8092 = vmatprep.subr.bf16.mxu0 0
    %8093 = vmatpush1.bf16.msra.mxu0 0
    %8094 = vmatprep.subr.bf16.mxu0 0
    %8095 = vmatpush1.bf16.msra.mxu0 0
    %8096 = vmatprep.subr.bf16.mxu0 0
    %8097 = vmatpush1.bf16.msra.mxu0 0
    %8098 = vmatprep.subr.bf16.mxu0 0
    %8099 = vmatpush1.bf16.msra.mxu0 0
    %8100 = vmatprep.subr.bf16.mxu0 0
    %8101 = vmatpush1.bf16.msra.mxu0 0
    %8102 = vmatprep.subr.bf16.mxu0 0
    %8103 = vmatpush1.bf16.msra.mxu0 0
    %8104 = vmatprep.subr.bf16.mxu0 0
    %8105 = vmatpush1.bf16.msra.mxu0 0
    %8106 = vmatprep.subr.bf16.mxu0 0
    %8107 = vmatpush1.bf16.msra.mxu0 0
    %8108 = vmatprep.mubr.bf16.mxu0 0
    %8109 = vmatmul.mubr.bf16.gmra.mrb[0].mxu0 %v7980
    %v8110 = vpop.f32.mrb[0].mxu0
    %v8111 = vadd.f32 0.0, %v8110
    %v8112 = vpop.f32.mrb[0].mxu0
    %v8113 = vpop.f32.mrb[0].mxu0
    %v8114 = vadd.f32 0.0, %v8113
    %v8115 = vpop.f32.mrb[0].mxu0
    %8116 = vmatprep.mubr.bf16.mxu0 0
    %8117 = vmatmul.mubr.bf16.gmra.mrb[0].mxu0 %v7981
    %v8118 = vpop.f32.mrb[0].mxu0
    %v8119 = vadd.f32 0.0, %v8118
    %v8120 = vpop.f32.mrb[0].mxu0
    %v8121 = vpop.f32.mrb[0].mxu0
    %v8122 = vadd.f32 0.0, %v8121
    %v8123 = vpop.f32.mrb[0].mxu0
    %8124 = vmatprep.mubr.bf16.mxu0 0
    %8125 = vmatmul.mubr.bf16.gmra.mrb[0].mxu0 %v7982
    %v8126 = vpop.f32.mrb[0].mxu0
    %v8127 = vadd.f32 0.0, %v8126
    %v8128 = vpop.f32.mrb[0].mxu0
    %v8129 = vpop.f32.mrb[0].mxu0
    %v8130 = vadd.f32 0.0, %v8129
    %v8131 = vpop.f32.mrb[0].mxu0
    %8132 = vmatprep.mubr.bf16.mxu0 0
    %8133 = vmatmul.mubr.bf16.gmra.mrb[0].mxu0 %v7983
    %v8134 = vpop.f32.mrb[0].mxu0
    %v8135 = vadd.f32 0.0, %v8134
    %v8136 = vpop.f32.mrb[0].mxu0
    %v8137 = vpop.f32.mrb[0].mxu0
    %v8138 = vadd.f32 0.0, %v8137
    %v8139 = vpop.f32.mrb[0].mxu0
    %8140 = vmatprep.mubr.bf16.mxu0 0
    %8141 = vmatmul.mubr.bf16.gmra.mrb[0].mxu0 %v7984
    %v8142 = vpop.f32.mrb[0].mxu0
    %v8143 = vadd.f32 0.0, %v8142
    %v8144 = vpop.f32.mrb[0].mxu0
    %v8145 = vpop.f32.mrb[0].mxu0
    %v8146 = vadd.f32 0.0, %v8145
    %v8147 = vpop.f32.mrb[0].mxu0
    %8148 = vmatprep.mubr.bf16.mxu0 0
    %8149 = vmatmul.mubr.bf16.gmra.mrb[0].mxu0 %v7985
    %v8150 = vpop.f32.mrb[0].mxu0
    %v8151 = vadd.f32 0.0, %v8150
    %v8152 = vpop.f32.mrb[0].mxu0
    %v8153 = vpop.f32.mrb[0].mxu0
    %v8154 = vadd.f32 0.0, %v8153
    %v8155 = vpop.f32.mrb[0].mxu0
    %8156 = vmatprep.mubr.bf16.mxu0 0
    %8157 = vmatmul.mubr.bf16.gmra.mrb[0].mxu0 %v7986
    %v8158 = vpop.f32.mrb[0].mxu0
    %v8159 = vadd.f32 0.0, %v8158
    %v8160 = vpop.f32.mrb[0].mxu0
    %v8161 = vpop.f32.mrb[0].mxu0
    %v8162 = vadd.f32 0.0, %v8161
    %v8163 = vpop.f32.mrb[0].mxu0
    %8164 = vmatprep.mubr.bf16.mxu0 0
    %8165 = vmatmul.mubr.bf16.gmra.mrb[0].mxu0 %v7987
    %v8166 = vpop.f32.mrb[0].mxu0
    %v8167 = vadd.f32 0.0, %v8166
    %v8168 = vpop.f32.mrb[0].mxu0
    %v8169 = vpop.f32.mrb[0].mxu0
    %v8170 = vadd.f32 0.0, %v8169
    %v8171 = vpop.f32.mrb[0].mxu0
    %8172 = vmatprep.mubr.bf16.mxu0 0
    %8173 = vmatmul.mubr.bf16.gmra.mrb[0].mxu0 %v7988
    %v8174 = vpop.f32.mrb[0].mxu0
    %v8175 = vadd.f32 0.0, %v8174
    %v8176 = vpop.f32.mrb[0].mxu0
    %v8177 = vpop.f32.mrb[0].mxu0
    %v8178 = vadd.f32 0.0, %v8177
    %v8179 = vpop.f32.mrb[0].mxu0
    %8180 = vmatprep.mubr.bf16.mxu0 0
    %8181 = vmatmul.mubr.bf16.gmra.mrb[0].mxu0 %v7989
    %v8182 = vpop.f32.mrb[0].mxu0
    %v8183 = vadd.f32 0.0, %v8182
    %v8184 = vpop.f32.mrb[0].mxu0
    %v8185 = vpop.f32.mrb[0].mxu0
    %v8186 = vadd.f32 0.0, %v8185
    %v8187 = vpop.f32.mrb[0].mxu0
    %8188 = vmatprep.mubr.bf16.mxu0 0
    %8189 = vmatmul.mubr.bf16.gmra.mrb[0].mxu0 %v7990
    %v8190 = vpop.f32.mrb[0].mxu0
    %v8191 = vadd.f32 0.0, %v8190
    %v8192 = vpop.f32.mrb[0].mxu0
    %v8193 = vpop.f32.mrb[0].mxu0
    %v8194 = vadd.f32 0.0, %v8193
    %v8195 = vpop.f32.mrb[0].mxu0
    %8196 = vmatprep.mubr.bf16.mxu0 0
    %8197 = vmatmul.mubr.bf16.gmra.mrb[0].mxu0 %v7991
    %v8198 = vpop.f32.mrb[0].mxu0
    %v8199 = vadd.f32 0.0, %v8198
    %v8200 = vpop.f32.mrb[0].mxu0
    %v8201 = vpop.f32.mrb[0].mxu0
    %v8202 = vadd.f32 0.0, %v8201
    %v8203 = vpop.f32.mrb[0].mxu0
    %8204 = vmatprep.mubr.bf16.mxu0 0
    %8205 = vmatmul.mubr.bf16.gmra.mrb[0].mxu0 %v7992
    %v8206 = vpop.f32.mrb[0].mxu0
    %v8207 = vadd.f32 0.0, %v8206
    %v8208 = vpop.f32.mrb[0].mxu0
    %v8209 = vpop.f32.mrb[0].mxu0
    %v8210 = vadd.f32 0.0, %v8209
    %v8211 = vpop.f32.mrb[0].mxu0
    %8212 = vmatprep.mubr.bf16.mxu0 0
    %8213 = vmatmul.mubr.bf16.gmra.mrb[0].mxu0 %v7993
    %v8214 = vpop.f32.mrb[0].mxu0
    %v8215 = vadd.f32 0.0, %v8214
    %v8216 = vpop.f32.mrb[0].mxu0
    %v8217 = vpop.f32.mrb[0].mxu0
    %v8218 = vadd.f32 0.0, %v8217
    %v8219 = vpop.f32.mrb[0].mxu0
    %8220 = vmatprep.mubr.bf16.mxu0 0
    %8221 = vmatmul.mubr.bf16.gmra.mrb[0].mxu0 %v7994
    %v8222 = vpop.f32.mrb[0].mxu0
    %v8223 = vadd.f32 0.0, %v8222
    %v8224 = vpop.f32.mrb[0].mxu0
    %v8225 = vpop.f32.mrb[0].mxu0
    %v8226 = vadd.f32 0.0, %v8225
    %v8227 = vpop.f32.mrb[0].mxu0
    %8228 = vmatprep.mubr.bf16.mxu0 0
    %8229 = vmatmul.mubr.bf16.gmra.mrb[0].mxu0 %v7995
    %v8230 = vpop.f32.mrb[0].mxu0
    %v8231 = vadd.f32 0.0, %v8230
    %v8232 = vpop.f32.mrb[0].mxu0
    %v8233 = vpop.f32.mrb[0].mxu0
    %v8234 = vadd.f32 0.0, %v8233
    %v8235 = vpop.f32.mrb[0].mxu0
    %8236 = vmatprep.mubr.bf16.mxu0 0
    %8237 = vmatmul.mubr.bf16.gmra.mrb[0].mxu0 %v7996
    %v8238 = vpop.f32.mrb[0].mxu0
    %v8239 = vadd.f32 0.0, %v8238
    %v8240 = vpop.f32.mrb[0].mxu0
    %v8241 = vpop.f32.mrb[0].mxu0
    %v8242 = vadd.f32 0.0, %v8241
    %v8243 = vpop.f32.mrb[0].mxu0
    %8244 = vmatprep.mubr.bf16.mxu0 0
    %8245 = vmatmul.mubr.bf16.gmra.mrb[0].mxu0 %v7997
    %v8246 = vpop.f32.mrb[0].mxu0
    %v8247 = vadd.f32 0.0, %v8246
    %v8248 = vpop.f32.mrb[0].mxu0
    %v8249 = vpop.f32.mrb[0].mxu0
    %v8250 = vadd.f32 0.0, %v8249
    %v8251 = vpop.f32.mrb[0].mxu0
    %8252 = vmatprep.mubr.bf16.mxu0 0
    %8253 = vmatmul.mubr.bf16.gmra.mrb[0].mxu0 %v7998
    %v8254 = vpop.f32.mrb[0].mxu0
    %v8255 = vadd.f32 0.0, %v8254
    %v8256 = vpop.f32.mrb[0].mxu0
    %v8257 = vpop.f32.mrb[0].mxu0
    %v8258 = vadd.f32 0.0, %v8257
    %v8259 = vpop.f32.mrb[0].mxu0
    %8260 = vmatprep.mubr.bf16.mxu0 0
    %8261 = vmatmul.mubr.bf16.gmra.mrb[0].mxu0 %v7999
    %v8262 = vpop.f32.mrb[0].mxu0
    %v8263 = vadd.f32 0.0, %v8262
    %v8264 = vpop.f32.mrb[0].mxu0
    %v8265 = vpop.f32.mrb[0].mxu0
    %v8266 = vadd.f32 0.0, %v8265
    %v8267 = vpop.f32.mrb[0].mxu0
    %8268 = vmatprep.mubr.bf16.mxu0 0
    %8269 = vmatmul.mubr.bf16.gmra.mrb[0].mxu0 %v8000
    %v8270 = vpop.f32.mrb[0].mxu0
    %v8271 = vadd.f32 0.0, %v8270
    %v8272 = vpop.f32.mrb[0].mxu0
    %v8273 = vpop.f32.mrb[0].mxu0
    %v8274 = vadd.f32 0.0, %v8273
    %v8275 = vpop.f32.mrb[0].mxu0
    %8276 = vmatprep.mubr.bf16.mxu0 0
    %8277 = vmatmul.mubr.bf16.gmra.mrb[0].mxu0 %v8001
    %v8278 = vpop.f32.mrb[0].mxu0
    %v8279 = vadd.f32 0.0, %v8278
    %v8280 = vpop.f32.mrb[0].mxu0
    %v8281 = vpop.f32.mrb[0].mxu0
    %v8282 = vadd.f32 0.0, %v8281
    %v8283 = vpop.f32.mrb[0].mxu0
    %8284 = vmatprep.mubr.bf16.mxu0 0
    %8285 = vmatmul.mubr.bf16.gmra.mrb[0].mxu0 %v8002
    %v8286 = vpop.f32.mrb[0].mxu0
    %v8287 = vadd.f32 0.0, %v8286
    %v8288 = vpop.f32.mrb[0].mxu0
    %v8289 = vpop.f32.mrb[0].mxu0
    %v8290 = vadd.f32 0.0, %v8289
    %v8291 = vpop.f32.mrb[0].mxu0
    %8292 = vmatprep.mubr.bf16.mxu0 0
    %8293 = vmatmul.mubr.bf16.gmra.mrb[0].mxu0 %v8003
    %v8294 = vpop.f32.mrb[0].mxu0
    %v8295 = vadd.f32 0.0, %v8294
    %v8296 = vpop.f32.mrb[0].mxu0
    %v8297 = vpop.f32.mrb[0].mxu0
    %v8298 = vadd.f32 0.0, %v8297
    %v8299 = vpop.f32.mrb[0].mxu0
    %8300 = vmatprep.mubr.bf16.mxu0 0
    %8301 = vmatmul.mubr.bf16.gmra.mrb[0].mxu0 %v8004
    %v8302 = vpop.f32.mrb[0].mxu0
    %v8303 = vadd.f32 0.0, %v8302
    %v8304 = vpop.f32.mrb[0].mxu0
    %v8305 = vpop.f32.mrb[0].mxu0
    %v8306 = vadd.f32 0.0, %v8305
    %v8307 = vpop.f32.mrb[0].mxu0
    %8308 = vmatprep.mubr.bf16.mxu0 0
    %8309 = vmatmul.mubr.bf16.gmra.mrb[0].mxu0 %v8005
    %v8310 = vpop.f32.mrb[0].mxu0
    %v8311 = vadd.f32 0.0, %v8310
    %v8312 = vpop.f32.mrb[0].mxu0
    %v8313 = vpop.f32.mrb[0].mxu0
    %v8314 = vadd.f32 0.0, %v8313
    %v8315 = vpop.f32.mrb[0].mxu0
    %8316 = vmatprep.mubr.bf16.mxu0 0
    %8317 = vmatmul.mubr.bf16.gmra.mrb[0].mxu0 %v8006
    %v8318 = vpop.f32.mrb[0].mxu0
    %v8319 = vadd.f32 0.0, %v8318
    %v8320 = vpop.f32.mrb[0].mxu0
    %v8321 = vpop.f32.mrb[0].mxu0
    %v8322 = vadd.f32 0.0, %v8321
    %v8323 = vpop.f32.mrb[0].mxu0
    %8324 = vmatprep.mubr.bf16.mxu0 0
    %8325 = vmatmul.mubr.bf16.gmra.mrb[0].mxu0 %v8007
    %v8326 = vpop.f32.mrb[0].mxu0
    %v8327 = vadd.f32 0.0, %v8326
    %v8328 = vpop.f32.mrb[0].mxu0
    %v8329 = vpop.f32.mrb[0].mxu0
    %v8330 = vadd.f32 0.0, %v8329
    %v8331 = vpop.f32.mrb[0].mxu0
    %8332 = vmatprep.mubr.bf16.mxu0 0
    %8333 = vmatmul.mubr.bf16.gmra.mrb[0].mxu0 %v8008
    %v8334 = vpop.f32.mrb[0].mxu0
    %v8335 = vadd.f32 0.0, %v8334
    %v8336 = vpop.f32.mrb[0].mxu0
    %v8337 = vpop.f32.mrb[0].mxu0
    %v8338 = vadd.f32 0.0, %v8337
    %v8339 = vpop.f32.mrb[0].mxu0
    %8340 = vmatprep.mubr.bf16.mxu0 0
    %8341 = vmatmul.mubr.bf16.gmra.mrb[0].mxu0 %v8009
    %v8342 = vpop.f32.mrb[0].mxu0
    %v8343 = vadd.f32 0.0, %v8342
    %v8344 = vpop.f32.mrb[0].mxu0
    %v8345 = vpop.f32.mrb[0].mxu0
    %v8346 = vadd.f32 0.0, %v8345
    %v8347 = vpop.f32.mrb[0].mxu0
    %8348 = vmatprep.mubr.bf16.mxu0 0
    %8349 = vmatmul.mubr.bf16.gmra.mrb[0].mxu0 %v8010
    %v8350 = vpop.f32.mrb[0].mxu0
    %v8351 = vadd.f32 0.0, %v8350
    %v8352 = vpop.f32.mrb[0].mxu0
    %v8353 = vpop.f32.mrb[0].mxu0
    %v8354 = vadd.f32 0.0, %v8353
    %v8355 = vpop.f32.mrb[0].mxu0
    %8356 = vmatprep.mubr.bf16.mxu0 0
    %8357 = vmatmul.mubr.bf16.gmra.mrb[0].mxu0 %v8011
    %v8358 = vpop.f32.mrb[0].mxu0
    %v8359 = vadd.f32 0.0, %v8358
    %v8360 = vpop.f32.mrb[0].mxu0
    %v8361 = vpop.f32.mrb[0].mxu0
    %v8362 = vadd.f32 0.0, %v8361
    %v8363 = vpop.f32.mrb[0].mxu0
    %8364 = vdwg.mxu0
    %v8365 = vld [vmem:[%s8] sm:$0x1]
    %v8366 = vld [vmem:[%s9] sm:$0x1]
    %v8367 = vadd.f32 %v8111, %v8114
    %v8368 = vadd.f32 %v8367, %v8119
    %v8369 = vadd.f32 %v8368, %v8122
    %v8370 = vadd.f32 %v8369, %v8127
    %v8371 = vadd.f32 %v8370, %v8130
    %v8372 = vadd.f32 %v8371, %v8135
    %v8373 = vadd.f32 %v8372, %v8138
    %v8374 = vadd.f32 %v8373, %v8143
    %v8375 = vadd.f32 %v8374, %v8146
    %v8376 = vadd.f32 %v8375, %v8151
    %v8377 = vadd.f32 %v8376, %v8154
    %v8378 = vadd.f32 %v8377, %v8159
    %v8379 = vadd.f32 %v8378, %v8162
    %v8380 = vadd.f32 %v8379, %v8167
    %v8381 = vadd.f32 %v8380, %v8170
    %v8382 = vadd.f32 %v8381, %v8175
    %v8383 = vadd.f32 %v8382, %v8178
    %v8384 = vadd.f32 %v8383, %v8183
    %v8385 = vadd.f32 %v8384, %v8186
    %v8386 = vadd.f32 %v8385, %v8191
    %v8387 = vadd.f32 %v8386, %v8194
    %v8388 = vadd.f32 %v8387, %v8199
    %v8389 = vadd.f32 %v8388, %v8202
    %v8390 = vadd.f32 %v8389, %v8207
    %v8391 = vadd.f32 %v8390, %v8210
    %v8392 = vadd.f32 %v8391, %v8215
    %v8393 = vadd.f32 %v8392, %v8218
    %v8394 = vadd.f32 %v8393, %v8223
    %v8395 = vadd.f32 %v8394, %v8226
    %v8396 = vadd.f32 %v8395, %v8231
    %v8397 = vadd.f32 %v8396, %v8234
    %v8398 = vadd.f32 %v8397, %v8239
    %v8399 = vadd.f32 %v8398, %v8242
    %v8400 = vadd.f32 %v8399, %v8247
    %v8401 = vadd.f32 %v8400, %v8250
    %v8402 = vadd.f32 %v8401, %v8255
    %v8403 = vadd.f32 %v8402, %v8258
    %v8404 = vadd.f32 %v8403, %v8263
    %v8405 = vadd.f32 %v8404, %v8266
    %v8406 = vadd.f32 %v8405, %v8271
    %v8407 = vadd.f32 %v8406, %v8274
    %v8408 = vadd.f32 %v8407, %v8279
    %v8409 = vadd.f32 %v8408, %v8282
    %v8410 = vadd.f32 %v8409, %v8287
    %v8411 = vadd.f32 %v8410, %v8290
    %v8412 = vadd.f32 %v8411, %v8295
    %v8413 = vadd.f32 %v8412, %v8298
    %v8414 = vadd.f32 %v8413, %v8303
    %v8415 = vadd.f32 %v8414, %v8306
    %v8416 = vadd.f32 %v8415, %v8311
    %v8417 = vadd.f32 %v8416, %v8314
    %v8418 = vadd.f32 %v8417, %v8319
    %v8419 = vadd.f32 %v8418, %v8322
    %v8420 = vadd.f32 %v8419, %v8327
    %v8421 = vadd.f32 %v8420, %v8330
    %v8422 = vadd.f32 %v8421, %v8335
    %v8423 = vadd.f32 %v8422, %v8338
    %v8424 = vadd.f32 %v8423, %v8343
    %v8425 = vadd.f32 %v8424, %v8346
    %v8426 = vadd.f32 %v8425, %v8351
    %v8427 = vadd.f32 %v8426, %v8354
    %v8428 = vadd.f32 %v8427, %v8359
    %v8429 = vadd.f32 %v8428, %v8362
    %v8430 = vrot.slane %v8429, 4
    %v8431 = vadd.f32 %v8429, %v8430
    %v8432 = vrot.slane %v8431, 2
    %v8433 = vadd.f32 %v8431, %v8432
    %v8434 = vrot.slane %v8433, 1
    %v8435 = vadd.f32 %v8433, %v8434
    %v8436 = vmul.f32 %v8435, 0.001953125
    %v8437 = vmul.f32 %v8111, %v8111
    %v8438 = vmul.f32 %v8114, %v8114
    %v8439 = vmul.f32 %v8119, %v8119
    %v8440 = vmul.f32 %v8122, %v8122
    %v8441 = vmul.f32 %v8127, %v8127
    %v8442 = vmul.f32 %v8130, %v8130
    %v8443 = vmul.f32 %v8135, %v8135
    %v8444 = vmul.f32 %v8138, %v8138
    %v8445 = vmul.f32 %v8143, %v8143
    %v8446 = vmul.f32 %v8146, %v8146
    %v8447 = vmul.f32 %v8151, %v8151
    %v8448 = vmul.f32 %v8154, %v8154
    %v8449 = vmul.f32 %v8159, %v8159
    %v8450 = vmul.f32 %v8162, %v8162
    %v8451 = vmul.f32 %v8167, %v8167
    %v8452 = vmul.f32 %v8170, %v8170
    %v8453 = vmul.f32 %v8175, %v8175
    %v8454 = vmul.f32 %v8178, %v8178
    %v8455 = vmul.f32 %v8183, %v8183
    %v8456 = vmul.f32 %v8186, %v8186
    %v8457 = vmul.f32 %v8191, %v8191
    %v8458 = vmul.f32 %v8194, %v8194
    %v8459 = vmul.f32 %v8199, %v8199
    %v8460 = vmul.f32 %v8202, %v8202
    %v8461 = vmul.f32 %v8207, %v8207
    %v8462 = vmul.f32 %v8210, %v8210
    %v8463 = vmul.f32 %v8215, %v8215
    %v8464 = vmul.f32 %v8218, %v8218
    %v8465 = vmul.f32 %v8223, %v8223
    %v8466 = vmul.f32 %v8226, %v8226
    %v8467 = vmul.f32 %v8231, %v8231
    %v8468 = vmul.f32 %v8234, %v8234
    %v8469 = vmul.f32 %v8239, %v8239
    %v8470 = vmul.f32 %v8242, %v8242
    %v8471 = vmul.f32 %v8247, %v8247
    %v8472 = vmul.f32 %v8250, %v8250
    %v8473 = vmul.f32 %v8255, %v8255
    %v8474 = vmul.f32 %v8258, %v8258
    %v8475 = vmul.f32 %v8263, %v8263
    %v8476 = vmul.f32 %v8266, %v8266
    %v8477 = vmul.f32 %v8271, %v8271
    %v8478 = vmul.f32 %v8274, %v8274
    %v8479 = vmul.f32 %v8279, %v8279
    %v8480 = vmul.f32 %v8282, %v8282
    %v8481 = vmul.f32 %v8287, %v8287
    %v8482 = vmul.f32 %v8290, %v8290
    %v8483 = vmul.f32 %v8295, %v8295
    %v8484 = vmul.f32 %v8298, %v8298
    %v8485 = vmul.f32 %v8303, %v8303
    %v8486 = vmul.f32 %v8306, %v8306
    %v8487 = vmul.f32 %v8311, %v8311
    %v8488 = vmul.f32 %v8314, %v8314
    %v8489 = vmul.f32 %v8319, %v8319
    %v8490 = vmul.f32 %v8322, %v8322
    %v8491 = vmul.f32 %v8327, %v8327
    %v8492 = vmul.f32 %v8330, %v8330
    %v8493 = vmul.f32 %v8335, %v8335
    %v8494 = vmul.f32 %v8338, %v8338
    %v8495 = vmul.f32 %v8343, %v8343
    %v8496 = vmul.f32 %v8346, %v8346
    %v8497 = vmul.f32 %v8351, %v8351
    %v8498 = vmul.f32 %v8354, %v8354
    %v8499 = vmul.f32 %v8359, %v8359
    %v8500 = vmul.f32 %v8362, %v8362
    %v8501 = vadd.f32 %v8437, %v8438
    %v8502 = vadd.f32 %v8501, %v8439
    %v8503 = vadd.f32 %v8502, %v8440
    %v8504 = vadd.f32 %v8503, %v8441
    %v8505 = vadd.f32 %v8504, %v8442
    %v8506 = vadd.f32 %v8505, %v8443
    %v8507 = vadd.f32 %v8506, %v8444
    %v8508 = vadd.f32 %v8507, %v8445
    %v8509 = vadd.f32 %v8508, %v8446
    %v8510 = vadd.f32 %v8509, %v8447
    %v8511 = vadd.f32 %v8510, %v8448
    %v8512 = vadd.f32 %v8511, %v8449
    %v8513 = vadd.f32 %v8512, %v8450
    %v8514 = vadd.f32 %v8513, %v8451
    %v8515 = vadd.f32 %v8514, %v8452
    %v8516 = vadd.f32 %v8515, %v8453
    %v8517 = vadd.f32 %v8516, %v8454
    %v8518 = vadd.f32 %v8517, %v8455
    %v8519 = vadd.f32 %v8518, %v8456
    %v8520 = vadd.f32 %v8519, %v8457
    %v8521 = vadd.f32 %v8520, %v8458
    %v8522 = vadd.f32 %v8521, %v8459
    %v8523 = vadd.f32 %v8522, %v8460
    %v8524 = vadd.f32 %v8523, %v8461
    %v8525 = vadd.f32 %v8524, %v8462
    %v8526 = vadd.f32 %v8525, %v8463
    %v8527 = vadd.f32 %v8526, %v8464
    %v8528 = vadd.f32 %v8527, %v8465
    %v8529 = vadd.f32 %v8528, %v8466
    %v8530 = vadd.f32 %v8529, %v8467
    %v8531 = vadd.f32 %v8530, %v8468
    %v8532 = vadd.f32 %v8531, %v8469
    %v8533 = vadd.f32 %v8532, %v8470
    %v8534 = vadd.f32 %v8533, %v8471
    %v8535 = vadd.f32 %v8534, %v8472
    %v8536 = vadd.f32 %v8535, %v8473
    %v8537 = vadd.f32 %v8536, %v8474
    %v8538 = vadd.f32 %v8537, %v8475
    %v8539 = vadd.f32 %v8538, %v8476
    %v8540 = vadd.f32 %v8539, %v8477
    %v8541 = vadd.f32 %v8540, %v8478
    %v8542 = vadd.f32 %v8541, %v8479
    %v8543 = vadd.f32 %v8542, %v8480
    %v8544 = vadd.f32 %v8543, %v8481
    %v8545 = vadd.f32 %v8544, %v8482
    %v8546 = vadd.f32 %v8545, %v8483
    %v8547 = vadd.f32 %v8546, %v8484
    %v8548 = vadd.f32 %v8547, %v8485
    %v8549 = vadd.f32 %v8548, %v8486
    %v8550 = vadd.f32 %v8549, %v8487
    %v8551 = vadd.f32 %v8550, %v8488
    %v8552 = vadd.f32 %v8551, %v8489
    %v8553 = vadd.f32 %v8552, %v8490
    %v8554 = vadd.f32 %v8553, %v8491
    %v8555 = vadd.f32 %v8554, %v8492
    %v8556 = vadd.f32 %v8555, %v8493
    %v8557 = vadd.f32 %v8556, %v8494
    %v8558 = vadd.f32 %v8557, %v8495
    %v8559 = vadd.f32 %v8558, %v8496
    %v8560 = vadd.f32 %v8559, %v8497
    %v8561 = vadd.f32 %v8560, %v8498
    %v8562 = vadd.f32 %v8561, %v8499
    %v8563 = vadd.f32 %v8562, %v8500
    %v8564 = vrot.slane %v8563, 4
    %v8565 = vadd.f32 %v8563, %v8564
    %v8566 = vrot.slane %v8565, 2
    %v8567 = vadd.f32 %v8565, %v8566
    %v8568 = vrot.slane %v8567, 1
    %v8569 = vadd.f32 %v8567, %v8568
    %v8570 = vmul.f32 %v8569, 0.001953125
    %v8571 = vmul.f32 %v8436, %v8436
    %v8572 = vsub.f32 %v8570, %v8571
    %v8573 = vmax.f32 %v8572, 0.0
    %v8574 = vadd.f32 %v8573, 1e-05
    %v8575 = vrsqrt.pop %v8574
    %v8576 = vmul.f32 %v8365, %v8575
    %v8577 = vmul.f32 %v8436, %v8576
    %v8578 = vsub.f32 %v8366, %v8577
    %v8580 = vlaneseq
    %v8581 = vshrl.u32 %v8580, 7
    %v8582 = vsub.s32 0, %v8581
    %v8583 = vrot.slane %v8576, %v8582
    %v8585 = vmul.f32 %v8111, %v8583
    %v8586 = vmul.f32 %v8114, %v8583
    %v8587 = vmul.f32 %v8119, %v8583
    %v8588 = vmul.f32 %v8122, %v8583
    %v8589 = vmul.f32 %v8127, %v8583
    %v8590 = vmul.f32 %v8130, %v8583
    %v8591 = vmul.f32 %v8135, %v8583
    %v8592 = vmul.f32 %v8138, %v8583
    %v8593 = vmul.f32 %v8143, %v8583
    %v8594 = vmul.f32 %v8146, %v8583
    %v8595 = vmul.f32 %v8151, %v8583
    %v8596 = vmul.f32 %v8154, %v8583
    %v8597 = vmul.f32 %v8159, %v8583
    %v8598 = vmul.f32 %v8162, %v8583
    %v8599 = vmul.f32 %v8167, %v8583
    %v8600 = vmul.f32 %v8170, %v8583
    %v8601 = vmul.f32 %v8175, %v8583
    %v8602 = vmul.f32 %v8178, %v8583
    %v8603 = vmul.f32 %v8183, %v8583
    %v8604 = vmul.f32 %v8186, %v8583
    %v8605 = vmul.f32 %v8191, %v8583
    %v8606 = vmul.f32 %v8194, %v8583
    %v8607 = vmul.f32 %v8199, %v8583
    %v8608 = vmul.f32 %v8202, %v8583
    %v8609 = vmul.f32 %v8207, %v8583
    %v8610 = vmul.f32 %v8210, %v8583
    %v8611 = vmul.f32 %v8215, %v8583
    %v8612 = vmul.f32 %v8218, %v8583
    %v8613 = vmul.f32 %v8223, %v8583
    %v8614 = vmul.f32 %v8226, %v8583
    %v8615 = vmul.f32 %v8231, %v8583
    %v8616 = vmul.f32 %v8234, %v8583
    %v8617 = vmul.f32 %v8239, %v8583
    %v8618 = vmul.f32 %v8242, %v8583
    %v8619 = vmul.f32 %v8247, %v8583
    %v8620 = vmul.f32 %v8250, %v8583
    %v8621 = vmul.f32 %v8255, %v8583
    %v8622 = vmul.f32 %v8258, %v8583
    %v8623 = vmul.f32 %v8263, %v8583
    %v8624 = vmul.f32 %v8266, %v8583
    %v8625 = vmul.f32 %v8271, %v8583
    %v8626 = vmul.f32 %v8274, %v8583
    %v8627 = vmul.f32 %v8279, %v8583
    %v8628 = vmul.f32 %v8282, %v8583
    %v8629 = vmul.f32 %v8287, %v8583
    %v8630 = vmul.f32 %v8290, %v8583
    %v8631 = vmul.f32 %v8295, %v8583
    %v8632 = vmul.f32 %v8298, %v8583
    %v8633 = vmul.f32 %v8303, %v8583
    %v8634 = vmul.f32 %v8306, %v8583
    %v8635 = vmul.f32 %v8311, %v8583
    %v8636 = vmul.f32 %v8314, %v8583
    %v8637 = vmul.f32 %v8319, %v8583
    %v8638 = vmul.f32 %v8322, %v8583
    %v8639 = vmul.f32 %v8327, %v8583
    %v8640 = vmul.f32 %v8330, %v8583
    %v8641 = vmul.f32 %v8335, %v8583
    %v8642 = vmul.f32 %v8338, %v8583
    %v8643 = vmul.f32 %v8343, %v8583
    %v8644 = vmul.f32 %v8346, %v8583
    %v8645 = vmul.f32 %v8351, %v8583
    %v8646 = vmul.f32 %v8354, %v8583
    %v8647 = vmul.f32 %v8359, %v8583
    %v8648 = vmul.f32 %v8362, %v8583
    %v8650 = vlaneseq
    %v8651 = vshrl.u32 %v8650, 7
    %v8652 = vsub.s32 0, %v8651
    %v8653 = vrot.slane %v8578, %v8652
    %v8655 = vadd.f32 %v8585, %v8653
    %v8656 = vadd.f32 %v8586, %v8653
    %v8657 = vadd.f32 %v8587, %v8653
    %v8658 = vadd.f32 %v8588, %v8653
    %v8659 = vadd.f32 %v8589, %v8653
    %v8660 = vadd.f32 %v8590, %v8653
    %v8661 = vadd.f32 %v8591, %v8653
    %v8662 = vadd.f32 %v8592, %v8653
    %v8663 = vadd.f32 %v8593, %v8653
    %v8664 = vadd.f32 %v8594, %v8653
    %v8665 = vadd.f32 %v8595, %v8653
    %v8666 = vadd.f32 %v8596, %v8653
    %v8667 = vadd.f32 %v8597, %v8653
    %v8668 = vadd.f32 %v8598, %v8653
    %v8669 = vadd.f32 %v8599, %v8653
    %v8670 = vadd.f32 %v8600, %v8653
    %v8671 = vadd.f32 %v8601, %v8653
    %v8672 = vadd.f32 %v8602, %v8653
    %v8673 = vadd.f32 %v8603, %v8653
    %v8674 = vadd.f32 %v8604, %v8653
    %v8675 = vadd.f32 %v8605, %v8653
    %v8676 = vadd.f32 %v8606, %v8653
    %v8677 = vadd.f32 %v8607, %v8653
    %v8678 = vadd.f32 %v8608, %v8653
    %v8679 = vadd.f32 %v8609, %v8653
    %v8680 = vadd.f32 %v8610, %v8653
    %v8681 = vadd.f32 %v8611, %v8653
    %v8682 = vadd.f32 %v8612, %v8653
    %v8683 = vadd.f32 %v8613, %v8653
    %v8684 = vadd.f32 %v8614, %v8653
    %v8685 = vadd.f32 %v8615, %v8653
    %v8686 = vadd.f32 %v8616, %v8653
    %v8687 = vadd.f32 %v8617, %v8653
    %v8688 = vadd.f32 %v8618, %v8653
    %v8689 = vadd.f32 %v8619, %v8653
    %v8690 = vadd.f32 %v8620, %v8653
    %v8691 = vadd.f32 %v8621, %v8653
    %v8692 = vadd.f32 %v8622, %v8653
    %v8693 = vadd.f32 %v8623, %v8653
    %v8694 = vadd.f32 %v8624, %v8653
    %v8695 = vadd.f32 %v8625, %v8653
    %v8696 = vadd.f32 %v8626, %v8653
    %v8697 = vadd.f32 %v8627, %v8653
    %v8698 = vadd.f32 %v8628, %v8653
    %v8699 = vadd.f32 %v8629, %v8653
    %v8700 = vadd.f32 %v8630, %v8653
    %v8701 = vadd.f32 %v8631, %v8653
    %v8702 = vadd.f32 %v8632, %v8653
    %v8703 = vadd.f32 %v8633, %v8653
    %v8704 = vadd.f32 %v8634, %v8653
    %v8705 = vadd.f32 %v8635, %v8653
    %v8706 = vadd.f32 %v8636, %v8653
    %v8707 = vadd.f32 %v8637, %v8653
    %v8708 = vadd.f32 %v8638, %v8653
    %v8709 = vadd.f32 %v8639, %v8653
    %v8710 = vadd.f32 %v8640, %v8653
    %v8711 = vadd.f32 %v8641, %v8653
    %v8712 = vadd.f32 %v8642, %v8653
    %v8713 = vadd.f32 %v8643, %v8653
    %v8714 = vadd.f32 %v8644, %v8653
    %v8715 = vadd.f32 %v8645, %v8653
    %v8716 = vadd.f32 %v8646, %v8653
    %v8717 = vadd.f32 %v8647, %v8653
    %v8718 = vadd.f32 %v8648, %v8653
    %v8719 = vld [vmem:[#allocation4] sm:$0xff]
    %v8720 = vld [vmem:[#allocation4 + $0x8] sm:$0xff]
    %v8721 = vld [vmem:[#allocation4 + $0x10] sm:$0xff]
    %v8722 = vld [vmem:[#allocation4 + $0x18] sm:$0xff]
    %v8723 = vld [vmem:[#allocation4 + $0x20] sm:$0xff]
    %v8724 = vld [vmem:[#allocation4 + $0x28] sm:$0xff]
    %v8725 = vld [vmem:[#allocation4 + $0x30] sm:$0xff]
    %v8726 = vld [vmem:[#allocation4 + $0x38] sm:$0xff]
    %v8727 = vld [vmem:[#allocation4 + $0x40] sm:$0xff]
    %v8728 = vld [vmem:[#allocation4 + $0x48] sm:$0xff]
    %v8729 = vld [vmem:[#allocation4 + $0x50] sm:$0xff]
    %v8730 = vld [vmem:[#allocation4 + $0x58] sm:$0xff]
    %v8731 = vld [vmem:[#allocation4 + $0x60] sm:$0xff]
    %v8732 = vld [vmem:[#allocation4 + $0x68] sm:$0xff]
    %v8733 = vld [vmem:[#allocation4 + $0x70] sm:$0xff]
    %v8734 = vld [vmem:[#allocation4 + $0x78] sm:$0xff]
    %v8735 = vld [vmem:[#allocation4 + $0x80] sm:$0xff]
    %v8736 = vld [vmem:[#allocation4 + $0x88] sm:$0xff]
    %v8737 = vld [vmem:[#allocation4 + $0x90] sm:$0xff]
    %v8738 = vld [vmem:[#allocation4 + $0x98] sm:$0xff]
    %v8739 = vld [vmem:[#allocation4 + $0xa0] sm:$0xff]
    %v8740 = vld [vmem:[#allocation4 + $0xa8] sm:$0xff]
    %v8741 = vld [vmem:[#allocation4 + $0xb0] sm:$0xff]
    %v8742 = vld [vmem:[#allocation4 + $0xb8] sm:$0xff]
    %v8743 = vld [vmem:[#allocation4 + $0xc0] sm:$0xff]
    %v8744 = vld [vmem:[#allocation4 + $0xc8] sm:$0xff]
    %v8745 = vld [vmem:[#allocation4 + $0xd0] sm:$0xff]
    %v8746 = vld [vmem:[#allocation4 + $0xd8] sm:$0xff]
    %v8747 = vld [vmem:[#allocation4 + $0xe0] sm:$0xff]
    %v8748 = vld [vmem:[#allocation4 + $0xe8] sm:$0xff]
    %v8749 = vld [vmem:[#allocation4 + $0xf0] sm:$0xff]
    %v8750 = vld [vmem:[#allocation4 + $0xf8] sm:$0xff]
    %v8751 = vld [vmem:[#allocation4 + $0x100] sm:$0xff]
    %v8752 = vld [vmem:[#allocation4 + $0x108] sm:$0xff]
    %v8753 = vld [vmem:[#allocation4 + $0x110] sm:$0xff]
    %v8754 = vld [vmem:[#allocation4 + $0x118] sm:$0xff]
    %v8755 = vld [vmem:[#allocation4 + $0x120] sm:$0xff]
    %v8756 = vld [vmem:[#allocation4 + $0x128] sm:$0xff]
    %v8757 = vld [vmem:[#allocation4 + $0x130] sm:$0xff]
    %v8758 = vld [vmem:[#allocation4 + $0x138] sm:$0xff]
    %v8759 = vld [vmem:[#allocation4 + $0x140] sm:$0xff]
    %v8760 = vld [vmem:[#allocation4 + $0x148] sm:$0xff]
    %v8761 = vld [vmem:[#allocation4 + $0x150] sm:$0xff]
    %v8762 = vld [vmem:[#allocation4 + $0x158] sm:$0xff]
    %v8763 = vld [vmem:[#allocation4 + $0x160] sm:$0xff]
    %v8764 = vld [vmem:[#allocation4 + $0x168] sm:$0xff]
    %v8765 = vld [vmem:[#allocation4 + $0x170] sm:$0xff]
    %v8766 = vld [vmem:[#allocation4 + $0x178] sm:$0xff]
    %v8767 = vld [vmem:[#allocation4 + $0x180] sm:$0xff]
    %v8768 = vld [vmem:[#allocation4 + $0x188] sm:$0xff]
    %v8769 = vld [vmem:[#allocation4 + $0x190] sm:$0xff]
    %v8770 = vld [vmem:[#allocation4 + $0x198] sm:$0xff]
    %v8771 = vld [vmem:[#allocation4 + $0x1a0] sm:$0xff]
    %v8772 = vld [vmem:[#allocation4 + $0x1a8] sm:$0xff]
    %v8773 = vld [vmem:[#allocation4 + $0x1b0] sm:$0xff]
    %v8774 = vld [vmem:[#allocation4 + $0x1b8] sm:$0xff]
    %v8775 = vld [vmem:[#allocation4 + $0x1c0] sm:$0xff]
    %v8776 = vld [vmem:[#allocation4 + $0x1c8] sm:$0xff]
    %v8777 = vld [vmem:[#allocation4 + $0x1d0] sm:$0xff]
    %v8778 = vld [vmem:[#allocation4 + $0x1d8] sm:$0xff]
    %v8779 = vld [vmem:[#allocation4 + $0x1e0] sm:$0xff]
    %v8780 = vld [vmem:[#allocation4 + $0x1e8] sm:$0xff]
    %v8781 = vld [vmem:[#allocation4 + $0x1f0] sm:$0xff]
    %v8782 = vld [vmem:[#allocation4 + $0x1f8] sm:$0xff]
    %v8783 = vadd.f32 %v8655, %v8719
    %v8784 = vadd.f32 %v8656, %v8720
    %v8785 = vadd.f32 %v8657, %v8721
    %v8786 = vadd.f32 %v8658, %v8722
    %v8787 = vadd.f32 %v8659, %v8723
    %v8788 = vadd.f32 %v8660, %v8724
    %v8789 = vadd.f32 %v8661, %v8725
    %v8790 = vadd.f32 %v8662, %v8726
    %v8791 = vadd.f32 %v8663, %v8727
    %v8792 = vadd.f32 %v8664, %v8728
    %v8793 = vadd.f32 %v8665, %v8729
    %v8794 = vadd.f32 %v8666, %v8730
    %v8795 = vadd.f32 %v8667, %v8731
    %v8796 = vadd.f32 %v8668, %v8732
    %v8797 = vadd.f32 %v8669, %v8733
    %v8798 = vadd.f32 %v8670, %v8734
    %v8799 = vadd.f32 %v8671, %v8735
    %v8800 = vadd.f32 %v8672, %v8736
    %v8801 = vadd.f32 %v8673, %v8737
    %v8802 = vadd.f32 %v8674, %v8738
    %v8803 = vadd.f32 %v8675, %v8739
    %v8804 = vadd.f32 %v8676, %v8740
    %v8805 = vadd.f32 %v8677, %v8741
    %v8806 = vadd.f32 %v8678, %v8742
    %v8807 = vadd.f32 %v8679, %v8743
    %v8808 = vadd.f32 %v8680, %v8744
    %v8809 = vadd.f32 %v8681, %v8745
    %v8810 = vadd.f32 %v8682, %v8746
    %v8811 = vadd.f32 %v8683, %v8747
    %v8812 = vadd.f32 %v8684, %v8748
    %v8813 = vadd.f32 %v8685, %v8749
    %v8814 = vadd.f32 %v8686, %v8750
    %v8815 = vadd.f32 %v8687, %v8751
    %v8816 = vadd.f32 %v8688, %v8752
    %v8817 = vadd.f32 %v8689, %v8753
    %v8818 = vadd.f32 %v8690, %v8754
    %v8819 = vadd.f32 %v8691, %v8755
    %v8820 = vadd.f32 %v8692, %v8756
    %v8821 = vadd.f32 %v8693, %v8757
    %v8822 = vadd.f32 %v8694, %v8758
    %v8823 = vadd.f32 %v8695, %v8759
    %v8824 = vadd.f32 %v8696, %v8760
    %v8825 = vadd.f32 %v8697, %v8761
    %v8826 = vadd.f32 %v8698, %v8762
    %v8827 = vadd.f32 %v8699, %v8763
    %v8828 = vadd.f32 %v8700, %v8764
    %v8829 = vadd.f32 %v8701, %v8765
    %v8830 = vadd.f32 %v8702, %v8766
    %v8831 = vadd.f32 %v8703, %v8767
    %v8832 = vadd.f32 %v8704, %v8768
    %v8833 = vadd.f32 %v8705, %v8769
    %v8834 = vadd.f32 %v8706, %v8770
    %v8835 = vadd.f32 %v8707, %v8771
    %v8836 = vadd.f32 %v8708, %v8772
    %v8837 = vadd.f32 %v8709, %v8773
    %v8838 = vadd.f32 %v8710, %v8774
    %v8839 = vadd.f32 %v8711, %v8775
    %v8840 = vadd.f32 %v8712, %v8776
    %v8841 = vadd.f32 %v8713, %v8777
    %v8842 = vadd.f32 %v8714, %v8778
    %v8843 = vadd.f32 %v8715, %v8779
    %v8844 = vadd.f32 %v8716, %v8780
    %v8845 = vadd.f32 %v8717, %v8781
    %v8846 = vadd.f32 %v8718, %v8782
    %v8847 = vmax.f32 %v8783, 0.0
    %v8848 = vmax.f32 %v8784, 0.0
    %v8849 = vmax.f32 %v8785, 0.0
    %v8850 = vmax.f32 %v8786, 0.0
    %v8851 = vmax.f32 %v8787, 0.0
    %v8852 = vmax.f32 %v8788, 0.0
    %v8853 = vmax.f32 %v8789, 0.0
    %v8854 = vmax.f32 %v8790, 0.0
    %v8855 = vmax.f32 %v8791, 0.0
    %v8856 = vmax.f32 %v8792, 0.0
    %v8857 = vmax.f32 %v8793, 0.0
    %v8858 = vmax.f32 %v8794, 0.0
    %v8859 = vmax.f32 %v8795, 0.0
    %v8860 = vmax.f32 %v8796, 0.0
    %v8861 = vmax.f32 %v8797, 0.0
    %v8862 = vmax.f32 %v8798, 0.0
    %v8863 = vmax.f32 %v8799, 0.0
    %v8864 = vmax.f32 %v8800, 0.0
    %v8865 = vmax.f32 %v8801, 0.0
    %v8866 = vmax.f32 %v8802, 0.0
    %v8867 = vmax.f32 %v8803, 0.0
    %v8868 = vmax.f32 %v8804, 0.0
    %v8869 = vmax.f32 %v8805, 0.0
    %v8870 = vmax.f32 %v8806, 0.0
    %v8871 = vmax.f32 %v8807, 0.0
    %v8872 = vmax.f32 %v8808, 0.0
    %v8873 = vmax.f32 %v8809, 0.0
    %v8874 = vmax.f32 %v8810, 0.0
    %v8875 = vmax.f32 %v8811, 0.0
    %v8876 = vmax.f32 %v8812, 0.0
    %v8877 = vmax.f32 %v8813, 0.0
    %v8878 = vmax.f32 %v8814, 0.0
    %v8879 = vmax.f32 %v8815, 0.0
    %v8880 = vmax.f32 %v8816, 0.0
    %v8881 = vmax.f32 %v8817, 0.0
    %v8882 = vmax.f32 %v8818, 0.0
    %v8883 = vmax.f32 %v8819, 0.0
    %v8884 = vmax.f32 %v8820, 0.0
    %v8885 = vmax.f32 %v8821, 0.0
    %v8886 = vmax.f32 %v8822, 0.0
    %v8887 = vmax.f32 %v8823, 0.0
    %v8888 = vmax.f32 %v8824, 0.0
    %v8889 = vmax.f32 %v8825, 0.0
    %v8890 = vmax.f32 %v8826, 0.0
    %v8891 = vmax.f32 %v8827, 0.0
    %v8892 = vmax.f32 %v8828, 0.0
    %v8893 = vmax.f32 %v8829, 0.0
    %v8894 = vmax.f32 %v8830, 0.0
    %v8895 = vmax.f32 %v8831, 0.0
    %v8896 = vmax.f32 %v8832, 0.0
    %v8897 = vmax.f32 %v8833, 0.0
    %v8898 = vmax.f32 %v8834, 0.0
    %v8899 = vmax.f32 %v8835, 0.0
    %v8900 = vmax.f32 %v8836, 0.0
    %v8901 = vmax.f32 %v8837, 0.0
    %v8902 = vmax.f32 %v8838, 0.0
    %v8903 = vmax.f32 %v8839, 0.0
    %v8904 = vmax.f32 %v8840, 0.0
    %v8905 = vmax.f32 %v8841, 0.0
    %v8906 = vmax.f32 %v8842, 0.0
    %v8907 = vmax.f32 %v8843, 0.0
    %v8908 = vmax.f32 %v8844, 0.0
    %v8909 = vmax.f32 %v8845, 0.0
    %v8910 = vmax.f32 %v8846, 0.0
    %8911 = vst [vmem:[#allocation13] sm:$0xff] %v8847
    %8912 = vst [vmem:[#allocation13 + $0x8] sm:$0xff] %v8848
    %8913 = vst [vmem:[#allocation13 + $0x10] sm:$0xff] %v8849
    %8914 = vst [vmem:[#allocation13 + $0x18] sm:$0xff] %v8850
    %8915 = vst [vmem:[#allocation13 + $0x20] sm:$0xff] %v8851
    %8916 = vst [vmem:[#allocation13 + $0x28] sm:$0xff] %v8852
    %8917 = vst [vmem:[#allocation13 + $0x30] sm:$0xff] %v8853
    %8918 = vst [vmem:[#allocation13 + $0x38] sm:$0xff] %v8854
    %8919 = vst [vmem:[#allocation13 + $0x40] sm:$0xff] %v8855
    %8920 = vst [vmem:[#allocation13 + $0x48] sm:$0xff] %v8856
    %8921 = vst [vmem:[#allocation13 + $0x50] sm:$0xff] %v8857
    %8922 = vst [vmem:[#allocation13 + $0x58] sm:$0xff] %v8858
    %8923 = vst [vmem:[#allocation13 + $0x60] sm:$0xff] %v8859
    %8924 = vst [vmem:[#allocation13 + $0x68] sm:$0xff] %v8860
    %8925 = vst [vmem:[#allocation13 + $0x70] sm:$0xff] %v8861
    %8926 = vst [vmem:[#allocation13 + $0x78] sm:$0xff] %v8862
    %8927 = vst [vmem:[#allocation13 + $0x80] sm:$0xff] %v8863
    %8928 = vst [vmem:[#allocation13 + $0x88] sm:$0xff] %v8864
    %8929 = vst [vmem:[#allocation13 + $0x90] sm:$0xff] %v8865
    %8930 = vst [vmem:[#allocation13 + $0x98] sm:$0xff] %v8866
    %8931 = vst [vmem:[#allocation13 + $0xa0] sm:$0xff] %v8867
    %8932 = vst [vmem:[#allocation13 + $0xa8] sm:$0xff] %v8868
    %8933 = vst [vmem:[#allocation13 + $0xb0] sm:$0xff] %v8869
    %8934 = vst [vmem:[#allocation13 + $0xb8] sm:$0xff] %v8870
    %8935 = vst [vmem:[#allocation13 + $0xc0] sm:$0xff] %v8871
    %8936 = vst [vmem:[#allocation13 + $0xc8] sm:$0xff] %v8872
    %8937 = vst [vmem:[#allocation13 + $0xd0] sm:$0xff] %v8873
    %8938 = vst [vmem:[#allocation13 + $0xd8] sm:$0xff] %v8874
    %8939 = vst [vmem:[#allocation13 + $0xe0] sm:$0xff] %v8875
    %8940 = vst [vmem:[#allocation13 + $0xe8] sm:$0xff] %v8876
    %8941 = vst [vmem:[#allocation13 + $0xf0] sm:$0xff] %v8877
    %8942 = vst [vmem:[#allocation13 + $0xf8] sm:$0xff] %v8878
    %8943 = vst [vmem:[#allocation13 + $0x100] sm:$0xff] %v8879
    %8944 = vst [vmem:[#allocation13 + $0x108] sm:$0xff] %v8880
    %8945 = vst [vmem:[#allocation13 + $0x110] sm:$0xff] %v8881
    %8946 = vst [vmem:[#allocation13 + $0x118] sm:$0xff] %v8882
    %8947 = vst [vmem:[#allocation13 + $0x120] sm:$0xff] %v8883
    %8948 = vst [vmem:[#allocation13 + $0x128] sm:$0xff] %v8884
    %8949 = vst [vmem:[#allocation13 + $0x130] sm:$0xff] %v8885
    %8950 = vst [vmem:[#allocation13 + $0x138] sm:$0xff] %v8886
    %8951 = vst [vmem:[#allocation13 + $0x140] sm:$0xff] %v8887
    %8952 = vst [vmem:[#allocation13 + $0x148] sm:$0xff] %v8888
    %8953 = vst [vmem:[#allocation13 + $0x150] sm:$0xff] %v8889
    %8954 = vst [vmem:[#allocation13 + $0x158] sm:$0xff] %v8890
    %8955 = vst [vmem:[#allocation13 + $0x160] sm:$0xff] %v8891
    %8956 = vst [vmem:[#allocation13 + $0x168] sm:$0xff] %v8892
    %8957 = vst [vmem:[#allocation13 + $0x170] sm:$0xff] %v8893
    %8958 = vst [vmem:[#allocation13 + $0x178] sm:$0xff] %v8894
    %8959 = vst [vmem:[#allocation13 + $0x180] sm:$0xff] %v8895
    %8960 = vst [vmem:[#allocation13 + $0x188] sm:$0xff] %v8896
    %8961 = vst [vmem:[#allocation13 + $0x190] sm:$0xff] %v8897
    %8962 = vst [vmem:[#allocation13 + $0x198] sm:$0xff] %v8898
    %8963 = vst [vmem:[#allocation13 + $0x1a0] sm:$0xff] %v8899
    %8964 = vst [vmem:[#allocation13 + $0x1a8] sm:$0xff] %v8900
    %8965 = vst [vmem:[#allocation13 + $0x1b0] sm:$0xff] %v8901
    %8966 = vst [vmem:[#allocation13 + $0x1b8] sm:$0xff] %v8902
    %8967 = vst [vmem:[#allocation13 + $0x1c0] sm:$0xff] %v8903
    %8968 = vst [vmem:[#allocation13 + $0x1c8] sm:$0xff] %v8904
    %8969 = vst [vmem:[#allocation13 + $0x1d0] sm:$0xff] %v8905
    %8970 = vst [vmem:[#allocation13 + $0x1d8] sm:$0xff] %v8906
    %8971 = vst [vmem:[#allocation13 + $0x1e0] sm:$0xff] %v8907
    %8972 = vst [vmem:[#allocation13 + $0x1e8] sm:$0xff] %v8908
    %8973 = vst [vmem:[#allocation13 + $0x1f0] sm:$0xff] %v8909
    %8974 = vst [vmem:[#allocation13 + $0x1f8] sm:$0xff] %v8910
    // Predicated region
    $region66: #{tpu_custom_call.1} parent=1 // pred_check
      _
    $region67: #{tpu_custom_call.1} parent=1 // pred_check_branch
      %8976 = sbr.rel (0) target = $region69
    $region68: #{tpu_custom_call.1} parent=1 // pred_region
      %s8978 = ssub.s32 8192, 8192
      %8979 = vsyncadd [#allocation7], %s8978
      %s8980 = sshll.u32 [#allocation13], 4
      %s8981 = int_to_ptr.vmem [resolvable:$true] %s8980
      %8986 = dma.vmem_to_hbm [thread:$0]  %s8981, 8192, %s12, [#allocation7], 128, 128, 8
    $region69: #{tpu_custom_call.1} parent=1 // pred_fallthru
      _
    // Predicated region
    $region70: #{tpu_custom_call.1} parent=1 // pred_check
      _
    $region71: #{tpu_custom_call.1} parent=1 // pred_check_branch
      %8988 = sbr.rel (0) target = $region73
    $region72: #{tpu_custom_call.1} parent=1 // pred_region
      %8989 = dma.done [#allocation7], 8192
    $region73: #{tpu_custom_call.1} parent=1 // pred_fallthru
      _
    %8990 = vsyncpa [#allocation6], 1
    %8991 = vsyncpa [#allocation9], 1
    %8992 = vsyncpa [#allocation12], 1
    %8993 = vsyncpa [#allocation7], 1

</llo_original>
